<compile_context>
chip_gen: v5e
topology: v5e:2x2
jax: 0.10.0
libtpu: 0.0.40
codegen_flags: <defaults>
</compile_context>

<pallas_src>
import numpy as np
import jax
import jax.numpy as jnp
from jax import lax
from jax.experimental import pallas as pl
from jax.experimental.pallas import tpu as pltpu

INPUT_SIZE = 5
HIDDEN_SIZE = 128
SEQ_LEN = 20          # implied by Linear(20 * hidden_size, 5)
NUM_OUT = 5


def lstm_linear_kernel(x_ref, wih_ref, whh_ref, b_ref, wout_ref, bout_ref,
                       out_ref, xg_ref, hflat_ref):
    """Full LSTM recurrence + output projection, single invocation.

    x_ref    : (T*B, I)    f32  time-major input, rows [t0 b0..bB-1, t1 ..., ...]
    wih_ref  : (I, 4H)     f32  input->gates weight, PyTorch gate order (i,f,g,o)
    whh_ref  : (H, 4H)     bf16 hidden->gates weight, gate order (i,f,g,o)
    b_ref    : (1, 4H)     f32  b_ih + b_hh
    wout_ref : (NUM_OUT, T*H) f32 output linear weight (lane-dense, NOT transposed)
    bout_ref : (1, NUM_OUT) f32 output linear bias
    out_ref  : (B, NUM_OUT)
    xg_ref   : (T*B, 4H)   f32  VMEM scratch: precomputed x@W_ih + b
    hflat_ref: (B, T*H)    f32  VMEM scratch: h_t history, time slow / hidden fast
    """
    B = out_ref.shape[0]
    H = whh_ref.shape[0]
    I = x_ref.shape[1]
    T = x_ref.shape[0] // B

    # --- Input projection on the VPU (off the serial critical path). --------
    # xg[t] = x[t] @ W_ih + (b_ih + b_hh) as I rank-1 FMAs per (B, 4H) block.
    for t in range(T):
        xt = x_ref[t * B:(t + 1) * B, :]                        # (B, I)
        acc = b_ref[...] + xt[:, 0:1] * wih_ref[0:1, :]         # (B, 4H)
        for k in range(1, I):
            acc = acc + xt[:, k:k + 1] * wih_ref[k:k + 1, :]
        xg_ref[t * B:(t + 1) * B, :] = acc

    # --- Serial recurrence (static unroll, T = 20). --------------------------
    h = jnp.zeros((B, H), jnp.float32)
    c = jnp.zeros((B, H), jnp.float32)
    for t in range(T):
        gates = (xg_ref[t * B:(t + 1) * B, :]
                 + jnp.dot(h.astype(jnp.bfloat16), whh_ref[...],
                           preferred_element_type=jnp.float32))  # (B, 4H) f32
        # Gate order (i, f, g, o).  EUP chain: sigmoid(i,f) -> tanh(g) -> c ->
        # tanh(c) -> sigmoid(o) -> h, so tanh(c) is not queued behind sigmoid(o).
        if_g = jax.nn.sigmoid(gates[:, 0:2 * H])                 # i, f slab
        i_g = if_g[:, 0:H]
        f_g = if_g[:, H:2 * H]
        g_g = jnp.tanh(gates[:, 2 * H:3 * H])
        c = f_g * c + i_g * g_g
        tanh_c = jnp.tanh(c)
        o_g = jax.nn.sigmoid(gates[:, 3 * H:4 * H])
        h = o_g * tanh_c
        hflat_ref[:, t * H:(t + 1) * H] = h                      # static slice

    # --- Single output projection after the loop (lane-dense W, A @ B^T). ----
    out_ref[...] = (lax.dot_general(
        hflat_ref[...], wout_ref[...],
        dimension_numbers=(((1,), (1,)), ((), ())),
        preferred_element_type=jnp.float32) + bout_ref[...])


def model_forward(x, params):
    """x: (B, T, I) float32 (batch_first, like the PyTorch module)."""
    B0, T, I = x.shape
    assert T == SEQ_LEN and I == INPUT_SIZE
    H = HIDDEN_SIZE
    w_ih, w_hh, b_ih, b_hh, w_out, b_out = params

    # Pad batch to a multiple of 8 so every per-step slice is sublane-aligned.
    B = ((B0 + 7) // 8) * 8
    if B != B0:
        x = jnp.concatenate([x, jnp.zeros((B - B0, T, I), x.dtype)], axis=0)

    # Layout prep (plain JAX glue).
    x_2d = jnp.transpose(x, (1, 0, 2)).reshape(T * B, I)            # (T*B, I)
    wih_t = jnp.transpose(w_ih, (1, 0))                             # (I, 4H) f32
    whh_t = jnp.transpose(w_hh, (1, 0)).astype(jnp.bfloat16)        # (H, 4H) bf16
    b = (b_ih + b_hh).reshape(1, 4 * H)                             # (1, 4H)
    wout = w_out                                                    # (NUM_OUT, T*H) lane-dense
    bout = b_out.reshape(1, NUM_OUT)

    flops = (2 * T * B * H * (4 * H)          # recurrent h @ W_hh
             + 2 * T * B * I * (4 * H)        # input projection
             + 2 * B * (T * H) * NUM_OUT)     # output linear
    transcendentals = T * B * 5 * H            # 4 gate activations + tanh(c)
    bytes_accessed = (x_2d.size * 4 + wih_t.size * 4 + whh_t.size * 2
                      + b.size * 4 + wout.size * 4 + bout.size * 4
                      + B * NUM_OUT * 4)

    vmem = pl.BlockSpec(memory_space=pltpu.MemorySpace.VMEM)
    out = pl.pallas_call(
        lstm_linear_kernel,
        out_shape=jax.ShapeDtypeStruct((B, NUM_OUT), jnp.float32),
        in_specs=[vmem] * 6,
        out_specs=vmem,
        scratch_shapes=[
            pltpu.VMEM((T * B, 4 * H), jnp.float32),   # precomputed x-gates
            pltpu.VMEM((B, T * H), jnp.float32),       # h_t history (flattened)
        ],
        cost_estimate=pl.CostEstimate(
            flops=flops, transcendentals=transcendentals,
            bytes_accessed=bytes_accessed),
    )(x_2d, wih_t, whh_t, b, wout, bout)
    return out[:B0]


def init_params(key):
    """Deterministic init mimicking PyTorch's uniform(-1/sqrt(H), 1/sqrt(H))."""
    k = 1.0 / np.sqrt(HIDDEN_SIZE)
    ks = jax.random.split(key, 6)
    w_ih = jax.random.uniform(ks[0], (4 * HIDDEN_SIZE, INPUT_SIZE), jnp.float32, -k, k)
    w_hh = jax.random.uniform(ks[1], (4 * HIDDEN_SIZE, HIDDEN_SIZE), jnp.float32, -k, k)
    b_ih = jax.random.uniform(ks[2], (4 * HIDDEN_SIZE,), jnp.float32, -k, k)
    b_hh = jax.random.uniform(ks[3], (4 * HIDDEN_SIZE,), jnp.float32, -k, k)
    k2 = 1.0 / np.sqrt(SEQ_LEN * HIDDEN_SIZE)
    w_out = jax.random.uniform(ks[4], (NUM_OUT, SEQ_LEN * HIDDEN_SIZE), jnp.float32, -k2, k2)
    b_out = jax.random.uniform(ks[5], (NUM_OUT,), jnp.float32, -k2, k2)
    return (w_ih, w_hh, b_ih, b_hh, w_out, b_out)


def reference_forward(x, params):
    """Pure-JAX f32 reference of the PyTorch module's forward."""
    w_ih, w_hh, b_ih, b_hh, w_out, b_out = params
    B, T, _ = x.shape
    H = HIDDEN_SIZE
    h = jnp.zeros((B, H), jnp.float32)
    c = jnp.zeros((B, H), jnp.float32)
    hs = []
    for t in range(T):
        gates = x[:, t, :] @ w_ih.T + b_ih + h @ w_hh.T + b_hh
        i_g = jax.nn.sigmoid(gates[:, 0:H])
        f_g = jax.nn.sigmoid(gates[:, H:2 * H])
        g_g = jnp.tanh(gates[:, 2 * H:3 * H])
        o_g = jax.nn.sigmoid(gates[:, 3 * H:4 * H])
        c = f_g * c + i_g * g_g
        h = o_g * jnp.tanh(c)
        hs.append(h)
    flat = jnp.concatenate(hs, axis=1)      # (B, T*H) -- time slow, hidden fast
    return flat @ w_out.T + b_out


if __name__ == "__main__":
    key = jax.random.PRNGKey(0)
    k_param, k_x = jax.random.split(key)
    params = init_params(k_param)

    B = 8
    x = jax.random.normal(k_x, (B, SEQ_LEN, INPUT_SIZE), jnp.float32)

    out = model_forward(x, params)
    out = jax.block_until_ready(out)

    ref = reference_forward(x, params)
    # Recurrent matmul uses bf16 MXU operands (f32 accumulate) -> looser tolerance.
    np.testing.assert_allclose(np.asarray(out), np.asarray(ref), rtol=2e-2, atol=2e-2)

    print("KERNEL_OK")
</pallas_src>

<mosaic_0001>
module attributes {stable_mosaic.version = 11 : i64} {
  func.func @lstm_linear_kernel(%arg0: memref<160x5xf32, #tpu.memory_space<vmem>>, %arg1: memref<5x512xf32, #tpu.memory_space<vmem>>, %arg2: memref<128x512xbf16, #tpu.memory_space<vmem>>, %arg3: memref<1x512xf32, #tpu.memory_space<vmem>>, %arg4: memref<5x2560xf32, #tpu.memory_space<vmem>>, %arg5: memref<1x5xf32, #tpu.memory_space<vmem>>, %arg6: memref<8x5xf32, #tpu.memory_space<vmem>>, %arg7: memref<160x512xf32, #tpu.memory_space<vmem>>, %arg8: memref<8x2560xf32, #tpu.memory_space<vmem>>) attributes {dimension_semantics = [], scalar_prefetch = 0 : i64, scratch_operands = 2 : i64, tpu.core_type = #tpu.core_type<tc>} {
    %c0 = arith.constant 0 : index
    %c0_0 = arith.constant 0 : index
    %0 = vector.load %arg0[%c0, %c0_0] : memref<160x5xf32, #tpu.memory_space<vmem>>, vector<8x5xf32>
    %c0_1 = arith.constant 0 : index
    %c0_2 = arith.constant 0 : index
    %1 = vector.load %arg3[%c0_1, %c0_2] : memref<1x512xf32, #tpu.memory_space<vmem>>, vector<1x512xf32>
    %2 = vector.extract_strided_slice %0 {offsets = [0, 0], sizes = [8, 1], strides = [1, 1]} : vector<8x5xf32> to vector<8x1xf32>
    %c0_3 = arith.constant 0 : index
    %c0_4 = arith.constant 0 : index
    %3 = vector.load %arg1[%c0_3, %c0_4] : memref<5x512xf32, #tpu.memory_space<vmem>>, vector<1x512xf32>
    %4 = vector.broadcast %2 : vector<8x1xf32> to vector<8x512xf32>
    %5 = vector.broadcast %3 : vector<1x512xf32> to vector<8x512xf32>
    %6 = arith.mulf %4, %5 : vector<8x512xf32>
    %7 = vector.broadcast %1 : vector<1x512xf32> to vector<8x512xf32>
    %8 = arith.addf %7, %6 : vector<8x512xf32>
    %9 = vector.extract_strided_slice %0 {offsets = [0, 1], sizes = [8, 1], strides = [1, 1]} : vector<8x5xf32> to vector<8x1xf32>
    %c1 = arith.constant 1 : index
    %c0_5 = arith.constant 0 : index
    %10 = vector.load %arg1[%c1, %c0_5] : memref<5x512xf32, #tpu.memory_space<vmem>>, vector<1x512xf32>
    %11 = vector.broadcast %9 : vector<8x1xf32> to vector<8x512xf32>
    %12 = vector.broadcast %10 : vector<1x512xf32> to vector<8x512xf32>
    %13 = arith.mulf %11, %12 : vector<8x512xf32>
    %14 = arith.addf %8, %13 : vector<8x512xf32>
    %15 = vector.extract_strided_slice %0 {offsets = [0, 2], sizes = [8, 1], strides = [1, 1]} : vector<8x5xf32> to vector<8x1xf32>
    %c2 = arith.constant 2 : index
    %c0_6 = arith.constant 0 : index
    %16 = vector.load %arg1[%c2, %c0_6] : memref<5x512xf32, #tpu.memory_space<vmem>>, vector<1x512xf32>
    %17 = vector.broadcast %15 : vector<8x1xf32> to vector<8x512xf32>
    %18 = vector.broadcast %16 : vector<1x512xf32> to vector<8x512xf32>
    %19 = arith.mulf %17, %18 : vector<8x512xf32>
    %20 = arith.addf %14, %19 : vector<8x512xf32>
    %21 = vector.extract_strided_slice %0 {offsets = [0, 3], sizes = [8, 1], strides = [1, 1]} : vector<8x5xf32> to vector<8x1xf32>
    %c3 = arith.constant 3 : index
    %c0_7 = arith.constant 0 : index
    %22 = vector.load %arg1[%c3, %c0_7] : memref<5x512xf32, #tpu.memory_space<vmem>>, vector<1x512xf32>
    %23 = vector.broadcast %21 : vector<8x1xf32> to vector<8x512xf32>
    %24 = vector.broadcast %22 : vector<1x512xf32> to vector<8x512xf32>
    %25 = arith.mulf %23, %24 : vector<8x512xf32>
    %26 = arith.addf %20, %25 : vector<8x512xf32>
    %27 = vector.extract_strided_slice %0 {offsets = [0, 4], sizes = [8, 1], strides = [1, 1]} : vector<8x5xf32> to vector<8x1xf32>
    %c4 = arith.constant 4 : index
    %c0_8 = arith.constant 0 : index
    %28 = vector.load %arg1[%c4, %c0_8] : memref<5x512xf32, #tpu.memory_space<vmem>>, vector<1x512xf32>
    %29 = vector.broadcast %27 : vector<8x1xf32> to vector<8x512xf32>
    %30 = vector.broadcast %28 : vector<1x512xf32> to vector<8x512xf32>
    %31 = arith.mulf %29, %30 : vector<8x512xf32>
    %32 = arith.addf %26, %31 : vector<8x512xf32>
    %c0_9 = arith.constant 0 : index
    %c0_10 = arith.constant 0 : index
    %33 = vector.load %arg7[%c0_9, %c0_10] : memref<160x512xf32, #tpu.memory_space<vmem>>, vector<8x512xf32>
    tpu.vector_store %arg7[%c0_9, %c0_10], %32 {strides = array<i32>} : memref<160x512xf32, #tpu.memory_space<vmem>>, vector<8x512xf32>,
    %c8 = arith.constant 8 : index
    %c0_11 = arith.constant 0 : index
    %34 = vector.load %arg0[%c8, %c0_11] : memref<160x5xf32, #tpu.memory_space<vmem>>, vector<8x5xf32>
    %c0_12 = arith.constant 0 : index
    %c0_13 = arith.constant 0 : index
    %35 = vector.load %arg3[%c0_12, %c0_13] : memref<1x512xf32, #tpu.memory_space<vmem>>, vector<1x512xf32>
    %36 = vector.extract_strided_slice %34 {offsets = [0, 0], sizes = [8, 1], strides = [1, 1]} : vector<8x5xf32> to vector<8x1xf32>
    %c0_14 = arith.constant 0 : index
    %c0_15 = arith.constant 0 : index
    %37 = vector.load %arg1[%c0_14, %c0_15] : memref<5x512xf32, #tpu.memory_space<vmem>>, vector<1x512xf32>
    %38 = vector.broadcast %36 : vector<8x1xf32> to vector<8x512xf32>
    %39 = vector.broadcast %37 : vector<1x512xf32> to vector<8x512xf32>
    %40 = arith.mulf %38, %39 : vector<8x512xf32>
    %41 = vector.broadcast %35 : vector<1x512xf32> to vector<8x512xf32>
    %42 = arith.addf %41, %40 : vector<8x512xf32>
    %43 = vector.extract_strided_slice %34 {offsets = [0, 1], sizes = [8, 1], strides = [1, 1]} : vector<8x5xf32> to vector<8x1xf32>
    %c1_16 = arith.constant 1 : index
    %c0_17 = arith.constant 0 : index
    %44 = vector.load %arg1[%c1_16, %c0_17] : memref<5x512xf32, #tpu.memory_space<vmem>>, vector<1x512xf32>
    %45 = vector.broadcast %43 : vector<8x1xf32> to vector<8x512xf32>
    %46 = vector.broadcast %44 : vector<1x512xf32> to vector<8x512xf32>
    %47 = arith.mulf %45, %46 : vector<8x512xf32>
    %48 = arith.addf %42, %47 : vector<8x512xf32>
    %49 = vector.extract_strided_slice %34 {offsets = [0, 2], sizes = [8, 1], strides = [1, 1]} : vector<8x5xf32> to vector<8x1xf32>
    %c2_18 = arith.constant 2 : index
    %c0_19 = arith.constant 0 : index
    %50 = vector.load %arg1[%c2_18, %c0_19] : memref<5x512xf32, #tpu.memory_space<vmem>>, vector<1x512xf32>
    %51 = vector.broadcast %49 : vector<8x1xf32> to vector<8x512xf32>
    %52 = vector.broadcast %50 : vector<1x512xf32> to vector<8x512xf32>
    %53 = arith.mulf %51, %52 : vector<8x512xf32>
    %54 = arith.addf %48, %53 : vector<8x512xf32>
    %55 = vector.extract_strided_slice %34 {offsets = [0, 3], sizes = [8, 1], strides = [1, 1]} : vector<8x5xf32> to vector<8x1xf32>
    %c3_20 = arith.constant 3 : index
    %c0_21 = arith.constant 0 : index
    %56 = vector.load %arg1[%c3_20, %c0_21] : memref<5x512xf32, #tpu.memory_space<vmem>>, vector<1x512xf32>
    %57 = vector.broadcast %55 : vector<8x1xf32> to vector<8x512xf32>
    %58 = vector.broadcast %56 : vector<1x512xf32> to vector<8x512xf32>
    %59 = arith.mulf %57, %58 : vector<8x512xf32>
    %60 = arith.addf %54, %59 : vector<8x512xf32>
    %61 = vector.extract_strided_slice %34 {offsets = [0, 4], sizes = [8, 1], strides = [1, 1]} : vector<8x5xf32> to vector<8x1xf32>
    %c4_22 = arith.constant 4 : index
    %c0_23 = arith.constant 0 : index
    %62 = vector.load %arg1[%c4_22, %c0_23] : memref<5x512xf32, #tpu.memory_space<vmem>>, vector<1x512xf32>
    %63 = vector.broadcast %61 : vector<8x1xf32> to vector<8x512xf32>
    %64 = vector.broadcast %62 : vector<1x512xf32> to vector<8x512xf32>
    %65 = arith.mulf %63, %64 : vector<8x512xf32>
    %66 = arith.addf %60, %65 : vector<8x512xf32>
    %c8_24 = arith.constant 8 : index
    %c0_25 = arith.constant 0 : index
    %67 = vector.load %arg7[%c8_24, %c0_25] : memref<160x512xf32, #tpu.memory_space<vmem>>, vector<8x512xf32>
    tpu.vector_store %arg7[%c8_24, %c0_25], %66 {strides = array<i32>} : memref<160x512xf32, #tpu.memory_space<vmem>>, vector<8x512xf32>,
    %c16 = arith.constant 16 : index
    %c0_26 = arith.constant 0 : index
    %68 = vector.load %arg0[%c16, %c0_26] : memref<160x5xf32, #tpu.memory_space<vmem>>, vector<8x5xf32>
    %c0_27 = arith.constant 0 : index
    %c0_28 = arith.constant 0 : index
    %69 = vector.load %arg3[%c0_27, %c0_28] : memref<1x512xf32, #tpu.memory_space<vmem>>, vector<1x512xf32>
    %70 = vector.extract_strided_slice %68 {offsets = [0, 0], sizes = [8, 1], strides = [1, 1]} : vector<8x5xf32> to vector<8x1xf32>
    %c0_29 = arith.constant 0 : index
    %c0_30 = arith.constant 0 : index
    %71 = vector.load %arg1[%c0_29, %c0_30] : memref<5x512xf32, #tpu.memory_space<vmem>>, vector<1x512xf32>
    %72 = vector.broadcast %70 : vector<8x1xf32> to vector<8x512xf32>
    %73 = vector.broadcast %71 : vector<1x512xf32> to vector<8x512xf32>
    %74 = arith.mulf %72, %73 : vector<8x512xf32>
    %75 = vector.broadcast %69 : vector<1x512xf32> to vector<8x512xf32>
    %76 = arith.addf %75, %74 : vector<8x512xf32>
    %77 = vector.extract_strided_slice %68 {offsets = [0, 1], sizes = [8, 1], strides = [1, 1]} : vector<8x5xf32> to vector<8x1xf32>
    %c1_31 = arith.constant 1 : index
    %c0_32 = arith.constant 0 : index
    %78 = vector.load %arg1[%c1_31, %c0_32] : memref<5x512xf32, #tpu.memory_space<vmem>>, vector<1x512xf32>
    %79 = vector.broadcast %77 : vector<8x1xf32> to vector<8x512xf32>
    %80 = vector.broadcast %78 : vector<1x512xf32> to vector<8x512xf32>
    %81 = arith.mulf %79, %80 : vector<8x512xf32>
    %82 = arith.addf %76, %81 : vector<8x512xf32>
    %83 = vector.extract_strided_slice %68 {offsets = [0, 2], sizes = [8, 1], strides = [1, 1]} : vector<8x5xf32> to vector<8x1xf32>
    %c2_33 = arith.constant 2 : index
    %c0_34 = arith.constant 0 : index
    %84 = vector.load %arg1[%c2_33, %c0_34] : memref<5x512xf32, #tpu.memory_space<vmem>>, vector<1x512xf32>
    %85 = vector.broadcast %83 : vector<8x1xf32> to vector<8x512xf32>
    %86 = vector.broadcast %84 : vector<1x512xf32> to vector<8x512xf32>
    %87 = arith.mulf %85, %86 : vector<8x512xf32>
    %88 = arith.addf %82, %87 : vector<8x512xf32>
    %89 = vector.extract_strided_slice %68 {offsets = [0, 3], sizes = [8, 1], strides = [1, 1]} : vector<8x5xf32> to vector<8x1xf32>
    %c3_35 = arith.constant 3 : index
    %c0_36 = arith.constant 0 : index
    %90 = vector.load %arg1[%c3_35, %c0_36] : memref<5x512xf32, #tpu.memory_space<vmem>>, vector<1x512xf32>
    %91 = vector.broadcast %89 : vector<8x1xf32> to vector<8x512xf32>
    %92 = vector.broadcast %90 : vector<1x512xf32> to vector<8x512xf32>
    %93 = arith.mulf %91, %92 : vector<8x512xf32>
    %94 = arith.addf %88, %93 : vector<8x512xf32>
    %95 = vector.extract_strided_slice %68 {offsets = [0, 4], sizes = [8, 1], strides = [1, 1]} : vector<8x5xf32> to vector<8x1xf32>
    %c4_37 = arith.constant 4 : index
    %c0_38 = arith.constant 0 : index
    %96 = vector.load %arg1[%c4_37, %c0_38] : memref<5x512xf32, #tpu.memory_space<vmem>>, vector<1x512xf32>
    %97 = vector.broadcast %95 : vector<8x1xf32> to vector<8x512xf32>
    %98 = vector.broadcast %96 : vector<1x512xf32> to vector<8x512xf32>
    %99 = arith.mulf %97, %98 : vector<8x512xf32>
    %100 = arith.addf %94, %99 : vector<8x512xf32>
    %c16_39 = arith.constant 16 : index
    %c0_40 = arith.constant 0 : index
    %101 = vector.load %arg7[%c16_39, %c0_40] : memref<160x512xf32, #tpu.memory_space<vmem>>, vector<8x512xf32>
    tpu.vector_store %arg7[%c16_39, %c0_40], %100 {strides = array<i32>} : memref<160x512xf32, #tpu.memory_space<vmem>>, vector<8x512xf32>,
    %c24 = arith.constant 24 : index
    %c0_41 = arith.constant 0 : index
    %102 = vector.load %arg0[%c24, %c0_41] : memref<160x5xf32, #tpu.memory_space<vmem>>, vector<8x5xf32>
    %c0_42 = arith.constant 0 : index
    %c0_43 = arith.constant 0 : index
    %103 = vector.load %arg3[%c0_42, %c0_43] : memref<1x512xf32, #tpu.memory_space<vmem>>, vector<1x512xf32>
    %104 = vector.extract_strided_slice %102 {offsets = [0, 0], sizes = [8, 1], strides = [1, 1]} : vector<8x5xf32> to vector<8x1xf32>
    %c0_44 = arith.constant 0 : index
    %c0_45 = arith.constant 0 : index
    %105 = vector.load %arg1[%c0_44, %c0_45] : memref<5x512xf32, #tpu.memory_space<vmem>>, vector<1x512xf32>
    %106 = vector.broadcast %104 : vector<8x1xf32> to vector<8x512xf32>
    %107 = vector.broadcast %105 : vector<1x512xf32> to vector<8x512xf32>
    %108 = arith.mulf %106, %107 : vector<8x512xf32>
    %109 = vector.broadcast %103 : vector<1x512xf32> to vector<8x512xf32>
    %110 = arith.addf %109, %108 : vector<8x512xf32>
    %111 = vector.extract_strided_slice %102 {offsets = [0, 1], sizes = [8, 1], strides = [1, 1]} : vector<8x5xf32> to vector<8x1xf32>
    %c1_46 = arith.constant 1 : index
    %c0_47 = arith.constant 0 : index
    %112 = vector.load %arg1[%c1_46, %c0_47] : memref<5x512xf32, #tpu.memory_space<vmem>>, vector<1x512xf32>
    %113 = vector.broadcast %111 : vector<8x1xf32> to vector<8x512xf32>
    %114 = vector.broadcast %112 : vector<1x512xf32> to vector<8x512xf32>
    %115 = arith.mulf %113, %114 : vector<8x512xf32>
    %116 = arith.addf %110, %115 : vector<8x512xf32>
    %117 = vector.extract_strided_slice %102 {offsets = [0, 2], sizes = [8, 1], strides = [1, 1]} : vector<8x5xf32> to vector<8x1xf32>
    %c2_48 = arith.constant 2 : index
    %c0_49 = arith.constant 0 : index
    %118 = vector.load %arg1[%c2_48, %c0_49] : memref<5x512xf32, #tpu.memory_space<vmem>>, vector<1x512xf32>
    %119 = vector.broadcast %117 : vector<8x1xf32> to vector<8x512xf32>
    %120 = vector.broadcast %118 : vector<1x512xf32> to vector<8x512xf32>
    %121 = arith.mulf %119, %120 : vector<8x512xf32>
    %122 = arith.addf %116, %121 : vector<8x512xf32>
    %123 = vector.extract_strided_slice %102 {offsets = [0, 3], sizes = [8, 1], strides = [1, 1]} : vector<8x5xf32> to vector<8x1xf32>
    %c3_50 = arith.constant 3 : index
    %c0_51 = arith.constant 0 : index
    %124 = vector.load %arg1[%c3_50, %c0_51] : memref<5x512xf32, #tpu.memory_space<vmem>>, vector<1x512xf32>
    %125 = vector.broadcast %123 : vector<8x1xf32> to vector<8x512xf32>
    %126 = vector.broadcast %124 : vector<1x512xf32> to vector<8x512xf32>
    %127 = arith.mulf %125, %126 : vector<8x512xf32>
    %128 = arith.addf %122, %127 : vector<8x512xf32>
    %129 = vector.extract_strided_slice %102 {offsets = [0, 4], sizes = [8, 1], strides = [1, 1]} : vector<8x5xf32> to vector<8x1xf32>
    %c4_52 = arith.constant 4 : index
    %c0_53 = arith.constant 0 : index
    %130 = vector.load %arg1[%c4_52, %c0_53] : memref<5x512xf32, #tpu.memory_space<vmem>>, vector<1x512xf32>
    %131 = vector.broadcast %129 : vector<8x1xf32> to vector<8x512xf32>
    %132 = vector.broadcast %130 : vector<1x512xf32> to vector<8x512xf32>
    %133 = arith.mulf %131, %132 : vector<8x512xf32>
    %134 = arith.addf %128, %133 : vector<8x512xf32>
    %c24_54 = arith.constant 24 : index
    %c0_55 = arith.constant 0 : index
    %135 = vector.load %arg7[%c24_54, %c0_55] : memref<160x512xf32, #tpu.memory_space<vmem>>, vector<8x512xf32>
    tpu.vector_store %arg7[%c24_54, %c0_55], %134 {strides = array<i32>} : memref<160x512xf32, #tpu.memory_space<vmem>>, vector<8x512xf32>,
    %c32 = arith.constant 32 : index
    %c0_56 = arith.constant 0 : index
    %136 = vector.load %arg0[%c32, %c0_56] : memref<160x5xf32, #tpu.memory_space<vmem>>, vector<8x5xf32>
    %c0_57 = arith.constant 0 : index
    %c0_58 = arith.constant 0 : index
    %137 = vector.load %arg3[%c0_57, %c0_58] : memref<1x512xf32, #tpu.memory_space<vmem>>, vector<1x512xf32>
    %138 = vector.extract_strided_slice %136 {offsets = [0, 0], sizes = [8, 1], strides = [1, 1]} : vector<8x5xf32> to vector<8x1xf32>
    %c0_59 = arith.constant 0 : index
    %c0_60 = arith.constant 0 : index
    %139 = vector.load %arg1[%c0_59, %c0_60] : memref<5x512xf32, #tpu.memory_space<vmem>>, vector<1x512xf32>
    %140 = vector.broadcast %138 : vector<8x1xf32> to vector<8x512xf32>
    %141 = vector.broadcast %139 : vector<1x512xf32> to vector<8x512xf32>
    %142 = arith.mulf %140, %141 : vector<8x512xf32>
    %143 = vector.broadcast %137 : vector<1x512xf32> to vector<8x512xf32>
    %144 = arith.addf %143, %142 : vector<8x512xf32>
    %145 = vector.extract_strided_slice %136 {offsets = [0, 1], sizes = [8, 1], strides = [1, 1]} : vector<8x5xf32> to vector<8x1xf32>
    %c1_61 = arith.constant 1 : index
    %c0_62 = arith.constant 0 : index
    %146 = vector.load %arg1[%c1_61, %c0_62] : memref<5x512xf32, #tpu.memory_space<vmem>>, vector<1x512xf32>
    %147 = vector.broadcast %145 : vector<8x1xf32> to vector<8x512xf32>
    %148 = vector.broadcast %146 : vector<1x512xf32> to vector<8x512xf32>
    %149 = arith.mulf %147, %148 : vector<8x512xf32>
    %150 = arith.addf %144, %149 : vector<8x512xf32>
    %151 = vector.extract_strided_slice %136 {offsets = [0, 2], sizes = [8, 1], strides = [1, 1]} : vector<8x5xf32> to vector<8x1xf32>
    %c2_63 = arith.constant 2 : index
    %c0_64 = arith.constant 0 : index
    %152 = vector.load %arg1[%c2_63, %c0_64] : memref<5x512xf32, #tpu.memory_space<vmem>>, vector<1x512xf32>
    %153 = vector.broadcast %151 : vector<8x1xf32> to vector<8x512xf32>
    %154 = vector.broadcast %152 : vector<1x512xf32> to vector<8x512xf32>
    %155 = arith.mulf %153, %154 : vector<8x512xf32>
    %156 = arith.addf %150, %155 : vector<8x512xf32>
    %157 = vector.extract_strided_slice %136 {offsets = [0, 3], sizes = [8, 1], strides = [1, 1]} : vector<8x5xf32> to vector<8x1xf32>
    %c3_65 = arith.constant 3 : index
    %c0_66 = arith.constant 0 : index
    %158 = vector.load %arg1[%c3_65, %c0_66] : memref<5x512xf32, #tpu.memory_space<vmem>>, vector<1x512xf32>
    %159 = vector.broadcast %157 : vector<8x1xf32> to vector<8x512xf32>
    %160 = vector.broadcast %158 : vector<1x512xf32> to vector<8x512xf32>
    %161 = arith.mulf %159, %160 : vector<8x512xf32>
    %162 = arith.addf %156, %161 : vector<8x512xf32>
    %163 = vector.extract_strided_slice %136 {offsets = [0, 4], sizes = [8, 1], strides = [1, 1]} : vector<8x5xf32> to vector<8x1xf32>
    %c4_67 = arith.constant 4 : index
    %c0_68 = arith.constant 0 : index
    %164 = vector.load %arg1[%c4_67, %c0_68] : memref<5x512xf32, #tpu.memory_space<vmem>>, vector<1x512xf32>
    %165 = vector.broadcast %163 : vector<8x1xf32> to vector<8x512xf32>
    %166 = vector.broadcast %164 : vector<1x512xf32> to vector<8x512xf32>
    %167 = arith.mulf %165, %166 : vector<8x512xf32>
    %168 = arith.addf %162, %167 : vector<8x512xf32>
    %c32_69 = arith.constant 32 : index
    %c0_70 = arith.constant 0 : index
    %169 = vector.load %arg7[%c32_69, %c0_70] : memref<160x512xf32, #tpu.memory_space<vmem>>, vector<8x512xf32>
    tpu.vector_store %arg7[%c32_69, %c0_70], %168 {strides = array<i32>} : memref<160x512xf32, #tpu.memory_space<vmem>>, vector<8x512xf32>,
    %c40 = arith.constant 40 : index
    %c0_71 = arith.constant 0 : index
    %170 = vector.load %arg0[%c40, %c0_71] : memref<160x5xf32, #tpu.memory_space<vmem>>, vector<8x5xf32>
    %c0_72 = arith.constant 0 : index
    %c0_73 = arith.constant 0 : index
    %171 = vector.load %arg3[%c0_72, %c0_73] : memref<1x512xf32, #tpu.memory_space<vmem>>, vector<1x512xf32>
    %172 = vector.extract_strided_slice %170 {offsets = [0, 0], sizes = [8, 1], strides = [1, 1]} : vector<8x5xf32> to vector<8x1xf32>
    %c0_74 = arith.constant 0 : index
    %c0_75 = arith.constant 0 : index
    %173 = vector.load %arg1[%c0_74, %c0_75] : memref<5x512xf32, #tpu.memory_space<vmem>>, vector<1x512xf32>
    %174 = vector.broadcast %172 : vector<8x1xf32> to vector<8x512xf32>
    %175 = vector.broadcast %173 : vector<1x512xf32> to vector<8x512xf32>
    %176 = arith.mulf %174, %175 : vector<8x512xf32>
    %177 = vector.broadcast %171 : vector<1x512xf32> to vector<8x512xf32>
    %178 = arith.addf %177, %176 : vector<8x512xf32>
    %179 = vector.extract_strided_slice %170 {offsets = [0, 1], sizes = [8, 1], strides = [1, 1]} : vector<8x5xf32> to vector<8x1xf32>
    %c1_76 = arith.constant 1 : index
    %c0_77 = arith.constant 0 : index
    %180 = vector.load %arg1[%c1_76, %c0_77] : memref<5x512xf32, #tpu.memory_space<vmem>>, vector<1x512xf32>
    %181 = vector.broadcast %179 : vector<8x1xf32> to vector<8x512xf32>
    %182 = vector.broadcast %180 : vector<1x512xf32> to vector<8x512xf32>
    %183 = arith.mulf %181, %182 : vector<8x512xf32>
    %184 = arith.addf %178, %183 : vector<8x512xf32>
    %185 = vector.extract_strided_slice %170 {offsets = [0, 2], sizes = [8, 1], strides = [1, 1]} : vector<8x5xf32> to vector<8x1xf32>
    %c2_78 = arith.constant 2 : index
    %c0_79 = arith.constant 0 : index
    %186 = vector.load %arg1[%c2_78, %c0_79] : memref<5x512xf32, #tpu.memory_space<vmem>>, vector<1x512xf32>
    %187 = vector.broadcast %185 : vector<8x1xf32> to vector<8x512xf32>
    %188 = vector.broadcast %186 : vector<1x512xf32> to vector<8x512xf32>
    %189 = arith.mulf %187, %188 : vector<8x512xf32>
    %190 = arith.addf %184, %189 : vector<8x512xf32>
    %191 = vector.extract_strided_slice %170 {offsets = [0, 3], sizes = [8, 1], strides = [1, 1]} : vector<8x5xf32> to vector<8x1xf32>
    %c3_80 = arith.constant 3 : index
    %c0_81 = arith.constant 0 : index
    %192 = vector.load %arg1[%c3_80, %c0_81] : memref<5x512xf32, #tpu.memory_space<vmem>>, vector<1x512xf32>
    %193 = vector.broadcast %191 : vector<8x1xf32> to vector<8x512xf32>
    %194 = vector.broadcast %192 : vector<1x512xf32> to vector<8x512xf32>
    %195 = arith.mulf %193, %194 : vector<8x512xf32>
    %196 = arith.addf %190, %195 : vector<8x512xf32>
    %197 = vector.extract_strided_slice %170 {offsets = [0, 4], sizes = [8, 1], strides = [1, 1]} : vector<8x5xf32> to vector<8x1xf32>
    %c4_82 = arith.constant 4 : index
    %c0_83 = arith.constant 0 : index
    %198 = vector.load %arg1[%c4_82, %c0_83] : memref<5x512xf32, #tpu.memory_space<vmem>>, vector<1x512xf32>
    %199 = vector.broadcast %197 : vector<8x1xf32> to vector<8x512xf32>
    %200 = vector.broadcast %198 : vector<1x512xf32> to vector<8x512xf32>
    %201 = arith.mulf %199, %200 : vector<8x512xf32>
    %202 = arith.addf %196, %201 : vector<8x512xf32>
    %c40_84 = arith.constant 40 : index
    %c0_85 = arith.constant 0 : index
    %203 = vector.load %arg7[%c40_84, %c0_85] : memref<160x512xf32, #tpu.memory_space<vmem>>, vector<8x512xf32>
    tpu.vector_store %arg7[%c40_84, %c0_85], %202 {strides = array<i32>} : memref<160x512xf32, #tpu.memory_space<vmem>>, vector<8x512xf32>,
    %c48 = arith.constant 48 : index
    %c0_86 = arith.constant 0 : index
    %204 = vector.load %arg0[%c48, %c0_86] : memref<160x5xf32, #tpu.memory_space<vmem>>, vector<8x5xf32>
    %c0_87 = arith.constant 0 : index
    %c0_88 = arith.constant 0 : index
    %205 = vector.load %arg3[%c0_87, %c0_88] : memref<1x512xf32, #tpu.memory_space<vmem>>, vector<1x512xf32>
    %206 = vector.extract_strided_slice %204 {offsets = [0, 0], sizes = [8, 1], strides = [1, 1]} : vector<8x5xf32> to vector<8x1xf32>
    %c0_89 = arith.constant 0 : index
    %c0_90 = arith.constant 0 : index
    %207 = vector.load %arg1[%c0_89, %c0_90] : memref<5x512xf32, #tpu.memory_space<vmem>>, vector<1x512xf32>
    %208 = vector.broadcast %206 : vector<8x1xf32> to vector<8x512xf32>
    %209 = vector.broadcast %207 : vector<1x512xf32> to vector<8x512xf32>
    %210 = arith.mulf %208, %209 : vector<8x512xf32>
    %211 = vector.broadcast %205 : vector<1x512xf32> to vector<8x512xf32>
    %212 = arith.addf %211, %210 : vector<8x512xf32>
    %213 = vector.extract_strided_slice %204 {offsets = [0, 1], sizes = [8, 1], strides = [1, 1]} : vector<8x5xf32> to vector<8x1xf32>
    %c1_91 = arith.constant 1 : index
    %c0_92 = arith.constant 0 : index
    %214 = vector.load %arg1[%c1_91, %c0_92] : memref<5x512xf32, #tpu.memory_space<vmem>>, vector<1x512xf32>
    %215 = vector.broadcast %213 : vector<8x1xf32> to vector<8x512xf32>
    %216 = vector.broadcast %214 : vector<1x512xf32> to vector<8x512xf32>
    %217 = arith.mulf %215, %216 : vector<8x512xf32>
    %218 = arith.addf %212, %217 : vector<8x512xf32>
    %219 = vector.extract_strided_slice %204 {offsets = [0, 2], sizes = [8, 1], strides = [1, 1]} : vector<8x5xf32> to vector<8x1xf32>
    %c2_93 = arith.constant 2 : index
    %c0_94 = arith.constant 0 : index
    %220 = vector.load %arg1[%c2_93, %c0_94] : memref<5x512xf32, #tpu.memory_space<vmem>>, vector<1x512xf32>
    %221 = vector.broadcast %219 : vector<8x1xf32> to vector<8x512xf32>
    %222 = vector.broadcast %220 : vector<1x512xf32> to vector<8x512xf32>
    %223 = arith.mulf %221, %222 : vector<8x512xf32>
    %224 = arith.addf %218, %223 : vector<8x512xf32>
    %225 = vector.extract_strided_slice %204 {offsets = [0, 3], sizes = [8, 1], strides = [1, 1]} : vector<8x5xf32> to vector<8x1xf32>
    %c3_95 = arith.constant 3 : index
    %c0_96 = arith.constant 0 : index
    %226 = vector.load %arg1[%c3_95, %c0_96] : memref<5x512xf32, #tpu.memory_space<vmem>>, vector<1x512xf32>
    %227 = vector.broadcast %225 : vector<8x1xf32> to vector<8x512xf32>
    %228 = vector.broadcast %226 : vector<1x512xf32> to vector<8x512xf32>
    %229 = arith.mulf %227, %228 : vector<8x512xf32>
    %230 = arith.addf %224, %229 : vector<8x512xf32>
    %231 = vector.extract_strided_slice %204 {offsets = [0, 4], sizes = [8, 1], strides = [1, 1]} : vector<8x5xf32> to vector<8x1xf32>
    %c4_97 = arith.constant 4 : index
    %c0_98 = arith.constant 0 : index
    %232 = vector.load %arg1[%c4_97, %c0_98] : memref<5x512xf32, #tpu.memory_space<vmem>>, vector<1x512xf32>
    %233 = vector.broadcast %231 : vector<8x1xf32> to vector<8x512xf32>
    %234 = vector.broadcast %232 : vector<1x512xf32> to vector<8x512xf32>
    %235 = arith.mulf %233, %234 : vector<8x512xf32>
    %236 = arith.addf %230, %235 : vector<8x512xf32>
    %c48_99 = arith.constant 48 : index
    %c0_100 = arith.constant 0 : index
    %237 = vector.load %arg7[%c48_99, %c0_100] : memref<160x512xf32, #tpu.memory_space<vmem>>, vector<8x512xf32>
    tpu.vector_store %arg7[%c48_99, %c0_100], %236 {strides = array<i32>} : memref<160x512xf32, #tpu.memory_space<vmem>>, vector<8x512xf32>,
    %c56 = arith.constant 56 : index
    %c0_101 = arith.constant 0 : index
    %238 = vector.load %arg0[%c56, %c0_101] : memref<160x5xf32, #tpu.memory_space<vmem>>, vector<8x5xf32>
    %c0_102 = arith.constant 0 : index
    %c0_103 = arith.constant 0 : index
    %239 = vector.load %arg3[%c0_102, %c0_103] : memref<1x512xf32, #tpu.memory_space<vmem>>, vector<1x512xf32>
    %240 = vector.extract_strided_slice %238 {offsets = [0, 0], sizes = [8, 1], strides = [1, 1]} : vector<8x5xf32> to vector<8x1xf32>
    %c0_104 = arith.constant 0 : index
    %c0_105 = arith.constant 0 : index
    %241 = vector.load %arg1[%c0_104, %c0_105] : memref<5x512xf32, #tpu.memory_space<vmem>>, vector<1x512xf32>
    %242 = vector.broadcast %240 : vector<8x1xf32> to vector<8x512xf32>
    %243 = vector.broadcast %241 : vector<1x512xf32> to vector<8x512xf32>
    %244 = arith.mulf %242, %243 : vector<8x512xf32>
    %245 = vector.broadcast %239 : vector<1x512xf32> to vector<8x512xf32>
    %246 = arith.addf %245, %244 : vector<8x512xf32>
    %247 = vector.extract_strided_slice %238 {offsets = [0, 1], sizes = [8, 1], strides = [1, 1]} : vector<8x5xf32> to vector<8x1xf32>
    %c1_106 = arith.constant 1 : index
    %c0_107 = arith.constant 0 : index
    %248 = vector.load %arg1[%c1_106, %c0_107] : memref<5x512xf32, #tpu.memory_space<vmem>>, vector<1x512xf32>
    %249 = vector.broadcast %247 : vector<8x1xf32> to vector<8x512xf32>
    %250 = vector.broadcast %248 : vector<1x512xf32> to vector<8x512xf32>
    %251 = arith.mulf %249, %250 : vector<8x512xf32>
    %252 = arith.addf %246, %251 : vector<8x512xf32>
    %253 = vector.extract_strided_slice %238 {offsets = [0, 2], sizes = [8, 1], strides = [1, 1]} : vector<8x5xf32> to vector<8x1xf32>
    %c2_108 = arith.constant 2 : index
    %c0_109 = arith.constant 0 : index
    %254 = vector.load %arg1[%c2_108, %c0_109] : memref<5x512xf32, #tpu.memory_space<vmem>>, vector<1x512xf32>
    %255 = vector.broadcast %253 : vector<8x1xf32> to vector<8x512xf32>
    %256 = vector.broadcast %254 : vector<1x512xf32> to vector<8x512xf32>
    %257 = arith.mulf %255, %256 : vector<8x512xf32>
    %258 = arith.addf %252, %257 : vector<8x512xf32>
    %259 = vector.extract_strided_slice %238 {offsets = [0, 3], sizes = [8, 1], strides = [1, 1]} : vector<8x5xf32> to vector<8x1xf32>
    %c3_110 = arith.constant 3 : index
    %c0_111 = arith.constant 0 : index
    %260 = vector.load %arg1[%c3_110, %c0_111] : memref<5x512xf32, #tpu.memory_space<vmem>>, vector<1x512xf32>
    %261 = vector.broadcast %259 : vector<8x1xf32> to vector<8x512xf32>
    %262 = vector.broadcast %260 : vector<1x512xf32> to vector<8x512xf32>
    %263 = arith.mulf %261, %262 : vector<8x512xf32>
    %264 = arith.addf %258, %263 : vector<8x512xf32>
    %265 = vector.extract_strided_slice %238 {offsets = [0, 4], sizes = [8, 1], strides = [1, 1]} : vector<8x5xf32> to vector<8x1xf32>
    %c4_112 = arith.constant 4 : index
    %c0_113 = arith.constant 0 : index
    %266 = vector.load %arg1[%c4_112, %c0_113] : memref<5x512xf32, #tpu.memory_space<vmem>>, vector<1x512xf32>
    %267 = vector.broadcast %265 : vector<8x1xf32> to vector<8x512xf32>
    %268 = vector.broadcast %266 : vector<1x512xf32> to vector<8x512xf32>
    %269 = arith.mulf %267, %268 : vector<8x512xf32>
    %270 = arith.addf %264, %269 : vector<8x512xf32>
    %c56_114 = arith.constant 56 : index
    %c0_115 = arith.constant 0 : index
    %271 = vector.load %arg7[%c56_114, %c0_115] : memref<160x512xf32, #tpu.memory_space<vmem>>, vector<8x512xf32>
    tpu.vector_store %arg7[%c56_114, %c0_115], %270 {strides = array<i32>} : memref<160x512xf32, #tpu.memory_space<vmem>>, vector<8x512xf32>,
    %c64 = arith.constant 64 : index
    %c0_116 = arith.constant 0 : index
    %272 = vector.load %arg0[%c64, %c0_116] : memref<160x5xf32, #tpu.memory_space<vmem>>, vector<8x5xf32>
    %c0_117 = arith.constant 0 : index
    %c0_118 = arith.constant 0 : index
    %273 = vector.load %arg3[%c0_117, %c0_118] : memref<1x512xf32, #tpu.memory_space<vmem>>, vector<1x512xf32>
    %274 = vector.extract_strided_slice %272 {offsets = [0, 0], sizes = [8, 1], strides = [1, 1]} : vector<8x5xf32> to vector<8x1xf32>
    %c0_119 = arith.constant 0 : index
    %c0_120 = arith.constant 0 : index
    %275 = vector.load %arg1[%c0_119, %c0_120] : memref<5x512xf32, #tpu.memory_space<vmem>>, vector<1x512xf32>
    %276 = vector.broadcast %274 : vector<8x1xf32> to vector<8x512xf32>
    %277 = vector.broadcast %275 : vector<1x512xf32> to vector<8x512xf32>
    %278 = arith.mulf %276, %277 : vector<8x512xf32>
    %279 = vector.broadcast %273 : vector<1x512xf32> to vector<8x512xf32>
    %280 = arith.addf %279, %278 : vector<8x512xf32>
    %281 = vector.extract_strided_slice %272 {offsets = [0, 1], sizes = [8, 1], strides = [1, 1]} : vector<8x5xf32> to vector<8x1xf32>
    %c1_121 = arith.constant 1 : index
    %c0_122 = arith.constant 0 : index
    %282 = vector.load %arg1[%c1_121, %c0_122] : memref<5x512xf32, #tpu.memory_space<vmem>>, vector<1x512xf32>
    %283 = vector.broadcast %281 : vector<8x1xf32> to vector<8x512xf32>
    %284 = vector.broadcast %282 : vector<1x512xf32> to vector<8x512xf32>
    %285 = arith.mulf %283, %284 : vector<8x512xf32>
    %286 = arith.addf %280, %285 : vector<8x512xf32>
    %287 = vector.extract_strided_slice %272 {offsets = [0, 2], sizes = [8, 1], strides = [1, 1]} : vector<8x5xf32> to vector<8x1xf32>
    %c2_123 = arith.constant 2 : index
    %c0_124 = arith.constant 0 : index
    %288 = vector.load %arg1[%c2_123, %c0_124] : memref<5x512xf32, #tpu.memory_space<vmem>>, vector<1x512xf32>
    %289 = vector.broadcast %287 : vector<8x1xf32> to vector<8x512xf32>
    %290 = vector.broadcast %288 : vector<1x512xf32> to vector<8x512xf32>
    %291 = arith.mulf %289, %290 : vector<8x512xf32>
    %292 = arith.addf %286, %291 : vector<8x512xf32>
    %293 = vector.extract_strided_slice %272 {offsets = [0, 3], sizes = [8, 1], strides = [1, 1]} : vector<8x5xf32> to vector<8x1xf32>
    %c3_125 = arith.constant 3 : index
    %c0_126 = arith.constant 0 : index
    %294 = vector.load %arg1[%c3_125, %c0_126] : memref<5x512xf32, #tpu.memory_space<vmem>>, vector<1x512xf32>
    %295 = vector.broadcast %293 : vector<8x1xf32> to vector<8x512xf32>
    %296 = vector.broadcast %294 : vector<1x512xf32> to vector<8x512xf32>
    %297 = arith.mulf %295, %296 : vector<8x512xf32>
    %298 = arith.addf %292, %297 : vector<8x512xf32>
    %299 = vector.extract_strided_slice %272 {offsets = [0, 4], sizes = [8, 1], strides = [1, 1]} : vector<8x5xf32> to vector<8x1xf32>
    %c4_127 = arith.constant 4 : index
    %c0_128 = arith.constant 0 : index
    %300 = vector.load %arg1[%c4_127, %c0_128] : memref<5x512xf32, #tpu.memory_space<vmem>>, vector<1x512xf32>
    %301 = vector.broadcast %299 : vector<8x1xf32> to vector<8x512xf32>
    %302 = vector.broadcast %300 : vector<1x512xf32> to vector<8x512xf32>
    %303 = arith.mulf %301, %302 : vector<8x512xf32>
    %304 = arith.addf %298, %303 : vector<8x512xf32>
    %c64_129 = arith.constant 64 : index
    %c0_130 = arith.constant 0 : index
    %305 = vector.load %arg7[%c64_129, %c0_130] : memref<160x512xf32, #tpu.memory_space<vmem>>, vector<8x512xf32>
    tpu.vector_store %arg7[%c64_129, %c0_130], %304 {strides = array<i32>} : memref<160x512xf32, #tpu.memory_space<vmem>>, vector<8x512xf32>,
    %c72 = arith.constant 72 : index
    %c0_131 = arith.constant 0 : index
    %306 = vector.load %arg0[%c72, %c0_131] : memref<160x5xf32, #tpu.memory_space<vmem>>, vector<8x5xf32>
    %c0_132 = arith.constant 0 : index
    %c0_133 = arith.constant 0 : index
    %307 = vector.load %arg3[%c0_132, %c0_133] : memref<1x512xf32, #tpu.memory_space<vmem>>, vector<1x512xf32>
    %308 = vector.extract_strided_slice %306 {offsets = [0, 0], sizes = [8, 1], strides = [1, 1]} : vector<8x5xf32> to vector<8x1xf32>
    %c0_134 = arith.constant 0 : index
    %c0_135 = arith.constant 0 : index
    %309 = vector.load %arg1[%c0_134, %c0_135] : memref<5x512xf32, #tpu.memory_space<vmem>>, vector<1x512xf32>
    %310 = vector.broadcast %308 : vector<8x1xf32> to vector<8x512xf32>
    %311 = vector.broadcast %309 : vector<1x512xf32> to vector<8x512xf32>
    %312 = arith.mulf %310, %311 : vector<8x512xf32>
    %313 = vector.broadcast %307 : vector<1x512xf32> to vector<8x512xf32>
    %314 = arith.addf %313, %312 : vector<8x512xf32>
    %315 = vector.extract_strided_slice %306 {offsets = [0, 1], sizes = [8, 1], strides = [1, 1]} : vector<8x5xf32> to vector<8x1xf32>
    %c1_136 = arith.constant 1 : index
    %c0_137 = arith.constant 0 : index
    %316 = vector.load %arg1[%c1_136, %c0_137] : memref<5x512xf32, #tpu.memory_space<vmem>>, vector<1x512xf32>
    %317 = vector.broadcast %315 : vector<8x1xf32> to vector<8x512xf32>
    %318 = vector.broadcast %316 : vector<1x512xf32> to vector<8x512xf32>
    %319 = arith.mulf %317, %318 : vector<8x512xf32>
    %320 = arith.addf %314, %319 : vector<8x512xf32>
    %321 = vector.extract_strided_slice %306 {offsets = [0, 2], sizes = [8, 1], strides = [1, 1]} : vector<8x5xf32> to vector<8x1xf32>
    %c2_138 = arith.constant 2 : index
    %c0_139 = arith.constant 0 : index
    %322 = vector.load %arg1[%c2_138, %c0_139] : memref<5x512xf32, #tpu.memory_space<vmem>>, vector<1x512xf32>
    %323 = vector.broadcast %321 : vector<8x1xf32> to vector<8x512xf32>
    %324 = vector.broadcast %322 : vector<1x512xf32> to vector<8x512xf32>
    %325 = arith.mulf %323, %324 : vector<8x512xf32>
    %326 = arith.addf %320, %325 : vector<8x512xf32>
    %327 = vector.extract_strided_slice %306 {offsets = [0, 3], sizes = [8, 1], strides = [1, 1]} : vector<8x5xf32> to vector<8x1xf32>
    %c3_140 = arith.constant 3 : index
    %c0_141 = arith.constant 0 : index
    %328 = vector.load %arg1[%c3_140, %c0_141] : memref<5x512xf32, #tpu.memory_space<vmem>>, vector<1x512xf32>
    %329 = vector.broadcast %327 : vector<8x1xf32> to vector<8x512xf32>
    %330 = vector.broadcast %328 : vector<1x512xf32> to vector<8x512xf32>
    %331 = arith.mulf %329, %330 : vector<8x512xf32>
    %332 = arith.addf %326, %331 : vector<8x512xf32>
    %333 = vector.extract_strided_slice %306 {offsets = [0, 4], sizes = [8, 1], strides = [1, 1]} : vector<8x5xf32> to vector<8x1xf32>
    %c4_142 = arith.constant 4 : index
    %c0_143 = arith.constant 0 : index
    %334 = vector.load %arg1[%c4_142, %c0_143] : memref<5x512xf32, #tpu.memory_space<vmem>>, vector<1x512xf32>
    %335 = vector.broadcast %333 : vector<8x1xf32> to vector<8x512xf32>
    %336 = vector.broadcast %334 : vector<1x512xf32> to vector<8x512xf32>
    %337 = arith.mulf %335, %336 : vector<8x512xf32>
    %338 = arith.addf %332, %337 : vector<8x512xf32>
    %c72_144 = arith.constant 72 : index
    %c0_145 = arith.constant 0 : index
    %339 = vector.load %arg7[%c72_144, %c0_145] : memref<160x512xf32, #tpu.memory_space<vmem>>, vector<8x512xf32>
    tpu.vector_store %arg7[%c72_144, %c0_145], %338 {strides = array<i32>} : memref<160x512xf32, #tpu.memory_space<vmem>>, vector<8x512xf32>,
    %c80 = arith.constant 80 : index
    %c0_146 = arith.constant 0 : index
    %340 = vector.load %arg0[%c80, %c0_146] : memref<160x5xf32, #tpu.memory_space<vmem>>, vector<8x5xf32>
    %c0_147 = arith.constant 0 : index
    %c0_148 = arith.constant 0 : index
    %341 = vector.load %arg3[%c0_147, %c0_148] : memref<1x512xf32, #tpu.memory_space<vmem>>, vector<1x512xf32>
    %342 = vector.extract_strided_slice %340 {offsets = [0, 0], sizes = [8, 1], strides = [1, 1]} : vector<8x5xf32> to vector<8x1xf32>
    %c0_149 = arith.constant 0 : index
    %c0_150 = arith.constant 0 : index
    %343 = vector.load %arg1[%c0_149, %c0_150] : memref<5x512xf32, #tpu.memory_space<vmem>>, vector<1x512xf32>
    %344 = vector.broadcast %342 : vector<8x1xf32> to vector<8x512xf32>
    %345 = vector.broadcast %343 : vector<1x512xf32> to vector<8x512xf32>
    %346 = arith.mulf %344, %345 : vector<8x512xf32>
    %347 = vector.broadcast %341 : vector<1x512xf32> to vector<8x512xf32>
    %348 = arith.addf %347, %346 : vector<8x512xf32>
    %349 = vector.extract_strided_slice %340 {offsets = [0, 1], sizes = [8, 1], strides = [1, 1]} : vector<8x5xf32> to vector<8x1xf32>
    %c1_151 = arith.constant 1 : index
    %c0_152 = arith.constant 0 : index
    %350 = vector.load %arg1[%c1_151, %c0_152] : memref<5x512xf32, #tpu.memory_space<vmem>>, vector<1x512xf32>
    %351 = vector.broadcast %349 : vector<8x1xf32> to vector<8x512xf32>
    %352 = vector.broadcast %350 : vector<1x512xf32> to vector<8x512xf32>
    %353 = arith.mulf %351, %352 : vector<8x512xf32>
    %354 = arith.addf %348, %353 : vector<8x512xf32>
    %355 = vector.extract_strided_slice %340 {offsets = [0, 2], sizes = [8, 1], strides = [1, 1]} : vector<8x5xf32> to vector<8x1xf32>
    %c2_153 = arith.constant 2 : index
    %c0_154 = arith.constant 0 : index
    %356 = vector.load %arg1[%c2_153, %c0_154] : memref<5x512xf32, #tpu.memory_space<vmem>>, vector<1x512xf32>
    %357 = vector.broadcast %355 : vector<8x1xf32> to vector<8x512xf32>
    %358 = vector.broadcast %356 : vector<1x512xf32> to vector<8x512xf32>
    %359 = arith.mulf %357, %358 : vector<8x512xf32>
    %360 = arith.addf %354, %359 : vector<8x512xf32>
    %361 = vector.extract_strided_slice %340 {offsets = [0, 3], sizes = [8, 1], strides = [1, 1]} : vector<8x5xf32> to vector<8x1xf32>
    %c3_155 = arith.constant 3 : index
    %c0_156 = arith.constant 0 : index
    %362 = vector.load %arg1[%c3_155, %c0_156] : memref<5x512xf32, #tpu.memory_space<vmem>>, vector<1x512xf32>
    %363 = vector.broadcast %361 : vector<8x1xf32> to vector<8x512xf32>
    %364 = vector.broadcast %362 : vector<1x512xf32> to vector<8x512xf32>
    %365 = arith.mulf %363, %364 : vector<8x512xf32>
    %366 = arith.addf %360, %365 : vector<8x512xf32>
    %367 = vector.extract_strided_slice %340 {offsets = [0, 4], sizes = [8, 1], strides = [1, 1]} : vector<8x5xf32> to vector<8x1xf32>
    %c4_157 = arith.constant 4 : index
    %c0_158 = arith.constant 0 : index
    %368 = vector.load %arg1[%c4_157, %c0_158] : memref<5x512xf32, #tpu.memory_space<vmem>>, vector<1x512xf32>
    %369 = vector.broadcast %367 : vector<8x1xf32> to vector<8x512xf32>
    %370 = vector.broadcast %368 : vector<1x512xf32> to vector<8x512xf32>
    %371 = arith.mulf %369, %370 : vector<8x512xf32>
    %372 = arith.addf %366, %371 : vector<8x512xf32>
    %c80_159 = arith.constant 80 : index
    %c0_160 = arith.constant 0 : index
    %373 = vector.load %arg7[%c80_159, %c0_160] : memref<160x512xf32, #tpu.memory_space<vmem>>, vector<8x512xf32>
    tpu.vector_store %arg7[%c80_159, %c0_160], %372 {strides = array<i32>} : memref<160x512xf32, #tpu.memory_space<vmem>>, vector<8x512xf32>,
    %c88 = arith.constant 88 : index
    %c0_161 = arith.constant 0 : index
    %374 = vector.load %arg0[%c88, %c0_161] : memref<160x5xf32, #tpu.memory_space<vmem>>, vector<8x5xf32>
    %c0_162 = arith.constant 0 : index
    %c0_163 = arith.constant 0 : index
    %375 = vector.load %arg3[%c0_162, %c0_163] : memref<1x512xf32, #tpu.memory_space<vmem>>, vector<1x512xf32>
    %376 = vector.extract_strided_slice %374 {offsets = [0, 0], sizes = [8, 1], strides = [1, 1]} : vector<8x5xf32> to vector<8x1xf32>
    %c0_164 = arith.constant 0 : index
    %c0_165 = arith.constant 0 : index
    %377 = vector.load %arg1[%c0_164, %c0_165] : memref<5x512xf32, #tpu.memory_space<vmem>>, vector<1x512xf32>
    %378 = vector.broadcast %376 : vector<8x1xf32> to vector<8x512xf32>
    %379 = vector.broadcast %377 : vector<1x512xf32> to vector<8x512xf32>
    %380 = arith.mulf %378, %379 : vector<8x512xf32>
    %381 = vector.broadcast %375 : vector<1x512xf32> to vector<8x512xf32>
    %382 = arith.addf %381, %380 : vector<8x512xf32>
    %383 = vector.extract_strided_slice %374 {offsets = [0, 1], sizes = [8, 1], strides = [1, 1]} : vector<8x5xf32> to vector<8x1xf32>
    %c1_166 = arith.constant 1 : index
    %c0_167 = arith.constant 0 : index
    %384 = vector.load %arg1[%c1_166, %c0_167] : memref<5x512xf32, #tpu.memory_space<vmem>>, vector<1x512xf32>
    %385 = vector.broadcast %383 : vector<8x1xf32> to vector<8x512xf32>
    %386 = vector.broadcast %384 : vector<1x512xf32> to vector<8x512xf32>
    %387 = arith.mulf %385, %386 : vector<8x512xf32>
    %388 = arith.addf %382, %387 : vector<8x512xf32>
    %389 = vector.extract_strided_slice %374 {offsets = [0, 2], sizes = [8, 1], strides = [1, 1]} : vector<8x5xf32> to vector<8x1xf32>
    %c2_168 = arith.constant 2 : index
    %c0_169 = arith.constant 0 : index
    %390 = vector.load %arg1[%c2_168, %c0_169] : memref<5x512xf32, #tpu.memory_space<vmem>>, vector<1x512xf32>
    %391 = vector.broadcast %389 : vector<8x1xf32> to vector<8x512xf32>
    %392 = vector.broadcast %390 : vector<1x512xf32> to vector<8x512xf32>
    %393 = arith.mulf %391, %392 : vector<8x512xf32>
    %394 = arith.addf %388, %393 : vector<8x512xf32>
    %395 = vector.extract_strided_slice %374 {offsets = [0, 3], sizes = [8, 1], strides = [1, 1]} : vector<8x5xf32> to vector<8x1xf32>
    %c3_170 = arith.constant 3 : index
    %c0_171 = arith.constant 0 : index
    %396 = vector.load %arg1[%c3_170, %c0_171] : memref<5x512xf32, #tpu.memory_space<vmem>>, vector<1x512xf32>
    %397 = vector.broadcast %395 : vector<8x1xf32> to vector<8x512xf32>
    %398 = vector.broadcast %396 : vector<1x512xf32> to vector<8x512xf32>
    %399 = arith.mulf %397, %398 : vector<8x512xf32>
    %400 = arith.addf %394, %399 : vector<8x512xf32>
    %401 = vector.extract_strided_slice %374 {offsets = [0, 4], sizes = [8, 1], strides = [1, 1]} : vector<8x5xf32> to vector<8x1xf32>
    %c4_172 = arith.constant 4 : index
    %c0_173 = arith.constant 0 : index
    %402 = vector.load %arg1[%c4_172, %c0_173] : memref<5x512xf32, #tpu.memory_space<vmem>>, vector<1x512xf32>
    %403 = vector.broadcast %401 : vector<8x1xf32> to vector<8x512xf32>
    %404 = vector.broadcast %402 : vector<1x512xf32> to vector<8x512xf32>
    %405 = arith.mulf %403, %404 : vector<8x512xf32>
    %406 = arith.addf %400, %405 : vector<8x512xf32>
    %c88_174 = arith.constant 88 : index
    %c0_175 = arith.constant 0 : index
    %407 = vector.load %arg7[%c88_174, %c0_175] : memref<160x512xf32, #tpu.memory_space<vmem>>, vector<8x512xf32>
    tpu.vector_store %arg7[%c88_174, %c0_175], %406 {strides = array<i32>} : memref<160x512xf32, #tpu.memory_space<vmem>>, vector<8x512xf32>,
    %c96 = arith.constant 96 : index
    %c0_176 = arith.constant 0 : index
    %408 = vector.load %arg0[%c96, %c0_176] : memref<160x5xf32, #tpu.memory_space<vmem>>, vector<8x5xf32>
    %c0_177 = arith.constant 0 : index
    %c0_178 = arith.constant 0 : index
    %409 = vector.load %arg3[%c0_177, %c0_178] : memref<1x512xf32, #tpu.memory_space<vmem>>, vector<1x512xf32>
    %410 = vector.extract_strided_slice %408 {offsets = [0, 0], sizes = [8, 1], strides = [1, 1]} : vector<8x5xf32> to vector<8x1xf32>
    %c0_179 = arith.constant 0 : index
    %c0_180 = arith.constant 0 : index
    %411 = vector.load %arg1[%c0_179, %c0_180] : memref<5x512xf32, #tpu.memory_space<vmem>>, vector<1x512xf32>
    %412 = vector.broadcast %410 : vector<8x1xf32> to vector<8x512xf32>
    %413 = vector.broadcast %411 : vector<1x512xf32> to vector<8x512xf32>
    %414 = arith.mulf %412, %413 : vector<8x512xf32>
    %415 = vector.broadcast %409 : vector<1x512xf32> to vector<8x512xf32>
    %416 = arith.addf %415, %414 : vector<8x512xf32>
    %417 = vector.extract_strided_slice %408 {offsets = [0, 1], sizes = [8, 1], strides = [1, 1]} : vector<8x5xf32> to vector<8x1xf32>
    %c1_181 = arith.constant 1 : index
    %c0_182 = arith.constant 0 : index
    %418 = vector.load %arg1[%c1_181, %c0_182] : memref<5x512xf32, #tpu.memory_space<vmem>>, vector<1x512xf32>
    %419 = vector.broadcast %417 : vector<8x1xf32> to vector<8x512xf32>
    %420 = vector.broadcast %418 : vector<1x512xf32> to vector<8x512xf32>
    %421 = arith.mulf %419, %420 : vector<8x512xf32>
    %422 = arith.addf %416, %421 : vector<8x512xf32>
    %423 = vector.extract_strided_slice %408 {offsets = [0, 2], sizes = [8, 1], strides = [1, 1]} : vector<8x5xf32> to vector<8x1xf32>
    %c2_183 = arith.constant 2 : index
    %c0_184 = arith.constant 0 : index
    %424 = vector.load %arg1[%c2_183, %c0_184] : memref<5x512xf32, #tpu.memory_space<vmem>>, vector<1x512xf32>
    %425 = vector.broadcast %423 : vector<8x1xf32> to vector<8x512xf32>
    %426 = vector.broadcast %424 : vector<1x512xf32> to vector<8x512xf32>
    %427 = arith.mulf %425, %426 : vector<8x512xf32>
    %428 = arith.addf %422, %427 : vector<8x512xf32>
    %429 = vector.extract_strided_slice %408 {offsets = [0, 3], sizes = [8, 1], strides = [1, 1]} : vector<8x5xf32> to vector<8x1xf32>
    %c3_185 = arith.constant 3 : index
    %c0_186 = arith.constant 0 : index
    %430 = vector.load %arg1[%c3_185, %c0_186] : memref<5x512xf32, #tpu.memory_space<vmem>>, vector<1x512xf32>
    %431 = vector.broadcast %429 : vector<8x1xf32> to vector<8x512xf32>
    %432 = vector.broadcast %430 : vector<1x512xf32> to vector<8x512xf32>
    %433 = arith.mulf %431, %432 : vector<8x512xf32>
    %434 = arith.addf %428, %433 : vector<8x512xf32>
    %435 = vector.extract_strided_slice %408 {offsets = [0, 4], sizes = [8, 1], strides = [1, 1]} : vector<8x5xf32> to vector<8x1xf32>
    %c4_187 = arith.constant 4 : index
    %c0_188 = arith.constant 0 : index
    %436 = vector.load %arg1[%c4_187, %c0_188] : memref<5x512xf32, #tpu.memory_space<vmem>>, vector<1x512xf32>
    %437 = vector.broadcast %435 : vector<8x1xf32> to vector<8x512xf32>
    %438 = vector.broadcast %436 : vector<1x512xf32> to vector<8x512xf32>
    %439 = arith.mulf %437, %438 : vector<8x512xf32>
    %440 = arith.addf %434, %439 : vector<8x512xf32>
    %c96_189 = arith.constant 96 : index
    %c0_190 = arith.constant 0 : index
    %441 = vector.load %arg7[%c96_189, %c0_190] : memref<160x512xf32, #tpu.memory_space<vmem>>, vector<8x512xf32>
    tpu.vector_store %arg7[%c96_189, %c0_190], %440 {strides = array<i32>} : memref<160x512xf32, #tpu.memory_space<vmem>>, vector<8x512xf32>,
    %c104 = arith.constant 104 : index
    %c0_191 = arith.constant 0 : index
    %442 = vector.load %arg0[%c104, %c0_191] : memref<160x5xf32, #tpu.memory_space<vmem>>, vector<8x5xf32>
    %c0_192 = arith.constant 0 : index
    %c0_193 = arith.constant 0 : index
    %443 = vector.load %arg3[%c0_192, %c0_193] : memref<1x512xf32, #tpu.memory_space<vmem>>, vector<1x512xf32>
    %444 = vector.extract_strided_slice %442 {offsets = [0, 0], sizes = [8, 1], strides = [1, 1]} : vector<8x5xf32> to vector<8x1xf32>
    %c0_194 = arith.constant 0 : index
    %c0_195 = arith.constant 0 : index
    %445 = vector.load %arg1[%c0_194, %c0_195] : memref<5x512xf32, #tpu.memory_space<vmem>>, vector<1x512xf32>
    %446 = vector.broadcast %444 : vector<8x1xf32> to vector<8x512xf32>
    %447 = vector.broadcast %445 : vector<1x512xf32> to vector<8x512xf32>
    %448 = arith.mulf %446, %447 : vector<8x512xf32>
    %449 = vector.broadcast %443 : vector<1x512xf32> to vector<8x512xf32>
    %450 = arith.addf %449, %448 : vector<8x512xf32>
    %451 = vector.extract_strided_slice %442 {offsets = [0, 1], sizes = [8, 1], strides = [1, 1]} : vector<8x5xf32> to vector<8x1xf32>
    %c1_196 = arith.constant 1 : index
    %c0_197 = arith.constant 0 : index
    %452 = vector.load %arg1[%c1_196, %c0_197] : memref<5x512xf32, #tpu.memory_space<vmem>>, vector<1x512xf32>
    %453 = vector.broadcast %451 : vector<8x1xf32> to vector<8x512xf32>
    %454 = vector.broadcast %452 : vector<1x512xf32> to vector<8x512xf32>
    %455 = arith.mulf %453, %454 : vector<8x512xf32>
    %456 = arith.addf %450, %455 : vector<8x512xf32>
    %457 = vector.extract_strided_slice %442 {offsets = [0, 2], sizes = [8, 1], strides = [1, 1]} : vector<8x5xf32> to vector<8x1xf32>
    %c2_198 = arith.constant 2 : index
    %c0_199 = arith.constant 0 : index
    %458 = vector.load %arg1[%c2_198, %c0_199] : memref<5x512xf32, #tpu.memory_space<vmem>>, vector<1x512xf32>
    %459 = vector.broadcast %457 : vector<8x1xf32> to vector<8x512xf32>
    %460 = vector.broadcast %458 : vector<1x512xf32> to vector<8x512xf32>
    %461 = arith.mulf %459, %460 : vector<8x512xf32>
    %462 = arith.addf %456, %461 : vector<8x512xf32>
    %463 = vector.extract_strided_slice %442 {offsets = [0, 3], sizes = [8, 1], strides = [1, 1]} : vector<8x5xf32> to vector<8x1xf32>
    %c3_200 = arith.constant 3 : index
    %c0_201 = arith.constant 0 : index
    %464 = vector.load %arg1[%c3_200, %c0_201] : memref<5x512xf32, #tpu.memory_space<vmem>>, vector<1x512xf32>
    %465 = vector.broadcast %463 : vector<8x1xf32> to vector<8x512xf32>
    %466 = vector.broadcast %464 : vector<1x512xf32> to vector<8x512xf32>
    %467 = arith.mulf %465, %466 : vector<8x512xf32>
    %468 = arith.addf %462, %467 : vector<8x512xf32>
    %469 = vector.extract_strided_slice %442 {offsets = [0, 4], sizes = [8, 1], strides = [1, 1]} : vector<8x5xf32> to vector<8x1xf32>
    %c4_202 = arith.constant 4 : index
    %c0_203 = arith.constant 0 : index
    %470 = vector.load %arg1[%c4_202, %c0_203] : memref<5x512xf32, #tpu.memory_space<vmem>>, vector<1x512xf32>
    %471 = vector.broadcast %469 : vector<8x1xf32> to vector<8x512xf32>
    %472 = vector.broadcast %470 : vector<1x512xf32> to vector<8x512xf32>
    %473 = arith.mulf %471, %472 : vector<8x512xf32>
    %474 = arith.addf %468, %473 : vector<8x512xf32>
    %c104_204 = arith.constant 104 : index
    %c0_205 = arith.constant 0 : index
    %475 = vector.load %arg7[%c104_204, %c0_205] : memref<160x512xf32, #tpu.memory_space<vmem>>, vector<8x512xf32>
    tpu.vector_store %arg7[%c104_204, %c0_205], %474 {strides = array<i32>} : memref<160x512xf32, #tpu.memory_space<vmem>>, vector<8x512xf32>,
    %c112 = arith.constant 112 : index
    %c0_206 = arith.constant 0 : index
    %476 = vector.load %arg0[%c112, %c0_206] : memref<160x5xf32, #tpu.memory_space<vmem>>, vector<8x5xf32>
    %c0_207 = arith.constant 0 : index
    %c0_208 = arith.constant 0 : index
    %477 = vector.load %arg3[%c0_207, %c0_208] : memref<1x512xf32, #tpu.memory_space<vmem>>, vector<1x512xf32>
    %478 = vector.extract_strided_slice %476 {offsets = [0, 0], sizes = [8, 1], strides = [1, 1]} : vector<8x5xf32> to vector<8x1xf32>
    %c0_209 = arith.constant 0 : index
    %c0_210 = arith.constant 0 : index
    %479 = vector.load %arg1[%c0_209, %c0_210] : memref<5x512xf32, #tpu.memory_space<vmem>>, vector<1x512xf32>
    %480 = vector.broadcast %478 : vector<8x1xf32> to vector<8x512xf32>
    %481 = vector.broadcast %479 : vector<1x512xf32> to vector<8x512xf32>
    %482 = arith.mulf %480, %481 : vector<8x512xf32>
    %483 = vector.broadcast %477 : vector<1x512xf32> to vector<8x512xf32>
    %484 = arith.addf %483, %482 : vector<8x512xf32>
    %485 = vector.extract_strided_slice %476 {offsets = [0, 1], sizes = [8, 1], strides = [1, 1]} : vector<8x5xf32> to vector<8x1xf32>
    %c1_211 = arith.constant 1 : index
    %c0_212 = arith.constant 0 : index
    %486 = vector.load %arg1[%c1_211, %c0_212] : memref<5x512xf32, #tpu.memory_space<vmem>>, vector<1x512xf32>
    %487 = vector.broadcast %485 : vector<8x1xf32> to vector<8x512xf32>
    %488 = vector.broadcast %486 : vector<1x512xf32> to vector<8x512xf32>
    %489 = arith.mulf %487, %488 : vector<8x512xf32>
    %490 = arith.addf %484, %489 : vector<8x512xf32>
    %491 = vector.extract_strided_slice %476 {offsets = [0, 2], sizes = [8, 1], strides = [1, 1]} : vector<8x5xf32> to vector<8x1xf32>
    %c2_213 = arith.constant 2 : index
    %c0_214 = arith.constant 0 : index
    %492 = vector.load %arg1[%c2_213, %c0_214] : memref<5x512xf32, #tpu.memory_space<vmem>>, vector<1x512xf32>
    %493 = vector.broadcast %491 : vector<8x1xf32> to vector<8x512xf32>
    %494 = vector.broadcast %492 : vector<1x512xf32> to vector<8x512xf32>
    %495 = arith.mulf %493, %494 : vector<8x512xf32>
    %496 = arith.addf %490, %495 : vector<8x512xf32>
    %497 = vector.extract_strided_slice %476 {offsets = [0, 3], sizes = [8, 1], strides = [1, 1]} : vector<8x5xf32> to vector<8x1xf32>
    %c3_215 = arith.constant 3 : index
    %c0_216 = arith.constant 0 : index
    %498 = vector.load %arg1[%c3_215, %c0_216] : memref<5x512xf32, #tpu.memory_space<vmem>>, vector<1x512xf32>
    %499 = vector.broadcast %497 : vector<8x1xf32> to vector<8x512xf32>
    %500 = vector.broadcast %498 : vector<1x512xf32> to vector<8x512xf32>
    %501 = arith.mulf %499, %500 : vector<8x512xf32>
    %502 = arith.addf %496, %501 : vector<8x512xf32>
    %503 = vector.extract_strided_slice %476 {offsets = [0, 4], sizes = [8, 1], strides = [1, 1]} : vector<8x5xf32> to vector<8x1xf32>
    %c4_217 = arith.constant 4 : index
    %c0_218 = arith.constant 0 : index
    %504 = vector.load %arg1[%c4_217, %c0_218] : memref<5x512xf32, #tpu.memory_space<vmem>>, vector<1x512xf32>
    %505 = vector.broadcast %503 : vector<8x1xf32> to vector<8x512xf32>
    %506 = vector.broadcast %504 : vector<1x512xf32> to vector<8x512xf32>
    %507 = arith.mulf %505, %506 : vector<8x512xf32>
    %508 = arith.addf %502, %507 : vector<8x512xf32>
    %c112_219 = arith.constant 112 : index
    %c0_220 = arith.constant 0 : index
    %509 = vector.load %arg7[%c112_219, %c0_220] : memref<160x512xf32, #tpu.memory_space<vmem>>, vector<8x512xf32>
    tpu.vector_store %arg7[%c112_219, %c0_220], %508 {strides = array<i32>} : memref<160x512xf32, #tpu.memory_space<vmem>>, vector<8x512xf32>,
    %c120 = arith.constant 120 : index
    %c0_221 = arith.constant 0 : index
    %510 = vector.load %arg0[%c120, %c0_221] : memref<160x5xf32, #tpu.memory_space<vmem>>, vector<8x5xf32>
    %c0_222 = arith.constant 0 : index
    %c0_223 = arith.constant 0 : index
    %511 = vector.load %arg3[%c0_222, %c0_223] : memref<1x512xf32, #tpu.memory_space<vmem>>, vector<1x512xf32>
    %512 = vector.extract_strided_slice %510 {offsets = [0, 0], sizes = [8, 1], strides = [1, 1]} : vector<8x5xf32> to vector<8x1xf32>
    %c0_224 = arith.constant 0 : index
    %c0_225 = arith.constant 0 : index
    %513 = vector.load %arg1[%c0_224, %c0_225] : memref<5x512xf32, #tpu.memory_space<vmem>>, vector<1x512xf32>
    %514 = vector.broadcast %512 : vector<8x1xf32> to vector<8x512xf32>
    %515 = vector.broadcast %513 : vector<1x512xf32> to vector<8x512xf32>
    %516 = arith.mulf %514, %515 : vector<8x512xf32>
    %517 = vector.broadcast %511 : vector<1x512xf32> to vector<8x512xf32>
    %518 = arith.addf %517, %516 : vector<8x512xf32>
    %519 = vector.extract_strided_slice %510 {offsets = [0, 1], sizes = [8, 1], strides = [1, 1]} : vector<8x5xf32> to vector<8x1xf32>
    %c1_226 = arith.constant 1 : index
    %c0_227 = arith.constant 0 : index
    %520 = vector.load %arg1[%c1_226, %c0_227] : memref<5x512xf32, #tpu.memory_space<vmem>>, vector<1x512xf32>
    %521 = vector.broadcast %519 : vector<8x1xf32> to vector<8x512xf32>
    %522 = vector.broadcast %520 : vector<1x512xf32> to vector<8x512xf32>
    %523 = arith.mulf %521, %522 : vector<8x512xf32>
    %524 = arith.addf %518, %523 : vector<8x512xf32>
    %525 = vector.extract_strided_slice %510 {offsets = [0, 2], sizes = [8, 1], strides = [1, 1]} : vector<8x5xf32> to vector<8x1xf32>
    %c2_228 = arith.constant 2 : index
    %c0_229 = arith.constant 0 : index
    %526 = vector.load %arg1[%c2_228, %c0_229] : memref<5x512xf32, #tpu.memory_space<vmem>>, vector<1x512xf32>
    %527 = vector.broadcast %525 : vector<8x1xf32> to vector<8x512xf32>
    %528 = vector.broadcast %526 : vector<1x512xf32> to vector<8x512xf32>
    %529 = arith.mulf %527, %528 : vector<8x512xf32>
    %530 = arith.addf %524, %529 : vector<8x512xf32>
    %531 = vector.extract_strided_slice %510 {offsets = [0, 3], sizes = [8, 1], strides = [1, 1]} : vector<8x5xf32> to vector<8x1xf32>
    %c3_230 = arith.constant 3 : index
    %c0_231 = arith.constant 0 : index
    %532 = vector.load %arg1[%c3_230, %c0_231] : memref<5x512xf32, #tpu.memory_space<vmem>>, vector<1x512xf32>
    %533 = vector.broadcast %531 : vector<8x1xf32> to vector<8x512xf32>
    %534 = vector.broadcast %532 : vector<1x512xf32> to vector<8x512xf32>
    %535 = arith.mulf %533, %534 : vector<8x512xf32>
    %536 = arith.addf %530, %535 : vector<8x512xf32>
    %537 = vector.extract_strided_slice %510 {offsets = [0, 4], sizes = [8, 1], strides = [1, 1]} : vector<8x5xf32> to vector<8x1xf32>
    %c4_232 = arith.constant 4 : index
    %c0_233 = arith.constant 0 : index
    %538 = vector.load %arg1[%c4_232, %c0_233] : memref<5x512xf32, #tpu.memory_space<vmem>>, vector<1x512xf32>
    %539 = vector.broadcast %537 : vector<8x1xf32> to vector<8x512xf32>
    %540 = vector.broadcast %538 : vector<1x512xf32> to vector<8x512xf32>
    %541 = arith.mulf %539, %540 : vector<8x512xf32>
    %542 = arith.addf %536, %541 : vector<8x512xf32>
    %c120_234 = arith.constant 120 : index
    %c0_235 = arith.constant 0 : index
    %543 = vector.load %arg7[%c120_234, %c0_235] : memref<160x512xf32, #tpu.memory_space<vmem>>, vector<8x512xf32>
    tpu.vector_store %arg7[%c120_234, %c0_235], %542 {strides = array<i32>} : memref<160x512xf32, #tpu.memory_space<vmem>>, vector<8x512xf32>,
    %c128 = arith.constant 128 : index
    %c0_236 = arith.constant 0 : index
    %544 = vector.load %arg0[%c128, %c0_236] : memref<160x5xf32, #tpu.memory_space<vmem>>, vector<8x5xf32>
    %c0_237 = arith.constant 0 : index
    %c0_238 = arith.constant 0 : index
    %545 = vector.load %arg3[%c0_237, %c0_238] : memref<1x512xf32, #tpu.memory_space<vmem>>, vector<1x512xf32>
    %546 = vector.extract_strided_slice %544 {offsets = [0, 0], sizes = [8, 1], strides = [1, 1]} : vector<8x5xf32> to vector<8x1xf32>
    %c0_239 = arith.constant 0 : index
    %c0_240 = arith.constant 0 : index
    %547 = vector.load %arg1[%c0_239, %c0_240] : memref<5x512xf32, #tpu.memory_space<vmem>>, vector<1x512xf32>
    %548 = vector.broadcast %546 : vector<8x1xf32> to vector<8x512xf32>
    %549 = vector.broadcast %547 : vector<1x512xf32> to vector<8x512xf32>
    %550 = arith.mulf %548, %549 : vector<8x512xf32>
    %551 = vector.broadcast %545 : vector<1x512xf32> to vector<8x512xf32>
    %552 = arith.addf %551, %550 : vector<8x512xf32>
    %553 = vector.extract_strided_slice %544 {offsets = [0, 1], sizes = [8, 1], strides = [1, 1]} : vector<8x5xf32> to vector<8x1xf32>
    %c1_241 = arith.constant 1 : index
    %c0_242 = arith.constant 0 : index
    %554 = vector.load %arg1[%c1_241, %c0_242] : memref<5x512xf32, #tpu.memory_space<vmem>>, vector<1x512xf32>
    %555 = vector.broadcast %553 : vector<8x1xf32> to vector<8x512xf32>
    %556 = vector.broadcast %554 : vector<1x512xf32> to vector<8x512xf32>
    %557 = arith.mulf %555, %556 : vector<8x512xf32>
    %558 = arith.addf %552, %557 : vector<8x512xf32>
    %559 = vector.extract_strided_slice %544 {offsets = [0, 2], sizes = [8, 1], strides = [1, 1]} : vector<8x5xf32> to vector<8x1xf32>
    %c2_243 = arith.constant 2 : index
    %c0_244 = arith.constant 0 : index
    %560 = vector.load %arg1[%c2_243, %c0_244] : memref<5x512xf32, #tpu.memory_space<vmem>>, vector<1x512xf32>
    %561 = vector.broadcast %559 : vector<8x1xf32> to vector<8x512xf32>
    %562 = vector.broadcast %560 : vector<1x512xf32> to vector<8x512xf32>
    %563 = arith.mulf %561, %562 : vector<8x512xf32>
    %564 = arith.addf %558, %563 : vector<8x512xf32>
    %565 = vector.extract_strided_slice %544 {offsets = [0, 3], sizes = [8, 1], strides = [1, 1]} : vector<8x5xf32> to vector<8x1xf32>
    %c3_245 = arith.constant 3 : index
    %c0_246 = arith.constant 0 : index
    %566 = vector.load %arg1[%c3_245, %c0_246] : memref<5x512xf32, #tpu.memory_space<vmem>>, vector<1x512xf32>
    %567 = vector.broadcast %565 : vector<8x1xf32> to vector<8x512xf32>
    %568 = vector.broadcast %566 : vector<1x512xf32> to vector<8x512xf32>
    %569 = arith.mulf %567, %568 : vector<8x512xf32>
    %570 = arith.addf %564, %569 : vector<8x512xf32>
    %571 = vector.extract_strided_slice %544 {offsets = [0, 4], sizes = [8, 1], strides = [1, 1]} : vector<8x5xf32> to vector<8x1xf32>
    %c4_247 = arith.constant 4 : index
    %c0_248 = arith.constant 0 : index
    %572 = vector.load %arg1[%c4_247, %c0_248] : memref<5x512xf32, #tpu.memory_space<vmem>>, vector<1x512xf32>
    %573 = vector.broadcast %571 : vector<8x1xf32> to vector<8x512xf32>
    %574 = vector.broadcast %572 : vector<1x512xf32> to vector<8x512xf32>
    %575 = arith.mulf %573, %574 : vector<8x512xf32>
    %576 = arith.addf %570, %575 : vector<8x512xf32>
    %c128_249 = arith.constant 128 : index
    %c0_250 = arith.constant 0 : index
    %577 = vector.load %arg7[%c128_249, %c0_250] : memref<160x512xf32, #tpu.memory_space<vmem>>, vector<8x512xf32>
    tpu.vector_store %arg7[%c128_249, %c0_250], %576 {strides = array<i32>} : memref<160x512xf32, #tpu.memory_space<vmem>>, vector<8x512xf32>,
    %c136 = arith.constant 136 : index
    %c0_251 = arith.constant 0 : index
    %578 = vector.load %arg0[%c136, %c0_251] : memref<160x5xf32, #tpu.memory_space<vmem>>, vector<8x5xf32>
    %c0_252 = arith.constant 0 : index
    %c0_253 = arith.constant 0 : index
    %579 = vector.load %arg3[%c0_252, %c0_253] : memref<1x512xf32, #tpu.memory_space<vmem>>, vector<1x512xf32>
    %580 = vector.extract_strided_slice %578 {offsets = [0, 0], sizes = [8, 1], strides = [1, 1]} : vector<8x5xf32> to vector<8x1xf32>
    %c0_254 = arith.constant 0 : index
    %c0_255 = arith.constant 0 : index
    %581 = vector.load %arg1[%c0_254, %c0_255] : memref<5x512xf32, #tpu.memory_space<vmem>>, vector<1x512xf32>
    %582 = vector.broadcast %580 : vector<8x1xf32> to vector<8x512xf32>
    %583 = vector.broadcast %581 : vector<1x512xf32> to vector<8x512xf32>
    %584 = arith.mulf %582, %583 : vector<8x512xf32>
    %585 = vector.broadcast %579 : vector<1x512xf32> to vector<8x512xf32>
    %586 = arith.addf %585, %584 : vector<8x512xf32>
    %587 = vector.extract_strided_slice %578 {offsets = [0, 1], sizes = [8, 1], strides = [1, 1]} : vector<8x5xf32> to vector<8x1xf32>
    %c1_256 = arith.constant 1 : index
    %c0_257 = arith.constant 0 : index
    %588 = vector.load %arg1[%c1_256, %c0_257] : memref<5x512xf32, #tpu.memory_space<vmem>>, vector<1x512xf32>
    %589 = vector.broadcast %587 : vector<8x1xf32> to vector<8x512xf32>
    %590 = vector.broadcast %588 : vector<1x512xf32> to vector<8x512xf32>
    %591 = arith.mulf %589, %590 : vector<8x512xf32>
    %592 = arith.addf %586, %591 : vector<8x512xf32>
    %593 = vector.extract_strided_slice %578 {offsets = [0, 2], sizes = [8, 1], strides = [1, 1]} : vector<8x5xf32> to vector<8x1xf32>
    %c2_258 = arith.constant 2 : index
    %c0_259 = arith.constant 0 : index
    %594 = vector.load %arg1[%c2_258, %c0_259] : memref<5x512xf32, #tpu.memory_space<vmem>>, vector<1x512xf32>
    %595 = vector.broadcast %593 : vector<8x1xf32> to vector<8x512xf32>
    %596 = vector.broadcast %594 : vector<1x512xf32> to vector<8x512xf32>
    %597 = arith.mulf %595, %596 : vector<8x512xf32>
    %598 = arith.addf %592, %597 : vector<8x512xf32>
    %599 = vector.extract_strided_slice %578 {offsets = [0, 3], sizes = [8, 1], strides = [1, 1]} : vector<8x5xf32> to vector<8x1xf32>
    %c3_260 = arith.constant 3 : index
    %c0_261 = arith.constant 0 : index
    %600 = vector.load %arg1[%c3_260, %c0_261] : memref<5x512xf32, #tpu.memory_space<vmem>>, vector<1x512xf32>
    %601 = vector.broadcast %599 : vector<8x1xf32> to vector<8x512xf32>
    %602 = vector.broadcast %600 : vector<1x512xf32> to vector<8x512xf32>
    %603 = arith.mulf %601, %602 : vector<8x512xf32>
    %604 = arith.addf %598, %603 : vector<8x512xf32>
    %605 = vector.extract_strided_slice %578 {offsets = [0, 4], sizes = [8, 1], strides = [1, 1]} : vector<8x5xf32> to vector<8x1xf32>
    %c4_262 = arith.constant 4 : index
    %c0_263 = arith.constant 0 : index
    %606 = vector.load %arg1[%c4_262, %c0_263] : memref<5x512xf32, #tpu.memory_space<vmem>>, vector<1x512xf32>
    %607 = vector.broadcast %605 : vector<8x1xf32> to vector<8x512xf32>
    %608 = vector.broadcast %606 : vector<1x512xf32> to vector<8x512xf32>
    %609 = arith.mulf %607, %608 : vector<8x512xf32>
    %610 = arith.addf %604, %609 : vector<8x512xf32>
    %c136_264 = arith.constant 136 : index
    %c0_265 = arith.constant 0 : index
    %611 = vector.load %arg7[%c136_264, %c0_265] : memref<160x512xf32, #tpu.memory_space<vmem>>, vector<8x512xf32>
    tpu.vector_store %arg7[%c136_264, %c0_265], %610 {strides = array<i32>} : memref<160x512xf32, #tpu.memory_space<vmem>>, vector<8x512xf32>,
    %c144 = arith.constant 144 : index
    %c0_266 = arith.constant 0 : index
    %612 = vector.load %arg0[%c144, %c0_266] : memref<160x5xf32, #tpu.memory_space<vmem>>, vector<8x5xf32>
    %c0_267 = arith.constant 0 : index
    %c0_268 = arith.constant 0 : index
    %613 = vector.load %arg3[%c0_267, %c0_268] : memref<1x512xf32, #tpu.memory_space<vmem>>, vector<1x512xf32>
    %614 = vector.extract_strided_slice %612 {offsets = [0, 0], sizes = [8, 1], strides = [1, 1]} : vector<8x5xf32> to vector<8x1xf32>
    %c0_269 = arith.constant 0 : index
    %c0_270 = arith.constant 0 : index
    %615 = vector.load %arg1[%c0_269, %c0_270] : memref<5x512xf32, #tpu.memory_space<vmem>>, vector<1x512xf32>
    %616 = vector.broadcast %614 : vector<8x1xf32> to vector<8x512xf32>
    %617 = vector.broadcast %615 : vector<1x512xf32> to vector<8x512xf32>
    %618 = arith.mulf %616, %617 : vector<8x512xf32>
    %619 = vector.broadcast %613 : vector<1x512xf32> to vector<8x512xf32>
    %620 = arith.addf %619, %618 : vector<8x512xf32>
    %621 = vector.extract_strided_slice %612 {offsets = [0, 1], sizes = [8, 1], strides = [1, 1]} : vector<8x5xf32> to vector<8x1xf32>
    %c1_271 = arith.constant 1 : index
    %c0_272 = arith.constant 0 : index
    %622 = vector.load %arg1[%c1_271, %c0_272] : memref<5x512xf32, #tpu.memory_space<vmem>>, vector<1x512xf32>
    %623 = vector.broadcast %621 : vector<8x1xf32> to vector<8x512xf32>
    %624 = vector.broadcast %622 : vector<1x512xf32> to vector<8x512xf32>
    %625 = arith.mulf %623, %624 : vector<8x512xf32>
    %626 = arith.addf %620, %625 : vector<8x512xf32>
    %627 = vector.extract_strided_slice %612 {offsets = [0, 2], sizes = [8, 1], strides = [1, 1]} : vector<8x5xf32> to vector<8x1xf32>
    %c2_273 = arith.constant 2 : index
    %c0_274 = arith.constant 0 : index
    %628 = vector.load %arg1[%c2_273, %c0_274] : memref<5x512xf32, #tpu.memory_space<vmem>>, vector<1x512xf32>
    %629 = vector.broadcast %627 : vector<8x1xf32> to vector<8x512xf32>
    %630 = vector.broadcast %628 : vector<1x512xf32> to vector<8x512xf32>
    %631 = arith.mulf %629, %630 : vector<8x512xf32>
    %632 = arith.addf %626, %631 : vector<8x512xf32>
    %633 = vector.extract_strided_slice %612 {offsets = [0, 3], sizes = [8, 1], strides = [1, 1]} : vector<8x5xf32> to vector<8x1xf32>
    %c3_275 = arith.constant 3 : index
    %c0_276 = arith.constant 0 : index
    %634 = vector.load %arg1[%c3_275, %c0_276] : memref<5x512xf32, #tpu.memory_space<vmem>>, vector<1x512xf32>
    %635 = vector.broadcast %633 : vector<8x1xf32> to vector<8x512xf32>
    %636 = vector.broadcast %634 : vector<1x512xf32> to vector<8x512xf32>
    %637 = arith.mulf %635, %636 : vector<8x512xf32>
    %638 = arith.addf %632, %637 : vector<8x512xf32>
    %639 = vector.extract_strided_slice %612 {offsets = [0, 4], sizes = [8, 1], strides = [1, 1]} : vector<8x5xf32> to vector<8x1xf32>
    %c4_277 = arith.constant 4 : index
    %c0_278 = arith.constant 0 : index
    %640 = vector.load %arg1[%c4_277, %c0_278] : memref<5x512xf32, #tpu.memory_space<vmem>>, vector<1x512xf32>
    %641 = vector.broadcast %639 : vector<8x1xf32> to vector<8x512xf32>
    %642 = vector.broadcast %640 : vector<1x512xf32> to vector<8x512xf32>
    %643 = arith.mulf %641, %642 : vector<8x512xf32>
    %644 = arith.addf %638, %643 : vector<8x512xf32>
    %c144_279 = arith.constant 144 : index
    %c0_280 = arith.constant 0 : index
    %645 = vector.load %arg7[%c144_279, %c0_280] : memref<160x512xf32, #tpu.memory_space<vmem>>, vector<8x512xf32>
    tpu.vector_store %arg7[%c144_279, %c0_280], %644 {strides = array<i32>} : memref<160x512xf32, #tpu.memory_space<vmem>>, vector<8x512xf32>,
    %c152 = arith.constant 152 : index
    %c0_281 = arith.constant 0 : index
    %646 = vector.load %arg0[%c152, %c0_281] : memref<160x5xf32, #tpu.memory_space<vmem>>, vector<8x5xf32>
    %c0_282 = arith.constant 0 : index
    %c0_283 = arith.constant 0 : index
    %647 = vector.load %arg3[%c0_282, %c0_283] : memref<1x512xf32, #tpu.memory_space<vmem>>, vector<1x512xf32>
    %648 = vector.extract_strided_slice %646 {offsets = [0, 0], sizes = [8, 1], strides = [1, 1]} : vector<8x5xf32> to vector<8x1xf32>
    %c0_284 = arith.constant 0 : index
    %c0_285 = arith.constant 0 : index
    %649 = vector.load %arg1[%c0_284, %c0_285] : memref<5x512xf32, #tpu.memory_space<vmem>>, vector<1x512xf32>
    %650 = vector.broadcast %648 : vector<8x1xf32> to vector<8x512xf32>
    %651 = vector.broadcast %649 : vector<1x512xf32> to vector<8x512xf32>
    %652 = arith.mulf %650, %651 : vector<8x512xf32>
    %653 = vector.broadcast %647 : vector<1x512xf32> to vector<8x512xf32>
    %654 = arith.addf %653, %652 : vector<8x512xf32>
    %655 = vector.extract_strided_slice %646 {offsets = [0, 1], sizes = [8, 1], strides = [1, 1]} : vector<8x5xf32> to vector<8x1xf32>
    %c1_286 = arith.constant 1 : index
    %c0_287 = arith.constant 0 : index
    %656 = vector.load %arg1[%c1_286, %c0_287] : memref<5x512xf32, #tpu.memory_space<vmem>>, vector<1x512xf32>
    %657 = vector.broadcast %655 : vector<8x1xf32> to vector<8x512xf32>
    %658 = vector.broadcast %656 : vector<1x512xf32> to vector<8x512xf32>
    %659 = arith.mulf %657, %658 : vector<8x512xf32>
    %660 = arith.addf %654, %659 : vector<8x512xf32>
    %661 = vector.extract_strided_slice %646 {offsets = [0, 2], sizes = [8, 1], strides = [1, 1]} : vector<8x5xf32> to vector<8x1xf32>
    %c2_288 = arith.constant 2 : index
    %c0_289 = arith.constant 0 : index
    %662 = vector.load %arg1[%c2_288, %c0_289] : memref<5x512xf32, #tpu.memory_space<vmem>>, vector<1x512xf32>
    %663 = vector.broadcast %661 : vector<8x1xf32> to vector<8x512xf32>
    %664 = vector.broadcast %662 : vector<1x512xf32> to vector<8x512xf32>
    %665 = arith.mulf %663, %664 : vector<8x512xf32>
    %666 = arith.addf %660, %665 : vector<8x512xf32>
    %667 = vector.extract_strided_slice %646 {offsets = [0, 3], sizes = [8, 1], strides = [1, 1]} : vector<8x5xf32> to vector<8x1xf32>
    %c3_290 = arith.constant 3 : index
    %c0_291 = arith.constant 0 : index
    %668 = vector.load %arg1[%c3_290, %c0_291] : memref<5x512xf32, #tpu.memory_space<vmem>>, vector<1x512xf32>
    %669 = vector.broadcast %667 : vector<8x1xf32> to vector<8x512xf32>
    %670 = vector.broadcast %668 : vector<1x512xf32> to vector<8x512xf32>
    %671 = arith.mulf %669, %670 : vector<8x512xf32>
    %672 = arith.addf %666, %671 : vector<8x512xf32>
    %673 = vector.extract_strided_slice %646 {offsets = [0, 4], sizes = [8, 1], strides = [1, 1]} : vector<8x5xf32> to vector<8x1xf32>
    %c4_292 = arith.constant 4 : index
    %c0_293 = arith.constant 0 : index
    %674 = vector.load %arg1[%c4_292, %c0_293] : memref<5x512xf32, #tpu.memory_space<vmem>>, vector<1x512xf32>
    %675 = vector.broadcast %673 : vector<8x1xf32> to vector<8x512xf32>
    %676 = vector.broadcast %674 : vector<1x512xf32> to vector<8x512xf32>
    %677 = arith.mulf %675, %676 : vector<8x512xf32>
    %678 = arith.addf %672, %677 : vector<8x512xf32>
    %c152_294 = arith.constant 152 : index
    %c0_295 = arith.constant 0 : index
    %679 = vector.load %arg7[%c152_294, %c0_295] : memref<160x512xf32, #tpu.memory_space<vmem>>, vector<8x512xf32>
    tpu.vector_store %arg7[%c152_294, %c0_295], %678 {strides = array<i32>} : memref<160x512xf32, #tpu.memory_space<vmem>>, vector<8x512xf32>,
    %cst = arith.constant 0.000000e+00 : f32
    %680 = vector.broadcast %cst : f32 to vector<8x128xf32>
    %cst_296 = arith.constant 0.000000e+00 : f32
    %681 = vector.broadcast %cst_296 : f32 to vector<8x128xf32>
    %c0_297 = arith.constant 0 : index
    %c0_298 = arith.constant 0 : index
    %682 = vector.load %arg7[%c0_297, %c0_298] : memref<160x512xf32, #tpu.memory_space<vmem>>, vector<8x512xf32>
    %683 = arith.truncf %680 : vector<8x128xf32> to vector<8x128xbf16>
    %c0_299 = arith.constant 0 : index
    %c0_300 = arith.constant 0 : index
    %684 = vector.load %arg2[%c0_299, %c0_300] : memref<128x512xbf16, #tpu.memory_space<vmem>>, vector<128x512xbf16>
    %cst_301 = arith.constant dense<0.000000e+00> : vector<8x512xf32>
    %685 = tpu.matmul %683, %684, %cst_301 {dimension_numbers = #tpu.dot_dimension_numbers<[1], [0], [0], [1], [0, 0, 1, 1], [], []>} : vector<8x128xbf16>, vector<128x512xbf16>, vector<8x512xf32> -> vector<8x512xf32>
    %686 = arith.addf %682, %685 : vector<8x512xf32>
    %687 = vector.extract_strided_slice %686 {offsets = [0, 0], sizes = [8, 256], strides = [1, 1]} : vector<8x512xf32> to vector<8x256xf32>
    %688 = arith.negf %687 : vector<8x256xf32>
    %689 = math.exp %688 : vector<8x256xf32>
    %cst_302 = arith.constant 1.000000e+00 : f32
    %690 = vector.broadcast %cst_302 : f32 to vector<8x256xf32>
    %691 = arith.addf %690, %689 : vector<8x256xf32>
    %692 = arith.divf %690, %691 : vector<8x256xf32>
    %693 = vector.extract_strided_slice %692 {offsets = [0, 0], sizes = [8, 128], strides = [1, 1]} : vector<8x256xf32> to vector<8x128xf32>
    %694 = vector.extract_strided_slice %692 {offsets = [0, 128], sizes = [8, 128], strides = [1, 1]} : vector<8x256xf32> to vector<8x128xf32>
    %695 = vector.extract_strided_slice %686 {offsets = [0, 256], sizes = [8, 128], strides = [1, 1]} : vector<8x512xf32> to vector<8x128xf32>
    %696 = math.tanh %695 : vector<8x128xf32>
    %697 = arith.mulf %694, %681 : vector<8x128xf32>
    %698 = arith.mulf %693, %696 : vector<8x128xf32>
    %699 = arith.addf %697, %698 : vector<8x128xf32>
    %700 = math.tanh %699 : vector<8x128xf32>
    %701 = vector.extract_strided_slice %686 {offsets = [0, 384], sizes = [8, 128], strides = [1, 1]} : vector<8x512xf32> to vector<8x128xf32>
    %702 = arith.negf %701 : vector<8x128xf32>
    %703 = math.exp %702 : vector<8x128xf32>
    %cst_303 = arith.constant 1.000000e+00 : f32
    %704 = vector.broadcast %cst_303 : f32 to vector<8x128xf32>
    %705 = arith.addf %704, %703 : vector<8x128xf32>
    %706 = arith.divf %704, %705 : vector<8x128xf32>
    %707 = arith.mulf %706, %700 : vector<8x128xf32>
    %c0_304 = arith.constant 0 : index
    %c0_305 = arith.constant 0 : index
    %708 = vector.load %arg8[%c0_304, %c0_305] : memref<8x2560xf32, #tpu.memory_space<vmem>>, vector<8x128xf32>
    tpu.vector_store %arg8[%c0_304, %c0_305], %707 {strides = array<i32>} : memref<8x2560xf32, #tpu.memory_space<vmem>>, vector<8x128xf32>,
    %c8_306 = arith.constant 8 : index
    %c0_307 = arith.constant 0 : index
    %709 = vector.load %arg7[%c8_306, %c0_307] : memref<160x512xf32, #tpu.memory_space<vmem>>, vector<8x512xf32>
    %710 = arith.truncf %707 : vector<8x128xf32> to vector<8x128xbf16>
    %c0_308 = arith.constant 0 : index
    %c0_309 = arith.constant 0 : index
    %711 = vector.load %arg2[%c0_308, %c0_309] : memref<128x512xbf16, #tpu.memory_space<vmem>>, vector<128x512xbf16>
    %cst_310 = arith.constant dense<0.000000e+00> : vector<8x512xf32>
    %712 = tpu.matmul %710, %711, %cst_310 {dimension_numbers = #tpu.dot_dimension_numbers<[1], [0], [0], [1], [0, 0, 1, 1], [], []>} : vector<8x128xbf16>, vector<128x512xbf16>, vector<8x512xf32> -> vector<8x512xf32>
    %713 = arith.addf %709, %712 : vector<8x512xf32>
    %714 = vector.extract_strided_slice %713 {offsets = [0, 0], sizes = [8, 256], strides = [1, 1]} : vector<8x512xf32> to vector<8x256xf32>
    %715 = arith.negf %714 : vector<8x256xf32>
    %716 = math.exp %715 : vector<8x256xf32>
    %cst_311 = arith.constant 1.000000e+00 : f32
    %717 = vector.broadcast %cst_311 : f32 to vector<8x256xf32>
    %718 = arith.addf %717, %716 : vector<8x256xf32>
    %719 = arith.divf %717, %718 : vector<8x256xf32>
    %720 = vector.extract_strided_slice %719 {offsets = [0, 0], sizes = [8, 128], strides = [1, 1]} : vector<8x256xf32> to vector<8x128xf32>
    %721 = vector.extract_strided_slice %719 {offsets = [0, 128], sizes = [8, 128], strides = [1, 1]} : vector<8x256xf32> to vector<8x128xf32>
    %722 = vector.extract_strided_slice %713 {offsets = [0, 256], sizes = [8, 128], strides = [1, 1]} : vector<8x512xf32> to vector<8x128xf32>
    %723 = math.tanh %722 : vector<8x128xf32>
    %724 = arith.mulf %721, %699 : vector<8x128xf32>
    %725 = arith.mulf %720, %723 : vector<8x128xf32>
    %726 = arith.addf %724, %725 : vector<8x128xf32>
    %727 = math.tanh %726 : vector<8x128xf32>
    %728 = vector.extract_strided_slice %713 {offsets = [0, 384], sizes = [8, 128], strides = [1, 1]} : vector<8x512xf32> to vector<8x128xf32>
    %729 = arith.negf %728 : vector<8x128xf32>
    %730 = math.exp %729 : vector<8x128xf32>
    %cst_312 = arith.constant 1.000000e+00 : f32
    %731 = vector.broadcast %cst_312 : f32 to vector<8x128xf32>
    %732 = arith.addf %731, %730 : vector<8x128xf32>
    %733 = arith.divf %731, %732 : vector<8x128xf32>
    %734 = arith.mulf %733, %727 : vector<8x128xf32>
    %c0_313 = arith.constant 0 : index
    %c128_314 = arith.constant 128 : index
    %735 = vector.load %arg8[%c0_313, %c128_314] : memref<8x2560xf32, #tpu.memory_space<vmem>>, vector<8x128xf32>
    tpu.vector_store %arg8[%c0_313, %c128_314], %734 {strides = array<i32>} : memref<8x2560xf32, #tpu.memory_space<vmem>>, vector<8x128xf32>,
    %c16_315 = arith.constant 16 : index
    %c0_316 = arith.constant 0 : index
    %736 = vector.load %arg7[%c16_315, %c0_316] : memref<160x512xf32, #tpu.memory_space<vmem>>, vector<8x512xf32>
    %737 = arith.truncf %734 : vector<8x128xf32> to vector<8x128xbf16>
    %c0_317 = arith.constant 0 : index
    %c0_318 = arith.constant 0 : index
    %738 = vector.load %arg2[%c0_317, %c0_318] : memref<128x512xbf16, #tpu.memory_space<vmem>>, vector<128x512xbf16>
    %cst_319 = arith.constant dense<0.000000e+00> : vector<8x512xf32>
    %739 = tpu.matmul %737, %738, %cst_319 {dimension_numbers = #tpu.dot_dimension_numbers<[1], [0], [0], [1], [0, 0, 1, 1], [], []>} : vector<8x128xbf16>, vector<128x512xbf16>, vector<8x512xf32> -> vector<8x512xf32>
    %740 = arith.addf %736, %739 : vector<8x512xf32>
    %741 = vector.extract_strided_slice %740 {offsets = [0, 0], sizes = [8, 256], strides = [1, 1]} : vector<8x512xf32> to vector<8x256xf32>
    %742 = arith.negf %741 : vector<8x256xf32>
    %743 = math.exp %742 : vector<8x256xf32>
    %cst_320 = arith.constant 1.000000e+00 : f32
    %744 = vector.broadcast %cst_320 : f32 to vector<8x256xf32>
    %745 = arith.addf %744, %743 : vector<8x256xf32>
    %746 = arith.divf %744, %745 : vector<8x256xf32>
    %747 = vector.extract_strided_slice %746 {offsets = [0, 0], sizes = [8, 128], strides = [1, 1]} : vector<8x256xf32> to vector<8x128xf32>
    %748 = vector.extract_strided_slice %746 {offsets = [0, 128], sizes = [8, 128], strides = [1, 1]} : vector<8x256xf32> to vector<8x128xf32>
    %749 = vector.extract_strided_slice %740 {offsets = [0, 256], sizes = [8, 128], strides = [1, 1]} : vector<8x512xf32> to vector<8x128xf32>
    %750 = math.tanh %749 : vector<8x128xf32>
    %751 = arith.mulf %748, %726 : vector<8x128xf32>
    %752 = arith.mulf %747, %750 : vector<8x128xf32>
    %753 = arith.addf %751, %752 : vector<8x128xf32>
    %754 = math.tanh %753 : vector<8x128xf32>
    %755 = vector.extract_strided_slice %740 {offsets = [0, 384], sizes = [8, 128], strides = [1, 1]} : vector<8x512xf32> to vector<8x128xf32>
    %756 = arith.negf %755 : vector<8x128xf32>
    %757 = math.exp %756 : vector<8x128xf32>
    %cst_321 = arith.constant 1.000000e+00 : f32
    %758 = vector.broadcast %cst_321 : f32 to vector<8x128xf32>
    %759 = arith.addf %758, %757 : vector<8x128xf32>
    %760 = arith.divf %758, %759 : vector<8x128xf32>
    %761 = arith.mulf %760, %754 : vector<8x128xf32>
    %c0_322 = arith.constant 0 : index
    %c256 = arith.constant 256 : index
    %762 = vector.load %arg8[%c0_322, %c256] : memref<8x2560xf32, #tpu.memory_space<vmem>>, vector<8x128xf32>
    tpu.vector_store %arg8[%c0_322, %c256], %761 {strides = array<i32>} : memref<8x2560xf32, #tpu.memory_space<vmem>>, vector<8x128xf32>,
    %c24_323 = arith.constant 24 : index
    %c0_324 = arith.constant 0 : index
    %763 = vector.load %arg7[%c24_323, %c0_324] : memref<160x512xf32, #tpu.memory_space<vmem>>, vector<8x512xf32>
    %764 = arith.truncf %761 : vector<8x128xf32> to vector<8x128xbf16>
    %c0_325 = arith.constant 0 : index
    %c0_326 = arith.constant 0 : index
    %765 = vector.load %arg2[%c0_325, %c0_326] : memref<128x512xbf16, #tpu.memory_space<vmem>>, vector<128x512xbf16>
    %cst_327 = arith.constant dense<0.000000e+00> : vector<8x512xf32>
    %766 = tpu.matmul %764, %765, %cst_327 {dimension_numbers = #tpu.dot_dimension_numbers<[1], [0], [0], [1], [0, 0, 1, 1], [], []>} : vector<8x128xbf16>, vector<128x512xbf16>, vector<8x512xf32> -> vector<8x512xf32>
    %767 = arith.addf %763, %766 : vector<8x512xf32>
    %768 = vector.extract_strided_slice %767 {offsets = [0, 0], sizes = [8, 256], strides = [1, 1]} : vector<8x512xf32> to vector<8x256xf32>
    %769 = arith.negf %768 : vector<8x256xf32>
    %770 = math.exp %769 : vector<8x256xf32>
    %cst_328 = arith.constant 1.000000e+00 : f32
    %771 = vector.broadcast %cst_328 : f32 to vector<8x256xf32>
    %772 = arith.addf %771, %770 : vector<8x256xf32>
    %773 = arith.divf %771, %772 : vector<8x256xf32>
    %774 = vector.extract_strided_slice %773 {offsets = [0, 0], sizes = [8, 128], strides = [1, 1]} : vector<8x256xf32> to vector<8x128xf32>
    %775 = vector.extract_strided_slice %773 {offsets = [0, 128], sizes = [8, 128], strides = [1, 1]} : vector<8x256xf32> to vector<8x128xf32>
    %776 = vector.extract_strided_slice %767 {offsets = [0, 256], sizes = [8, 128], strides = [1, 1]} : vector<8x512xf32> to vector<8x128xf32>
    %777 = math.tanh %776 : vector<8x128xf32>
    %778 = arith.mulf %775, %753 : vector<8x128xf32>
    %779 = arith.mulf %774, %777 : vector<8x128xf32>
    %780 = arith.addf %778, %779 : vector<8x128xf32>
    %781 = math.tanh %780 : vector<8x128xf32>
    %782 = vector.extract_strided_slice %767 {offsets = [0, 384], sizes = [8, 128], strides = [1, 1]} : vector<8x512xf32> to vector<8x128xf32>
    %783 = arith.negf %782 : vector<8x128xf32>
    %784 = math.exp %783 : vector<8x128xf32>
    %cst_329 = arith.constant 1.000000e+00 : f32
    %785 = vector.broadcast %cst_329 : f32 to vector<8x128xf32>
    %786 = arith.addf %785, %784 : vector<8x128xf32>
    %787 = arith.divf %785, %786 : vector<8x128xf32>
    %788 = arith.mulf %787, %781 : vector<8x128xf32>
    %c0_330 = arith.constant 0 : index
    %c384 = arith.constant 384 : index
    %789 = vector.load %arg8[%c0_330, %c384] : memref<8x2560xf32, #tpu.memory_space<vmem>>, vector<8x128xf32>
    tpu.vector_store %arg8[%c0_330, %c384], %788 {strides = array<i32>} : memref<8x2560xf32, #tpu.memory_space<vmem>>, vector<8x128xf32>,
    %c32_331 = arith.constant 32 : index
    %c0_332 = arith.constant 0 : index
    %790 = vector.load %arg7[%c32_331, %c0_332] : memref<160x512xf32, #tpu.memory_space<vmem>>, vector<8x512xf32>
    %791 = arith.truncf %788 : vector<8x128xf32> to vector<8x128xbf16>
    %c0_333 = arith.constant 0 : index
    %c0_334 = arith.constant 0 : index
    %792 = vector.load %arg2[%c0_333, %c0_334] : memref<128x512xbf16, #tpu.memory_space<vmem>>, vector<128x512xbf16>
    %cst_335 = arith.constant dense<0.000000e+00> : vector<8x512xf32>
    %793 = tpu.matmul %791, %792, %cst_335 {dimension_numbers = #tpu.dot_dimension_numbers<[1], [0], [0], [1], [0, 0, 1, 1], [], []>} : vector<8x128xbf16>, vector<128x512xbf16>, vector<8x512xf32> -> vector<8x512xf32>
    %794 = arith.addf %790, %793 : vector<8x512xf32>
    %795 = vector.extract_strided_slice %794 {offsets = [0, 0], sizes = [8, 256], strides = [1, 1]} : vector<8x512xf32> to vector<8x256xf32>
    %796 = arith.negf %795 : vector<8x256xf32>
    %797 = math.exp %796 : vector<8x256xf32>
    %cst_336 = arith.constant 1.000000e+00 : f32
    %798 = vector.broadcast %cst_336 : f32 to vector<8x256xf32>
    %799 = arith.addf %798, %797 : vector<8x256xf32>
    %800 = arith.divf %798, %799 : vector<8x256xf32>
    %801 = vector.extract_strided_slice %800 {offsets = [0, 0], sizes = [8, 128], strides = [1, 1]} : vector<8x256xf32> to vector<8x128xf32>
    %802 = vector.extract_strided_slice %800 {offsets = [0, 128], sizes = [8, 128], strides = [1, 1]} : vector<8x256xf32> to vector<8x128xf32>
    %803 = vector.extract_strided_slice %794 {offsets = [0, 256], sizes = [8, 128], strides = [1, 1]} : vector<8x512xf32> to vector<8x128xf32>
    %804 = math.tanh %803 : vector<8x128xf32>
    %805 = arith.mulf %802, %780 : vector<8x128xf32>
    %806 = arith.mulf %801, %804 : vector<8x128xf32>
    %807 = arith.addf %805, %806 : vector<8x128xf32>
    %808 = math.tanh %807 : vector<8x128xf32>
    %809 = vector.extract_strided_slice %794 {offsets = [0, 384], sizes = [8, 128], strides = [1, 1]} : vector<8x512xf32> to vector<8x128xf32>
    %810 = arith.negf %809 : vector<8x128xf32>
    %811 = math.exp %810 : vector<8x128xf32>
    %cst_337 = arith.constant 1.000000e+00 : f32
    %812 = vector.broadcast %cst_337 : f32 to vector<8x128xf32>
    %813 = arith.addf %812, %811 : vector<8x128xf32>
    %814 = arith.divf %812, %813 : vector<8x128xf32>
    %815 = arith.mulf %814, %808 : vector<8x128xf32>
    %c0_338 = arith.constant 0 : index
    %c512 = arith.constant 512 : index
    %816 = vector.load %arg8[%c0_338, %c512] : memref<8x2560xf32, #tpu.memory_space<vmem>>, vector<8x128xf32>
    tpu.vector_store %arg8[%c0_338, %c512], %815 {strides = array<i32>} : memref<8x2560xf32, #tpu.memory_space<vmem>>, vector<8x128xf32>,
    %c40_339 = arith.constant 40 : index
    %c0_340 = arith.constant 0 : index
    %817 = vector.load %arg7[%c40_339, %c0_340] : memref<160x512xf32, #tpu.memory_space<vmem>>, vector<8x512xf32>
    %818 = arith.truncf %815 : vector<8x128xf32> to vector<8x128xbf16>
    %c0_341 = arith.constant 0 : index
    %c0_342 = arith.constant 0 : index
    %819 = vector.load %arg2[%c0_341, %c0_342] : memref<128x512xbf16, #tpu.memory_space<vmem>>, vector<128x512xbf16>
    %cst_343 = arith.constant dense<0.000000e+00> : vector<8x512xf32>
    %820 = tpu.matmul %818, %819, %cst_343 {dimension_numbers = #tpu.dot_dimension_numbers<[1], [0], [0], [1], [0, 0, 1, 1], [], []>} : vector<8x128xbf16>, vector<128x512xbf16>, vector<8x512xf32> -> vector<8x512xf32>
    %821 = arith.addf %817, %820 : vector<8x512xf32>
    %822 = vector.extract_strided_slice %821 {offsets = [0, 0], sizes = [8, 256], strides = [1, 1]} : vector<8x512xf32> to vector<8x256xf32>
    %823 = arith.negf %822 : vector<8x256xf32>
    %824 = math.exp %823 : vector<8x256xf32>
    %cst_344 = arith.constant 1.000000e+00 : f32
    %825 = vector.broadcast %cst_344 : f32 to vector<8x256xf32>
    %826 = arith.addf %825, %824 : vector<8x256xf32>
    %827 = arith.divf %825, %826 : vector<8x256xf32>
    %828 = vector.extract_strided_slice %827 {offsets = [0, 0], sizes = [8, 128], strides = [1, 1]} : vector<8x256xf32> to vector<8x128xf32>
    %829 = vector.extract_strided_slice %827 {offsets = [0, 128], sizes = [8, 128], strides = [1, 1]} : vector<8x256xf32> to vector<8x128xf32>
    %830 = vector.extract_strided_slice %821 {offsets = [0, 256], sizes = [8, 128], strides = [1, 1]} : vector<8x512xf32> to vector<8x128xf32>
    %831 = math.tanh %830 : vector<8x128xf32>
    %832 = arith.mulf %829, %807 : vector<8x128xf32>
    %833 = arith.mulf %828, %831 : vector<8x128xf32>
    %834 = arith.addf %832, %833 : vector<8x128xf32>
    %835 = math.tanh %834 : vector<8x128xf32>
    %836 = vector.extract_strided_slice %821 {offsets = [0, 384], sizes = [8, 128], strides = [1, 1]} : vector<8x512xf32> to vector<8x128xf32>
    %837 = arith.negf %836 : vector<8x128xf32>
    %838 = math.exp %837 : vector<8x128xf32>
    %cst_345 = arith.constant 1.000000e+00 : f32
    %839 = vector.broadcast %cst_345 : f32 to vector<8x128xf32>
    %840 = arith.addf %839, %838 : vector<8x128xf32>
    %841 = arith.divf %839, %840 : vector<8x128xf32>
    %842 = arith.mulf %841, %835 : vector<8x128xf32>
    %c0_346 = arith.constant 0 : index
    %c640 = arith.constant 640 : index
    %843 = vector.load %arg8[%c0_346, %c640] : memref<8x2560xf32, #tpu.memory_space<vmem>>, vector<8x128xf32>
    tpu.vector_store %arg8[%c0_346, %c640], %842 {strides = array<i32>} : memref<8x2560xf32, #tpu.memory_space<vmem>>, vector<8x128xf32>,
    %c48_347 = arith.constant 48 : index
    %c0_348 = arith.constant 0 : index
    %844 = vector.load %arg7[%c48_347, %c0_348] : memref<160x512xf32, #tpu.memory_space<vmem>>, vector<8x512xf32>
    %845 = arith.truncf %842 : vector<8x128xf32> to vector<8x128xbf16>
    %c0_349 = arith.constant 0 : index
    %c0_350 = arith.constant 0 : index
    %846 = vector.load %arg2[%c0_349, %c0_350] : memref<128x512xbf16, #tpu.memory_space<vmem>>, vector<128x512xbf16>
    %cst_351 = arith.constant dense<0.000000e+00> : vector<8x512xf32>
    %847 = tpu.matmul %845, %846, %cst_351 {dimension_numbers = #tpu.dot_dimension_numbers<[1], [0], [0], [1], [0, 0, 1, 1], [], []>} : vector<8x128xbf16>, vector<128x512xbf16>, vector<8x512xf32> -> vector<8x512xf32>
    %848 = arith.addf %844, %847 : vector<8x512xf32>
    %849 = vector.extract_strided_slice %848 {offsets = [0, 0], sizes = [8, 256], strides = [1, 1]} : vector<8x512xf32> to vector<8x256xf32>
    %850 = arith.negf %849 : vector<8x256xf32>
    %851 = math.exp %850 : vector<8x256xf32>
    %cst_352 = arith.constant 1.000000e+00 : f32
    %852 = vector.broadcast %cst_352 : f32 to vector<8x256xf32>
    %853 = arith.addf %852, %851 : vector<8x256xf32>
    %854 = arith.divf %852, %853 : vector<8x256xf32>
    %855 = vector.extract_strided_slice %854 {offsets = [0, 0], sizes = [8, 128], strides = [1, 1]} : vector<8x256xf32> to vector<8x128xf32>
    %856 = vector.extract_strided_slice %854 {offsets = [0, 128], sizes = [8, 128], strides = [1, 1]} : vector<8x256xf32> to vector<8x128xf32>
    %857 = vector.extract_strided_slice %848 {offsets = [0, 256], sizes = [8, 128], strides = [1, 1]} : vector<8x512xf32> to vector<8x128xf32>
    %858 = math.tanh %857 : vector<8x128xf32>
    %859 = arith.mulf %856, %834 : vector<8x128xf32>
    %860 = arith.mulf %855, %858 : vector<8x128xf32>
    %861 = arith.addf %859, %860 : vector<8x128xf32>
    %862 = math.tanh %861 : vector<8x128xf32>
    %863 = vector.extract_strided_slice %848 {offsets = [0, 384], sizes = [8, 128], strides = [1, 1]} : vector<8x512xf32> to vector<8x128xf32>
    %864 = arith.negf %863 : vector<8x128xf32>
    %865 = math.exp %864 : vector<8x128xf32>
    %cst_353 = arith.constant 1.000000e+00 : f32
    %866 = vector.broadcast %cst_353 : f32 to vector<8x128xf32>
    %867 = arith.addf %866, %865 : vector<8x128xf32>
    %868 = arith.divf %866, %867 : vector<8x128xf32>
    %869 = arith.mulf %868, %862 : vector<8x128xf32>
    %c0_354 = arith.constant 0 : index
    %c768 = arith.constant 768 : index
    %870 = vector.load %arg8[%c0_354, %c768] : memref<8x2560xf32, #tpu.memory_space<vmem>>, vector<8x128xf32>
    tpu.vector_store %arg8[%c0_354, %c768], %869 {strides = array<i32>} : memref<8x2560xf32, #tpu.memory_space<vmem>>, vector<8x128xf32>,
    %c56_355 = arith.constant 56 : index
    %c0_356 = arith.constant 0 : index
    %871 = vector.load %arg7[%c56_355, %c0_356] : memref<160x512xf32, #tpu.memory_space<vmem>>, vector<8x512xf32>
    %872 = arith.truncf %869 : vector<8x128xf32> to vector<8x128xbf16>
    %c0_357 = arith.constant 0 : index
    %c0_358 = arith.constant 0 : index
    %873 = vector.load %arg2[%c0_357, %c0_358] : memref<128x512xbf16, #tpu.memory_space<vmem>>, vector<128x512xbf16>
    %cst_359 = arith.constant dense<0.000000e+00> : vector<8x512xf32>
    %874 = tpu.matmul %872, %873, %cst_359 {dimension_numbers = #tpu.dot_dimension_numbers<[1], [0], [0], [1], [0, 0, 1, 1], [], []>} : vector<8x128xbf16>, vector<128x512xbf16>, vector<8x512xf32> -> vector<8x512xf32>
    %875 = arith.addf %871, %874 : vector<8x512xf32>
    %876 = vector.extract_strided_slice %875 {offsets = [0, 0], sizes = [8, 256], strides = [1, 1]} : vector<8x512xf32> to vector<8x256xf32>
    %877 = arith.negf %876 : vector<8x256xf32>
    %878 = math.exp %877 : vector<8x256xf32>
    %cst_360 = arith.constant 1.000000e+00 : f32
    %879 = vector.broadcast %cst_360 : f32 to vector<8x256xf32>
    %880 = arith.addf %879, %878 : vector<8x256xf32>
    %881 = arith.divf %879, %880 : vector<8x256xf32>
    %882 = vector.extract_strided_slice %881 {offsets = [0, 0], sizes = [8, 128], strides = [1, 1]} : vector<8x256xf32> to vector<8x128xf32>
    %883 = vector.extract_strided_slice %881 {offsets = [0, 128], sizes = [8, 128], strides = [1, 1]} : vector<8x256xf32> to vector<8x128xf32>
    %884 = vector.extract_strided_slice %875 {offsets = [0, 256], sizes = [8, 128], strides = [1, 1]} : vector<8x512xf32> to vector<8x128xf32>
    %885 = math.tanh %884 : vector<8x128xf32>
    %886 = arith.mulf %883, %861 : vector<8x128xf32>
    %887 = arith.mulf %882, %885 : vector<8x128xf32>
    %888 = arith.addf %886, %887 : vector<8x128xf32>
    %889 = math.tanh %888 : vector<8x128xf32>
    %890 = vector.extract_strided_slice %875 {offsets = [0, 384], sizes = [8, 128], strides = [1, 1]} : vector<8x512xf32> to vector<8x128xf32>
    %891 = arith.negf %890 : vector<8x128xf32>
    %892 = math.exp %891 : vector<8x128xf32>
    %cst_361 = arith.constant 1.000000e+00 : f32
    %893 = vector.broadcast %cst_361 : f32 to vector<8x128xf32>
    %894 = arith.addf %893, %892 : vector<8x128xf32>
    %895 = arith.divf %893, %894 : vector<8x128xf32>
    %896 = arith.mulf %895, %889 : vector<8x128xf32>
    %c0_362 = arith.constant 0 : index
    %c896 = arith.constant 896 : index
    %897 = vector.load %arg8[%c0_362, %c896] : memref<8x2560xf32, #tpu.memory_space<vmem>>, vector<8x128xf32>
    tpu.vector_store %arg8[%c0_362, %c896], %896 {strides = array<i32>} : memref<8x2560xf32, #tpu.memory_space<vmem>>, vector<8x128xf32>,
    %c64_363 = arith.constant 64 : index
    %c0_364 = arith.constant 0 : index
    %898 = vector.load %arg7[%c64_363, %c0_364] : memref<160x512xf32, #tpu.memory_space<vmem>>, vector<8x512xf32>
    %899 = arith.truncf %896 : vector<8x128xf32> to vector<8x128xbf16>
    %c0_365 = arith.constant 0 : index
    %c0_366 = arith.constant 0 : index
    %900 = vector.load %arg2[%c0_365, %c0_366] : memref<128x512xbf16, #tpu.memory_space<vmem>>, vector<128x512xbf16>
    %cst_367 = arith.constant dense<0.000000e+00> : vector<8x512xf32>
    %901 = tpu.matmul %899, %900, %cst_367 {dimension_numbers = #tpu.dot_dimension_numbers<[1], [0], [0], [1], [0, 0, 1, 1], [], []>} : vector<8x128xbf16>, vector<128x512xbf16>, vector<8x512xf32> -> vector<8x512xf32>
    %902 = arith.addf %898, %901 : vector<8x512xf32>
    %903 = vector.extract_strided_slice %902 {offsets = [0, 0], sizes = [8, 256], strides = [1, 1]} : vector<8x512xf32> to vector<8x256xf32>
    %904 = arith.negf %903 : vector<8x256xf32>
    %905 = math.exp %904 : vector<8x256xf32>
    %cst_368 = arith.constant 1.000000e+00 : f32
    %906 = vector.broadcast %cst_368 : f32 to vector<8x256xf32>
    %907 = arith.addf %906, %905 : vector<8x256xf32>
    %908 = arith.divf %906, %907 : vector<8x256xf32>
    %909 = vector.extract_strided_slice %908 {offsets = [0, 0], sizes = [8, 128], strides = [1, 1]} : vector<8x256xf32> to vector<8x128xf32>
    %910 = vector.extract_strided_slice %908 {offsets = [0, 128], sizes = [8, 128], strides = [1, 1]} : vector<8x256xf32> to vector<8x128xf32>
    %911 = vector.extract_strided_slice %902 {offsets = [0, 256], sizes = [8, 128], strides = [1, 1]} : vector<8x512xf32> to vector<8x128xf32>
    %912 = math.tanh %911 : vector<8x128xf32>
    %913 = arith.mulf %910, %888 : vector<8x128xf32>
    %914 = arith.mulf %909, %912 : vector<8x128xf32>
    %915 = arith.addf %913, %914 : vector<8x128xf32>
    %916 = math.tanh %915 : vector<8x128xf32>
    %917 = vector.extract_strided_slice %902 {offsets = [0, 384], sizes = [8, 128], strides = [1, 1]} : vector<8x512xf32> to vector<8x128xf32>
    %918 = arith.negf %917 : vector<8x128xf32>
    %919 = math.exp %918 : vector<8x128xf32>
    %cst_369 = arith.constant 1.000000e+00 : f32
    %920 = vector.broadcast %cst_369 : f32 to vector<8x128xf32>
    %921 = arith.addf %920, %919 : vector<8x128xf32>
    %922 = arith.divf %920, %921 : vector<8x128xf32>
    %923 = arith.mulf %922, %916 : vector<8x128xf32>
    %c0_370 = arith.constant 0 : index
    %c1024 = arith.constant 1024 : index
    %924 = vector.load %arg8[%c0_370, %c1024] : memref<8x2560xf32, #tpu.memory_space<vmem>>, vector<8x128xf32>
    tpu.vector_store %arg8[%c0_370, %c1024], %923 {strides = array<i32>} : memref<8x2560xf32, #tpu.memory_space<vmem>>, vector<8x128xf32>,
    %c72_371 = arith.constant 72 : index
    %c0_372 = arith.constant 0 : index
    %925 = vector.load %arg7[%c72_371, %c0_372] : memref<160x512xf32, #tpu.memory_space<vmem>>, vector<8x512xf32>
    %926 = arith.truncf %923 : vector<8x128xf32> to vector<8x128xbf16>
    %c0_373 = arith.constant 0 : index
    %c0_374 = arith.constant 0 : index
    %927 = vector.load %arg2[%c0_373, %c0_374] : memref<128x512xbf16, #tpu.memory_space<vmem>>, vector<128x512xbf16>
    %cst_375 = arith.constant dense<0.000000e+00> : vector<8x512xf32>
    %928 = tpu.matmul %926, %927, %cst_375 {dimension_numbers = #tpu.dot_dimension_numbers<[1], [0], [0], [1], [0, 0, 1, 1], [], []>} : vector<8x128xbf16>, vector<128x512xbf16>, vector<8x512xf32> -> vector<8x512xf32>
    %929 = arith.addf %925, %928 : vector<8x512xf32>
    %930 = vector.extract_strided_slice %929 {offsets = [0, 0], sizes = [8, 256], strides = [1, 1]} : vector<8x512xf32> to vector<8x256xf32>
    %931 = arith.negf %930 : vector<8x256xf32>
    %932 = math.exp %931 : vector<8x256xf32>
    %cst_376 = arith.constant 1.000000e+00 : f32
    %933 = vector.broadcast %cst_376 : f32 to vector<8x256xf32>
    %934 = arith.addf %933, %932 : vector<8x256xf32>
    %935 = arith.divf %933, %934 : vector<8x256xf32>
    %936 = vector.extract_strided_slice %935 {offsets = [0, 0], sizes = [8, 128], strides = [1, 1]} : vector<8x256xf32> to vector<8x128xf32>
    %937 = vector.extract_strided_slice %935 {offsets = [0, 128], sizes = [8, 128], strides = [1, 1]} : vector<8x256xf32> to vector<8x128xf32>
    %938 = vector.extract_strided_slice %929 {offsets = [0, 256], sizes = [8, 128], strides = [1, 1]} : vector<8x512xf32> to vector<8x128xf32>
    %939 = math.tanh %938 : vector<8x128xf32>
    %940 = arith.mulf %937, %915 : vector<8x128xf32>
    %941 = arith.mulf %936, %939 : vector<8x128xf32>
    %942 = arith.addf %940, %941 : vector<8x128xf32>
    %943 = math.tanh %942 : vector<8x128xf32>
    %944 = vector.extract_strided_slice %929 {offsets = [0, 384], sizes = [8, 128], strides = [1, 1]} : vector<8x512xf32> to vector<8x128xf32>
    %945 = arith.negf %944 : vector<8x128xf32>
    %946 = math.exp %945 : vector<8x128xf32>
    %cst_377 = arith.constant 1.000000e+00 : f32
    %947 = vector.broadcast %cst_377 : f32 to vector<8x128xf32>
    %948 = arith.addf %947, %946 : vector<8x128xf32>
    %949 = arith.divf %947, %948 : vector<8x128xf32>
    %950 = arith.mulf %949, %943 : vector<8x128xf32>
    %c0_378 = arith.constant 0 : index
    %c1152 = arith.constant 1152 : index
    %951 = vector.load %arg8[%c0_378, %c1152] : memref<8x2560xf32, #tpu.memory_space<vmem>>, vector<8x128xf32>
    tpu.vector_store %arg8[%c0_378, %c1152], %950 {strides = array<i32>} : memref<8x2560xf32, #tpu.memory_space<vmem>>, vector<8x128xf32>,
    %c80_379 = arith.constant 80 : index
    %c0_380 = arith.constant 0 : index
    %952 = vector.load %arg7[%c80_379, %c0_380] : memref<160x512xf32, #tpu.memory_space<vmem>>, vector<8x512xf32>
    %953 = arith.truncf %950 : vector<8x128xf32> to vector<8x128xbf16>
    %c0_381 = arith.constant 0 : index
    %c0_382 = arith.constant 0 : index
    %954 = vector.load %arg2[%c0_381, %c0_382] : memref<128x512xbf16, #tpu.memory_space<vmem>>, vector<128x512xbf16>
    %cst_383 = arith.constant dense<0.000000e+00> : vector<8x512xf32>
    %955 = tpu.matmul %953, %954, %cst_383 {dimension_numbers = #tpu.dot_dimension_numbers<[1], [0], [0], [1], [0, 0, 1, 1], [], []>} : vector<8x128xbf16>, vector<128x512xbf16>, vector<8x512xf32> -> vector<8x512xf32>
    %956 = arith.addf %952, %955 : vector<8x512xf32>
    %957 = vector.extract_strided_slice %956 {offsets = [0, 0], sizes = [8, 256], strides = [1, 1]} : vector<8x512xf32> to vector<8x256xf32>
    %958 = arith.negf %957 : vector<8x256xf32>
    %959 = math.exp %958 : vector<8x256xf32>
    %cst_384 = arith.constant 1.000000e+00 : f32
    %960 = vector.broadcast %cst_384 : f32 to vector<8x256xf32>
    %961 = arith.addf %960, %959 : vector<8x256xf32>
    %962 = arith.divf %960, %961 : vector<8x256xf32>
    %963 = vector.extract_strided_slice %962 {offsets = [0, 0], sizes = [8, 128], strides = [1, 1]} : vector<8x256xf32> to vector<8x128xf32>
    %964 = vector.extract_strided_slice %962 {offsets = [0, 128], sizes = [8, 128], strides = [1, 1]} : vector<8x256xf32> to vector<8x128xf32>
    %965 = vector.extract_strided_slice %956 {offsets = [0, 256], sizes = [8, 128], strides = [1, 1]} : vector<8x512xf32> to vector<8x128xf32>
    %966 = math.tanh %965 : vector<8x128xf32>
    %967 = arith.mulf %964, %942 : vector<8x128xf32>
    %968 = arith.mulf %963, %966 : vector<8x128xf32>
    %969 = arith.addf %967, %968 : vector<8x128xf32>
    %970 = math.tanh %969 : vector<8x128xf32>
    %971 = vector.extract_strided_slice %956 {offsets = [0, 384], sizes = [8, 128], strides = [1, 1]} : vector<8x512xf32> to vector<8x128xf32>
    %972 = arith.negf %971 : vector<8x128xf32>
    %973 = math.exp %972 : vector<8x128xf32>
    %cst_385 = arith.constant 1.000000e+00 : f32
    %974 = vector.broadcast %cst_385 : f32 to vector<8x128xf32>
    %975 = arith.addf %974, %973 : vector<8x128xf32>
    %976 = arith.divf %974, %975 : vector<8x128xf32>
    %977 = arith.mulf %976, %970 : vector<8x128xf32>
    %c0_386 = arith.constant 0 : index
    %c1280 = arith.constant 1280 : index
    %978 = vector.load %arg8[%c0_386, %c1280] : memref<8x2560xf32, #tpu.memory_space<vmem>>, vector<8x128xf32>
    tpu.vector_store %arg8[%c0_386, %c1280], %977 {strides = array<i32>} : memref<8x2560xf32, #tpu.memory_space<vmem>>, vector<8x128xf32>,
    %c88_387 = arith.constant 88 : index
    %c0_388 = arith.constant 0 : index
    %979 = vector.load %arg7[%c88_387, %c0_388] : memref<160x512xf32, #tpu.memory_space<vmem>>, vector<8x512xf32>
    %980 = arith.truncf %977 : vector<8x128xf32> to vector<8x128xbf16>
    %c0_389 = arith.constant 0 : index
    %c0_390 = arith.constant 0 : index
    %981 = vector.load %arg2[%c0_389, %c0_390] : memref<128x512xbf16, #tpu.memory_space<vmem>>, vector<128x512xbf16>
    %cst_391 = arith.constant dense<0.000000e+00> : vector<8x512xf32>
    %982 = tpu.matmul %980, %981, %cst_391 {dimension_numbers = #tpu.dot_dimension_numbers<[1], [0], [0], [1], [0, 0, 1, 1], [], []>} : vector<8x128xbf16>, vector<128x512xbf16>, vector<8x512xf32> -> vector<8x512xf32>
    %983 = arith.addf %979, %982 : vector<8x512xf32>
    %984 = vector.extract_strided_slice %983 {offsets = [0, 0], sizes = [8, 256], strides = [1, 1]} : vector<8x512xf32> to vector<8x256xf32>
    %985 = arith.negf %984 : vector<8x256xf32>
    %986 = math.exp %985 : vector<8x256xf32>
    %cst_392 = arith.constant 1.000000e+00 : f32
    %987 = vector.broadcast %cst_392 : f32 to vector<8x256xf32>
    %988 = arith.addf %987, %986 : vector<8x256xf32>
    %989 = arith.divf %987, %988 : vector<8x256xf32>
    %990 = vector.extract_strided_slice %989 {offsets = [0, 0], sizes = [8, 128], strides = [1, 1]} : vector<8x256xf32> to vector<8x128xf32>
    %991 = vector.extract_strided_slice %989 {offsets = [0, 128], sizes = [8, 128], strides = [1, 1]} : vector<8x256xf32> to vector<8x128xf32>
    %992 = vector.extract_strided_slice %983 {offsets = [0, 256], sizes = [8, 128], strides = [1, 1]} : vector<8x512xf32> to vector<8x128xf32>
    %993 = math.tanh %992 : vector<8x128xf32>
    %994 = arith.mulf %991, %969 : vector<8x128xf32>
    %995 = arith.mulf %990, %993 : vector<8x128xf32>
    %996 = arith.addf %994, %995 : vector<8x128xf32>
    %997 = math.tanh %996 : vector<8x128xf32>
    %998 = vector.extract_strided_slice %983 {offsets = [0, 384], sizes = [8, 128], strides = [1, 1]} : vector<8x512xf32> to vector<8x128xf32>
    %999 = arith.negf %998 : vector<8x128xf32>
    %1000 = math.exp %999 : vector<8x128xf32>
    %cst_393 = arith.constant 1.000000e+00 : f32
    %1001 = vector.broadcast %cst_393 : f32 to vector<8x128xf32>
    %1002 = arith.addf %1001, %1000 : vector<8x128xf32>
    %1003 = arith.divf %1001, %1002 : vector<8x128xf32>
    %1004 = arith.mulf %1003, %997 : vector<8x128xf32>
    %c0_394 = arith.constant 0 : index
    %c1408 = arith.constant 1408 : index
    %1005 = vector.load %arg8[%c0_394, %c1408] : memref<8x2560xf32, #tpu.memory_space<vmem>>, vector<8x128xf32>
    tpu.vector_store %arg8[%c0_394, %c1408], %1004 {strides = array<i32>} : memref<8x2560xf32, #tpu.memory_space<vmem>>, vector<8x128xf32>,
    %c96_395 = arith.constant 96 : index
    %c0_396 = arith.constant 0 : index
    %1006 = vector.load %arg7[%c96_395, %c0_396] : memref<160x512xf32, #tpu.memory_space<vmem>>, vector<8x512xf32>
    %1007 = arith.truncf %1004 : vector<8x128xf32> to vector<8x128xbf16>
    %c0_397 = arith.constant 0 : index
    %c0_398 = arith.constant 0 : index
    %1008 = vector.load %arg2[%c0_397, %c0_398] : memref<128x512xbf16, #tpu.memory_space<vmem>>, vector<128x512xbf16>
    %cst_399 = arith.constant dense<0.000000e+00> : vector<8x512xf32>
    %1009 = tpu.matmul %1007, %1008, %cst_399 {dimension_numbers = #tpu.dot_dimension_numbers<[1], [0], [0], [1], [0, 0, 1, 1], [], []>} : vector<8x128xbf16>, vector<128x512xbf16>, vector<8x512xf32> -> vector<8x512xf32>
    %1010 = arith.addf %1006, %1009 : vector<8x512xf32>
    %1011 = vector.extract_strided_slice %1010 {offsets = [0, 0], sizes = [8, 256], strides = [1, 1]} : vector<8x512xf32> to vector<8x256xf32>
    %1012 = arith.negf %1011 : vector<8x256xf32>
    %1013 = math.exp %1012 : vector<8x256xf32>
    %cst_400 = arith.constant 1.000000e+00 : f32
    %1014 = vector.broadcast %cst_400 : f32 to vector<8x256xf32>
    %1015 = arith.addf %1014, %1013 : vector<8x256xf32>
    %1016 = arith.divf %1014, %1015 : vector<8x256xf32>
    %1017 = vector.extract_strided_slice %1016 {offsets = [0, 0], sizes = [8, 128], strides = [1, 1]} : vector<8x256xf32> to vector<8x128xf32>
    %1018 = vector.extract_strided_slice %1016 {offsets = [0, 128], sizes = [8, 128], strides = [1, 1]} : vector<8x256xf32> to vector<8x128xf32>
    %1019 = vector.extract_strided_slice %1010 {offsets = [0, 256], sizes = [8, 128], strides = [1, 1]} : vector<8x512xf32> to vector<8x128xf32>
    %1020 = math.tanh %1019 : vector<8x128xf32>
    %1021 = arith.mulf %1018, %996 : vector<8x128xf32>
    %1022 = arith.mulf %1017, %1020 : vector<8x128xf32>
    %1023 = arith.addf %1021, %1022 : vector<8x128xf32>
    %1024 = math.tanh %1023 : vector<8x128xf32>
    %1025 = vector.extract_strided_slice %1010 {offsets = [0, 384], sizes = [8, 128], strides = [1, 1]} : vector<8x512xf32> to vector<8x128xf32>
    %1026 = arith.negf %1025 : vector<8x128xf32>
    %1027 = math.exp %1026 : vector<8x128xf32>
    %cst_401 = arith.constant 1.000000e+00 : f32
    %1028 = vector.broadcast %cst_401 : f32 to vector<8x128xf32>
    %1029 = arith.addf %1028, %1027 : vector<8x128xf32>
    %1030 = arith.divf %1028, %1029 : vector<8x128xf32>
    %1031 = arith.mulf %1030, %1024 : vector<8x128xf32>
    %c0_402 = arith.constant 0 : index
    %c1536 = arith.constant 1536 : index
    %1032 = vector.load %arg8[%c0_402, %c1536] : memref<8x2560xf32, #tpu.memory_space<vmem>>, vector<8x128xf32>
    tpu.vector_store %arg8[%c0_402, %c1536], %1031 {strides = array<i32>} : memref<8x2560xf32, #tpu.memory_space<vmem>>, vector<8x128xf32>,
    %c104_403 = arith.constant 104 : index
    %c0_404 = arith.constant 0 : index
    %1033 = vector.load %arg7[%c104_403, %c0_404] : memref<160x512xf32, #tpu.memory_space<vmem>>, vector<8x512xf32>
    %1034 = arith.truncf %1031 : vector<8x128xf32> to vector<8x128xbf16>
    %c0_405 = arith.constant 0 : index
    %c0_406 = arith.constant 0 : index
    %1035 = vector.load %arg2[%c0_405, %c0_406] : memref<128x512xbf16, #tpu.memory_space<vmem>>, vector<128x512xbf16>
    %cst_407 = arith.constant dense<0.000000e+00> : vector<8x512xf32>
    %1036 = tpu.matmul %1034, %1035, %cst_407 {dimension_numbers = #tpu.dot_dimension_numbers<[1], [0], [0], [1], [0, 0, 1, 1], [], []>} : vector<8x128xbf16>, vector<128x512xbf16>, vector<8x512xf32> -> vector<8x512xf32>
    %1037 = arith.addf %1033, %1036 : vector<8x512xf32>
    %1038 = vector.extract_strided_slice %1037 {offsets = [0, 0], sizes = [8, 256], strides = [1, 1]} : vector<8x512xf32> to vector<8x256xf32>
    %1039 = arith.negf %1038 : vector<8x256xf32>
    %1040 = math.exp %1039 : vector<8x256xf32>
    %cst_408 = arith.constant 1.000000e+00 : f32
    %1041 = vector.broadcast %cst_408 : f32 to vector<8x256xf32>
    %1042 = arith.addf %1041, %1040 : vector<8x256xf32>
    %1043 = arith.divf %1041, %1042 : vector<8x256xf32>
    %1044 = vector.extract_strided_slice %1043 {offsets = [0, 0], sizes = [8, 128], strides = [1, 1]} : vector<8x256xf32> to vector<8x128xf32>
    %1045 = vector.extract_strided_slice %1043 {offsets = [0, 128], sizes = [8, 128], strides = [1, 1]} : vector<8x256xf32> to vector<8x128xf32>
    %1046 = vector.extract_strided_slice %1037 {offsets = [0, 256], sizes = [8, 128], strides = [1, 1]} : vector<8x512xf32> to vector<8x128xf32>
    %1047 = math.tanh %1046 : vector<8x128xf32>
    %1048 = arith.mulf %1045, %1023 : vector<8x128xf32>
    %1049 = arith.mulf %1044, %1047 : vector<8x128xf32>
    %1050 = arith.addf %1048, %1049 : vector<8x128xf32>
    %1051 = math.tanh %1050 : vector<8x128xf32>
    %1052 = vector.extract_strided_slice %1037 {offsets = [0, 384], sizes = [8, 128], strides = [1, 1]} : vector<8x512xf32> to vector<8x128xf32>
    %1053 = arith.negf %1052 : vector<8x128xf32>
    %1054 = math.exp %1053 : vector<8x128xf32>
    %cst_409 = arith.constant 1.000000e+00 : f32
    %1055 = vector.broadcast %cst_409 : f32 to vector<8x128xf32>
    %1056 = arith.addf %1055, %1054 : vector<8x128xf32>
    %1057 = arith.divf %1055, %1056 : vector<8x128xf32>
    %1058 = arith.mulf %1057, %1051 : vector<8x128xf32>
    %c0_410 = arith.constant 0 : index
    %c1664 = arith.constant 1664 : index
    %1059 = vector.load %arg8[%c0_410, %c1664] : memref<8x2560xf32, #tpu.memory_space<vmem>>, vector<8x128xf32>
    tpu.vector_store %arg8[%c0_410, %c1664], %1058 {strides = array<i32>} : memref<8x2560xf32, #tpu.memory_space<vmem>>, vector<8x128xf32>,
    %c112_411 = arith.constant 112 : index
    %c0_412 = arith.constant 0 : index
    %1060 = vector.load %arg7[%c112_411, %c0_412] : memref<160x512xf32, #tpu.memory_space<vmem>>, vector<8x512xf32>
    %1061 = arith.truncf %1058 : vector<8x128xf32> to vector<8x128xbf16>
    %c0_413 = arith.constant 0 : index
    %c0_414 = arith.constant 0 : index
    %1062 = vector.load %arg2[%c0_413, %c0_414] : memref<128x512xbf16, #tpu.memory_space<vmem>>, vector<128x512xbf16>
    %cst_415 = arith.constant dense<0.000000e+00> : vector<8x512xf32>
    %1063 = tpu.matmul %1061, %1062, %cst_415 {dimension_numbers = #tpu.dot_dimension_numbers<[1], [0], [0], [1], [0, 0, 1, 1], [], []>} : vector<8x128xbf16>, vector<128x512xbf16>, vector<8x512xf32> -> vector<8x512xf32>
    %1064 = arith.addf %1060, %1063 : vector<8x512xf32>
    %1065 = vector.extract_strided_slice %1064 {offsets = [0, 0], sizes = [8, 256], strides = [1, 1]} : vector<8x512xf32> to vector<8x256xf32>
    %1066 = arith.negf %1065 : vector<8x256xf32>
    %1067 = math.exp %1066 : vector<8x256xf32>
    %cst_416 = arith.constant 1.000000e+00 : f32
    %1068 = vector.broadcast %cst_416 : f32 to vector<8x256xf32>
    %1069 = arith.addf %1068, %1067 : vector<8x256xf32>
    %1070 = arith.divf %1068, %1069 : vector<8x256xf32>
    %1071 = vector.extract_strided_slice %1070 {offsets = [0, 0], sizes = [8, 128], strides = [1, 1]} : vector<8x256xf32> to vector<8x128xf32>
    %1072 = vector.extract_strided_slice %1070 {offsets = [0, 128], sizes = [8, 128], strides = [1, 1]} : vector<8x256xf32> to vector<8x128xf32>
    %1073 = vector.extract_strided_slice %1064 {offsets = [0, 256], sizes = [8, 128], strides = [1, 1]} : vector<8x512xf32> to vector<8x128xf32>
    %1074 = math.tanh %1073 : vector<8x128xf32>
    %1075 = arith.mulf %1072, %1050 : vector<8x128xf32>
    %1076 = arith.mulf %1071, %1074 : vector<8x128xf32>
    %1077 = arith.addf %1075, %1076 : vector<8x128xf32>
    %1078 = math.tanh %1077 : vector<8x128xf32>
    %1079 = vector.extract_strided_slice %1064 {offsets = [0, 384], sizes = [8, 128], strides = [1, 1]} : vector<8x512xf32> to vector<8x128xf32>
    %1080 = arith.negf %1079 : vector<8x128xf32>
    %1081 = math.exp %1080 : vector<8x128xf32>
    %cst_417 = arith.constant 1.000000e+00 : f32
    %1082 = vector.broadcast %cst_417 : f32 to vector<8x128xf32>
    %1083 = arith.addf %1082, %1081 : vector<8x128xf32>
    %1084 = arith.divf %1082, %1083 : vector<8x128xf32>
    %1085 = arith.mulf %1084, %1078 : vector<8x128xf32>
    %c0_418 = arith.constant 0 : index
    %c1792 = arith.constant 1792 : index
    %1086 = vector.load %arg8[%c0_418, %c1792] : memref<8x2560xf32, #tpu.memory_space<vmem>>, vector<8x128xf32>
    tpu.vector_store %arg8[%c0_418, %c1792], %1085 {strides = array<i32>} : memref<8x2560xf32, #tpu.memory_space<vmem>>, vector<8x128xf32>,
    %c120_419 = arith.constant 120 : index
    %c0_420 = arith.constant 0 : index
    %1087 = vector.load %arg7[%c120_419, %c0_420] : memref<160x512xf32, #tpu.memory_space<vmem>>, vector<8x512xf32>
    %1088 = arith.truncf %1085 : vector<8x128xf32> to vector<8x128xbf16>
    %c0_421 = arith.constant 0 : index
    %c0_422 = arith.constant 0 : index
    %1089 = vector.load %arg2[%c0_421, %c0_422] : memref<128x512xbf16, #tpu.memory_space<vmem>>, vector<128x512xbf16>
    %cst_423 = arith.constant dense<0.000000e+00> : vector<8x512xf32>
    %1090 = tpu.matmul %1088, %1089, %cst_423 {dimension_numbers = #tpu.dot_dimension_numbers<[1], [0], [0], [1], [0, 0, 1, 1], [], []>} : vector<8x128xbf16>, vector<128x512xbf16>, vector<8x512xf32> -> vector<8x512xf32>
    %1091 = arith.addf %1087, %1090 : vector<8x512xf32>
    %1092 = vector.extract_strided_slice %1091 {offsets = [0, 0], sizes = [8, 256], strides = [1, 1]} : vector<8x512xf32> to vector<8x256xf32>
    %1093 = arith.negf %1092 : vector<8x256xf32>
    %1094 = math.exp %1093 : vector<8x256xf32>
    %cst_424 = arith.constant 1.000000e+00 : f32
    %1095 = vector.broadcast %cst_424 : f32 to vector<8x256xf32>
    %1096 = arith.addf %1095, %1094 : vector<8x256xf32>
    %1097 = arith.divf %1095, %1096 : vector<8x256xf32>
    %1098 = vector.extract_strided_slice %1097 {offsets = [0, 0], sizes = [8, 128], strides = [1, 1]} : vector<8x256xf32> to vector<8x128xf32>
    %1099 = vector.extract_strided_slice %1097 {offsets = [0, 128], sizes = [8, 128], strides = [1, 1]} : vector<8x256xf32> to vector<8x128xf32>
    %1100 = vector.extract_strided_slice %1091 {offsets = [0, 256], sizes = [8, 128], strides = [1, 1]} : vector<8x512xf32> to vector<8x128xf32>
    %1101 = math.tanh %1100 : vector<8x128xf32>
    %1102 = arith.mulf %1099, %1077 : vector<8x128xf32>
    %1103 = arith.mulf %1098, %1101 : vector<8x128xf32>
    %1104 = arith.addf %1102, %1103 : vector<8x128xf32>
    %1105 = math.tanh %1104 : vector<8x128xf32>
    %1106 = vector.extract_strided_slice %1091 {offsets = [0, 384], sizes = [8, 128], strides = [1, 1]} : vector<8x512xf32> to vector<8x128xf32>
    %1107 = arith.negf %1106 : vector<8x128xf32>
    %1108 = math.exp %1107 : vector<8x128xf32>
    %cst_425 = arith.constant 1.000000e+00 : f32
    %1109 = vector.broadcast %cst_425 : f32 to vector<8x128xf32>
    %1110 = arith.addf %1109, %1108 : vector<8x128xf32>
    %1111 = arith.divf %1109, %1110 : vector<8x128xf32>
    %1112 = arith.mulf %1111, %1105 : vector<8x128xf32>
    %c0_426 = arith.constant 0 : index
    %c1920 = arith.constant 1920 : index
    %1113 = vector.load %arg8[%c0_426, %c1920] : memref<8x2560xf32, #tpu.memory_space<vmem>>, vector<8x128xf32>
    tpu.vector_store %arg8[%c0_426, %c1920], %1112 {strides = array<i32>} : memref<8x2560xf32, #tpu.memory_space<vmem>>, vector<8x128xf32>,
    %c128_427 = arith.constant 128 : index
    %c0_428 = arith.constant 0 : index
    %1114 = vector.load %arg7[%c128_427, %c0_428] : memref<160x512xf32, #tpu.memory_space<vmem>>, vector<8x512xf32>
    %1115 = arith.truncf %1112 : vector<8x128xf32> to vector<8x128xbf16>
    %c0_429 = arith.constant 0 : index
    %c0_430 = arith.constant 0 : index
    %1116 = vector.load %arg2[%c0_429, %c0_430] : memref<128x512xbf16, #tpu.memory_space<vmem>>, vector<128x512xbf16>
    %cst_431 = arith.constant dense<0.000000e+00> : vector<8x512xf32>
    %1117 = tpu.matmul %1115, %1116, %cst_431 {dimension_numbers = #tpu.dot_dimension_numbers<[1], [0], [0], [1], [0, 0, 1, 1], [], []>} : vector<8x128xbf16>, vector<128x512xbf16>, vector<8x512xf32> -> vector<8x512xf32>
    %1118 = arith.addf %1114, %1117 : vector<8x512xf32>
    %1119 = vector.extract_strided_slice %1118 {offsets = [0, 0], sizes = [8, 256], strides = [1, 1]} : vector<8x512xf32> to vector<8x256xf32>
    %1120 = arith.negf %1119 : vector<8x256xf32>
    %1121 = math.exp %1120 : vector<8x256xf32>
    %cst_432 = arith.constant 1.000000e+00 : f32
    %1122 = vector.broadcast %cst_432 : f32 to vector<8x256xf32>
    %1123 = arith.addf %1122, %1121 : vector<8x256xf32>
    %1124 = arith.divf %1122, %1123 : vector<8x256xf32>
    %1125 = vector.extract_strided_slice %1124 {offsets = [0, 0], sizes = [8, 128], strides = [1, 1]} : vector<8x256xf32> to vector<8x128xf32>
    %1126 = vector.extract_strided_slice %1124 {offsets = [0, 128], sizes = [8, 128], strides = [1, 1]} : vector<8x256xf32> to vector<8x128xf32>
    %1127 = vector.extract_strided_slice %1118 {offsets = [0, 256], sizes = [8, 128], strides = [1, 1]} : vector<8x512xf32> to vector<8x128xf32>
    %1128 = math.tanh %1127 : vector<8x128xf32>
    %1129 = arith.mulf %1126, %1104 : vector<8x128xf32>
    %1130 = arith.mulf %1125, %1128 : vector<8x128xf32>
    %1131 = arith.addf %1129, %1130 : vector<8x128xf32>
    %1132 = math.tanh %1131 : vector<8x128xf32>
    %1133 = vector.extract_strided_slice %1118 {offsets = [0, 384], sizes = [8, 128], strides = [1, 1]} : vector<8x512xf32> to vector<8x128xf32>
    %1134 = arith.negf %1133 : vector<8x128xf32>
    %1135 = math.exp %1134 : vector<8x128xf32>
    %cst_433 = arith.constant 1.000000e+00 : f32
    %1136 = vector.broadcast %cst_433 : f32 to vector<8x128xf32>
    %1137 = arith.addf %1136, %1135 : vector<8x128xf32>
    %1138 = arith.divf %1136, %1137 : vector<8x128xf32>
    %1139 = arith.mulf %1138, %1132 : vector<8x128xf32>
    %c0_434 = arith.constant 0 : index
    %c2048 = arith.constant 2048 : index
    %1140 = vector.load %arg8[%c0_434, %c2048] : memref<8x2560xf32, #tpu.memory_space<vmem>>, vector<8x128xf32>
    tpu.vector_store %arg8[%c0_434, %c2048], %1139 {strides = array<i32>} : memref<8x2560xf32, #tpu.memory_space<vmem>>, vector<8x128xf32>,
    %c136_435 = arith.constant 136 : index
    %c0_436 = arith.constant 0 : index
    %1141 = vector.load %arg7[%c136_435, %c0_436] : memref<160x512xf32, #tpu.memory_space<vmem>>, vector<8x512xf32>
    %1142 = arith.truncf %1139 : vector<8x128xf32> to vector<8x128xbf16>
    %c0_437 = arith.constant 0 : index
    %c0_438 = arith.constant 0 : index
    %1143 = vector.load %arg2[%c0_437, %c0_438] : memref<128x512xbf16, #tpu.memory_space<vmem>>, vector<128x512xbf16>
    %cst_439 = arith.constant dense<0.000000e+00> : vector<8x512xf32>
    %1144 = tpu.matmul %1142, %1143, %cst_439 {dimension_numbers = #tpu.dot_dimension_numbers<[1], [0], [0], [1], [0, 0, 1, 1], [], []>} : vector<8x128xbf16>, vector<128x512xbf16>, vector<8x512xf32> -> vector<8x512xf32>
    %1145 = arith.addf %1141, %1144 : vector<8x512xf32>
    %1146 = vector.extract_strided_slice %1145 {offsets = [0, 0], sizes = [8, 256], strides = [1, 1]} : vector<8x512xf32> to vector<8x256xf32>
    %1147 = arith.negf %1146 : vector<8x256xf32>
    %1148 = math.exp %1147 : vector<8x256xf32>
    %cst_440 = arith.constant 1.000000e+00 : f32
    %1149 = vector.broadcast %cst_440 : f32 to vector<8x256xf32>
    %1150 = arith.addf %1149, %1148 : vector<8x256xf32>
    %1151 = arith.divf %1149, %1150 : vector<8x256xf32>
    %1152 = vector.extract_strided_slice %1151 {offsets = [0, 0], sizes = [8, 128], strides = [1, 1]} : vector<8x256xf32> to vector<8x128xf32>
    %1153 = vector.extract_strided_slice %1151 {offsets = [0, 128], sizes = [8, 128], strides = [1, 1]} : vector<8x256xf32> to vector<8x128xf32>
    %1154 = vector.extract_strided_slice %1145 {offsets = [0, 256], sizes = [8, 128], strides = [1, 1]} : vector<8x512xf32> to vector<8x128xf32>
    %1155 = math.tanh %1154 : vector<8x128xf32>
    %1156 = arith.mulf %1153, %1131 : vector<8x128xf32>
    %1157 = arith.mulf %1152, %1155 : vector<8x128xf32>
    %1158 = arith.addf %1156, %1157 : vector<8x128xf32>
    %1159 = math.tanh %1158 : vector<8x128xf32>
    %1160 = vector.extract_strided_slice %1145 {offsets = [0, 384], sizes = [8, 128], strides = [1, 1]} : vector<8x512xf32> to vector<8x128xf32>
    %1161 = arith.negf %1160 : vector<8x128xf32>
    %1162 = math.exp %1161 : vector<8x128xf32>
    %cst_441 = arith.constant 1.000000e+00 : f32
    %1163 = vector.broadcast %cst_441 : f32 to vector<8x128xf32>
    %1164 = arith.addf %1163, %1162 : vector<8x128xf32>
    %1165 = arith.divf %1163, %1164 : vector<8x128xf32>
    %1166 = arith.mulf %1165, %1159 : vector<8x128xf32>
    %c0_442 = arith.constant 0 : index
    %c2176 = arith.constant 2176 : index
    %1167 = vector.load %arg8[%c0_442, %c2176] : memref<8x2560xf32, #tpu.memory_space<vmem>>, vector<8x128xf32>
    tpu.vector_store %arg8[%c0_442, %c2176], %1166 {strides = array<i32>} : memref<8x2560xf32, #tpu.memory_space<vmem>>, vector<8x128xf32>,
    %c144_443 = arith.constant 144 : index
    %c0_444 = arith.constant 0 : index
    %1168 = vector.load %arg7[%c144_443, %c0_444] : memref<160x512xf32, #tpu.memory_space<vmem>>, vector<8x512xf32>
    %1169 = arith.truncf %1166 : vector<8x128xf32> to vector<8x128xbf16>
    %c0_445 = arith.constant 0 : index
    %c0_446 = arith.constant 0 : index
    %1170 = vector.load %arg2[%c0_445, %c0_446] : memref<128x512xbf16, #tpu.memory_space<vmem>>, vector<128x512xbf16>
    %cst_447 = arith.constant dense<0.000000e+00> : vector<8x512xf32>
    %1171 = tpu.matmul %1169, %1170, %cst_447 {dimension_numbers = #tpu.dot_dimension_numbers<[1], [0], [0], [1], [0, 0, 1, 1], [], []>} : vector<8x128xbf16>, vector<128x512xbf16>, vector<8x512xf32> -> vector<8x512xf32>
    %1172 = arith.addf %1168, %1171 : vector<8x512xf32>
    %1173 = vector.extract_strided_slice %1172 {offsets = [0, 0], sizes = [8, 256], strides = [1, 1]} : vector<8x512xf32> to vector<8x256xf32>
    %1174 = arith.negf %1173 : vector<8x256xf32>
    %1175 = math.exp %1174 : vector<8x256xf32>
    %cst_448 = arith.constant 1.000000e+00 : f32
    %1176 = vector.broadcast %cst_448 : f32 to vector<8x256xf32>
    %1177 = arith.addf %1176, %1175 : vector<8x256xf32>
    %1178 = arith.divf %1176, %1177 : vector<8x256xf32>
    %1179 = vector.extract_strided_slice %1178 {offsets = [0, 0], sizes = [8, 128], strides = [1, 1]} : vector<8x256xf32> to vector<8x128xf32>
    %1180 = vector.extract_strided_slice %1178 {offsets = [0, 128], sizes = [8, 128], strides = [1, 1]} : vector<8x256xf32> to vector<8x128xf32>
    %1181 = vector.extract_strided_slice %1172 {offsets = [0, 256], sizes = [8, 128], strides = [1, 1]} : vector<8x512xf32> to vector<8x128xf32>
    %1182 = math.tanh %1181 : vector<8x128xf32>
    %1183 = arith.mulf %1180, %1158 : vector<8x128xf32>
    %1184 = arith.mulf %1179, %1182 : vector<8x128xf32>
    %1185 = arith.addf %1183, %1184 : vector<8x128xf32>
    %1186 = math.tanh %1185 : vector<8x128xf32>
    %1187 = vector.extract_strided_slice %1172 {offsets = [0, 384], sizes = [8, 128], strides = [1, 1]} : vector<8x512xf32> to vector<8x128xf32>
    %1188 = arith.negf %1187 : vector<8x128xf32>
    %1189 = math.exp %1188 : vector<8x128xf32>
    %cst_449 = arith.constant 1.000000e+00 : f32
    %1190 = vector.broadcast %cst_449 : f32 to vector<8x128xf32>
    %1191 = arith.addf %1190, %1189 : vector<8x128xf32>
    %1192 = arith.divf %1190, %1191 : vector<8x128xf32>
    %1193 = arith.mulf %1192, %1186 : vector<8x128xf32>
    %c0_450 = arith.constant 0 : index
    %c2304 = arith.constant 2304 : index
    %1194 = vector.load %arg8[%c0_450, %c2304] : memref<8x2560xf32, #tpu.memory_space<vmem>>, vector<8x128xf32>
    tpu.vector_store %arg8[%c0_450, %c2304], %1193 {strides = array<i32>} : memref<8x2560xf32, #tpu.memory_space<vmem>>, vector<8x128xf32>,
    %c152_451 = arith.constant 152 : index
    %c0_452 = arith.constant 0 : index
    %1195 = vector.load %arg7[%c152_451, %c0_452] : memref<160x512xf32, #tpu.memory_space<vmem>>, vector<8x512xf32>
    %1196 = arith.truncf %1193 : vector<8x128xf32> to vector<8x128xbf16>
    %c0_453 = arith.constant 0 : index
    %c0_454 = arith.constant 0 : index
    %1197 = vector.load %arg2[%c0_453, %c0_454] : memref<128x512xbf16, #tpu.memory_space<vmem>>, vector<128x512xbf16>
    %cst_455 = arith.constant dense<0.000000e+00> : vector<8x512xf32>
    %1198 = tpu.matmul %1196, %1197, %cst_455 {dimension_numbers = #tpu.dot_dimension_numbers<[1], [0], [0], [1], [0, 0, 1, 1], [], []>} : vector<8x128xbf16>, vector<128x512xbf16>, vector<8x512xf32> -> vector<8x512xf32>
    %1199 = arith.addf %1195, %1198 : vector<8x512xf32>
    %1200 = vector.extract_strided_slice %1199 {offsets = [0, 0], sizes = [8, 256], strides = [1, 1]} : vector<8x512xf32> to vector<8x256xf32>
    %1201 = arith.negf %1200 : vector<8x256xf32>
    %1202 = math.exp %1201 : vector<8x256xf32>
    %cst_456 = arith.constant 1.000000e+00 : f32
    %1203 = vector.broadcast %cst_456 : f32 to vector<8x256xf32>
    %1204 = arith.addf %1203, %1202 : vector<8x256xf32>
    %1205 = arith.divf %1203, %1204 : vector<8x256xf32>
    %1206 = vector.extract_strided_slice %1205 {offsets = [0, 0], sizes = [8, 128], strides = [1, 1]} : vector<8x256xf32> to vector<8x128xf32>
    %1207 = vector.extract_strided_slice %1205 {offsets = [0, 128], sizes = [8, 128], strides = [1, 1]} : vector<8x256xf32> to vector<8x128xf32>
    %1208 = vector.extract_strided_slice %1199 {offsets = [0, 256], sizes = [8, 128], strides = [1, 1]} : vector<8x512xf32> to vector<8x128xf32>
    %1209 = math.tanh %1208 : vector<8x128xf32>
    %1210 = arith.mulf %1207, %1185 : vector<8x128xf32>
    %1211 = arith.mulf %1206, %1209 : vector<8x128xf32>
    %1212 = arith.addf %1210, %1211 : vector<8x128xf32>
    %1213 = math.tanh %1212 : vector<8x128xf32>
    %1214 = vector.extract_strided_slice %1199 {offsets = [0, 384], sizes = [8, 128], strides = [1, 1]} : vector<8x512xf32> to vector<8x128xf32>
    %1215 = arith.negf %1214 : vector<8x128xf32>
    %1216 = math.exp %1215 : vector<8x128xf32>
    %cst_457 = arith.constant 1.000000e+00 : f32
    %1217 = vector.broadcast %cst_457 : f32 to vector<8x128xf32>
    %1218 = arith.addf %1217, %1216 : vector<8x128xf32>
    %1219 = arith.divf %1217, %1218 : vector<8x128xf32>
    %1220 = arith.mulf %1219, %1213 : vector<8x128xf32>
    %c0_458 = arith.constant 0 : index
    %c2432 = arith.constant 2432 : index
    %1221 = vector.load %arg8[%c0_458, %c2432] : memref<8x2560xf32, #tpu.memory_space<vmem>>, vector<8x128xf32>
    tpu.vector_store %arg8[%c0_458, %c2432], %1220 {strides = array<i32>} : memref<8x2560xf32, #tpu.memory_space<vmem>>, vector<8x128xf32>,
    %c0_459 = arith.constant 0 : index
    %c0_460 = arith.constant 0 : index
    %1222 = vector.load %arg8[%c0_459, %c0_460] : memref<8x2560xf32, #tpu.memory_space<vmem>>, vector<8x2560xf32>
    %c0_461 = arith.constant 0 : index
    %c0_462 = arith.constant 0 : index
    %1223 = vector.load %arg4[%c0_461, %c0_462] : memref<5x2560xf32, #tpu.memory_space<vmem>>, vector<5x2560xf32>
    %cst_463 = arith.constant dense<0.000000e+00> : vector<8x5xf32>
    %1224 = tpu.matmul %1222, %1223, %cst_463 {dimension_numbers = #tpu.dot_dimension_numbers<[1], [1], [0], [0], [0, 0, 1, 0], [], []>} : vector<8x2560xf32>, vector<5x2560xf32>, vector<8x5xf32> -> vector<8x5xf32>
    %c0_464 = arith.constant 0 : index
    %c0_465 = arith.constant 0 : index
    %1225 = vector.load %arg5[%c0_464, %c0_465] : memref<1x5xf32, #tpu.memory_space<vmem>>, vector<1x5xf32>
    %1226 = vector.broadcast %1225 : vector<1x5xf32> to vector<8x5xf32>
    %1227 = arith.addf %1224, %1226 : vector<8x5xf32>
    %c0_466 = arith.constant 0 : index
    %c0_467 = arith.constant 0 : index
    %1228 = vector.load %arg6[%c0_466, %c0_467] : memref<8x5xf32, #tpu.memory_space<vmem>>, vector<8x5xf32>
    tpu.vector_store %arg6[%c0_466, %c0_467], %1227 {strides = array<i32>} : memref<8x5xf32, #tpu.memory_space<vmem>>, vector<8x5xf32>,
    return
  }
}

</mosaic_0001>

<llo_original>
// kernel: tpu_custom_call.1
$region0: #{tpu_custom_call.1}
  #allocation0 [shape = 'u32[]', space=smem, size = 0x4, offset = 0x4, fixed_abs, tag = 'smem constant byte address 0x4 - core index']
  #allocation1 [shape = 'u32[72,128]{1,0:T(1,128)}', space=vmem, size = 0x9000, scoped, tag = 'internal scratch']
  #allocation2 [shape = 'f32[160,512]{1,0:T(8,128)}', space=vmem, size = 0x50000, scoped, tag = 'scratch operand']
  #allocation3 [shape = 'f32[8,2560]{1,0:T(8,128)}', space=vmem, size = 0x14000, scoped, tag = 'scratch operand']
  %s0 = inlined_call_operand.vmem [shape: f32[160,5], index: 0, kind: input, shape index: {}]
  %s1 = inlined_call_operand.hbm [shape: f32[5,512], index: 1, kind: input, shape index: {}]
  %s2 = inlined_call_operand.hbm [shape: bf16[128,512], index: 2, kind: input, shape index: {}]
  %s3 = inlined_call_operand.vmem [shape: f32[1,512], index: 3, kind: input, shape index: {}]
  %s4 = inlined_call_operand.vmem [shape: f32[5,2560], index: 4, kind: input, shape index: {}]
  %s5 = inlined_call_operand.vmem [shape: f32[1,5], index: 5, kind: input, shape index: {}]
  %s6 = inlined_call_operand.hbm [shape: f32[8,5], index: 6, kind: output, shape index: {}]
  %s7 = sld [smem:[#allocation0]]
  $region42: #{tpu_custom_call.1} parent=0
    _
  %s9 = ssub.s32 1, %s7
  %s10 = scalar_select 0, %s9, %s7
  $region1: #{tpu_custom_call.1} parent=0
    #allocation4 [shape = 'u8[16384]{0}', space=vmem, size = 0x4000, scoped, tag = 'input window, operand 1, single buffered']
    #allocation5 [shape = 's32[1]{0}', space=sflag, size = 0x4, scoped, tag = 'scoped memory for tpu_custom_call.1']
    #allocation6 [shape = 's32[1]{0}', space=sflag, size = 0x4, scoped, tag = 'scoped memory for tpu_custom_call.1']
    #allocation7 [shape = 'u8[131072]{0}', space=vmem, size = 0x20000, scoped, tag = 'input window, operand 2, single buffered']
    #allocation8 [shape = 's32[1]{0}', space=sflag, size = 0x4, scoped, tag = 'scoped memory for tpu_custom_call.1']
    #allocation9 [shape = 'u8[4096]{0}', space=vmem, size = 0x1000, scoped, tag = 'output window, operand 0, single buffered']
    %11 = vsyncpa [#allocation5], 0
    %12 = vsyncpa [#allocation8], 0
    %13 = vsyncpa [#allocation6], 0
    // Predicated region
    $region2: #{tpu_custom_call.1} parent=1 // pred_check
      _
    $region3: #{tpu_custom_call.1} parent=1 // pred_check_branch
      %15 = sbr.rel (0) target = $region5
    $region4: #{tpu_custom_call.1} parent=1 // pred_region
      _
    $region5: #{tpu_custom_call.1} parent=1 // pred_fallthru
      _
    // Predicated region
    $region6: #{tpu_custom_call.1} parent=1 // pred_check
      _
    $region7: #{tpu_custom_call.1} parent=1 // pred_check_branch
      %17 = sbr.rel (0) target = $region9
    $region8: #{tpu_custom_call.1} parent=1 // pred_region
      %19 = vsyncadd [#allocation5], 0
      %s21 = sshll.u32 %s1, 4
      %s22 = int_to_ptr.hbm [resolvable:$true] %s21
      %s23 = sshll.u32 [#allocation4], 4
      %s24 = int_to_ptr.vmem [resolvable:$true] %s23
      %26 = dma.hbm_to_vmem [thread:$0]  %s22, 512, %s24, [#allocation5]
    $region9: #{tpu_custom_call.1} parent=1 // pred_fallthru
      _
    // Predicated region
    $region10: #{tpu_custom_call.1} parent=1 // pred_check
      _
    $region11: #{tpu_custom_call.1} parent=1 // pred_check_branch
      %28 = sbr.rel (0) target = $region13
    $region12: #{tpu_custom_call.1} parent=1 // pred_region
      %30 = vsyncadd [#allocation8], 0
      %s31 = sshll.u32 %s2, 4
      %s32 = int_to_ptr.hbm [resolvable:$true] %s31
      %s33 = sshll.u32 [#allocation7], 4
      %s34 = int_to_ptr.vmem [resolvable:$true] %s33
      %39 = dma.hbm_to_vmem [thread:$0]  %s32, 4096, %s34, [#allocation8], 256, 256, 16
    $region13: #{tpu_custom_call.1} parent=1 // pred_fallthru
      _
    // Predicated region
    $region14: #{tpu_custom_call.1} parent=1 // pred_check
      _
    $region15: #{tpu_custom_call.1} parent=1 // pred_check_branch
      %41 = sbr.rel (0) target = $region17
    $region16: #{tpu_custom_call.1} parent=1 // pred_region
      _
    $region17: #{tpu_custom_call.1} parent=1 // pred_fallthru
      _
    // Predicated region
    $region18: #{tpu_custom_call.1} parent=1 // pred_check
      _
    $region19: #{tpu_custom_call.1} parent=1 // pred_check_branch
      %43 = sbr.rel (0) target = $region21
    $region20: #{tpu_custom_call.1} parent=1 // pred_region
      _
    $region21: #{tpu_custom_call.1} parent=1 // pred_fallthru
      _
    // Predicated region
    $region22: #{tpu_custom_call.1} parent=1 // pred_check
      _
    $region23: #{tpu_custom_call.1} parent=1 // pred_check_branch
      %45 = sbr.rel (0) target = $region25
    $region24: #{tpu_custom_call.1} parent=1 // pred_region
      _
    $region25: #{tpu_custom_call.1} parent=1 // pred_fallthru
      _
    // Predicated region
    $region26: #{tpu_custom_call.1} parent=1 // pred_check
      _
    $region27: #{tpu_custom_call.1} parent=1 // pred_check_branch
      %47 = sbr.rel (0) target = $region29
    $region28: #{tpu_custom_call.1} parent=1 // pred_region
      %49 = dma.done [#allocation5], 512
    $region29: #{tpu_custom_call.1} parent=1 // pred_fallthru
      _
    // Predicated region
    $region30: #{tpu_custom_call.1} parent=1 // pred_check
      _
    $region31: #{tpu_custom_call.1} parent=1 // pred_check_branch
      %51 = sbr.rel (0) target = $region33
    $region32: #{tpu_custom_call.1} parent=1 // pred_region
      %53 = dma.done [#allocation8], 4096
    $region33: #{tpu_custom_call.1} parent=1 // pred_fallthru
      _
    %v55 = vld [vmem:[%s0] sm:$0xff]
    %v56 = vld [vmem:[%s3] sm:$0xf]
    %v57 = vld [vmem:[#allocation4] ss:$8 sm:$0xf]
    %59 = vset.pattern.permute.xlu0 0
    %60 = vperm.xlu0 %59, %v55
    %v61 = vpop.permute.xlu0 %60
    %v64 = vperm.slane %v57, 0
    %v65 = vperm.slane %v57, 1
    %v66 = vperm.slane %v57, 2
    %v67 = vperm.slane %v57, 3
    %v72 = vmul.f32 %v61, %v64
    %v73 = vmul.f32 %v61, %v65
    %v74 = vmul.f32 %v61, %v66
    %v75 = vmul.f32 %v61, %v67
    %v77 = vperm.slane %v56, 0
    %v78 = vperm.slane %v56, 1
    %v79 = vperm.slane %v56, 2
    %v80 = vperm.slane %v56, 3
    %v85 = vadd.f32 %v77, %v72
    %v86 = vadd.f32 %v78, %v73
    %v87 = vadd.f32 %v79, %v74
    %v88 = vadd.f32 %v80, %v75
    %s89 = scalar_lea.vmem [#allocation4], 1
    %v90 = vld [vmem:[%s89] ss:$8 sm:$0xf]
    %91 = vset.pattern.permute.xlu0 1
    %92 = vperm.xlu0 %91, %v55
    %v93 = vpop.permute.xlu0 %92
    %v96 = vperm.slane %v90, 0
    %v97 = vperm.slane %v90, 1
    %v98 = vperm.slane %v90, 2
    %v99 = vperm.slane %v90, 3
    %v104 = vmul.f32 %v93, %v96
    %v105 = vmul.f32 %v93, %v97
    %v106 = vmul.f32 %v93, %v98
    %v107 = vmul.f32 %v93, %v99
    %v108 = vadd.f32 %v85, %v104
    %v109 = vadd.f32 %v86, %v105
    %v110 = vadd.f32 %v87, %v106
    %v111 = vadd.f32 %v88, %v107
    %s112 = scalar_lea.vmem [#allocation4], 2
    %v113 = vld [vmem:[%s112] ss:$8 sm:$0xf]
    %114 = vset.pattern.permute.xlu0 2
    %115 = vperm.xlu0 %114, %v55
    %v116 = vpop.permute.xlu0 %115
    %v119 = vperm.slane %v113, 0
    %v120 = vperm.slane %v113, 1
    %v121 = vperm.slane %v113, 2
    %v122 = vperm.slane %v113, 3
    %v127 = vmul.f32 %v116, %v119
    %v128 = vmul.f32 %v116, %v120
    %v129 = vmul.f32 %v116, %v121
    %v130 = vmul.f32 %v116, %v122
    %v131 = vadd.f32 %v108, %v127
    %v132 = vadd.f32 %v109, %v128
    %v133 = vadd.f32 %v110, %v129
    %v134 = vadd.f32 %v111, %v130
    %s135 = scalar_lea.vmem [#allocation4], 3
    %v136 = vld [vmem:[%s135] ss:$8 sm:$0xf]
    %137 = vset.pattern.permute.xlu0 3
    %138 = vperm.xlu0 %137, %v55
    %v139 = vpop.permute.xlu0 %138
    %v142 = vperm.slane %v136, 0
    %v143 = vperm.slane %v136, 1
    %v144 = vperm.slane %v136, 2
    %v145 = vperm.slane %v136, 3
    %v150 = vmul.f32 %v139, %v142
    %v151 = vmul.f32 %v139, %v143
    %v152 = vmul.f32 %v139, %v144
    %v153 = vmul.f32 %v139, %v145
    %v154 = vadd.f32 %v131, %v150
    %v155 = vadd.f32 %v132, %v151
    %v156 = vadd.f32 %v133, %v152
    %v157 = vadd.f32 %v134, %v153
    %s158 = scalar_lea.vmem [#allocation4], 4
    %v159 = vld [vmem:[%s158] ss:$8 sm:$0xf]
    %160 = vset.pattern.permute.xlu0 4
    %161 = vperm.xlu0 %160, %v55
    %v162 = vpop.permute.xlu0 %161
    %v165 = vperm.slane %v159, 0
    %v166 = vperm.slane %v159, 1
    %v167 = vperm.slane %v159, 2
    %v168 = vperm.slane %v159, 3
    %v173 = vmul.f32 %v162, %v165
    %v174 = vmul.f32 %v162, %v166
    %v175 = vmul.f32 %v162, %v167
    %v176 = vmul.f32 %v162, %v168
    %v177 = vadd.f32 %v154, %v173
    %v178 = vadd.f32 %v155, %v174
    %v179 = vadd.f32 %v156, %v175
    %v180 = vadd.f32 %v157, %v176
    %181 = vst [vmem:[#allocation2] sm:$0xff] %v177
    %182 = vst [vmem:[#allocation2 + $0x8] sm:$0xff] %v178
    %183 = vst [vmem:[#allocation2 + $0x10] sm:$0xff] %v179
    %184 = vst [vmem:[#allocation2 + $0x18] sm:$0xff] %v180
    %v185 = vld [vmem:[%s0 + $0x8] sm:$0xff]
    %v186 = vld [vmem:[%s3] sm:$0xf]
    %v187 = vld [vmem:[#allocation4] ss:$8 sm:$0xf]
    %189 = vset.pattern.permute.xlu0 0
    %190 = vperm.xlu0 %189, %v185
    %v191 = vpop.permute.xlu0 %190
    %v194 = vperm.slane %v187, 0
    %v195 = vperm.slane %v187, 1
    %v196 = vperm.slane %v187, 2
    %v197 = vperm.slane %v187, 3
    %v202 = vmul.f32 %v191, %v194
    %v203 = vmul.f32 %v191, %v195
    %v204 = vmul.f32 %v191, %v196
    %v205 = vmul.f32 %v191, %v197
    %v207 = vperm.slane %v186, 0
    %v208 = vperm.slane %v186, 1
    %v209 = vperm.slane %v186, 2
    %v210 = vperm.slane %v186, 3
    %v215 = vadd.f32 %v207, %v202
    %v216 = vadd.f32 %v208, %v203
    %v217 = vadd.f32 %v209, %v204
    %v218 = vadd.f32 %v210, %v205
    %v219 = vld [vmem:[%s89] ss:$8 sm:$0xf]
    %220 = vset.pattern.permute.xlu0 1
    %221 = vperm.xlu0 %220, %v185
    %v222 = vpop.permute.xlu0 %221
    %v225 = vperm.slane %v219, 0
    %v226 = vperm.slane %v219, 1
    %v227 = vperm.slane %v219, 2
    %v228 = vperm.slane %v219, 3
    %v233 = vmul.f32 %v222, %v225
    %v234 = vmul.f32 %v222, %v226
    %v235 = vmul.f32 %v222, %v227
    %v236 = vmul.f32 %v222, %v228
    %v237 = vadd.f32 %v215, %v233
    %v238 = vadd.f32 %v216, %v234
    %v239 = vadd.f32 %v217, %v235
    %v240 = vadd.f32 %v218, %v236
    %v241 = vld [vmem:[%s112] ss:$8 sm:$0xf]
    %242 = vset.pattern.permute.xlu0 2
    %243 = vperm.xlu0 %242, %v185
    %v244 = vpop.permute.xlu0 %243
    %v247 = vperm.slane %v241, 0
    %v248 = vperm.slane %v241, 1
    %v249 = vperm.slane %v241, 2
    %v250 = vperm.slane %v241, 3
    %v255 = vmul.f32 %v244, %v247
    %v256 = vmul.f32 %v244, %v248
    %v257 = vmul.f32 %v244, %v249
    %v258 = vmul.f32 %v244, %v250
    %v259 = vadd.f32 %v237, %v255
    %v260 = vadd.f32 %v238, %v256
    %v261 = vadd.f32 %v239, %v257
    %v262 = vadd.f32 %v240, %v258
    %v263 = vld [vmem:[%s135] ss:$8 sm:$0xf]
    %264 = vset.pattern.permute.xlu0 3
    %265 = vperm.xlu0 %264, %v185
    %v266 = vpop.permute.xlu0 %265
    %v269 = vperm.slane %v263, 0
    %v270 = vperm.slane %v263, 1
    %v271 = vperm.slane %v263, 2
    %v272 = vperm.slane %v263, 3
    %v277 = vmul.f32 %v266, %v269
    %v278 = vmul.f32 %v266, %v270
    %v279 = vmul.f32 %v266, %v271
    %v280 = vmul.f32 %v266, %v272
    %v281 = vadd.f32 %v259, %v277
    %v282 = vadd.f32 %v260, %v278
    %v283 = vadd.f32 %v261, %v279
    %v284 = vadd.f32 %v262, %v280
    %v285 = vld [vmem:[%s158] ss:$8 sm:$0xf]
    %286 = vset.pattern.permute.xlu0 4
    %287 = vperm.xlu0 %286, %v185
    %v288 = vpop.permute.xlu0 %287
    %v291 = vperm.slane %v285, 0
    %v292 = vperm.slane %v285, 1
    %v293 = vperm.slane %v285, 2
    %v294 = vperm.slane %v285, 3
    %v299 = vmul.f32 %v288, %v291
    %v300 = vmul.f32 %v288, %v292
    %v301 = vmul.f32 %v288, %v293
    %v302 = vmul.f32 %v288, %v294
    %v303 = vadd.f32 %v281, %v299
    %v304 = vadd.f32 %v282, %v300
    %v305 = vadd.f32 %v283, %v301
    %v306 = vadd.f32 %v284, %v302
    %307 = vst [vmem:[#allocation2 + $0x20] sm:$0xff] %v303
    %308 = vst [vmem:[#allocation2 + $0x28] sm:$0xff] %v304
    %309 = vst [vmem:[#allocation2 + $0x30] sm:$0xff] %v305
    %310 = vst [vmem:[#allocation2 + $0x38] sm:$0xff] %v306
    %v311 = vld [vmem:[%s0 + $0x10] sm:$0xff]
    %v312 = vld [vmem:[%s3] sm:$0xf]
    %v313 = vld [vmem:[#allocation4] ss:$8 sm:$0xf]
    %315 = vset.pattern.permute.xlu0 0
    %316 = vperm.xlu0 %315, %v311
    %v317 = vpop.permute.xlu0 %316
    %v320 = vperm.slane %v313, 0
    %v321 = vperm.slane %v313, 1
    %v322 = vperm.slane %v313, 2
    %v323 = vperm.slane %v313, 3
    %v328 = vmul.f32 %v317, %v320
    %v329 = vmul.f32 %v317, %v321
    %v330 = vmul.f32 %v317, %v322
    %v331 = vmul.f32 %v317, %v323
    %v333 = vperm.slane %v312, 0
    %v334 = vperm.slane %v312, 1
    %v335 = vperm.slane %v312, 2
    %v336 = vperm.slane %v312, 3
    %v341 = vadd.f32 %v333, %v328
    %v342 = vadd.f32 %v334, %v329
    %v343 = vadd.f32 %v335, %v330
    %v344 = vadd.f32 %v336, %v331
    %v345 = vld [vmem:[%s89] ss:$8 sm:$0xf]
    %346 = vset.pattern.permute.xlu0 1
    %347 = vperm.xlu0 %346, %v311
    %v348 = vpop.permute.xlu0 %347
    %v351 = vperm.slane %v345, 0
    %v352 = vperm.slane %v345, 1
    %v353 = vperm.slane %v345, 2
    %v354 = vperm.slane %v345, 3
    %v359 = vmul.f32 %v348, %v351
    %v360 = vmul.f32 %v348, %v352
    %v361 = vmul.f32 %v348, %v353
    %v362 = vmul.f32 %v348, %v354
    %v363 = vadd.f32 %v341, %v359
    %v364 = vadd.f32 %v342, %v360
    %v365 = vadd.f32 %v343, %v361
    %v366 = vadd.f32 %v344, %v362
    %v367 = vld [vmem:[%s112] ss:$8 sm:$0xf]
    %368 = vset.pattern.permute.xlu0 2
    %369 = vperm.xlu0 %368, %v311
    %v370 = vpop.permute.xlu0 %369
    %v373 = vperm.slane %v367, 0
    %v374 = vperm.slane %v367, 1
    %v375 = vperm.slane %v367, 2
    %v376 = vperm.slane %v367, 3
    %v381 = vmul.f32 %v370, %v373
    %v382 = vmul.f32 %v370, %v374
    %v383 = vmul.f32 %v370, %v375
    %v384 = vmul.f32 %v370, %v376
    %v385 = vadd.f32 %v363, %v381
    %v386 = vadd.f32 %v364, %v382
    %v387 = vadd.f32 %v365, %v383
    %v388 = vadd.f32 %v366, %v384
    %v389 = vld [vmem:[%s135] ss:$8 sm:$0xf]
    %390 = vset.pattern.permute.xlu0 3
    %391 = vperm.xlu0 %390, %v311
    %v392 = vpop.permute.xlu0 %391
    %v395 = vperm.slane %v389, 0
    %v396 = vperm.slane %v389, 1
    %v397 = vperm.slane %v389, 2
    %v398 = vperm.slane %v389, 3
    %v403 = vmul.f32 %v392, %v395
    %v404 = vmul.f32 %v392, %v396
    %v405 = vmul.f32 %v392, %v397
    %v406 = vmul.f32 %v392, %v398
    %v407 = vadd.f32 %v385, %v403
    %v408 = vadd.f32 %v386, %v404
    %v409 = vadd.f32 %v387, %v405
    %v410 = vadd.f32 %v388, %v406
    %v411 = vld [vmem:[%s158] ss:$8 sm:$0xf]
    %412 = vset.pattern.permute.xlu0 4
    %413 = vperm.xlu0 %412, %v311
    %v414 = vpop.permute.xlu0 %413
    %v417 = vperm.slane %v411, 0
    %v418 = vperm.slane %v411, 1
    %v419 = vperm.slane %v411, 2
    %v420 = vperm.slane %v411, 3
    %v425 = vmul.f32 %v414, %v417
    %v426 = vmul.f32 %v414, %v418
    %v427 = vmul.f32 %v414, %v419
    %v428 = vmul.f32 %v414, %v420
    %v429 = vadd.f32 %v407, %v425
    %v430 = vadd.f32 %v408, %v426
    %v431 = vadd.f32 %v409, %v427
    %v432 = vadd.f32 %v410, %v428
    %433 = vst [vmem:[#allocation2 + $0x40] sm:$0xff] %v429
    %434 = vst [vmem:[#allocation2 + $0x48] sm:$0xff] %v430
    %435 = vst [vmem:[#allocation2 + $0x50] sm:$0xff] %v431
    %436 = vst [vmem:[#allocation2 + $0x58] sm:$0xff] %v432
    %v437 = vld [vmem:[%s0 + $0x18] sm:$0xff]
    %v438 = vld [vmem:[%s3] sm:$0xf]
    %v439 = vld [vmem:[#allocation4] ss:$8 sm:$0xf]
    %441 = vset.pattern.permute.xlu0 0
    %442 = vperm.xlu0 %441, %v437
    %v443 = vpop.permute.xlu0 %442
    %v446 = vperm.slane %v439, 0
    %v447 = vperm.slane %v439, 1
    %v448 = vperm.slane %v439, 2
    %v449 = vperm.slane %v439, 3
    %v454 = vmul.f32 %v443, %v446
    %v455 = vmul.f32 %v443, %v447
    %v456 = vmul.f32 %v443, %v448
    %v457 = vmul.f32 %v443, %v449
    %v459 = vperm.slane %v438, 0
    %v460 = vperm.slane %v438, 1
    %v461 = vperm.slane %v438, 2
    %v462 = vperm.slane %v438, 3
    %v467 = vadd.f32 %v459, %v454
    %v468 = vadd.f32 %v460, %v455
    %v469 = vadd.f32 %v461, %v456
    %v470 = vadd.f32 %v462, %v457
    %v471 = vld [vmem:[%s89] ss:$8 sm:$0xf]
    %472 = vset.pattern.permute.xlu0 1
    %473 = vperm.xlu0 %472, %v437
    %v474 = vpop.permute.xlu0 %473
    %v477 = vperm.slane %v471, 0
    %v478 = vperm.slane %v471, 1
    %v479 = vperm.slane %v471, 2
    %v480 = vperm.slane %v471, 3
    %v485 = vmul.f32 %v474, %v477
    %v486 = vmul.f32 %v474, %v478
    %v487 = vmul.f32 %v474, %v479
    %v488 = vmul.f32 %v474, %v480
    %v489 = vadd.f32 %v467, %v485
    %v490 = vadd.f32 %v468, %v486
    %v491 = vadd.f32 %v469, %v487
    %v492 = vadd.f32 %v470, %v488
    %v493 = vld [vmem:[%s112] ss:$8 sm:$0xf]
    %494 = vset.pattern.permute.xlu0 2
    %495 = vperm.xlu0 %494, %v437
    %v496 = vpop.permute.xlu0 %495
    %v499 = vperm.slane %v493, 0
    %v500 = vperm.slane %v493, 1
    %v501 = vperm.slane %v493, 2
    %v502 = vperm.slane %v493, 3
    %v507 = vmul.f32 %v496, %v499
    %v508 = vmul.f32 %v496, %v500
    %v509 = vmul.f32 %v496, %v501
    %v510 = vmul.f32 %v496, %v502
    %v511 = vadd.f32 %v489, %v507
    %v512 = vadd.f32 %v490, %v508
    %v513 = vadd.f32 %v491, %v509
    %v514 = vadd.f32 %v492, %v510
    %v515 = vld [vmem:[%s135] ss:$8 sm:$0xf]
    %516 = vset.pattern.permute.xlu0 3
    %517 = vperm.xlu0 %516, %v437
    %v518 = vpop.permute.xlu0 %517
    %v521 = vperm.slane %v515, 0
    %v522 = vperm.slane %v515, 1
    %v523 = vperm.slane %v515, 2
    %v524 = vperm.slane %v515, 3
    %v529 = vmul.f32 %v518, %v521
    %v530 = vmul.f32 %v518, %v522
    %v531 = vmul.f32 %v518, %v523
    %v532 = vmul.f32 %v518, %v524
    %v533 = vadd.f32 %v511, %v529
    %v534 = vadd.f32 %v512, %v530
    %v535 = vadd.f32 %v513, %v531
    %v536 = vadd.f32 %v514, %v532
    %v537 = vld [vmem:[%s158] ss:$8 sm:$0xf]
    %538 = vset.pattern.permute.xlu0 4
    %539 = vperm.xlu0 %538, %v437
    %v540 = vpop.permute.xlu0 %539
    %v543 = vperm.slane %v537, 0
    %v544 = vperm.slane %v537, 1
    %v545 = vperm.slane %v537, 2
    %v546 = vperm.slane %v537, 3
    %v551 = vmul.f32 %v540, %v543
    %v552 = vmul.f32 %v540, %v544
    %v553 = vmul.f32 %v540, %v545
    %v554 = vmul.f32 %v540, %v546
    %v555 = vadd.f32 %v533, %v551
    %v556 = vadd.f32 %v534, %v552
    %v557 = vadd.f32 %v535, %v553
    %v558 = vadd.f32 %v536, %v554
    %559 = vst [vmem:[#allocation2 + $0x60] sm:$0xff] %v555
    %560 = vst [vmem:[#allocation2 + $0x68] sm:$0xff] %v556
    %561 = vst [vmem:[#allocation2 + $0x70] sm:$0xff] %v557
    %562 = vst [vmem:[#allocation2 + $0x78] sm:$0xff] %v558
    %v563 = vld [vmem:[%s0 + $0x20] sm:$0xff]
    %v564 = vld [vmem:[%s3] sm:$0xf]
    %v565 = vld [vmem:[#allocation4] ss:$8 sm:$0xf]
    %567 = vset.pattern.permute.xlu0 0
    %568 = vperm.xlu0 %567, %v563
    %v569 = vpop.permute.xlu0 %568
    %v572 = vperm.slane %v565, 0
    %v573 = vperm.slane %v565, 1
    %v574 = vperm.slane %v565, 2
    %v575 = vperm.slane %v565, 3
    %v580 = vmul.f32 %v569, %v572
    %v581 = vmul.f32 %v569, %v573
    %v582 = vmul.f32 %v569, %v574
    %v583 = vmul.f32 %v569, %v575
    %v585 = vperm.slane %v564, 0
    %v586 = vperm.slane %v564, 1
    %v587 = vperm.slane %v564, 2
    %v588 = vperm.slane %v564, 3
    %v593 = vadd.f32 %v585, %v580
    %v594 = vadd.f32 %v586, %v581
    %v595 = vadd.f32 %v587, %v582
    %v596 = vadd.f32 %v588, %v583
    %v597 = vld [vmem:[%s89] ss:$8 sm:$0xf]
    %598 = vset.pattern.permute.xlu0 1
    %599 = vperm.xlu0 %598, %v563
    %v600 = vpop.permute.xlu0 %599
    %v603 = vperm.slane %v597, 0
    %v604 = vperm.slane %v597, 1
    %v605 = vperm.slane %v597, 2
    %v606 = vperm.slane %v597, 3
    %v611 = vmul.f32 %v600, %v603
    %v612 = vmul.f32 %v600, %v604
    %v613 = vmul.f32 %v600, %v605
    %v614 = vmul.f32 %v600, %v606
    %v615 = vadd.f32 %v593, %v611
    %v616 = vadd.f32 %v594, %v612
    %v617 = vadd.f32 %v595, %v613
    %v618 = vadd.f32 %v596, %v614
    %v619 = vld [vmem:[%s112] ss:$8 sm:$0xf]
    %620 = vset.pattern.permute.xlu0 2
    %621 = vperm.xlu0 %620, %v563
    %v622 = vpop.permute.xlu0 %621
    %v625 = vperm.slane %v619, 0
    %v626 = vperm.slane %v619, 1
    %v627 = vperm.slane %v619, 2
    %v628 = vperm.slane %v619, 3
    %v633 = vmul.f32 %v622, %v625
    %v634 = vmul.f32 %v622, %v626
    %v635 = vmul.f32 %v622, %v627
    %v636 = vmul.f32 %v622, %v628
    %v637 = vadd.f32 %v615, %v633
    %v638 = vadd.f32 %v616, %v634
    %v639 = vadd.f32 %v617, %v635
    %v640 = vadd.f32 %v618, %v636
    %v641 = vld [vmem:[%s135] ss:$8 sm:$0xf]
    %642 = vset.pattern.permute.xlu0 3
    %643 = vperm.xlu0 %642, %v563
    %v644 = vpop.permute.xlu0 %643
    %v647 = vperm.slane %v641, 0
    %v648 = vperm.slane %v641, 1
    %v649 = vperm.slane %v641, 2
    %v650 = vperm.slane %v641, 3
    %v655 = vmul.f32 %v644, %v647
    %v656 = vmul.f32 %v644, %v648
    %v657 = vmul.f32 %v644, %v649
    %v658 = vmul.f32 %v644, %v650
    %v659 = vadd.f32 %v637, %v655
    %v660 = vadd.f32 %v638, %v656
    %v661 = vadd.f32 %v639, %v657
    %v662 = vadd.f32 %v640, %v658
    %v663 = vld [vmem:[%s158] ss:$8 sm:$0xf]
    %664 = vset.pattern.permute.xlu0 4
    %665 = vperm.xlu0 %664, %v563
    %v666 = vpop.permute.xlu0 %665
    %v669 = vperm.slane %v663, 0
    %v670 = vperm.slane %v663, 1
    %v671 = vperm.slane %v663, 2
    %v672 = vperm.slane %v663, 3
    %v677 = vmul.f32 %v666, %v669
    %v678 = vmul.f32 %v666, %v670
    %v679 = vmul.f32 %v666, %v671
    %v680 = vmul.f32 %v666, %v672
    %v681 = vadd.f32 %v659, %v677
    %v682 = vadd.f32 %v660, %v678
    %v683 = vadd.f32 %v661, %v679
    %v684 = vadd.f32 %v662, %v680
    %685 = vst [vmem:[#allocation2 + $0x80] sm:$0xff] %v681
    %686 = vst [vmem:[#allocation2 + $0x88] sm:$0xff] %v682
    %687 = vst [vmem:[#allocation2 + $0x90] sm:$0xff] %v683
    %688 = vst [vmem:[#allocation2 + $0x98] sm:$0xff] %v684
    %v689 = vld [vmem:[%s0 + $0x28] sm:$0xff]
    %v690 = vld [vmem:[%s3] sm:$0xf]
    %v691 = vld [vmem:[#allocation4] ss:$8 sm:$0xf]
    %693 = vset.pattern.permute.xlu0 0
    %694 = vperm.xlu0 %693, %v689
    %v695 = vpop.permute.xlu0 %694
    %v698 = vperm.slane %v691, 0
    %v699 = vperm.slane %v691, 1
    %v700 = vperm.slane %v691, 2
    %v701 = vperm.slane %v691, 3
    %v706 = vmul.f32 %v695, %v698
    %v707 = vmul.f32 %v695, %v699
    %v708 = vmul.f32 %v695, %v700
    %v709 = vmul.f32 %v695, %v701
    %v711 = vperm.slane %v690, 0
    %v712 = vperm.slane %v690, 1
    %v713 = vperm.slane %v690, 2
    %v714 = vperm.slane %v690, 3
    %v719 = vadd.f32 %v711, %v706
    %v720 = vadd.f32 %v712, %v707
    %v721 = vadd.f32 %v713, %v708
    %v722 = vadd.f32 %v714, %v709
    %v723 = vld [vmem:[%s89] ss:$8 sm:$0xf]
    %724 = vset.pattern.permute.xlu0 1
    %725 = vperm.xlu0 %724, %v689
    %v726 = vpop.permute.xlu0 %725
    %v729 = vperm.slane %v723, 0
    %v730 = vperm.slane %v723, 1
    %v731 = vperm.slane %v723, 2
    %v732 = vperm.slane %v723, 3
    %v737 = vmul.f32 %v726, %v729
    %v738 = vmul.f32 %v726, %v730
    %v739 = vmul.f32 %v726, %v731
    %v740 = vmul.f32 %v726, %v732
    %v741 = vadd.f32 %v719, %v737
    %v742 = vadd.f32 %v720, %v738
    %v743 = vadd.f32 %v721, %v739
    %v744 = vadd.f32 %v722, %v740
    %v745 = vld [vmem:[%s112] ss:$8 sm:$0xf]
    %746 = vset.pattern.permute.xlu0 2
    %747 = vperm.xlu0 %746, %v689
    %v748 = vpop.permute.xlu0 %747
    %v751 = vperm.slane %v745, 0
    %v752 = vperm.slane %v745, 1
    %v753 = vperm.slane %v745, 2
    %v754 = vperm.slane %v745, 3
    %v759 = vmul.f32 %v748, %v751
    %v760 = vmul.f32 %v748, %v752
    %v761 = vmul.f32 %v748, %v753
    %v762 = vmul.f32 %v748, %v754
    %v763 = vadd.f32 %v741, %v759
    %v764 = vadd.f32 %v742, %v760
    %v765 = vadd.f32 %v743, %v761
    %v766 = vadd.f32 %v744, %v762
    %v767 = vld [vmem:[%s135] ss:$8 sm:$0xf]
    %768 = vset.pattern.permute.xlu0 3
    %769 = vperm.xlu0 %768, %v689
    %v770 = vpop.permute.xlu0 %769
    %v773 = vperm.slane %v767, 0
    %v774 = vperm.slane %v767, 1
    %v775 = vperm.slane %v767, 2
    %v776 = vperm.slane %v767, 3
    %v781 = vmul.f32 %v770, %v773
    %v782 = vmul.f32 %v770, %v774
    %v783 = vmul.f32 %v770, %v775
    %v784 = vmul.f32 %v770, %v776
    %v785 = vadd.f32 %v763, %v781
    %v786 = vadd.f32 %v764, %v782
    %v787 = vadd.f32 %v765, %v783
    %v788 = vadd.f32 %v766, %v784
    %v789 = vld [vmem:[%s158] ss:$8 sm:$0xf]
    %790 = vset.pattern.permute.xlu0 4
    %791 = vperm.xlu0 %790, %v689
    %v792 = vpop.permute.xlu0 %791
    %v795 = vperm.slane %v789, 0
    %v796 = vperm.slane %v789, 1
    %v797 = vperm.slane %v789, 2
    %v798 = vperm.slane %v789, 3
    %v803 = vmul.f32 %v792, %v795
    %v804 = vmul.f32 %v792, %v796
    %v805 = vmul.f32 %v792, %v797
    %v806 = vmul.f32 %v792, %v798
    %v807 = vadd.f32 %v785, %v803
    %v808 = vadd.f32 %v786, %v804
    %v809 = vadd.f32 %v787, %v805
    %v810 = vadd.f32 %v788, %v806
    %811 = vst [vmem:[#allocation2 + $0xa0] sm:$0xff] %v807
    %812 = vst [vmem:[#allocation2 + $0xa8] sm:$0xff] %v808
    %813 = vst [vmem:[#allocation2 + $0xb0] sm:$0xff] %v809
    %814 = vst [vmem:[#allocation2 + $0xb8] sm:$0xff] %v810
    %v815 = vld [vmem:[%s0 + $0x30] sm:$0xff]
    %v816 = vld [vmem:[%s3] sm:$0xf]
    %v817 = vld [vmem:[#allocation4] ss:$8 sm:$0xf]
    %819 = vset.pattern.permute.xlu0 0
    %820 = vperm.xlu0 %819, %v815
    %v821 = vpop.permute.xlu0 %820
    %v824 = vperm.slane %v817, 0
    %v825 = vperm.slane %v817, 1
    %v826 = vperm.slane %v817, 2
    %v827 = vperm.slane %v817, 3
    %v832 = vmul.f32 %v821, %v824
    %v833 = vmul.f32 %v821, %v825
    %v834 = vmul.f32 %v821, %v826
    %v835 = vmul.f32 %v821, %v827
    %v837 = vperm.slane %v816, 0
    %v838 = vperm.slane %v816, 1
    %v839 = vperm.slane %v816, 2
    %v840 = vperm.slane %v816, 3
    %v845 = vadd.f32 %v837, %v832
    %v846 = vadd.f32 %v838, %v833
    %v847 = vadd.f32 %v839, %v834
    %v848 = vadd.f32 %v840, %v835
    %v849 = vld [vmem:[%s89] ss:$8 sm:$0xf]
    %850 = vset.pattern.permute.xlu0 1
    %851 = vperm.xlu0 %850, %v815
    %v852 = vpop.permute.xlu0 %851
    %v855 = vperm.slane %v849, 0
    %v856 = vperm.slane %v849, 1
    %v857 = vperm.slane %v849, 2
    %v858 = vperm.slane %v849, 3
    %v863 = vmul.f32 %v852, %v855
    %v864 = vmul.f32 %v852, %v856
    %v865 = vmul.f32 %v852, %v857
    %v866 = vmul.f32 %v852, %v858
    %v867 = vadd.f32 %v845, %v863
    %v868 = vadd.f32 %v846, %v864
    %v869 = vadd.f32 %v847, %v865
    %v870 = vadd.f32 %v848, %v866
    %v871 = vld [vmem:[%s112] ss:$8 sm:$0xf]
    %872 = vset.pattern.permute.xlu0 2
    %873 = vperm.xlu0 %872, %v815
    %v874 = vpop.permute.xlu0 %873
    %v877 = vperm.slane %v871, 0
    %v878 = vperm.slane %v871, 1
    %v879 = vperm.slane %v871, 2
    %v880 = vperm.slane %v871, 3
    %v885 = vmul.f32 %v874, %v877
    %v886 = vmul.f32 %v874, %v878
    %v887 = vmul.f32 %v874, %v879
    %v888 = vmul.f32 %v874, %v880
    %v889 = vadd.f32 %v867, %v885
    %v890 = vadd.f32 %v868, %v886
    %v891 = vadd.f32 %v869, %v887
    %v892 = vadd.f32 %v870, %v888
    %v893 = vld [vmem:[%s135] ss:$8 sm:$0xf]
    %894 = vset.pattern.permute.xlu0 3
    %895 = vperm.xlu0 %894, %v815
    %v896 = vpop.permute.xlu0 %895
    %v899 = vperm.slane %v893, 0
    %v900 = vperm.slane %v893, 1
    %v901 = vperm.slane %v893, 2
    %v902 = vperm.slane %v893, 3
    %v907 = vmul.f32 %v896, %v899
    %v908 = vmul.f32 %v896, %v900
    %v909 = vmul.f32 %v896, %v901
    %v910 = vmul.f32 %v896, %v902
    %v911 = vadd.f32 %v889, %v907
    %v912 = vadd.f32 %v890, %v908
    %v913 = vadd.f32 %v891, %v909
    %v914 = vadd.f32 %v892, %v910
    %v915 = vld [vmem:[%s158] ss:$8 sm:$0xf]
    %916 = vset.pattern.permute.xlu0 4
    %917 = vperm.xlu0 %916, %v815
    %v918 = vpop.permute.xlu0 %917
    %v921 = vperm.slane %v915, 0
    %v922 = vperm.slane %v915, 1
    %v923 = vperm.slane %v915, 2
    %v924 = vperm.slane %v915, 3
    %v929 = vmul.f32 %v918, %v921
    %v930 = vmul.f32 %v918, %v922
    %v931 = vmul.f32 %v918, %v923
    %v932 = vmul.f32 %v918, %v924
    %v933 = vadd.f32 %v911, %v929
    %v934 = vadd.f32 %v912, %v930
    %v935 = vadd.f32 %v913, %v931
    %v936 = vadd.f32 %v914, %v932
    %937 = vst [vmem:[#allocation2 + $0xc0] sm:$0xff] %v933
    %938 = vst [vmem:[#allocation2 + $0xc8] sm:$0xff] %v934
    %939 = vst [vmem:[#allocation2 + $0xd0] sm:$0xff] %v935
    %940 = vst [vmem:[#allocation2 + $0xd8] sm:$0xff] %v936
    %v941 = vld [vmem:[%s0 + $0x38] sm:$0xff]
    %v942 = vld [vmem:[%s3] sm:$0xf]
    %v943 = vld [vmem:[#allocation4] ss:$8 sm:$0xf]
    %945 = vset.pattern.permute.xlu0 0
    %946 = vperm.xlu0 %945, %v941
    %v947 = vpop.permute.xlu0 %946
    %v950 = vperm.slane %v943, 0
    %v951 = vperm.slane %v943, 1
    %v952 = vperm.slane %v943, 2
    %v953 = vperm.slane %v943, 3
    %v958 = vmul.f32 %v947, %v950
    %v959 = vmul.f32 %v947, %v951
    %v960 = vmul.f32 %v947, %v952
    %v961 = vmul.f32 %v947, %v953
    %v963 = vperm.slane %v942, 0
    %v964 = vperm.slane %v942, 1
    %v965 = vperm.slane %v942, 2
    %v966 = vperm.slane %v942, 3
    %v971 = vadd.f32 %v963, %v958
    %v972 = vadd.f32 %v964, %v959
    %v973 = vadd.f32 %v965, %v960
    %v974 = vadd.f32 %v966, %v961
    %v975 = vld [vmem:[%s89] ss:$8 sm:$0xf]
    %976 = vset.pattern.permute.xlu0 1
    %977 = vperm.xlu0 %976, %v941
    %v978 = vpop.permute.xlu0 %977
    %v981 = vperm.slane %v975, 0
    %v982 = vperm.slane %v975, 1
    %v983 = vperm.slane %v975, 2
    %v984 = vperm.slane %v975, 3
    %v989 = vmul.f32 %v978, %v981
    %v990 = vmul.f32 %v978, %v982
    %v991 = vmul.f32 %v978, %v983
    %v992 = vmul.f32 %v978, %v984
    %v993 = vadd.f32 %v971, %v989
    %v994 = vadd.f32 %v972, %v990
    %v995 = vadd.f32 %v973, %v991
    %v996 = vadd.f32 %v974, %v992
    %v997 = vld [vmem:[%s112] ss:$8 sm:$0xf]
    %998 = vset.pattern.permute.xlu0 2
    %999 = vperm.xlu0 %998, %v941
    %v1000 = vpop.permute.xlu0 %999
    %v1003 = vperm.slane %v997, 0
    %v1004 = vperm.slane %v997, 1
    %v1005 = vperm.slane %v997, 2
    %v1006 = vperm.slane %v997, 3
    %v1011 = vmul.f32 %v1000, %v1003
    %v1012 = vmul.f32 %v1000, %v1004
    %v1013 = vmul.f32 %v1000, %v1005
    %v1014 = vmul.f32 %v1000, %v1006
    %v1015 = vadd.f32 %v993, %v1011
    %v1016 = vadd.f32 %v994, %v1012
    %v1017 = vadd.f32 %v995, %v1013
    %v1018 = vadd.f32 %v996, %v1014
    %v1019 = vld [vmem:[%s135] ss:$8 sm:$0xf]
    %1020 = vset.pattern.permute.xlu0 3
    %1021 = vperm.xlu0 %1020, %v941
    %v1022 = vpop.permute.xlu0 %1021
    %v1025 = vperm.slane %v1019, 0
    %v1026 = vperm.slane %v1019, 1
    %v1027 = vperm.slane %v1019, 2
    %v1028 = vperm.slane %v1019, 3
    %v1033 = vmul.f32 %v1022, %v1025
    %v1034 = vmul.f32 %v1022, %v1026
    %v1035 = vmul.f32 %v1022, %v1027
    %v1036 = vmul.f32 %v1022, %v1028
    %v1037 = vadd.f32 %v1015, %v1033
    %v1038 = vadd.f32 %v1016, %v1034
    %v1039 = vadd.f32 %v1017, %v1035
    %v1040 = vadd.f32 %v1018, %v1036
    %v1041 = vld [vmem:[%s158] ss:$8 sm:$0xf]
    %1042 = vset.pattern.permute.xlu0 4
    %1043 = vperm.xlu0 %1042, %v941
    %v1044 = vpop.permute.xlu0 %1043
    %v1047 = vperm.slane %v1041, 0
    %v1048 = vperm.slane %v1041, 1
    %v1049 = vperm.slane %v1041, 2
    %v1050 = vperm.slane %v1041, 3
    %v1055 = vmul.f32 %v1044, %v1047
    %v1056 = vmul.f32 %v1044, %v1048
    %v1057 = vmul.f32 %v1044, %v1049
    %v1058 = vmul.f32 %v1044, %v1050
    %v1059 = vadd.f32 %v1037, %v1055
    %v1060 = vadd.f32 %v1038, %v1056
    %v1061 = vadd.f32 %v1039, %v1057
    %v1062 = vadd.f32 %v1040, %v1058
    %1063 = vst [vmem:[#allocation2 + $0xe0] sm:$0xff] %v1059
    %1064 = vst [vmem:[#allocation2 + $0xe8] sm:$0xff] %v1060
    %1065 = vst [vmem:[#allocation2 + $0xf0] sm:$0xff] %v1061
    %1066 = vst [vmem:[#allocation2 + $0xf8] sm:$0xff] %v1062
    %v1067 = vld [vmem:[%s0 + $0x40] sm:$0xff]
    %v1068 = vld [vmem:[%s3] sm:$0xf]
    %v1069 = vld [vmem:[#allocation4] ss:$8 sm:$0xf]
    %1071 = vset.pattern.permute.xlu0 0
    %1072 = vperm.xlu0 %1071, %v1067
    %v1073 = vpop.permute.xlu0 %1072
    %v1076 = vperm.slane %v1069, 0
    %v1077 = vperm.slane %v1069, 1
    %v1078 = vperm.slane %v1069, 2
    %v1079 = vperm.slane %v1069, 3
    %v1084 = vmul.f32 %v1073, %v1076
    %v1085 = vmul.f32 %v1073, %v1077
    %v1086 = vmul.f32 %v1073, %v1078
    %v1087 = vmul.f32 %v1073, %v1079
    %v1089 = vperm.slane %v1068, 0
    %v1090 = vperm.slane %v1068, 1
    %v1091 = vperm.slane %v1068, 2
    %v1092 = vperm.slane %v1068, 3
    %v1097 = vadd.f32 %v1089, %v1084
    %v1098 = vadd.f32 %v1090, %v1085
    %v1099 = vadd.f32 %v1091, %v1086
    %v1100 = vadd.f32 %v1092, %v1087
    %v1101 = vld [vmem:[%s89] ss:$8 sm:$0xf]
    %1102 = vset.pattern.permute.xlu0 1
    %1103 = vperm.xlu0 %1102, %v1067
    %v1104 = vpop.permute.xlu0 %1103
    %v1107 = vperm.slane %v1101, 0
    %v1108 = vperm.slane %v1101, 1
    %v1109 = vperm.slane %v1101, 2
    %v1110 = vperm.slane %v1101, 3
    %v1115 = vmul.f32 %v1104, %v1107
    %v1116 = vmul.f32 %v1104, %v1108
    %v1117 = vmul.f32 %v1104, %v1109
    %v1118 = vmul.f32 %v1104, %v1110
    %v1119 = vadd.f32 %v1097, %v1115
    %v1120 = vadd.f32 %v1098, %v1116
    %v1121 = vadd.f32 %v1099, %v1117
    %v1122 = vadd.f32 %v1100, %v1118
    %v1123 = vld [vmem:[%s112] ss:$8 sm:$0xf]
    %1124 = vset.pattern.permute.xlu0 2
    %1125 = vperm.xlu0 %1124, %v1067
    %v1126 = vpop.permute.xlu0 %1125
    %v1129 = vperm.slane %v1123, 0
    %v1130 = vperm.slane %v1123, 1
    %v1131 = vperm.slane %v1123, 2
    %v1132 = vperm.slane %v1123, 3
    %v1137 = vmul.f32 %v1126, %v1129
    %v1138 = vmul.f32 %v1126, %v1130
    %v1139 = vmul.f32 %v1126, %v1131
    %v1140 = vmul.f32 %v1126, %v1132
    %v1141 = vadd.f32 %v1119, %v1137
    %v1142 = vadd.f32 %v1120, %v1138
    %v1143 = vadd.f32 %v1121, %v1139
    %v1144 = vadd.f32 %v1122, %v1140
    %v1145 = vld [vmem:[%s135] ss:$8 sm:$0xf]
    %1146 = vset.pattern.permute.xlu0 3
    %1147 = vperm.xlu0 %1146, %v1067
    %v1148 = vpop.permute.xlu0 %1147
    %v1151 = vperm.slane %v1145, 0
    %v1152 = vperm.slane %v1145, 1
    %v1153 = vperm.slane %v1145, 2
    %v1154 = vperm.slane %v1145, 3
    %v1159 = vmul.f32 %v1148, %v1151
    %v1160 = vmul.f32 %v1148, %v1152
    %v1161 = vmul.f32 %v1148, %v1153
    %v1162 = vmul.f32 %v1148, %v1154
    %v1163 = vadd.f32 %v1141, %v1159
    %v1164 = vadd.f32 %v1142, %v1160
    %v1165 = vadd.f32 %v1143, %v1161
    %v1166 = vadd.f32 %v1144, %v1162
    %v1167 = vld [vmem:[%s158] ss:$8 sm:$0xf]
    %1168 = vset.pattern.permute.xlu0 4
    %1169 = vperm.xlu0 %1168, %v1067
    %v1170 = vpop.permute.xlu0 %1169
    %v1173 = vperm.slane %v1167, 0
    %v1174 = vperm.slane %v1167, 1
    %v1175 = vperm.slane %v1167, 2
    %v1176 = vperm.slane %v1167, 3
    %v1181 = vmul.f32 %v1170, %v1173
    %v1182 = vmul.f32 %v1170, %v1174
    %v1183 = vmul.f32 %v1170, %v1175
    %v1184 = vmul.f32 %v1170, %v1176
    %v1185 = vadd.f32 %v1163, %v1181
    %v1186 = vadd.f32 %v1164, %v1182
    %v1187 = vadd.f32 %v1165, %v1183
    %v1188 = vadd.f32 %v1166, %v1184
    %1189 = vst [vmem:[#allocation2 + $0x100] sm:$0xff] %v1185
    %1190 = vst [vmem:[#allocation2 + $0x108] sm:$0xff] %v1186
    %1191 = vst [vmem:[#allocation2 + $0x110] sm:$0xff] %v1187
    %1192 = vst [vmem:[#allocation2 + $0x118] sm:$0xff] %v1188
    %v1193 = vld [vmem:[%s0 + $0x48] sm:$0xff]
    %v1194 = vld [vmem:[%s3] sm:$0xf]
    %v1195 = vld [vmem:[#allocation4] ss:$8 sm:$0xf]
    %1197 = vset.pattern.permute.xlu0 0
    %1198 = vperm.xlu0 %1197, %v1193
    %v1199 = vpop.permute.xlu0 %1198
    %v1202 = vperm.slane %v1195, 0
    %v1203 = vperm.slane %v1195, 1
    %v1204 = vperm.slane %v1195, 2
    %v1205 = vperm.slane %v1195, 3
    %v1210 = vmul.f32 %v1199, %v1202
    %v1211 = vmul.f32 %v1199, %v1203
    %v1212 = vmul.f32 %v1199, %v1204
    %v1213 = vmul.f32 %v1199, %v1205
    %v1215 = vperm.slane %v1194, 0
    %v1216 = vperm.slane %v1194, 1
    %v1217 = vperm.slane %v1194, 2
    %v1218 = vperm.slane %v1194, 3
    %v1223 = vadd.f32 %v1215, %v1210
    %v1224 = vadd.f32 %v1216, %v1211
    %v1225 = vadd.f32 %v1217, %v1212
    %v1226 = vadd.f32 %v1218, %v1213
    %v1227 = vld [vmem:[%s89] ss:$8 sm:$0xf]
    %1228 = vset.pattern.permute.xlu0 1
    %1229 = vperm.xlu0 %1228, %v1193
    %v1230 = vpop.permute.xlu0 %1229
    %v1233 = vperm.slane %v1227, 0
    %v1234 = vperm.slane %v1227, 1
    %v1235 = vperm.slane %v1227, 2
    %v1236 = vperm.slane %v1227, 3
    %v1241 = vmul.f32 %v1230, %v1233
    %v1242 = vmul.f32 %v1230, %v1234
    %v1243 = vmul.f32 %v1230, %v1235
    %v1244 = vmul.f32 %v1230, %v1236
    %v1245 = vadd.f32 %v1223, %v1241
    %v1246 = vadd.f32 %v1224, %v1242
    %v1247 = vadd.f32 %v1225, %v1243
    %v1248 = vadd.f32 %v1226, %v1244
    %v1249 = vld [vmem:[%s112] ss:$8 sm:$0xf]
    %1250 = vset.pattern.permute.xlu0 2
    %1251 = vperm.xlu0 %1250, %v1193
    %v1252 = vpop.permute.xlu0 %1251
    %v1255 = vperm.slane %v1249, 0
    %v1256 = vperm.slane %v1249, 1
    %v1257 = vperm.slane %v1249, 2
    %v1258 = vperm.slane %v1249, 3
    %v1263 = vmul.f32 %v1252, %v1255
    %v1264 = vmul.f32 %v1252, %v1256
    %v1265 = vmul.f32 %v1252, %v1257
    %v1266 = vmul.f32 %v1252, %v1258
    %v1267 = vadd.f32 %v1245, %v1263
    %v1268 = vadd.f32 %v1246, %v1264
    %v1269 = vadd.f32 %v1247, %v1265
    %v1270 = vadd.f32 %v1248, %v1266
    %v1271 = vld [vmem:[%s135] ss:$8 sm:$0xf]
    %1272 = vset.pattern.permute.xlu0 3
    %1273 = vperm.xlu0 %1272, %v1193
    %v1274 = vpop.permute.xlu0 %1273
    %v1277 = vperm.slane %v1271, 0
    %v1278 = vperm.slane %v1271, 1
    %v1279 = vperm.slane %v1271, 2
    %v1280 = vperm.slane %v1271, 3
    %v1285 = vmul.f32 %v1274, %v1277
    %v1286 = vmul.f32 %v1274, %v1278
    %v1287 = vmul.f32 %v1274, %v1279
    %v1288 = vmul.f32 %v1274, %v1280
    %v1289 = vadd.f32 %v1267, %v1285
    %v1290 = vadd.f32 %v1268, %v1286
    %v1291 = vadd.f32 %v1269, %v1287
    %v1292 = vadd.f32 %v1270, %v1288
    %v1293 = vld [vmem:[%s158] ss:$8 sm:$0xf]
    %1294 = vset.pattern.permute.xlu0 4
    %1295 = vperm.xlu0 %1294, %v1193
    %v1296 = vpop.permute.xlu0 %1295
    %v1299 = vperm.slane %v1293, 0
    %v1300 = vperm.slane %v1293, 1
    %v1301 = vperm.slane %v1293, 2
    %v1302 = vperm.slane %v1293, 3
    %v1307 = vmul.f32 %v1296, %v1299
    %v1308 = vmul.f32 %v1296, %v1300
    %v1309 = vmul.f32 %v1296, %v1301
    %v1310 = vmul.f32 %v1296, %v1302
    %v1311 = vadd.f32 %v1289, %v1307
    %v1312 = vadd.f32 %v1290, %v1308
    %v1313 = vadd.f32 %v1291, %v1309
    %v1314 = vadd.f32 %v1292, %v1310
    %1315 = vst [vmem:[#allocation2 + $0x120] sm:$0xff] %v1311
    %1316 = vst [vmem:[#allocation2 + $0x128] sm:$0xff] %v1312
    %1317 = vst [vmem:[#allocation2 + $0x130] sm:$0xff] %v1313
    %1318 = vst [vmem:[#allocation2 + $0x138] sm:$0xff] %v1314
    %v1319 = vld [vmem:[%s0 + $0x50] sm:$0xff]
    %v1320 = vld [vmem:[%s3] sm:$0xf]
    %v1321 = vld [vmem:[#allocation4] ss:$8 sm:$0xf]
    %1323 = vset.pattern.permute.xlu0 0
    %1324 = vperm.xlu0 %1323, %v1319
    %v1325 = vpop.permute.xlu0 %1324
    %v1328 = vperm.slane %v1321, 0
    %v1329 = vperm.slane %v1321, 1
    %v1330 = vperm.slane %v1321, 2
    %v1331 = vperm.slane %v1321, 3
    %v1336 = vmul.f32 %v1325, %v1328
    %v1337 = vmul.f32 %v1325, %v1329
    %v1338 = vmul.f32 %v1325, %v1330
    %v1339 = vmul.f32 %v1325, %v1331
    %v1341 = vperm.slane %v1320, 0
    %v1342 = vperm.slane %v1320, 1
    %v1343 = vperm.slane %v1320, 2
    %v1344 = vperm.slane %v1320, 3
    %v1349 = vadd.f32 %v1341, %v1336
    %v1350 = vadd.f32 %v1342, %v1337
    %v1351 = vadd.f32 %v1343, %v1338
    %v1352 = vadd.f32 %v1344, %v1339
    %v1353 = vld [vmem:[%s89] ss:$8 sm:$0xf]
    %1354 = vset.pattern.permute.xlu0 1
    %1355 = vperm.xlu0 %1354, %v1319
    %v1356 = vpop.permute.xlu0 %1355
    %v1359 = vperm.slane %v1353, 0
    %v1360 = vperm.slane %v1353, 1
    %v1361 = vperm.slane %v1353, 2
    %v1362 = vperm.slane %v1353, 3
    %v1367 = vmul.f32 %v1356, %v1359
    %v1368 = vmul.f32 %v1356, %v1360
    %v1369 = vmul.f32 %v1356, %v1361
    %v1370 = vmul.f32 %v1356, %v1362
    %v1371 = vadd.f32 %v1349, %v1367
    %v1372 = vadd.f32 %v1350, %v1368
    %v1373 = vadd.f32 %v1351, %v1369
    %v1374 = vadd.f32 %v1352, %v1370
    %v1375 = vld [vmem:[%s112] ss:$8 sm:$0xf]
    %1376 = vset.pattern.permute.xlu0 2
    %1377 = vperm.xlu0 %1376, %v1319
    %v1378 = vpop.permute.xlu0 %1377
    %v1381 = vperm.slane %v1375, 0
    %v1382 = vperm.slane %v1375, 1
    %v1383 = vperm.slane %v1375, 2
    %v1384 = vperm.slane %v1375, 3
    %v1389 = vmul.f32 %v1378, %v1381
    %v1390 = vmul.f32 %v1378, %v1382
    %v1391 = vmul.f32 %v1378, %v1383
    %v1392 = vmul.f32 %v1378, %v1384
    %v1393 = vadd.f32 %v1371, %v1389
    %v1394 = vadd.f32 %v1372, %v1390
    %v1395 = vadd.f32 %v1373, %v1391
    %v1396 = vadd.f32 %v1374, %v1392
    %v1397 = vld [vmem:[%s135] ss:$8 sm:$0xf]
    %1398 = vset.pattern.permute.xlu0 3
    %1399 = vperm.xlu0 %1398, %v1319
    %v1400 = vpop.permute.xlu0 %1399
    %v1403 = vperm.slane %v1397, 0
    %v1404 = vperm.slane %v1397, 1
    %v1405 = vperm.slane %v1397, 2
    %v1406 = vperm.slane %v1397, 3
    %v1411 = vmul.f32 %v1400, %v1403
    %v1412 = vmul.f32 %v1400, %v1404
    %v1413 = vmul.f32 %v1400, %v1405
    %v1414 = vmul.f32 %v1400, %v1406
    %v1415 = vadd.f32 %v1393, %v1411
    %v1416 = vadd.f32 %v1394, %v1412
    %v1417 = vadd.f32 %v1395, %v1413
    %v1418 = vadd.f32 %v1396, %v1414
    %v1419 = vld [vmem:[%s158] ss:$8 sm:$0xf]
    %1420 = vset.pattern.permute.xlu0 4
    %1421 = vperm.xlu0 %1420, %v1319
    %v1422 = vpop.permute.xlu0 %1421
    %v1425 = vperm.slane %v1419, 0
    %v1426 = vperm.slane %v1419, 1
    %v1427 = vperm.slane %v1419, 2
    %v1428 = vperm.slane %v1419, 3
    %v1433 = vmul.f32 %v1422, %v1425
    %v1434 = vmul.f32 %v1422, %v1426
    %v1435 = vmul.f32 %v1422, %v1427
    %v1436 = vmul.f32 %v1422, %v1428
    %v1437 = vadd.f32 %v1415, %v1433
    %v1438 = vadd.f32 %v1416, %v1434
    %v1439 = vadd.f32 %v1417, %v1435
    %v1440 = vadd.f32 %v1418, %v1436
    %1441 = vst [vmem:[#allocation2 + $0x140] sm:$0xff] %v1437
    %1442 = vst [vmem:[#allocation2 + $0x148] sm:$0xff] %v1438
    %1443 = vst [vmem:[#allocation2 + $0x150] sm:$0xff] %v1439
    %1444 = vst [vmem:[#allocation2 + $0x158] sm:$0xff] %v1440
    %v1445 = vld [vmem:[%s0 + $0x58] sm:$0xff]
    %v1446 = vld [vmem:[%s3] sm:$0xf]
    %v1447 = vld [vmem:[#allocation4] ss:$8 sm:$0xf]
    %1449 = vset.pattern.permute.xlu0 0
    %1450 = vperm.xlu0 %1449, %v1445
    %v1451 = vpop.permute.xlu0 %1450
    %v1454 = vperm.slane %v1447, 0
    %v1455 = vperm.slane %v1447, 1
    %v1456 = vperm.slane %v1447, 2
    %v1457 = vperm.slane %v1447, 3
    %v1462 = vmul.f32 %v1451, %v1454
    %v1463 = vmul.f32 %v1451, %v1455
    %v1464 = vmul.f32 %v1451, %v1456
    %v1465 = vmul.f32 %v1451, %v1457
    %v1467 = vperm.slane %v1446, 0
    %v1468 = vperm.slane %v1446, 1
    %v1469 = vperm.slane %v1446, 2
    %v1470 = vperm.slane %v1446, 3
    %v1475 = vadd.f32 %v1467, %v1462
    %v1476 = vadd.f32 %v1468, %v1463
    %v1477 = vadd.f32 %v1469, %v1464
    %v1478 = vadd.f32 %v1470, %v1465
    %v1479 = vld [vmem:[%s89] ss:$8 sm:$0xf]
    %1480 = vset.pattern.permute.xlu0 1
    %1481 = vperm.xlu0 %1480, %v1445
    %v1482 = vpop.permute.xlu0 %1481
    %v1485 = vperm.slane %v1479, 0
    %v1486 = vperm.slane %v1479, 1
    %v1487 = vperm.slane %v1479, 2
    %v1488 = vperm.slane %v1479, 3
    %v1493 = vmul.f32 %v1482, %v1485
    %v1494 = vmul.f32 %v1482, %v1486
    %v1495 = vmul.f32 %v1482, %v1487
    %v1496 = vmul.f32 %v1482, %v1488
    %v1497 = vadd.f32 %v1475, %v1493
    %v1498 = vadd.f32 %v1476, %v1494
    %v1499 = vadd.f32 %v1477, %v1495
    %v1500 = vadd.f32 %v1478, %v1496
    %v1501 = vld [vmem:[%s112] ss:$8 sm:$0xf]
    %1502 = vset.pattern.permute.xlu0 2
    %1503 = vperm.xlu0 %1502, %v1445
    %v1504 = vpop.permute.xlu0 %1503
    %v1507 = vperm.slane %v1501, 0
    %v1508 = vperm.slane %v1501, 1
    %v1509 = vperm.slane %v1501, 2
    %v1510 = vperm.slane %v1501, 3
    %v1515 = vmul.f32 %v1504, %v1507
    %v1516 = vmul.f32 %v1504, %v1508
    %v1517 = vmul.f32 %v1504, %v1509
    %v1518 = vmul.f32 %v1504, %v1510
    %v1519 = vadd.f32 %v1497, %v1515
    %v1520 = vadd.f32 %v1498, %v1516
    %v1521 = vadd.f32 %v1499, %v1517
    %v1522 = vadd.f32 %v1500, %v1518
    %v1523 = vld [vmem:[%s135] ss:$8 sm:$0xf]
    %1524 = vset.pattern.permute.xlu0 3
    %1525 = vperm.xlu0 %1524, %v1445
    %v1526 = vpop.permute.xlu0 %1525
    %v1529 = vperm.slane %v1523, 0
    %v1530 = vperm.slane %v1523, 1
    %v1531 = vperm.slane %v1523, 2
    %v1532 = vperm.slane %v1523, 3
    %v1537 = vmul.f32 %v1526, %v1529
    %v1538 = vmul.f32 %v1526, %v1530
    %v1539 = vmul.f32 %v1526, %v1531
    %v1540 = vmul.f32 %v1526, %v1532
    %v1541 = vadd.f32 %v1519, %v1537
    %v1542 = vadd.f32 %v1520, %v1538
    %v1543 = vadd.f32 %v1521, %v1539
    %v1544 = vadd.f32 %v1522, %v1540
    %v1545 = vld [vmem:[%s158] ss:$8 sm:$0xf]
    %1546 = vset.pattern.permute.xlu0 4
    %1547 = vperm.xlu0 %1546, %v1445
    %v1548 = vpop.permute.xlu0 %1547
    %v1551 = vperm.slane %v1545, 0
    %v1552 = vperm.slane %v1545, 1
    %v1553 = vperm.slane %v1545, 2
    %v1554 = vperm.slane %v1545, 3
    %v1559 = vmul.f32 %v1548, %v1551
    %v1560 = vmul.f32 %v1548, %v1552
    %v1561 = vmul.f32 %v1548, %v1553
    %v1562 = vmul.f32 %v1548, %v1554
    %v1563 = vadd.f32 %v1541, %v1559
    %v1564 = vadd.f32 %v1542, %v1560
    %v1565 = vadd.f32 %v1543, %v1561
    %v1566 = vadd.f32 %v1544, %v1562
    %1567 = vst [vmem:[#allocation2 + $0x160] sm:$0xff] %v1563
    %1568 = vst [vmem:[#allocation2 + $0x168] sm:$0xff] %v1564
    %1569 = vst [vmem:[#allocation2 + $0x170] sm:$0xff] %v1565
    %1570 = vst [vmem:[#allocation2 + $0x178] sm:$0xff] %v1566
    %v1571 = vld [vmem:[%s0 + $0x60] sm:$0xff]
    %v1572 = vld [vmem:[%s3] sm:$0xf]
    %v1573 = vld [vmem:[#allocation4] ss:$8 sm:$0xf]
    %1575 = vset.pattern.permute.xlu0 0
    %1576 = vperm.xlu0 %1575, %v1571
    %v1577 = vpop.permute.xlu0 %1576
    %v1580 = vperm.slane %v1573, 0
    %v1581 = vperm.slane %v1573, 1
    %v1582 = vperm.slane %v1573, 2
    %v1583 = vperm.slane %v1573, 3
    %v1588 = vmul.f32 %v1577, %v1580
    %v1589 = vmul.f32 %v1577, %v1581
    %v1590 = vmul.f32 %v1577, %v1582
    %v1591 = vmul.f32 %v1577, %v1583
    %v1593 = vperm.slane %v1572, 0
    %v1594 = vperm.slane %v1572, 1
    %v1595 = vperm.slane %v1572, 2
    %v1596 = vperm.slane %v1572, 3
    %v1601 = vadd.f32 %v1593, %v1588
    %v1602 = vadd.f32 %v1594, %v1589
    %v1603 = vadd.f32 %v1595, %v1590
    %v1604 = vadd.f32 %v1596, %v1591
    %v1605 = vld [vmem:[%s89] ss:$8 sm:$0xf]
    %1606 = vset.pattern.permute.xlu0 1
    %1607 = vperm.xlu0 %1606, %v1571
    %v1608 = vpop.permute.xlu0 %1607
    %v1611 = vperm.slane %v1605, 0
    %v1612 = vperm.slane %v1605, 1
    %v1613 = vperm.slane %v1605, 2
    %v1614 = vperm.slane %v1605, 3
    %v1619 = vmul.f32 %v1608, %v1611
    %v1620 = vmul.f32 %v1608, %v1612
    %v1621 = vmul.f32 %v1608, %v1613
    %v1622 = vmul.f32 %v1608, %v1614
    %v1623 = vadd.f32 %v1601, %v1619
    %v1624 = vadd.f32 %v1602, %v1620
    %v1625 = vadd.f32 %v1603, %v1621
    %v1626 = vadd.f32 %v1604, %v1622
    %v1627 = vld [vmem:[%s112] ss:$8 sm:$0xf]
    %1628 = vset.pattern.permute.xlu0 2
    %1629 = vperm.xlu0 %1628, %v1571
    %v1630 = vpop.permute.xlu0 %1629
    %v1633 = vperm.slane %v1627, 0
    %v1634 = vperm.slane %v1627, 1
    %v1635 = vperm.slane %v1627, 2
    %v1636 = vperm.slane %v1627, 3
    %v1641 = vmul.f32 %v1630, %v1633
    %v1642 = vmul.f32 %v1630, %v1634
    %v1643 = vmul.f32 %v1630, %v1635
    %v1644 = vmul.f32 %v1630, %v1636
    %v1645 = vadd.f32 %v1623, %v1641
    %v1646 = vadd.f32 %v1624, %v1642
    %v1647 = vadd.f32 %v1625, %v1643
    %v1648 = vadd.f32 %v1626, %v1644
    %v1649 = vld [vmem:[%s135] ss:$8 sm:$0xf]
    %1650 = vset.pattern.permute.xlu0 3
    %1651 = vperm.xlu0 %1650, %v1571
    %v1652 = vpop.permute.xlu0 %1651
    %v1655 = vperm.slane %v1649, 0
    %v1656 = vperm.slane %v1649, 1
    %v1657 = vperm.slane %v1649, 2
    %v1658 = vperm.slane %v1649, 3
    %v1663 = vmul.f32 %v1652, %v1655
    %v1664 = vmul.f32 %v1652, %v1656
    %v1665 = vmul.f32 %v1652, %v1657
    %v1666 = vmul.f32 %v1652, %v1658
    %v1667 = vadd.f32 %v1645, %v1663
    %v1668 = vadd.f32 %v1646, %v1664
    %v1669 = vadd.f32 %v1647, %v1665
    %v1670 = vadd.f32 %v1648, %v1666
    %v1671 = vld [vmem:[%s158] ss:$8 sm:$0xf]
    %1672 = vset.pattern.permute.xlu0 4
    %1673 = vperm.xlu0 %1672, %v1571
    %v1674 = vpop.permute.xlu0 %1673
    %v1677 = vperm.slane %v1671, 0
    %v1678 = vperm.slane %v1671, 1
    %v1679 = vperm.slane %v1671, 2
    %v1680 = vperm.slane %v1671, 3
    %v1685 = vmul.f32 %v1674, %v1677
    %v1686 = vmul.f32 %v1674, %v1678
    %v1687 = vmul.f32 %v1674, %v1679
    %v1688 = vmul.f32 %v1674, %v1680
    %v1689 = vadd.f32 %v1667, %v1685
    %v1690 = vadd.f32 %v1668, %v1686
    %v1691 = vadd.f32 %v1669, %v1687
    %v1692 = vadd.f32 %v1670, %v1688
    %1693 = vst [vmem:[#allocation2 + $0x180] sm:$0xff] %v1689
    %1694 = vst [vmem:[#allocation2 + $0x188] sm:$0xff] %v1690
    %1695 = vst [vmem:[#allocation2 + $0x190] sm:$0xff] %v1691
    %1696 = vst [vmem:[#allocation2 + $0x198] sm:$0xff] %v1692
    %v1697 = vld [vmem:[%s0 + $0x68] sm:$0xff]
    %v1698 = vld [vmem:[%s3] sm:$0xf]
    %v1699 = vld [vmem:[#allocation4] ss:$8 sm:$0xf]
    %1701 = vset.pattern.permute.xlu0 0
    %1702 = vperm.xlu0 %1701, %v1697
    %v1703 = vpop.permute.xlu0 %1702
    %v1706 = vperm.slane %v1699, 0
    %v1707 = vperm.slane %v1699, 1
    %v1708 = vperm.slane %v1699, 2
    %v1709 = vperm.slane %v1699, 3
    %v1714 = vmul.f32 %v1703, %v1706
    %v1715 = vmul.f32 %v1703, %v1707
    %v1716 = vmul.f32 %v1703, %v1708
    %v1717 = vmul.f32 %v1703, %v1709
    %v1719 = vperm.slane %v1698, 0
    %v1720 = vperm.slane %v1698, 1
    %v1721 = vperm.slane %v1698, 2
    %v1722 = vperm.slane %v1698, 3
    %v1727 = vadd.f32 %v1719, %v1714
    %v1728 = vadd.f32 %v1720, %v1715
    %v1729 = vadd.f32 %v1721, %v1716
    %v1730 = vadd.f32 %v1722, %v1717
    %v1731 = vld [vmem:[%s89] ss:$8 sm:$0xf]
    %1732 = vset.pattern.permute.xlu0 1
    %1733 = vperm.xlu0 %1732, %v1697
    %v1734 = vpop.permute.xlu0 %1733
    %v1737 = vperm.slane %v1731, 0
    %v1738 = vperm.slane %v1731, 1
    %v1739 = vperm.slane %v1731, 2
    %v1740 = vperm.slane %v1731, 3
    %v1745 = vmul.f32 %v1734, %v1737
    %v1746 = vmul.f32 %v1734, %v1738
    %v1747 = vmul.f32 %v1734, %v1739
    %v1748 = vmul.f32 %v1734, %v1740
    %v1749 = vadd.f32 %v1727, %v1745
    %v1750 = vadd.f32 %v1728, %v1746
    %v1751 = vadd.f32 %v1729, %v1747
    %v1752 = vadd.f32 %v1730, %v1748
    %v1753 = vld [vmem:[%s112] ss:$8 sm:$0xf]
    %1754 = vset.pattern.permute.xlu0 2
    %1755 = vperm.xlu0 %1754, %v1697
    %v1756 = vpop.permute.xlu0 %1755
    %v1759 = vperm.slane %v1753, 0
    %v1760 = vperm.slane %v1753, 1
    %v1761 = vperm.slane %v1753, 2
    %v1762 = vperm.slane %v1753, 3
    %v1767 = vmul.f32 %v1756, %v1759
    %v1768 = vmul.f32 %v1756, %v1760
    %v1769 = vmul.f32 %v1756, %v1761
    %v1770 = vmul.f32 %v1756, %v1762
    %v1771 = vadd.f32 %v1749, %v1767
    %v1772 = vadd.f32 %v1750, %v1768
    %v1773 = vadd.f32 %v1751, %v1769
    %v1774 = vadd.f32 %v1752, %v1770
    %v1775 = vld [vmem:[%s135] ss:$8 sm:$0xf]
    %1776 = vset.pattern.permute.xlu0 3
    %1777 = vperm.xlu0 %1776, %v1697
    %v1778 = vpop.permute.xlu0 %1777
    %v1781 = vperm.slane %v1775, 0
    %v1782 = vperm.slane %v1775, 1
    %v1783 = vperm.slane %v1775, 2
    %v1784 = vperm.slane %v1775, 3
    %v1789 = vmul.f32 %v1778, %v1781
    %v1790 = vmul.f32 %v1778, %v1782
    %v1791 = vmul.f32 %v1778, %v1783
    %v1792 = vmul.f32 %v1778, %v1784
    %v1793 = vadd.f32 %v1771, %v1789
    %v1794 = vadd.f32 %v1772, %v1790
    %v1795 = vadd.f32 %v1773, %v1791
    %v1796 = vadd.f32 %v1774, %v1792
    %v1797 = vld [vmem:[%s158] ss:$8 sm:$0xf]
    %1798 = vset.pattern.permute.xlu0 4
    %1799 = vperm.xlu0 %1798, %v1697
    %v1800 = vpop.permute.xlu0 %1799
    %v1803 = vperm.slane %v1797, 0
    %v1804 = vperm.slane %v1797, 1
    %v1805 = vperm.slane %v1797, 2
    %v1806 = vperm.slane %v1797, 3
    %v1811 = vmul.f32 %v1800, %v1803
    %v1812 = vmul.f32 %v1800, %v1804
    %v1813 = vmul.f32 %v1800, %v1805
    %v1814 = vmul.f32 %v1800, %v1806
    %v1815 = vadd.f32 %v1793, %v1811
    %v1816 = vadd.f32 %v1794, %v1812
    %v1817 = vadd.f32 %v1795, %v1813
    %v1818 = vadd.f32 %v1796, %v1814
    %1819 = vst [vmem:[#allocation2 + $0x1a0] sm:$0xff] %v1815
    %1820 = vst [vmem:[#allocation2 + $0x1a8] sm:$0xff] %v1816
    %1821 = vst [vmem:[#allocation2 + $0x1b0] sm:$0xff] %v1817
    %1822 = vst [vmem:[#allocation2 + $0x1b8] sm:$0xff] %v1818
    %v1823 = vld [vmem:[%s0 + $0x70] sm:$0xff]
    %v1824 = vld [vmem:[%s3] sm:$0xf]
    %v1825 = vld [vmem:[#allocation4] ss:$8 sm:$0xf]
    %1827 = vset.pattern.permute.xlu0 0
    %1828 = vperm.xlu0 %1827, %v1823
    %v1829 = vpop.permute.xlu0 %1828
    %v1832 = vperm.slane %v1825, 0
    %v1833 = vperm.slane %v1825, 1
    %v1834 = vperm.slane %v1825, 2
    %v1835 = vperm.slane %v1825, 3
    %v1840 = vmul.f32 %v1829, %v1832
    %v1841 = vmul.f32 %v1829, %v1833
    %v1842 = vmul.f32 %v1829, %v1834
    %v1843 = vmul.f32 %v1829, %v1835
    %v1845 = vperm.slane %v1824, 0
    %v1846 = vperm.slane %v1824, 1
    %v1847 = vperm.slane %v1824, 2
    %v1848 = vperm.slane %v1824, 3
    %v1853 = vadd.f32 %v1845, %v1840
    %v1854 = vadd.f32 %v1846, %v1841
    %v1855 = vadd.f32 %v1847, %v1842
    %v1856 = vadd.f32 %v1848, %v1843
    %v1857 = vld [vmem:[%s89] ss:$8 sm:$0xf]
    %1858 = vset.pattern.permute.xlu0 1
    %1859 = vperm.xlu0 %1858, %v1823
    %v1860 = vpop.permute.xlu0 %1859
    %v1863 = vperm.slane %v1857, 0
    %v1864 = vperm.slane %v1857, 1
    %v1865 = vperm.slane %v1857, 2
    %v1866 = vperm.slane %v1857, 3
    %v1871 = vmul.f32 %v1860, %v1863
    %v1872 = vmul.f32 %v1860, %v1864
    %v1873 = vmul.f32 %v1860, %v1865
    %v1874 = vmul.f32 %v1860, %v1866
    %v1875 = vadd.f32 %v1853, %v1871
    %v1876 = vadd.f32 %v1854, %v1872
    %v1877 = vadd.f32 %v1855, %v1873
    %v1878 = vadd.f32 %v1856, %v1874
    %v1879 = vld [vmem:[%s112] ss:$8 sm:$0xf]
    %1880 = vset.pattern.permute.xlu0 2
    %1881 = vperm.xlu0 %1880, %v1823
    %v1882 = vpop.permute.xlu0 %1881
    %v1885 = vperm.slane %v1879, 0
    %v1886 = vperm.slane %v1879, 1
    %v1887 = vperm.slane %v1879, 2
    %v1888 = vperm.slane %v1879, 3
    %v1893 = vmul.f32 %v1882, %v1885
    %v1894 = vmul.f32 %v1882, %v1886
    %v1895 = vmul.f32 %v1882, %v1887
    %v1896 = vmul.f32 %v1882, %v1888
    %v1897 = vadd.f32 %v1875, %v1893
    %v1898 = vadd.f32 %v1876, %v1894
    %v1899 = vadd.f32 %v1877, %v1895
    %v1900 = vadd.f32 %v1878, %v1896
    %v1901 = vld [vmem:[%s135] ss:$8 sm:$0xf]
    %1902 = vset.pattern.permute.xlu0 3
    %1903 = vperm.xlu0 %1902, %v1823
    %v1904 = vpop.permute.xlu0 %1903
    %v1907 = vperm.slane %v1901, 0
    %v1908 = vperm.slane %v1901, 1
    %v1909 = vperm.slane %v1901, 2
    %v1910 = vperm.slane %v1901, 3
    %v1915 = vmul.f32 %v1904, %v1907
    %v1916 = vmul.f32 %v1904, %v1908
    %v1917 = vmul.f32 %v1904, %v1909
    %v1918 = vmul.f32 %v1904, %v1910
    %v1919 = vadd.f32 %v1897, %v1915
    %v1920 = vadd.f32 %v1898, %v1916
    %v1921 = vadd.f32 %v1899, %v1917
    %v1922 = vadd.f32 %v1900, %v1918
    %v1923 = vld [vmem:[%s158] ss:$8 sm:$0xf]
    %1924 = vset.pattern.permute.xlu0 4
    %1925 = vperm.xlu0 %1924, %v1823
    %v1926 = vpop.permute.xlu0 %1925
    %v1929 = vperm.slane %v1923, 0
    %v1930 = vperm.slane %v1923, 1
    %v1931 = vperm.slane %v1923, 2
    %v1932 = vperm.slane %v1923, 3
    %v1937 = vmul.f32 %v1926, %v1929
    %v1938 = vmul.f32 %v1926, %v1930
    %v1939 = vmul.f32 %v1926, %v1931
    %v1940 = vmul.f32 %v1926, %v1932
    %v1941 = vadd.f32 %v1919, %v1937
    %v1942 = vadd.f32 %v1920, %v1938
    %v1943 = vadd.f32 %v1921, %v1939
    %v1944 = vadd.f32 %v1922, %v1940
    %1945 = vst [vmem:[#allocation2 + $0x1c0] sm:$0xff] %v1941
    %1946 = vst [vmem:[#allocation2 + $0x1c8] sm:$0xff] %v1942
    %1947 = vst [vmem:[#allocation2 + $0x1d0] sm:$0xff] %v1943
    %1948 = vst [vmem:[#allocation2 + $0x1d8] sm:$0xff] %v1944
    %v1949 = vld [vmem:[%s0 + $0x78] sm:$0xff]
    %v1950 = vld [vmem:[%s3] sm:$0xf]
    %v1951 = vld [vmem:[#allocation4] ss:$8 sm:$0xf]
    %1953 = vset.pattern.permute.xlu0 0
    %1954 = vperm.xlu0 %1953, %v1949
    %v1955 = vpop.permute.xlu0 %1954
    %v1958 = vperm.slane %v1951, 0
    %v1959 = vperm.slane %v1951, 1
    %v1960 = vperm.slane %v1951, 2
    %v1961 = vperm.slane %v1951, 3
    %v1966 = vmul.f32 %v1955, %v1958
    %v1967 = vmul.f32 %v1955, %v1959
    %v1968 = vmul.f32 %v1955, %v1960
    %v1969 = vmul.f32 %v1955, %v1961
    %v1971 = vperm.slane %v1950, 0
    %v1972 = vperm.slane %v1950, 1
    %v1973 = vperm.slane %v1950, 2
    %v1974 = vperm.slane %v1950, 3
    %v1979 = vadd.f32 %v1971, %v1966
    %v1980 = vadd.f32 %v1972, %v1967
    %v1981 = vadd.f32 %v1973, %v1968
    %v1982 = vadd.f32 %v1974, %v1969
    %v1983 = vld [vmem:[%s89] ss:$8 sm:$0xf]
    %1984 = vset.pattern.permute.xlu0 1
    %1985 = vperm.xlu0 %1984, %v1949
    %v1986 = vpop.permute.xlu0 %1985
    %v1989 = vperm.slane %v1983, 0
    %v1990 = vperm.slane %v1983, 1
    %v1991 = vperm.slane %v1983, 2
    %v1992 = vperm.slane %v1983, 3
    %v1997 = vmul.f32 %v1986, %v1989
    %v1998 = vmul.f32 %v1986, %v1990
    %v1999 = vmul.f32 %v1986, %v1991
    %v2000 = vmul.f32 %v1986, %v1992
    %v2001 = vadd.f32 %v1979, %v1997
    %v2002 = vadd.f32 %v1980, %v1998
    %v2003 = vadd.f32 %v1981, %v1999
    %v2004 = vadd.f32 %v1982, %v2000
    %v2005 = vld [vmem:[%s112] ss:$8 sm:$0xf]
    %2006 = vset.pattern.permute.xlu0 2
    %2007 = vperm.xlu0 %2006, %v1949
    %v2008 = vpop.permute.xlu0 %2007
    %v2011 = vperm.slane %v2005, 0
    %v2012 = vperm.slane %v2005, 1
    %v2013 = vperm.slane %v2005, 2
    %v2014 = vperm.slane %v2005, 3
    %v2019 = vmul.f32 %v2008, %v2011
    %v2020 = vmul.f32 %v2008, %v2012
    %v2021 = vmul.f32 %v2008, %v2013
    %v2022 = vmul.f32 %v2008, %v2014
    %v2023 = vadd.f32 %v2001, %v2019
    %v2024 = vadd.f32 %v2002, %v2020
    %v2025 = vadd.f32 %v2003, %v2021
    %v2026 = vadd.f32 %v2004, %v2022
    %v2027 = vld [vmem:[%s135] ss:$8 sm:$0xf]
    %2028 = vset.pattern.permute.xlu0 3
    %2029 = vperm.xlu0 %2028, %v1949
    %v2030 = vpop.permute.xlu0 %2029
    %v2033 = vperm.slane %v2027, 0
    %v2034 = vperm.slane %v2027, 1
    %v2035 = vperm.slane %v2027, 2
    %v2036 = vperm.slane %v2027, 3
    %v2041 = vmul.f32 %v2030, %v2033
    %v2042 = vmul.f32 %v2030, %v2034
    %v2043 = vmul.f32 %v2030, %v2035
    %v2044 = vmul.f32 %v2030, %v2036
    %v2045 = vadd.f32 %v2023, %v2041
    %v2046 = vadd.f32 %v2024, %v2042
    %v2047 = vadd.f32 %v2025, %v2043
    %v2048 = vadd.f32 %v2026, %v2044
    %v2049 = vld [vmem:[%s158] ss:$8 sm:$0xf]
    %2050 = vset.pattern.permute.xlu0 4
    %2051 = vperm.xlu0 %2050, %v1949
    %v2052 = vpop.permute.xlu0 %2051
    %v2055 = vperm.slane %v2049, 0
    %v2056 = vperm.slane %v2049, 1
    %v2057 = vperm.slane %v2049, 2
    %v2058 = vperm.slane %v2049, 3
    %v2063 = vmul.f32 %v2052, %v2055
    %v2064 = vmul.f32 %v2052, %v2056
    %v2065 = vmul.f32 %v2052, %v2057
    %v2066 = vmul.f32 %v2052, %v2058
    %v2067 = vadd.f32 %v2045, %v2063
    %v2068 = vadd.f32 %v2046, %v2064
    %v2069 = vadd.f32 %v2047, %v2065
    %v2070 = vadd.f32 %v2048, %v2066
    %2071 = vst [vmem:[#allocation2 + $0x1e0] sm:$0xff] %v2067
    %2072 = vst [vmem:[#allocation2 + $0x1e8] sm:$0xff] %v2068
    %2073 = vst [vmem:[#allocation2 + $0x1f0] sm:$0xff] %v2069
    %2074 = vst [vmem:[#allocation2 + $0x1f8] sm:$0xff] %v2070
    %v2075 = vld [vmem:[%s0 + $0x80] sm:$0xff]
    %v2076 = vld [vmem:[%s3] sm:$0xf]
    %v2077 = vld [vmem:[#allocation4] ss:$8 sm:$0xf]
    %2079 = vset.pattern.permute.xlu0 0
    %2080 = vperm.xlu0 %2079, %v2075
    %v2081 = vpop.permute.xlu0 %2080
    %v2084 = vperm.slane %v2077, 0
    %v2085 = vperm.slane %v2077, 1
    %v2086 = vperm.slane %v2077, 2
    %v2087 = vperm.slane %v2077, 3
    %v2092 = vmul.f32 %v2081, %v2084
    %v2093 = vmul.f32 %v2081, %v2085
    %v2094 = vmul.f32 %v2081, %v2086
    %v2095 = vmul.f32 %v2081, %v2087
    %v2097 = vperm.slane %v2076, 0
    %v2098 = vperm.slane %v2076, 1
    %v2099 = vperm.slane %v2076, 2
    %v2100 = vperm.slane %v2076, 3
    %v2105 = vadd.f32 %v2097, %v2092
    %v2106 = vadd.f32 %v2098, %v2093
    %v2107 = vadd.f32 %v2099, %v2094
    %v2108 = vadd.f32 %v2100, %v2095
    %v2109 = vld [vmem:[%s89] ss:$8 sm:$0xf]
    %2110 = vset.pattern.permute.xlu0 1
    %2111 = vperm.xlu0 %2110, %v2075
    %v2112 = vpop.permute.xlu0 %2111
    %v2115 = vperm.slane %v2109, 0
    %v2116 = vperm.slane %v2109, 1
    %v2117 = vperm.slane %v2109, 2
    %v2118 = vperm.slane %v2109, 3
    %v2123 = vmul.f32 %v2112, %v2115
    %v2124 = vmul.f32 %v2112, %v2116
    %v2125 = vmul.f32 %v2112, %v2117
    %v2126 = vmul.f32 %v2112, %v2118
    %v2127 = vadd.f32 %v2105, %v2123
    %v2128 = vadd.f32 %v2106, %v2124
    %v2129 = vadd.f32 %v2107, %v2125
    %v2130 = vadd.f32 %v2108, %v2126
    %v2131 = vld [vmem:[%s112] ss:$8 sm:$0xf]
    %2132 = vset.pattern.permute.xlu0 2
    %2133 = vperm.xlu0 %2132, %v2075
    %v2134 = vpop.permute.xlu0 %2133
    %v2137 = vperm.slane %v2131, 0
    %v2138 = vperm.slane %v2131, 1
    %v2139 = vperm.slane %v2131, 2
    %v2140 = vperm.slane %v2131, 3
    %v2145 = vmul.f32 %v2134, %v2137
    %v2146 = vmul.f32 %v2134, %v2138
    %v2147 = vmul.f32 %v2134, %v2139
    %v2148 = vmul.f32 %v2134, %v2140
    %v2149 = vadd.f32 %v2127, %v2145
    %v2150 = vadd.f32 %v2128, %v2146
    %v2151 = vadd.f32 %v2129, %v2147
    %v2152 = vadd.f32 %v2130, %v2148
    %v2153 = vld [vmem:[%s135] ss:$8 sm:$0xf]
    %2154 = vset.pattern.permute.xlu0 3
    %2155 = vperm.xlu0 %2154, %v2075
    %v2156 = vpop.permute.xlu0 %2155
    %v2159 = vperm.slane %v2153, 0
    %v2160 = vperm.slane %v2153, 1
    %v2161 = vperm.slane %v2153, 2
    %v2162 = vperm.slane %v2153, 3
    %v2167 = vmul.f32 %v2156, %v2159
    %v2168 = vmul.f32 %v2156, %v2160
    %v2169 = vmul.f32 %v2156, %v2161
    %v2170 = vmul.f32 %v2156, %v2162
    %v2171 = vadd.f32 %v2149, %v2167
    %v2172 = vadd.f32 %v2150, %v2168
    %v2173 = vadd.f32 %v2151, %v2169
    %v2174 = vadd.f32 %v2152, %v2170
    %v2175 = vld [vmem:[%s158] ss:$8 sm:$0xf]
    %2176 = vset.pattern.permute.xlu0 4
    %2177 = vperm.xlu0 %2176, %v2075
    %v2178 = vpop.permute.xlu0 %2177
    %v2181 = vperm.slane %v2175, 0
    %v2182 = vperm.slane %v2175, 1
    %v2183 = vperm.slane %v2175, 2
    %v2184 = vperm.slane %v2175, 3
    %v2189 = vmul.f32 %v2178, %v2181
    %v2190 = vmul.f32 %v2178, %v2182
    %v2191 = vmul.f32 %v2178, %v2183
    %v2192 = vmul.f32 %v2178, %v2184
    %v2193 = vadd.f32 %v2171, %v2189
    %v2194 = vadd.f32 %v2172, %v2190
    %v2195 = vadd.f32 %v2173, %v2191
    %v2196 = vadd.f32 %v2174, %v2192
    %2197 = vst [vmem:[#allocation2 + $0x200] sm:$0xff] %v2193
    %2198 = vst [vmem:[#allocation2 + $0x208] sm:$0xff] %v2194
    %2199 = vst [vmem:[#allocation2 + $0x210] sm:$0xff] %v2195
    %2200 = vst [vmem:[#allocation2 + $0x218] sm:$0xff] %v2196
    %v2201 = vld [vmem:[%s0 + $0x88] sm:$0xff]
    %v2202 = vld [vmem:[%s3] sm:$0xf]
    %v2203 = vld [vmem:[#allocation4] ss:$8 sm:$0xf]
    %2205 = vset.pattern.permute.xlu0 0
    %2206 = vperm.xlu0 %2205, %v2201
    %v2207 = vpop.permute.xlu0 %2206
    %v2210 = vperm.slane %v2203, 0
    %v2211 = vperm.slane %v2203, 1
    %v2212 = vperm.slane %v2203, 2
    %v2213 = vperm.slane %v2203, 3
    %v2218 = vmul.f32 %v2207, %v2210
    %v2219 = vmul.f32 %v2207, %v2211
    %v2220 = vmul.f32 %v2207, %v2212
    %v2221 = vmul.f32 %v2207, %v2213
    %v2223 = vperm.slane %v2202, 0
    %v2224 = vperm.slane %v2202, 1
    %v2225 = vperm.slane %v2202, 2
    %v2226 = vperm.slane %v2202, 3
    %v2231 = vadd.f32 %v2223, %v2218
    %v2232 = vadd.f32 %v2224, %v2219
    %v2233 = vadd.f32 %v2225, %v2220
    %v2234 = vadd.f32 %v2226, %v2221
    %v2235 = vld [vmem:[%s89] ss:$8 sm:$0xf]
    %2236 = vset.pattern.permute.xlu0 1
    %2237 = vperm.xlu0 %2236, %v2201
    %v2238 = vpop.permute.xlu0 %2237
    %v2241 = vperm.slane %v2235, 0
    %v2242 = vperm.slane %v2235, 1
    %v2243 = vperm.slane %v2235, 2
    %v2244 = vperm.slane %v2235, 3
    %v2249 = vmul.f32 %v2238, %v2241
    %v2250 = vmul.f32 %v2238, %v2242
    %v2251 = vmul.f32 %v2238, %v2243
    %v2252 = vmul.f32 %v2238, %v2244
    %v2253 = vadd.f32 %v2231, %v2249
    %v2254 = vadd.f32 %v2232, %v2250
    %v2255 = vadd.f32 %v2233, %v2251
    %v2256 = vadd.f32 %v2234, %v2252
    %v2257 = vld [vmem:[%s112] ss:$8 sm:$0xf]
    %2258 = vset.pattern.permute.xlu0 2
    %2259 = vperm.xlu0 %2258, %v2201
    %v2260 = vpop.permute.xlu0 %2259
    %v2263 = vperm.slane %v2257, 0
    %v2264 = vperm.slane %v2257, 1
    %v2265 = vperm.slane %v2257, 2
    %v2266 = vperm.slane %v2257, 3
    %v2271 = vmul.f32 %v2260, %v2263
    %v2272 = vmul.f32 %v2260, %v2264
    %v2273 = vmul.f32 %v2260, %v2265
    %v2274 = vmul.f32 %v2260, %v2266
    %v2275 = vadd.f32 %v2253, %v2271
    %v2276 = vadd.f32 %v2254, %v2272
    %v2277 = vadd.f32 %v2255, %v2273
    %v2278 = vadd.f32 %v2256, %v2274
    %v2279 = vld [vmem:[%s135] ss:$8 sm:$0xf]
    %2280 = vset.pattern.permute.xlu0 3
    %2281 = vperm.xlu0 %2280, %v2201
    %v2282 = vpop.permute.xlu0 %2281
    %v2285 = vperm.slane %v2279, 0
    %v2286 = vperm.slane %v2279, 1
    %v2287 = vperm.slane %v2279, 2
    %v2288 = vperm.slane %v2279, 3
    %v2293 = vmul.f32 %v2282, %v2285
    %v2294 = vmul.f32 %v2282, %v2286
    %v2295 = vmul.f32 %v2282, %v2287
    %v2296 = vmul.f32 %v2282, %v2288
    %v2297 = vadd.f32 %v2275, %v2293
    %v2298 = vadd.f32 %v2276, %v2294
    %v2299 = vadd.f32 %v2277, %v2295
    %v2300 = vadd.f32 %v2278, %v2296
    %v2301 = vld [vmem:[%s158] ss:$8 sm:$0xf]
    %2302 = vset.pattern.permute.xlu0 4
    %2303 = vperm.xlu0 %2302, %v2201
    %v2304 = vpop.permute.xlu0 %2303
    %v2307 = vperm.slane %v2301, 0
    %v2308 = vperm.slane %v2301, 1
    %v2309 = vperm.slane %v2301, 2
    %v2310 = vperm.slane %v2301, 3
    %v2315 = vmul.f32 %v2304, %v2307
    %v2316 = vmul.f32 %v2304, %v2308
    %v2317 = vmul.f32 %v2304, %v2309
    %v2318 = vmul.f32 %v2304, %v2310
    %v2319 = vadd.f32 %v2297, %v2315
    %v2320 = vadd.f32 %v2298, %v2316
    %v2321 = vadd.f32 %v2299, %v2317
    %v2322 = vadd.f32 %v2300, %v2318
    %2323 = vst [vmem:[#allocation2 + $0x220] sm:$0xff] %v2319
    %2324 = vst [vmem:[#allocation2 + $0x228] sm:$0xff] %v2320
    %2325 = vst [vmem:[#allocation2 + $0x230] sm:$0xff] %v2321
    %2326 = vst [vmem:[#allocation2 + $0x238] sm:$0xff] %v2322
    %v2327 = vld [vmem:[%s0 + $0x90] sm:$0xff]
    %v2328 = vld [vmem:[%s3] sm:$0xf]
    %v2329 = vld [vmem:[#allocation4] ss:$8 sm:$0xf]
    %2331 = vset.pattern.permute.xlu0 0
    %2332 = vperm.xlu0 %2331, %v2327
    %v2333 = vpop.permute.xlu0 %2332
    %v2336 = vperm.slane %v2329, 0
    %v2337 = vperm.slane %v2329, 1
    %v2338 = vperm.slane %v2329, 2
    %v2339 = vperm.slane %v2329, 3
    %v2344 = vmul.f32 %v2333, %v2336
    %v2345 = vmul.f32 %v2333, %v2337
    %v2346 = vmul.f32 %v2333, %v2338
    %v2347 = vmul.f32 %v2333, %v2339
    %v2349 = vperm.slane %v2328, 0
    %v2350 = vperm.slane %v2328, 1
    %v2351 = vperm.slane %v2328, 2
    %v2352 = vperm.slane %v2328, 3
    %v2357 = vadd.f32 %v2349, %v2344
    %v2358 = vadd.f32 %v2350, %v2345
    %v2359 = vadd.f32 %v2351, %v2346
    %v2360 = vadd.f32 %v2352, %v2347
    %v2361 = vld [vmem:[%s89] ss:$8 sm:$0xf]
    %2362 = vset.pattern.permute.xlu0 1
    %2363 = vperm.xlu0 %2362, %v2327
    %v2364 = vpop.permute.xlu0 %2363
    %v2367 = vperm.slane %v2361, 0
    %v2368 = vperm.slane %v2361, 1
    %v2369 = vperm.slane %v2361, 2
    %v2370 = vperm.slane %v2361, 3
    %v2375 = vmul.f32 %v2364, %v2367
    %v2376 = vmul.f32 %v2364, %v2368
    %v2377 = vmul.f32 %v2364, %v2369
    %v2378 = vmul.f32 %v2364, %v2370
    %v2379 = vadd.f32 %v2357, %v2375
    %v2380 = vadd.f32 %v2358, %v2376
    %v2381 = vadd.f32 %v2359, %v2377
    %v2382 = vadd.f32 %v2360, %v2378
    %v2383 = vld [vmem:[%s112] ss:$8 sm:$0xf]
    %2384 = vset.pattern.permute.xlu0 2
    %2385 = vperm.xlu0 %2384, %v2327
    %v2386 = vpop.permute.xlu0 %2385
    %v2389 = vperm.slane %v2383, 0
    %v2390 = vperm.slane %v2383, 1
    %v2391 = vperm.slane %v2383, 2
    %v2392 = vperm.slane %v2383, 3
    %v2397 = vmul.f32 %v2386, %v2389
    %v2398 = vmul.f32 %v2386, %v2390
    %v2399 = vmul.f32 %v2386, %v2391
    %v2400 = vmul.f32 %v2386, %v2392
    %v2401 = vadd.f32 %v2379, %v2397
    %v2402 = vadd.f32 %v2380, %v2398
    %v2403 = vadd.f32 %v2381, %v2399
    %v2404 = vadd.f32 %v2382, %v2400
    %v2405 = vld [vmem:[%s135] ss:$8 sm:$0xf]
    %2406 = vset.pattern.permute.xlu0 3
    %2407 = vperm.xlu0 %2406, %v2327
    %v2408 = vpop.permute.xlu0 %2407
    %v2411 = vperm.slane %v2405, 0
    %v2412 = vperm.slane %v2405, 1
    %v2413 = vperm.slane %v2405, 2
    %v2414 = vperm.slane %v2405, 3
    %v2419 = vmul.f32 %v2408, %v2411
    %v2420 = vmul.f32 %v2408, %v2412
    %v2421 = vmul.f32 %v2408, %v2413
    %v2422 = vmul.f32 %v2408, %v2414
    %v2423 = vadd.f32 %v2401, %v2419
    %v2424 = vadd.f32 %v2402, %v2420
    %v2425 = vadd.f32 %v2403, %v2421
    %v2426 = vadd.f32 %v2404, %v2422
    %v2427 = vld [vmem:[%s158] ss:$8 sm:$0xf]
    %2428 = vset.pattern.permute.xlu0 4
    %2429 = vperm.xlu0 %2428, %v2327
    %v2430 = vpop.permute.xlu0 %2429
    %v2433 = vperm.slane %v2427, 0
    %v2434 = vperm.slane %v2427, 1
    %v2435 = vperm.slane %v2427, 2
    %v2436 = vperm.slane %v2427, 3
    %v2441 = vmul.f32 %v2430, %v2433
    %v2442 = vmul.f32 %v2430, %v2434
    %v2443 = vmul.f32 %v2430, %v2435
    %v2444 = vmul.f32 %v2430, %v2436
    %v2445 = vadd.f32 %v2423, %v2441
    %v2446 = vadd.f32 %v2424, %v2442
    %v2447 = vadd.f32 %v2425, %v2443
    %v2448 = vadd.f32 %v2426, %v2444
    %2449 = vst [vmem:[#allocation2 + $0x240] sm:$0xff] %v2445
    %2450 = vst [vmem:[#allocation2 + $0x248] sm:$0xff] %v2446
    %2451 = vst [vmem:[#allocation2 + $0x250] sm:$0xff] %v2447
    %2452 = vst [vmem:[#allocation2 + $0x258] sm:$0xff] %v2448
    %v2453 = vld [vmem:[%s0 + $0x98] sm:$0xff]
    %v2454 = vld [vmem:[%s3] sm:$0xf]
    %v2455 = vld [vmem:[#allocation4] ss:$8 sm:$0xf]
    %2457 = vset.pattern.permute.xlu0 0
    %2458 = vperm.xlu0 %2457, %v2453
    %v2459 = vpop.permute.xlu0 %2458
    %v2462 = vperm.slane %v2455, 0
    %v2463 = vperm.slane %v2455, 1
    %v2464 = vperm.slane %v2455, 2
    %v2465 = vperm.slane %v2455, 3
    %v2470 = vmul.f32 %v2459, %v2462
    %v2471 = vmul.f32 %v2459, %v2463
    %v2472 = vmul.f32 %v2459, %v2464
    %v2473 = vmul.f32 %v2459, %v2465
    %v2475 = vperm.slane %v2454, 0
    %v2476 = vperm.slane %v2454, 1
    %v2477 = vperm.slane %v2454, 2
    %v2478 = vperm.slane %v2454, 3
    %v2483 = vadd.f32 %v2475, %v2470
    %v2484 = vadd.f32 %v2476, %v2471
    %v2485 = vadd.f32 %v2477, %v2472
    %v2486 = vadd.f32 %v2478, %v2473
    %v2487 = vld [vmem:[%s89] ss:$8 sm:$0xf]
    %2488 = vset.pattern.permute.xlu0 1
    %2489 = vperm.xlu0 %2488, %v2453
    %v2490 = vpop.permute.xlu0 %2489
    %v2493 = vperm.slane %v2487, 0
    %v2494 = vperm.slane %v2487, 1
    %v2495 = vperm.slane %v2487, 2
    %v2496 = vperm.slane %v2487, 3
    %v2501 = vmul.f32 %v2490, %v2493
    %v2502 = vmul.f32 %v2490, %v2494
    %v2503 = vmul.f32 %v2490, %v2495
    %v2504 = vmul.f32 %v2490, %v2496
    %v2505 = vadd.f32 %v2483, %v2501
    %v2506 = vadd.f32 %v2484, %v2502
    %v2507 = vadd.f32 %v2485, %v2503
    %v2508 = vadd.f32 %v2486, %v2504
    %v2509 = vld [vmem:[%s112] ss:$8 sm:$0xf]
    %2510 = vset.pattern.permute.xlu0 2
    %2511 = vperm.xlu0 %2510, %v2453
    %v2512 = vpop.permute.xlu0 %2511
    %v2515 = vperm.slane %v2509, 0
    %v2516 = vperm.slane %v2509, 1
    %v2517 = vperm.slane %v2509, 2
    %v2518 = vperm.slane %v2509, 3
    %v2523 = vmul.f32 %v2512, %v2515
    %v2524 = vmul.f32 %v2512, %v2516
    %v2525 = vmul.f32 %v2512, %v2517
    %v2526 = vmul.f32 %v2512, %v2518
    %v2527 = vadd.f32 %v2505, %v2523
    %v2528 = vadd.f32 %v2506, %v2524
    %v2529 = vadd.f32 %v2507, %v2525
    %v2530 = vadd.f32 %v2508, %v2526
    %v2531 = vld [vmem:[%s135] ss:$8 sm:$0xf]
    %2532 = vset.pattern.permute.xlu0 3
    %2533 = vperm.xlu0 %2532, %v2453
    %v2534 = vpop.permute.xlu0 %2533
    %v2537 = vperm.slane %v2531, 0
    %v2538 = vperm.slane %v2531, 1
    %v2539 = vperm.slane %v2531, 2
    %v2540 = vperm.slane %v2531, 3
    %v2545 = vmul.f32 %v2534, %v2537
    %v2546 = vmul.f32 %v2534, %v2538
    %v2547 = vmul.f32 %v2534, %v2539
    %v2548 = vmul.f32 %v2534, %v2540
    %v2549 = vadd.f32 %v2527, %v2545
    %v2550 = vadd.f32 %v2528, %v2546
    %v2551 = vadd.f32 %v2529, %v2547
    %v2552 = vadd.f32 %v2530, %v2548
    %v2553 = vld [vmem:[%s158] ss:$8 sm:$0xf]
    %2554 = vset.pattern.permute.xlu0 4
    %2555 = vperm.xlu0 %2554, %v2453
    %v2556 = vpop.permute.xlu0 %2555
    %v2559 = vperm.slane %v2553, 0
    %v2560 = vperm.slane %v2553, 1
    %v2561 = vperm.slane %v2553, 2
    %v2562 = vperm.slane %v2553, 3
    %v2567 = vmul.f32 %v2556, %v2559
    %v2568 = vmul.f32 %v2556, %v2560
    %v2569 = vmul.f32 %v2556, %v2561
    %v2570 = vmul.f32 %v2556, %v2562
    %v2571 = vadd.f32 %v2549, %v2567
    %v2572 = vadd.f32 %v2550, %v2568
    %v2573 = vadd.f32 %v2551, %v2569
    %v2574 = vadd.f32 %v2552, %v2570
    %2575 = vst [vmem:[#allocation2 + $0x260] sm:$0xff] %v2571
    %2576 = vst [vmem:[#allocation2 + $0x268] sm:$0xff] %v2572
    %2577 = vst [vmem:[#allocation2 + $0x270] sm:$0xff] %v2573
    %2578 = vst [vmem:[#allocation2 + $0x278] sm:$0xff] %v2574
    %v2579 = vld [vmem:[#allocation2] sm:$0xff]
    %v2580 = vld [vmem:[#allocation2 + $0x8] sm:$0xff]
    %v2581 = vld [vmem:[#allocation2 + $0x10] sm:$0xff]
    %v2582 = vld [vmem:[#allocation2 + $0x18] sm:$0xff]
    %v2583 = vld [vmem:[#allocation7] sm:$0xff]
    %v2584 = vld [vmem:[#allocation7 + $0x8] sm:$0xff]
    %v2585 = vld [vmem:[#allocation7 + $0x10] sm:$0xff]
    %v2586 = vld [vmem:[#allocation7 + $0x18] sm:$0xff]
    %v2587 = vld [vmem:[#allocation7 + $0x20] sm:$0xff]
    %v2588 = vld [vmem:[#allocation7 + $0x28] sm:$0xff]
    %v2589 = vld [vmem:[#allocation7 + $0x30] sm:$0xff]
    %v2590 = vld [vmem:[#allocation7 + $0x38] sm:$0xff]
    %v2591 = vld [vmem:[#allocation7 + $0x40] sm:$0xff]
    %v2592 = vld [vmem:[#allocation7 + $0x48] sm:$0xff]
    %v2593 = vld [vmem:[#allocation7 + $0x50] sm:$0xff]
    %v2594 = vld [vmem:[#allocation7 + $0x58] sm:$0xff]
    %v2595 = vld [vmem:[#allocation7 + $0x60] sm:$0xff]
    %v2596 = vld [vmem:[#allocation7 + $0x68] sm:$0xff]
    %v2597 = vld [vmem:[#allocation7 + $0x70] sm:$0xff]
    %v2598 = vld [vmem:[#allocation7 + $0x78] sm:$0xff]
    %v2599 = vld [vmem:[#allocation7 + $0x80] sm:$0xff]
    %v2600 = vld [vmem:[#allocation7 + $0x88] sm:$0xff]
    %v2601 = vld [vmem:[#allocation7 + $0x90] sm:$0xff]
    %v2602 = vld [vmem:[#allocation7 + $0x98] sm:$0xff]
    %v2603 = vld [vmem:[#allocation7 + $0xa0] sm:$0xff]
    %v2604 = vld [vmem:[#allocation7 + $0xa8] sm:$0xff]
    %v2605 = vld [vmem:[#allocation7 + $0xb0] sm:$0xff]
    %v2606 = vld [vmem:[#allocation7 + $0xb8] sm:$0xff]
    %v2607 = vld [vmem:[#allocation7 + $0xc0] sm:$0xff]
    %v2608 = vld [vmem:[#allocation7 + $0xc8] sm:$0xff]
    %v2609 = vld [vmem:[#allocation7 + $0xd0] sm:$0xff]
    %v2610 = vld [vmem:[#allocation7 + $0xd8] sm:$0xff]
    %v2611 = vld [vmem:[#allocation7 + $0xe0] sm:$0xff]
    %v2612 = vld [vmem:[#allocation7 + $0xe8] sm:$0xff]
    %v2613 = vld [vmem:[#allocation7 + $0xf0] sm:$0xff]
    %v2614 = vld [vmem:[#allocation7 + $0xf8] sm:$0xff]
    %v2647 = vunpack.c.l.b16 %v2583
    %v2648 = vunpack.c.h.b16 %v2583
    %v2649 = vunpack.c.l.b16 %v2584
    %v2650 = vunpack.c.h.b16 %v2584
    %v2651 = vunpack.c.l.b16 %v2585
    %v2652 = vunpack.c.h.b16 %v2585
    %v2653 = vunpack.c.l.b16 %v2586
    %v2654 = vunpack.c.h.b16 %v2586
    %v2655 = vunpack.c.l.b16 %v2587
    %v2656 = vunpack.c.h.b16 %v2587
    %v2657 = vunpack.c.l.b16 %v2588
    %v2658 = vunpack.c.h.b16 %v2588
    %v2659 = vunpack.c.l.b16 %v2589
    %v2660 = vunpack.c.h.b16 %v2589
    %v2661 = vunpack.c.l.b16 %v2590
    %v2662 = vunpack.c.h.b16 %v2590
    %v2663 = vunpack.c.l.b16 %v2591
    %v2664 = vunpack.c.h.b16 %v2591
    %v2665 = vunpack.c.l.b16 %v2592
    %v2666 = vunpack.c.h.b16 %v2592
    %v2667 = vunpack.c.l.b16 %v2593
    %v2668 = vunpack.c.h.b16 %v2593
    %v2669 = vunpack.c.l.b16 %v2594
    %v2670 = vunpack.c.h.b16 %v2594
    %v2671 = vunpack.c.l.b16 %v2595
    %v2672 = vunpack.c.h.b16 %v2595
    %v2673 = vunpack.c.l.b16 %v2596
    %v2674 = vunpack.c.h.b16 %v2596
    %v2675 = vunpack.c.l.b16 %v2597
    %v2676 = vunpack.c.h.b16 %v2597
    %v2677 = vunpack.c.l.b16 %v2598
    %v2678 = vunpack.c.h.b16 %v2598
    %v2679 = vunpack.c.l.b16 %v2599
    %v2680 = vunpack.c.h.b16 %v2599
    %v2681 = vunpack.c.l.b16 %v2600
    %v2682 = vunpack.c.h.b16 %v2600
    %v2683 = vunpack.c.l.b16 %v2601
    %v2684 = vunpack.c.h.b16 %v2601
    %v2685 = vunpack.c.l.b16 %v2602
    %v2686 = vunpack.c.h.b16 %v2602
    %v2687 = vunpack.c.l.b16 %v2603
    %v2688 = vunpack.c.h.b16 %v2603
    %v2689 = vunpack.c.l.b16 %v2604
    %v2690 = vunpack.c.h.b16 %v2604
    %v2691 = vunpack.c.l.b16 %v2605
    %v2692 = vunpack.c.h.b16 %v2605
    %v2693 = vunpack.c.l.b16 %v2606
    %v2694 = vunpack.c.h.b16 %v2606
    %v2695 = vunpack.c.l.b16 %v2607
    %v2696 = vunpack.c.h.b16 %v2607
    %v2697 = vunpack.c.l.b16 %v2608
    %v2698 = vunpack.c.h.b16 %v2608
    %v2699 = vunpack.c.l.b16 %v2609
    %v2700 = vunpack.c.h.b16 %v2609
    %v2701 = vunpack.c.l.b16 %v2610
    %v2702 = vunpack.c.h.b16 %v2610
    %v2703 = vunpack.c.l.b16 %v2611
    %v2704 = vunpack.c.h.b16 %v2611
    %v2705 = vunpack.c.l.b16 %v2612
    %v2706 = vunpack.c.h.b16 %v2612
    %v2707 = vunpack.c.l.b16 %v2613
    %v2708 = vunpack.c.h.b16 %v2613
    %v2709 = vunpack.c.l.b16 %v2614
    %v2710 = vunpack.c.h.b16 %v2614
    %v2711 = vpack.c.b16 %v2651, %v2647
    %v2712 = vpack.c.b16 %v2652, %v2648
    %v2713 = vpack.c.b16 %v2653, %v2649
    %v2714 = vpack.c.b16 %v2654, %v2650
    %v2715 = vpack.c.b16 %v2659, %v2655
    %v2716 = vpack.c.b16 %v2660, %v2656
    %v2717 = vpack.c.b16 %v2661, %v2657
    %v2718 = vpack.c.b16 %v2662, %v2658
    %v2719 = vpack.c.b16 %v2667, %v2663
    %v2720 = vpack.c.b16 %v2668, %v2664
    %v2721 = vpack.c.b16 %v2669, %v2665
    %v2722 = vpack.c.b16 %v2670, %v2666
    %v2723 = vpack.c.b16 %v2675, %v2671
    %v2724 = vpack.c.b16 %v2676, %v2672
    %v2725 = vpack.c.b16 %v2677, %v2673
    %v2726 = vpack.c.b16 %v2678, %v2674
    %v2727 = vpack.c.b16 %v2683, %v2679
    %v2728 = vpack.c.b16 %v2684, %v2680
    %v2729 = vpack.c.b16 %v2685, %v2681
    %v2730 = vpack.c.b16 %v2686, %v2682
    %v2731 = vpack.c.b16 %v2691, %v2687
    %v2732 = vpack.c.b16 %v2692, %v2688
    %v2733 = vpack.c.b16 %v2693, %v2689
    %v2734 = vpack.c.b16 %v2694, %v2690
    %v2735 = vpack.c.b16 %v2699, %v2695
    %v2736 = vpack.c.b16 %v2700, %v2696
    %v2737 = vpack.c.b16 %v2701, %v2697
    %v2738 = vpack.c.b16 %v2702, %v2698
    %v2739 = vpack.c.b16 %v2707, %v2703
    %v2740 = vpack.c.b16 %v2708, %v2704
    %v2741 = vpack.c.b16 %v2709, %v2705
    %v2742 = vpack.c.b16 %v2710, %v2706
    %2775 = vmatpush.bf16.msra.mxu0 %v2739
    %2776 = vmatpush.bf16.msra.mxu0 %v2735
    %2777 = vmatpush.bf16.msra.mxu0 %v2731
    %2778 = vmatpush.bf16.msra.mxu0 %v2727
    %2779 = vmatpush.bf16.msra.mxu0 %v2723
    %2780 = vmatpush.bf16.msra.mxu0 %v2719
    %2781 = vmatpush.bf16.msra.mxu0 %v2715
    %2782 = vmatpush.bf16.msra.mxu0 %v2711
    %2783 = vmatmul.bf16.gmra.mxu0 0
    %v2784 = vpop.f32.mrf.mxu0
    %v2785 = vadd.f32 0.0, %v2784
    %v2786 = vpop.f32.mrf.mxu0
    %2787 = vdwg.mxu0
    %2788 = vmatpush.bf16.msra.mxu0 %v2740
    %2789 = vmatpush.bf16.msra.mxu0 %v2736
    %2790 = vmatpush.bf16.msra.mxu0 %v2732
    %2791 = vmatpush.bf16.msra.mxu0 %v2728
    %2792 = vmatpush.bf16.msra.mxu0 %v2724
    %2793 = vmatpush.bf16.msra.mxu0 %v2720
    %2794 = vmatpush.bf16.msra.mxu0 %v2716
    %2795 = vmatpush.bf16.msra.mxu0 %v2712
    %2796 = vmatmul.bf16.gmra.mxu0 0
    %v2797 = vpop.f32.mrf.mxu0
    %v2798 = vadd.f32 0.0, %v2797
    %v2799 = vpop.f32.mrf.mxu0
    %2800 = vdwg.mxu0
    %2801 = vmatpush.bf16.msra.mxu0 %v2741
    %2802 = vmatpush.bf16.msra.mxu0 %v2737
    %2803 = vmatpush.bf16.msra.mxu0 %v2733
    %2804 = vmatpush.bf16.msra.mxu0 %v2729
    %2805 = vmatpush.bf16.msra.mxu0 %v2725
    %2806 = vmatpush.bf16.msra.mxu0 %v2721
    %2807 = vmatpush.bf16.msra.mxu0 %v2717
    %2808 = vmatpush.bf16.msra.mxu0 %v2713
    %2809 = vmatmul.bf16.gmra.mxu0 0
    %v2810 = vpop.f32.mrf.mxu0
    %v2811 = vadd.f32 0.0, %v2810
    %v2812 = vpop.f32.mrf.mxu0
    %2813 = vdwg.mxu0
    %2814 = vmatpush.bf16.msra.mxu0 %v2742
    %2815 = vmatpush.bf16.msra.mxu0 %v2738
    %2816 = vmatpush.bf16.msra.mxu0 %v2734
    %2817 = vmatpush.bf16.msra.mxu0 %v2730
    %2818 = vmatpush.bf16.msra.mxu0 %v2726
    %2819 = vmatpush.bf16.msra.mxu0 %v2722
    %2820 = vmatpush.bf16.msra.mxu0 %v2718
    %2821 = vmatpush.bf16.msra.mxu0 %v2714
    %2822 = vmatmul.bf16.gmra.mxu0 0
    %v2823 = vpop.f32.mrf.mxu0
    %v2824 = vadd.f32 0.0, %v2823
    %v2825 = vpop.f32.mrf.mxu0
    %2826 = vdwg.mxu0
    %v2827 = vadd.f32 %v2579, %v2785
    %v2828 = vadd.f32 %v2580, %v2798
    %v2829 = vadd.f32 %v2581, %v2811
    %v2830 = vadd.f32 %v2582, %v2824
    %v2831 = vxor.u32 %v2827, 2147483648
    %v2832 = vxor.u32 %v2828, 2147483648
    %v2833 = vmul.f32 %v2831, 1.442695
    %v2834 = vpow.pop %v2833
    %v2835 = vmul.f32 %v2832, 1.442695
    %v2836 = vpow.pop %v2835
    %v2837 = vadd.f32 %v2834, 1.0
    %v2838 = vadd.f32 %v2836, 1.0
    %v2839 = vrcp.pop %v2837
    %v2840 = vmul.f32 %v2837, %v2839
    %v2841 = vsub.f32 1.0, %v2840
    %v2842 = vmul.f32 %v2839, %v2841
    %v2843 = vadd.f32 %v2839, %v2842
    %vm2844 = vweird.f32 %v2837
    %vm2845 = vweird.f32 %v2839
    %vm2846 = vmor %vm2844, %vm2845
    %v2847 = vsel %vm2846, %v2839, %v2843
    %v2848 = vand.u32 2147483647, %v2837
    %vm2849 = vcmp.eq.f32.partialorder %v2848, 8.507059e+37
    %v2850 = vand.u32 %v2837, 2147483648
    %v2851 = vor.u32 1.1754944e-38, %v2850
    %v2852 = vsel %vm2849, %v2851, %v2847
    %v2853 = vmul.f32 1.0, %v2852
    %v2854 = vrcp.pop %v2838
    %v2855 = vmul.f32 %v2838, %v2854
    %v2856 = vsub.f32 1.0, %v2855
    %v2857 = vmul.f32 %v2854, %v2856
    %v2858 = vadd.f32 %v2854, %v2857
    %vm2859 = vweird.f32 %v2838
    %vm2860 = vweird.f32 %v2854
    %vm2861 = vmor %vm2859, %vm2860
    %v2862 = vsel %vm2861, %v2854, %v2858
    %v2863 = vand.u32 2147483647, %v2838
    %vm2864 = vcmp.eq.f32.partialorder %v2863, 8.507059e+37
    %v2865 = vand.u32 %v2838, 2147483648
    %v2866 = vor.u32 1.1754944e-38, %v2865
    %v2867 = vsel %vm2864, %v2866, %v2862
    %v2868 = vmul.f32 1.0, %v2867
    %v2869 = vtanh.pop %v2829
    %v2870 = vmul.f32 %v2868, 0.0
    %v2871 = vmul.f32 %v2853, %v2869
    %v2872 = vadd.f32 %v2870, %v2871
    %v2873 = vtanh.pop %v2872
    %v2874 = vxor.u32 %v2830, 2147483648
    %v2875 = vmul.f32 %v2874, 1.442695
    %v2876 = vpow.pop %v2875
    %v2877 = vadd.f32 %v2876, 1.0
    %v2878 = vrcp.pop %v2877
    %v2879 = vmul.f32 %v2877, %v2878
    %v2880 = vsub.f32 1.0, %v2879
    %v2881 = vmul.f32 %v2878, %v2880
    %v2882 = vadd.f32 %v2878, %v2881
    %vm2883 = vweird.f32 %v2877
    %vm2884 = vweird.f32 %v2878
    %vm2885 = vmor %vm2883, %vm2884
    %v2886 = vsel %vm2885, %v2878, %v2882
    %v2887 = vand.u32 2147483647, %v2877
    %vm2888 = vcmp.eq.f32.partialorder %v2887, 8.507059e+37
    %v2889 = vand.u32 %v2877, 2147483648
    %v2890 = vor.u32 1.1754944e-38, %v2889
    %v2891 = vsel %vm2888, %v2890, %v2886
    %v2892 = vmul.f32 1.0, %v2891
    %v2893 = vmul.f32 %v2892, %v2873
    %2894 = vst [vmem:[#allocation3] sm:$0xff] %v2893
    %v2895 = vld [vmem:[#allocation2 + $0x20] sm:$0xff]
    %v2896 = vld [vmem:[#allocation2 + $0x28] sm:$0xff]
    %v2897 = vld [vmem:[#allocation2 + $0x30] sm:$0xff]
    %v2898 = vld [vmem:[#allocation2 + $0x38] sm:$0xff]
    %v2899 = vpack.c.bf16 %v2893, %v2893
    %v2900 = vld [vmem:[#allocation7] sm:$0xff]
    %v2901 = vld [vmem:[#allocation7 + $0x8] sm:$0xff]
    %v2902 = vld [vmem:[#allocation7 + $0x10] sm:$0xff]
    %v2903 = vld [vmem:[#allocation7 + $0x18] sm:$0xff]
    %v2904 = vld [vmem:[#allocation7 + $0x20] sm:$0xff]
    %v2905 = vld [vmem:[#allocation7 + $0x28] sm:$0xff]
    %v2906 = vld [vmem:[#allocation7 + $0x30] sm:$0xff]
    %v2907 = vld [vmem:[#allocation7 + $0x38] sm:$0xff]
    %v2908 = vld [vmem:[#allocation7 + $0x40] sm:$0xff]
    %v2909 = vld [vmem:[#allocation7 + $0x48] sm:$0xff]
    %v2910 = vld [vmem:[#allocation7 + $0x50] sm:$0xff]
    %v2911 = vld [vmem:[#allocation7 + $0x58] sm:$0xff]
    %v2912 = vld [vmem:[#allocation7 + $0x60] sm:$0xff]
    %v2913 = vld [vmem:[#allocation7 + $0x68] sm:$0xff]
    %v2914 = vld [vmem:[#allocation7 + $0x70] sm:$0xff]
    %v2915 = vld [vmem:[#allocation7 + $0x78] sm:$0xff]
    %v2916 = vld [vmem:[#allocation7 + $0x80] sm:$0xff]
    %v2917 = vld [vmem:[#allocation7 + $0x88] sm:$0xff]
    %v2918 = vld [vmem:[#allocation7 + $0x90] sm:$0xff]
    %v2919 = vld [vmem:[#allocation7 + $0x98] sm:$0xff]
    %v2920 = vld [vmem:[#allocation7 + $0xa0] sm:$0xff]
    %v2921 = vld [vmem:[#allocation7 + $0xa8] sm:$0xff]
    %v2922 = vld [vmem:[#allocation7 + $0xb0] sm:$0xff]
    %v2923 = vld [vmem:[#allocation7 + $0xb8] sm:$0xff]
    %v2924 = vld [vmem:[#allocation7 + $0xc0] sm:$0xff]
    %v2925 = vld [vmem:[#allocation7 + $0xc8] sm:$0xff]
    %v2926 = vld [vmem:[#allocation7 + $0xd0] sm:$0xff]
    %v2927 = vld [vmem:[#allocation7 + $0xd8] sm:$0xff]
    %v2928 = vld [vmem:[#allocation7 + $0xe0] sm:$0xff]
    %v2929 = vld [vmem:[#allocation7 + $0xe8] sm:$0xff]
    %v2930 = vld [vmem:[#allocation7 + $0xf0] sm:$0xff]
    %v2931 = vld [vmem:[#allocation7 + $0xf8] sm:$0xff]
    %v2964 = vunpack.c.l.b16 %v2900
    %v2965 = vunpack.c.h.b16 %v2900
    %v2966 = vunpack.c.l.b16 %v2901
    %v2967 = vunpack.c.h.b16 %v2901
    %v2968 = vunpack.c.l.b16 %v2902
    %v2969 = vunpack.c.h.b16 %v2902
    %v2970 = vunpack.c.l.b16 %v2903
    %v2971 = vunpack.c.h.b16 %v2903
    %v2972 = vunpack.c.l.b16 %v2904
    %v2973 = vunpack.c.h.b16 %v2904
    %v2974 = vunpack.c.l.b16 %v2905
    %v2975 = vunpack.c.h.b16 %v2905
    %v2976 = vunpack.c.l.b16 %v2906
    %v2977 = vunpack.c.h.b16 %v2906
    %v2978 = vunpack.c.l.b16 %v2907
    %v2979 = vunpack.c.h.b16 %v2907
    %v2980 = vunpack.c.l.b16 %v2908
    %v2981 = vunpack.c.h.b16 %v2908
    %v2982 = vunpack.c.l.b16 %v2909
    %v2983 = vunpack.c.h.b16 %v2909
    %v2984 = vunpack.c.l.b16 %v2910
    %v2985 = vunpack.c.h.b16 %v2910
    %v2986 = vunpack.c.l.b16 %v2911
    %v2987 = vunpack.c.h.b16 %v2911
    %v2988 = vunpack.c.l.b16 %v2912
    %v2989 = vunpack.c.h.b16 %v2912
    %v2990 = vunpack.c.l.b16 %v2913
    %v2991 = vunpack.c.h.b16 %v2913
    %v2992 = vunpack.c.l.b16 %v2914
    %v2993 = vunpack.c.h.b16 %v2914
    %v2994 = vunpack.c.l.b16 %v2915
    %v2995 = vunpack.c.h.b16 %v2915
    %v2996 = vunpack.c.l.b16 %v2916
    %v2997 = vunpack.c.h.b16 %v2916
    %v2998 = vunpack.c.l.b16 %v2917
    %v2999 = vunpack.c.h.b16 %v2917
    %v3000 = vunpack.c.l.b16 %v2918
    %v3001 = vunpack.c.h.b16 %v2918
    %v3002 = vunpack.c.l.b16 %v2919
    %v3003 = vunpack.c.h.b16 %v2919
    %v3004 = vunpack.c.l.b16 %v2920
    %v3005 = vunpack.c.h.b16 %v2920
    %v3006 = vunpack.c.l.b16 %v2921
    %v3007 = vunpack.c.h.b16 %v2921
    %v3008 = vunpack.c.l.b16 %v2922
    %v3009 = vunpack.c.h.b16 %v2922
    %v3010 = vunpack.c.l.b16 %v2923
    %v3011 = vunpack.c.h.b16 %v2923
    %v3012 = vunpack.c.l.b16 %v2924
    %v3013 = vunpack.c.h.b16 %v2924
    %v3014 = vunpack.c.l.b16 %v2925
    %v3015 = vunpack.c.h.b16 %v2925
    %v3016 = vunpack.c.l.b16 %v2926
    %v3017 = vunpack.c.h.b16 %v2926
    %v3018 = vunpack.c.l.b16 %v2927
    %v3019 = vunpack.c.h.b16 %v2927
    %v3020 = vunpack.c.l.b16 %v2928
    %v3021 = vunpack.c.h.b16 %v2928
    %v3022 = vunpack.c.l.b16 %v2929
    %v3023 = vunpack.c.h.b16 %v2929
    %v3024 = vunpack.c.l.b16 %v2930
    %v3025 = vunpack.c.h.b16 %v2930
    %v3026 = vunpack.c.l.b16 %v2931
    %v3027 = vunpack.c.h.b16 %v2931
    %v3028 = vpack.c.b16 %v2968, %v2964
    %v3029 = vpack.c.b16 %v2969, %v2965
    %v3030 = vpack.c.b16 %v2970, %v2966
    %v3031 = vpack.c.b16 %v2971, %v2967
    %v3032 = vpack.c.b16 %v2976, %v2972
    %v3033 = vpack.c.b16 %v2977, %v2973
    %v3034 = vpack.c.b16 %v2978, %v2974
    %v3035 = vpack.c.b16 %v2979, %v2975
    %v3036 = vpack.c.b16 %v2984, %v2980
    %v3037 = vpack.c.b16 %v2985, %v2981
    %v3038 = vpack.c.b16 %v2986, %v2982
    %v3039 = vpack.c.b16 %v2987, %v2983
    %v3040 = vpack.c.b16 %v2992, %v2988
    %v3041 = vpack.c.b16 %v2993, %v2989
    %v3042 = vpack.c.b16 %v2994, %v2990
    %v3043 = vpack.c.b16 %v2995, %v2991
    %v3044 = vpack.c.b16 %v3000, %v2996
    %v3045 = vpack.c.b16 %v3001, %v2997
    %v3046 = vpack.c.b16 %v3002, %v2998
    %v3047 = vpack.c.b16 %v3003, %v2999
    %v3048 = vpack.c.b16 %v3008, %v3004
    %v3049 = vpack.c.b16 %v3009, %v3005
    %v3050 = vpack.c.b16 %v3010, %v3006
    %v3051 = vpack.c.b16 %v3011, %v3007
    %v3052 = vpack.c.b16 %v3016, %v3012
    %v3053 = vpack.c.b16 %v3017, %v3013
    %v3054 = vpack.c.b16 %v3018, %v3014
    %v3055 = vpack.c.b16 %v3019, %v3015
    %v3056 = vpack.c.b16 %v3024, %v3020
    %v3057 = vpack.c.b16 %v3025, %v3021
    %v3058 = vpack.c.b16 %v3026, %v3022
    %v3059 = vpack.c.b16 %v3027, %v3023
    %3092 = vmatpush.bf16.msra.mxu0 %v3056
    %3093 = vmatpush.bf16.msra.mxu0 %v3052
    %3094 = vmatpush.bf16.msra.mxu0 %v3048
    %3095 = vmatpush.bf16.msra.mxu0 %v3044
    %3096 = vmatpush.bf16.msra.mxu0 %v3040
    %3097 = vmatpush.bf16.msra.mxu0 %v3036
    %3098 = vmatpush.bf16.msra.mxu0 %v3032
    %3099 = vmatpush.bf16.msra.mxu0 %v3028
    %3100 = vmatmul.bf16.gmra.mxu0 %v2899
    %v3101 = vpop.f32.mrf.mxu0
    %v3102 = vadd.f32 0.0, %v3101
    %v3103 = vpop.f32.mrf.mxu0
    %3104 = vdwg.mxu0
    %3105 = vmatpush.bf16.msra.mxu0 %v3057
    %3106 = vmatpush.bf16.msra.mxu0 %v3053
    %3107 = vmatpush.bf16.msra.mxu0 %v3049
    %3108 = vmatpush.bf16.msra.mxu0 %v3045
    %3109 = vmatpush.bf16.msra.mxu0 %v3041
    %3110 = vmatpush.bf16.msra.mxu0 %v3037
    %3111 = vmatpush.bf16.msra.mxu0 %v3033
    %3112 = vmatpush.bf16.msra.mxu0 %v3029
    %3113 = vmatmul.bf16.gmra.mxu0 %v2899
    %v3114 = vpop.f32.mrf.mxu0
    %v3115 = vadd.f32 0.0, %v3114
    %v3116 = vpop.f32.mrf.mxu0
    %3117 = vdwg.mxu0
    %3118 = vmatpush.bf16.msra.mxu0 %v3058
    %3119 = vmatpush.bf16.msra.mxu0 %v3054
    %3120 = vmatpush.bf16.msra.mxu0 %v3050
    %3121 = vmatpush.bf16.msra.mxu0 %v3046
    %3122 = vmatpush.bf16.msra.mxu0 %v3042
    %3123 = vmatpush.bf16.msra.mxu0 %v3038
    %3124 = vmatpush.bf16.msra.mxu0 %v3034
    %3125 = vmatpush.bf16.msra.mxu0 %v3030
    %3126 = vmatmul.bf16.gmra.mxu0 %v2899
    %v3127 = vpop.f32.mrf.mxu0
    %v3128 = vadd.f32 0.0, %v3127
    %v3129 = vpop.f32.mrf.mxu0
    %3130 = vdwg.mxu0
    %3131 = vmatpush.bf16.msra.mxu0 %v3059
    %3132 = vmatpush.bf16.msra.mxu0 %v3055
    %3133 = vmatpush.bf16.msra.mxu0 %v3051
    %3134 = vmatpush.bf16.msra.mxu0 %v3047
    %3135 = vmatpush.bf16.msra.mxu0 %v3043
    %3136 = vmatpush.bf16.msra.mxu0 %v3039
    %3137 = vmatpush.bf16.msra.mxu0 %v3035
    %3138 = vmatpush.bf16.msra.mxu0 %v3031
    %3139 = vmatmul.bf16.gmra.mxu0 %v2899
    %v3140 = vpop.f32.mrf.mxu0
    %v3141 = vadd.f32 0.0, %v3140
    %v3142 = vpop.f32.mrf.mxu0
    %3143 = vdwg.mxu0
    %v3144 = vadd.f32 %v2895, %v3102
    %v3145 = vadd.f32 %v2896, %v3115
    %v3146 = vadd.f32 %v2897, %v3128
    %v3147 = vadd.f32 %v2898, %v3141
    %v3148 = vxor.u32 %v3144, 2147483648
    %v3149 = vxor.u32 %v3145, 2147483648
    %v3150 = vmul.f32 %v3148, 1.442695
    %v3151 = vpow.pop %v3150
    %v3152 = vmul.f32 %v3149, 1.442695
    %v3153 = vpow.pop %v3152
    %v3154 = vadd.f32 %v3151, 1.0
    %v3155 = vadd.f32 %v3153, 1.0
    %v3156 = vrcp.pop %v3154
    %v3157 = vmul.f32 %v3154, %v3156
    %v3158 = vsub.f32 1.0, %v3157
    %v3159 = vmul.f32 %v3156, %v3158
    %v3160 = vadd.f32 %v3156, %v3159
    %vm3161 = vweird.f32 %v3154
    %vm3162 = vweird.f32 %v3156
    %vm3163 = vmor %vm3161, %vm3162
    %v3164 = vsel %vm3163, %v3156, %v3160
    %v3165 = vand.u32 2147483647, %v3154
    %vm3166 = vcmp.eq.f32.partialorder %v3165, 8.507059e+37
    %v3167 = vand.u32 %v3154, 2147483648
    %v3168 = vor.u32 1.1754944e-38, %v3167
    %v3169 = vsel %vm3166, %v3168, %v3164
    %v3170 = vmul.f32 1.0, %v3169
    %v3171 = vrcp.pop %v3155
    %v3172 = vmul.f32 %v3155, %v3171
    %v3173 = vsub.f32 1.0, %v3172
    %v3174 = vmul.f32 %v3171, %v3173
    %v3175 = vadd.f32 %v3171, %v3174
    %vm3176 = vweird.f32 %v3155
    %vm3177 = vweird.f32 %v3171
    %vm3178 = vmor %vm3176, %vm3177
    %v3179 = vsel %vm3178, %v3171, %v3175
    %v3180 = vand.u32 2147483647, %v3155
    %vm3181 = vcmp.eq.f32.partialorder %v3180, 8.507059e+37
    %v3182 = vand.u32 %v3155, 2147483648
    %v3183 = vor.u32 1.1754944e-38, %v3182
    %v3184 = vsel %vm3181, %v3183, %v3179
    %v3185 = vmul.f32 1.0, %v3184
    %v3186 = vtanh.pop %v3146
    %v3187 = vmul.f32 %v3185, %v2872
    %v3188 = vmul.f32 %v3170, %v3186
    %v3189 = vadd.f32 %v3187, %v3188
    %v3190 = vtanh.pop %v3189
    %v3191 = vxor.u32 %v3147, 2147483648
    %v3192 = vmul.f32 %v3191, 1.442695
    %v3193 = vpow.pop %v3192
    %v3194 = vadd.f32 %v3193, 1.0
    %v3195 = vrcp.pop %v3194
    %v3196 = vmul.f32 %v3194, %v3195
    %v3197 = vsub.f32 1.0, %v3196
    %v3198 = vmul.f32 %v3195, %v3197
    %v3199 = vadd.f32 %v3195, %v3198
    %vm3200 = vweird.f32 %v3194
    %vm3201 = vweird.f32 %v3195
    %vm3202 = vmor %vm3200, %vm3201
    %v3203 = vsel %vm3202, %v3195, %v3199
    %v3204 = vand.u32 2147483647, %v3194
    %vm3205 = vcmp.eq.f32.partialorder %v3204, 8.507059e+37
    %v3206 = vand.u32 %v3194, 2147483648
    %v3207 = vor.u32 1.1754944e-38, %v3206
    %v3208 = vsel %vm3205, %v3207, %v3203
    %v3209 = vmul.f32 1.0, %v3208
    %v3210 = vmul.f32 %v3209, %v3190
    %3211 = vst [vmem:[#allocation3 + $0x8] sm:$0xff] %v3210
    %v3212 = vld [vmem:[#allocation2 + $0x40] sm:$0xff]
    %v3213 = vld [vmem:[#allocation2 + $0x48] sm:$0xff]
    %v3214 = vld [vmem:[#allocation2 + $0x50] sm:$0xff]
    %v3215 = vld [vmem:[#allocation2 + $0x58] sm:$0xff]
    %v3216 = vpack.c.bf16 %v3210, %v3210
    %v3217 = vld [vmem:[#allocation7] sm:$0xff]
    %v3218 = vld [vmem:[#allocation7 + $0x8] sm:$0xff]
    %v3219 = vld [vmem:[#allocation7 + $0x10] sm:$0xff]
    %v3220 = vld [vmem:[#allocation7 + $0x18] sm:$0xff]
    %v3221 = vld [vmem:[#allocation7 + $0x20] sm:$0xff]
    %v3222 = vld [vmem:[#allocation7 + $0x28] sm:$0xff]
    %v3223 = vld [vmem:[#allocation7 + $0x30] sm:$0xff]
    %v3224 = vld [vmem:[#allocation7 + $0x38] sm:$0xff]
    %v3225 = vld [vmem:[#allocation7 + $0x40] sm:$0xff]
    %v3226 = vld [vmem:[#allocation7 + $0x48] sm:$0xff]
    %v3227 = vld [vmem:[#allocation7 + $0x50] sm:$0xff]
    %v3228 = vld [vmem:[#allocation7 + $0x58] sm:$0xff]
    %v3229 = vld [vmem:[#allocation7 + $0x60] sm:$0xff]
    %v3230 = vld [vmem:[#allocation7 + $0x68] sm:$0xff]
    %v3231 = vld [vmem:[#allocation7 + $0x70] sm:$0xff]
    %v3232 = vld [vmem:[#allocation7 + $0x78] sm:$0xff]
    %v3233 = vld [vmem:[#allocation7 + $0x80] sm:$0xff]
    %v3234 = vld [vmem:[#allocation7 + $0x88] sm:$0xff]
    %v3235 = vld [vmem:[#allocation7 + $0x90] sm:$0xff]
    %v3236 = vld [vmem:[#allocation7 + $0x98] sm:$0xff]
    %v3237 = vld [vmem:[#allocation7 + $0xa0] sm:$0xff]
    %v3238 = vld [vmem:[#allocation7 + $0xa8] sm:$0xff]
    %v3239 = vld [vmem:[#allocation7 + $0xb0] sm:$0xff]
    %v3240 = vld [vmem:[#allocation7 + $0xb8] sm:$0xff]
    %v3241 = vld [vmem:[#allocation7 + $0xc0] sm:$0xff]
    %v3242 = vld [vmem:[#allocation7 + $0xc8] sm:$0xff]
    %v3243 = vld [vmem:[#allocation7 + $0xd0] sm:$0xff]
    %v3244 = vld [vmem:[#allocation7 + $0xd8] sm:$0xff]
    %v3245 = vld [vmem:[#allocation7 + $0xe0] sm:$0xff]
    %v3246 = vld [vmem:[#allocation7 + $0xe8] sm:$0xff]
    %v3247 = vld [vmem:[#allocation7 + $0xf0] sm:$0xff]
    %v3248 = vld [vmem:[#allocation7 + $0xf8] sm:$0xff]
    %v3281 = vunpack.c.l.b16 %v3217
    %v3282 = vunpack.c.h.b16 %v3217
    %v3283 = vunpack.c.l.b16 %v3218
    %v3284 = vunpack.c.h.b16 %v3218
    %v3285 = vunpack.c.l.b16 %v3219
    %v3286 = vunpack.c.h.b16 %v3219
    %v3287 = vunpack.c.l.b16 %v3220
    %v3288 = vunpack.c.h.b16 %v3220
    %v3289 = vunpack.c.l.b16 %v3221
    %v3290 = vunpack.c.h.b16 %v3221
    %v3291 = vunpack.c.l.b16 %v3222
    %v3292 = vunpack.c.h.b16 %v3222
    %v3293 = vunpack.c.l.b16 %v3223
    %v3294 = vunpack.c.h.b16 %v3223
    %v3295 = vunpack.c.l.b16 %v3224
    %v3296 = vunpack.c.h.b16 %v3224
    %v3297 = vunpack.c.l.b16 %v3225
    %v3298 = vunpack.c.h.b16 %v3225
    %v3299 = vunpack.c.l.b16 %v3226
    %v3300 = vunpack.c.h.b16 %v3226
    %v3301 = vunpack.c.l.b16 %v3227
    %v3302 = vunpack.c.h.b16 %v3227
    %v3303 = vunpack.c.l.b16 %v3228
    %v3304 = vunpack.c.h.b16 %v3228
    %v3305 = vunpack.c.l.b16 %v3229
    %v3306 = vunpack.c.h.b16 %v3229
    %v3307 = vunpack.c.l.b16 %v3230
    %v3308 = vunpack.c.h.b16 %v3230
    %v3309 = vunpack.c.l.b16 %v3231
    %v3310 = vunpack.c.h.b16 %v3231
    %v3311 = vunpack.c.l.b16 %v3232
    %v3312 = vunpack.c.h.b16 %v3232
    %v3313 = vunpack.c.l.b16 %v3233
    %v3314 = vunpack.c.h.b16 %v3233
    %v3315 = vunpack.c.l.b16 %v3234
    %v3316 = vunpack.c.h.b16 %v3234
    %v3317 = vunpack.c.l.b16 %v3235
    %v3318 = vunpack.c.h.b16 %v3235
    %v3319 = vunpack.c.l.b16 %v3236
    %v3320 = vunpack.c.h.b16 %v3236
    %v3321 = vunpack.c.l.b16 %v3237
    %v3322 = vunpack.c.h.b16 %v3237
    %v3323 = vunpack.c.l.b16 %v3238
    %v3324 = vunpack.c.h.b16 %v3238
    %v3325 = vunpack.c.l.b16 %v3239
    %v3326 = vunpack.c.h.b16 %v3239
    %v3327 = vunpack.c.l.b16 %v3240
    %v3328 = vunpack.c.h.b16 %v3240
    %v3329 = vunpack.c.l.b16 %v3241
    %v3330 = vunpack.c.h.b16 %v3241
    %v3331 = vunpack.c.l.b16 %v3242
    %v3332 = vunpack.c.h.b16 %v3242
    %v3333 = vunpack.c.l.b16 %v3243
    %v3334 = vunpack.c.h.b16 %v3243
    %v3335 = vunpack.c.l.b16 %v3244
    %v3336 = vunpack.c.h.b16 %v3244
    %v3337 = vunpack.c.l.b16 %v3245
    %v3338 = vunpack.c.h.b16 %v3245
    %v3339 = vunpack.c.l.b16 %v3246
    %v3340 = vunpack.c.h.b16 %v3246
    %v3341 = vunpack.c.l.b16 %v3247
    %v3342 = vunpack.c.h.b16 %v3247
    %v3343 = vunpack.c.l.b16 %v3248
    %v3344 = vunpack.c.h.b16 %v3248
    %v3345 = vpack.c.b16 %v3285, %v3281
    %v3346 = vpack.c.b16 %v3286, %v3282
    %v3347 = vpack.c.b16 %v3287, %v3283
    %v3348 = vpack.c.b16 %v3288, %v3284
    %v3349 = vpack.c.b16 %v3293, %v3289
    %v3350 = vpack.c.b16 %v3294, %v3290
    %v3351 = vpack.c.b16 %v3295, %v3291
    %v3352 = vpack.c.b16 %v3296, %v3292
    %v3353 = vpack.c.b16 %v3301, %v3297
    %v3354 = vpack.c.b16 %v3302, %v3298
    %v3355 = vpack.c.b16 %v3303, %v3299
    %v3356 = vpack.c.b16 %v3304, %v3300
    %v3357 = vpack.c.b16 %v3309, %v3305
    %v3358 = vpack.c.b16 %v3310, %v3306
    %v3359 = vpack.c.b16 %v3311, %v3307
    %v3360 = vpack.c.b16 %v3312, %v3308
    %v3361 = vpack.c.b16 %v3317, %v3313
    %v3362 = vpack.c.b16 %v3318, %v3314
    %v3363 = vpack.c.b16 %v3319, %v3315
    %v3364 = vpack.c.b16 %v3320, %v3316
    %v3365 = vpack.c.b16 %v3325, %v3321
    %v3366 = vpack.c.b16 %v3326, %v3322
    %v3367 = vpack.c.b16 %v3327, %v3323
    %v3368 = vpack.c.b16 %v3328, %v3324
    %v3369 = vpack.c.b16 %v3333, %v3329
    %v3370 = vpack.c.b16 %v3334, %v3330
    %v3371 = vpack.c.b16 %v3335, %v3331
    %v3372 = vpack.c.b16 %v3336, %v3332
    %v3373 = vpack.c.b16 %v3341, %v3337
    %v3374 = vpack.c.b16 %v3342, %v3338
    %v3375 = vpack.c.b16 %v3343, %v3339
    %v3376 = vpack.c.b16 %v3344, %v3340
    %3409 = vmatpush.bf16.msra.mxu0 %v3373
    %3410 = vmatpush.bf16.msra.mxu0 %v3369
    %3411 = vmatpush.bf16.msra.mxu0 %v3365
    %3412 = vmatpush.bf16.msra.mxu0 %v3361
    %3413 = vmatpush.bf16.msra.mxu0 %v3357
    %3414 = vmatpush.bf16.msra.mxu0 %v3353
    %3415 = vmatpush.bf16.msra.mxu0 %v3349
    %3416 = vmatpush.bf16.msra.mxu0 %v3345
    %3417 = vmatmul.bf16.gmra.mxu0 %v3216
    %v3418 = vpop.f32.mrf.mxu0
    %v3419 = vadd.f32 0.0, %v3418
    %v3420 = vpop.f32.mrf.mxu0
    %3421 = vdwg.mxu0
    %3422 = vmatpush.bf16.msra.mxu0 %v3374
    %3423 = vmatpush.bf16.msra.mxu0 %v3370
    %3424 = vmatpush.bf16.msra.mxu0 %v3366
    %3425 = vmatpush.bf16.msra.mxu0 %v3362
    %3426 = vmatpush.bf16.msra.mxu0 %v3358
    %3427 = vmatpush.bf16.msra.mxu0 %v3354
    %3428 = vmatpush.bf16.msra.mxu0 %v3350
    %3429 = vmatpush.bf16.msra.mxu0 %v3346
    %3430 = vmatmul.bf16.gmra.mxu0 %v3216
    %v3431 = vpop.f32.mrf.mxu0
    %v3432 = vadd.f32 0.0, %v3431
    %v3433 = vpop.f32.mrf.mxu0
    %3434 = vdwg.mxu0
    %3435 = vmatpush.bf16.msra.mxu0 %v3375
    %3436 = vmatpush.bf16.msra.mxu0 %v3371
    %3437 = vmatpush.bf16.msra.mxu0 %v3367
    %3438 = vmatpush.bf16.msra.mxu0 %v3363
    %3439 = vmatpush.bf16.msra.mxu0 %v3359
    %3440 = vmatpush.bf16.msra.mxu0 %v3355
    %3441 = vmatpush.bf16.msra.mxu0 %v3351
    %3442 = vmatpush.bf16.msra.mxu0 %v3347
    %3443 = vmatmul.bf16.gmra.mxu0 %v3216
    %v3444 = vpop.f32.mrf.mxu0
    %v3445 = vadd.f32 0.0, %v3444
    %v3446 = vpop.f32.mrf.mxu0
    %3447 = vdwg.mxu0
    %3448 = vmatpush.bf16.msra.mxu0 %v3376
    %3449 = vmatpush.bf16.msra.mxu0 %v3372
    %3450 = vmatpush.bf16.msra.mxu0 %v3368
    %3451 = vmatpush.bf16.msra.mxu0 %v3364
    %3452 = vmatpush.bf16.msra.mxu0 %v3360
    %3453 = vmatpush.bf16.msra.mxu0 %v3356
    %3454 = vmatpush.bf16.msra.mxu0 %v3352
    %3455 = vmatpush.bf16.msra.mxu0 %v3348
    %3456 = vmatmul.bf16.gmra.mxu0 %v3216
    %v3457 = vpop.f32.mrf.mxu0
    %v3458 = vadd.f32 0.0, %v3457
    %v3459 = vpop.f32.mrf.mxu0
    %3460 = vdwg.mxu0
    %v3461 = vadd.f32 %v3212, %v3419
    %v3462 = vadd.f32 %v3213, %v3432
    %v3463 = vadd.f32 %v3214, %v3445
    %v3464 = vadd.f32 %v3215, %v3458
    %v3465 = vxor.u32 %v3461, 2147483648
    %v3466 = vxor.u32 %v3462, 2147483648
    %v3467 = vmul.f32 %v3465, 1.442695
    %v3468 = vpow.pop %v3467
    %v3469 = vmul.f32 %v3466, 1.442695
    %v3470 = vpow.pop %v3469
    %v3471 = vadd.f32 %v3468, 1.0
    %v3472 = vadd.f32 %v3470, 1.0
    %v3473 = vrcp.pop %v3471
    %v3474 = vmul.f32 %v3471, %v3473
    %v3475 = vsub.f32 1.0, %v3474
    %v3476 = vmul.f32 %v3473, %v3475
    %v3477 = vadd.f32 %v3473, %v3476
    %vm3478 = vweird.f32 %v3471
    %vm3479 = vweird.f32 %v3473
    %vm3480 = vmor %vm3478, %vm3479
    %v3481 = vsel %vm3480, %v3473, %v3477
    %v3482 = vand.u32 2147483647, %v3471
    %vm3483 = vcmp.eq.f32.partialorder %v3482, 8.507059e+37
    %v3484 = vand.u32 %v3471, 2147483648
    %v3485 = vor.u32 1.1754944e-38, %v3484
    %v3486 = vsel %vm3483, %v3485, %v3481
    %v3487 = vmul.f32 1.0, %v3486
    %v3488 = vrcp.pop %v3472
    %v3489 = vmul.f32 %v3472, %v3488
    %v3490 = vsub.f32 1.0, %v3489
    %v3491 = vmul.f32 %v3488, %v3490
    %v3492 = vadd.f32 %v3488, %v3491
    %vm3493 = vweird.f32 %v3472
    %vm3494 = vweird.f32 %v3488
    %vm3495 = vmor %vm3493, %vm3494
    %v3496 = vsel %vm3495, %v3488, %v3492
    %v3497 = vand.u32 2147483647, %v3472
    %vm3498 = vcmp.eq.f32.partialorder %v3497, 8.507059e+37
    %v3499 = vand.u32 %v3472, 2147483648
    %v3500 = vor.u32 1.1754944e-38, %v3499
    %v3501 = vsel %vm3498, %v3500, %v3496
    %v3502 = vmul.f32 1.0, %v3501
    %v3503 = vtanh.pop %v3463
    %v3504 = vmul.f32 %v3502, %v3189
    %v3505 = vmul.f32 %v3487, %v3503
    %v3506 = vadd.f32 %v3504, %v3505
    %v3507 = vtanh.pop %v3506
    %v3508 = vxor.u32 %v3464, 2147483648
    %v3509 = vmul.f32 %v3508, 1.442695
    %v3510 = vpow.pop %v3509
    %v3511 = vadd.f32 %v3510, 1.0
    %v3512 = vrcp.pop %v3511
    %v3513 = vmul.f32 %v3511, %v3512
    %v3514 = vsub.f32 1.0, %v3513
    %v3515 = vmul.f32 %v3512, %v3514
    %v3516 = vadd.f32 %v3512, %v3515
    %vm3517 = vweird.f32 %v3511
    %vm3518 = vweird.f32 %v3512
    %vm3519 = vmor %vm3517, %vm3518
    %v3520 = vsel %vm3519, %v3512, %v3516
    %v3521 = vand.u32 2147483647, %v3511
    %vm3522 = vcmp.eq.f32.partialorder %v3521, 8.507059e+37
    %v3523 = vand.u32 %v3511, 2147483648
    %v3524 = vor.u32 1.1754944e-38, %v3523
    %v3525 = vsel %vm3522, %v3524, %v3520
    %v3526 = vmul.f32 1.0, %v3525
    %v3527 = vmul.f32 %v3526, %v3507
    %3528 = vst [vmem:[#allocation3 + $0x10] sm:$0xff] %v3527
    %v3529 = vld [vmem:[#allocation2 + $0x60] sm:$0xff]
    %v3530 = vld [vmem:[#allocation2 + $0x68] sm:$0xff]
    %v3531 = vld [vmem:[#allocation2 + $0x70] sm:$0xff]
    %v3532 = vld [vmem:[#allocation2 + $0x78] sm:$0xff]
    %v3533 = vpack.c.bf16 %v3527, %v3527
    %v3534 = vld [vmem:[#allocation7] sm:$0xff]
    %v3535 = vld [vmem:[#allocation7 + $0x8] sm:$0xff]
    %v3536 = vld [vmem:[#allocation7 + $0x10] sm:$0xff]
    %v3537 = vld [vmem:[#allocation7 + $0x18] sm:$0xff]
    %v3538 = vld [vmem:[#allocation7 + $0x20] sm:$0xff]
    %v3539 = vld [vmem:[#allocation7 + $0x28] sm:$0xff]
    %v3540 = vld [vmem:[#allocation7 + $0x30] sm:$0xff]
    %v3541 = vld [vmem:[#allocation7 + $0x38] sm:$0xff]
    %v3542 = vld [vmem:[#allocation7 + $0x40] sm:$0xff]
    %v3543 = vld [vmem:[#allocation7 + $0x48] sm:$0xff]
    %v3544 = vld [vmem:[#allocation7 + $0x50] sm:$0xff]
    %v3545 = vld [vmem:[#allocation7 + $0x58] sm:$0xff]
    %v3546 = vld [vmem:[#allocation7 + $0x60] sm:$0xff]
    %v3547 = vld [vmem:[#allocation7 + $0x68] sm:$0xff]
    %v3548 = vld [vmem:[#allocation7 + $0x70] sm:$0xff]
    %v3549 = vld [vmem:[#allocation7 + $0x78] sm:$0xff]
    %v3550 = vld [vmem:[#allocation7 + $0x80] sm:$0xff]
    %v3551 = vld [vmem:[#allocation7 + $0x88] sm:$0xff]
    %v3552 = vld [vmem:[#allocation7 + $0x90] sm:$0xff]
    %v3553 = vld [vmem:[#allocation7 + $0x98] sm:$0xff]
    %v3554 = vld [vmem:[#allocation7 + $0xa0] sm:$0xff]
    %v3555 = vld [vmem:[#allocation7 + $0xa8] sm:$0xff]
    %v3556 = vld [vmem:[#allocation7 + $0xb0] sm:$0xff]
    %v3557 = vld [vmem:[#allocation7 + $0xb8] sm:$0xff]
    %v3558 = vld [vmem:[#allocation7 + $0xc0] sm:$0xff]
    %v3559 = vld [vmem:[#allocation7 + $0xc8] sm:$0xff]
    %v3560 = vld [vmem:[#allocation7 + $0xd0] sm:$0xff]
    %v3561 = vld [vmem:[#allocation7 + $0xd8] sm:$0xff]
    %v3562 = vld [vmem:[#allocation7 + $0xe0] sm:$0xff]
    %v3563 = vld [vmem:[#allocation7 + $0xe8] sm:$0xff]
    %v3564 = vld [vmem:[#allocation7 + $0xf0] sm:$0xff]
    %v3565 = vld [vmem:[#allocation7 + $0xf8] sm:$0xff]
    %v3598 = vunpack.c.l.b16 %v3534
    %v3599 = vunpack.c.h.b16 %v3534
    %v3600 = vunpack.c.l.b16 %v3535
    %v3601 = vunpack.c.h.b16 %v3535
    %v3602 = vunpack.c.l.b16 %v3536
    %v3603 = vunpack.c.h.b16 %v3536
    %v3604 = vunpack.c.l.b16 %v3537
    %v3605 = vunpack.c.h.b16 %v3537
    %v3606 = vunpack.c.l.b16 %v3538
    %v3607 = vunpack.c.h.b16 %v3538
    %v3608 = vunpack.c.l.b16 %v3539
    %v3609 = vunpack.c.h.b16 %v3539
    %v3610 = vunpack.c.l.b16 %v3540
    %v3611 = vunpack.c.h.b16 %v3540
    %v3612 = vunpack.c.l.b16 %v3541
    %v3613 = vunpack.c.h.b16 %v3541
    %v3614 = vunpack.c.l.b16 %v3542
    %v3615 = vunpack.c.h.b16 %v3542
    %v3616 = vunpack.c.l.b16 %v3543
    %v3617 = vunpack.c.h.b16 %v3543
    %v3618 = vunpack.c.l.b16 %v3544
    %v3619 = vunpack.c.h.b16 %v3544
    %v3620 = vunpack.c.l.b16 %v3545
    %v3621 = vunpack.c.h.b16 %v3545
    %v3622 = vunpack.c.l.b16 %v3546
    %v3623 = vunpack.c.h.b16 %v3546
    %v3624 = vunpack.c.l.b16 %v3547
    %v3625 = vunpack.c.h.b16 %v3547
    %v3626 = vunpack.c.l.b16 %v3548
    %v3627 = vunpack.c.h.b16 %v3548
    %v3628 = vunpack.c.l.b16 %v3549
    %v3629 = vunpack.c.h.b16 %v3549
    %v3630 = vunpack.c.l.b16 %v3550
    %v3631 = vunpack.c.h.b16 %v3550
    %v3632 = vunpack.c.l.b16 %v3551
    %v3633 = vunpack.c.h.b16 %v3551
    %v3634 = vunpack.c.l.b16 %v3552
    %v3635 = vunpack.c.h.b16 %v3552
    %v3636 = vunpack.c.l.b16 %v3553
    %v3637 = vunpack.c.h.b16 %v3553
    %v3638 = vunpack.c.l.b16 %v3554
    %v3639 = vunpack.c.h.b16 %v3554
    %v3640 = vunpack.c.l.b16 %v3555
    %v3641 = vunpack.c.h.b16 %v3555
    %v3642 = vunpack.c.l.b16 %v3556
    %v3643 = vunpack.c.h.b16 %v3556
    %v3644 = vunpack.c.l.b16 %v3557
    %v3645 = vunpack.c.h.b16 %v3557
    %v3646 = vunpack.c.l.b16 %v3558
    %v3647 = vunpack.c.h.b16 %v3558
    %v3648 = vunpack.c.l.b16 %v3559
    %v3649 = vunpack.c.h.b16 %v3559
    %v3650 = vunpack.c.l.b16 %v3560
    %v3651 = vunpack.c.h.b16 %v3560
    %v3652 = vunpack.c.l.b16 %v3561
    %v3653 = vunpack.c.h.b16 %v3561
    %v3654 = vunpack.c.l.b16 %v3562
    %v3655 = vunpack.c.h.b16 %v3562
    %v3656 = vunpack.c.l.b16 %v3563
    %v3657 = vunpack.c.h.b16 %v3563
    %v3658 = vunpack.c.l.b16 %v3564
    %v3659 = vunpack.c.h.b16 %v3564
    %v3660 = vunpack.c.l.b16 %v3565
    %v3661 = vunpack.c.h.b16 %v3565
    %v3662 = vpack.c.b16 %v3602, %v3598
    %v3663 = vpack.c.b16 %v3603, %v3599
    %v3664 = vpack.c.b16 %v3604, %v3600
    %v3665 = vpack.c.b16 %v3605, %v3601
    %v3666 = vpack.c.b16 %v3610, %v3606
    %v3667 = vpack.c.b16 %v3611, %v3607
    %v3668 = vpack.c.b16 %v3612, %v3608
    %v3669 = vpack.c.b16 %v3613, %v3609
    %v3670 = vpack.c.b16 %v3618, %v3614
    %v3671 = vpack.c.b16 %v3619, %v3615
    %v3672 = vpack.c.b16 %v3620, %v3616
    %v3673 = vpack.c.b16 %v3621, %v3617
    %v3674 = vpack.c.b16 %v3626, %v3622
    %v3675 = vpack.c.b16 %v3627, %v3623
    %v3676 = vpack.c.b16 %v3628, %v3624
    %v3677 = vpack.c.b16 %v3629, %v3625
    %v3678 = vpack.c.b16 %v3634, %v3630
    %v3679 = vpack.c.b16 %v3635, %v3631
    %v3680 = vpack.c.b16 %v3636, %v3632
    %v3681 = vpack.c.b16 %v3637, %v3633
    %v3682 = vpack.c.b16 %v3642, %v3638
    %v3683 = vpack.c.b16 %v3643, %v3639
    %v3684 = vpack.c.b16 %v3644, %v3640
    %v3685 = vpack.c.b16 %v3645, %v3641
    %v3686 = vpack.c.b16 %v3650, %v3646
    %v3687 = vpack.c.b16 %v3651, %v3647
    %v3688 = vpack.c.b16 %v3652, %v3648
    %v3689 = vpack.c.b16 %v3653, %v3649
    %v3690 = vpack.c.b16 %v3658, %v3654
    %v3691 = vpack.c.b16 %v3659, %v3655
    %v3692 = vpack.c.b16 %v3660, %v3656
    %v3693 = vpack.c.b16 %v3661, %v3657
    %3726 = vmatpush.bf16.msra.mxu0 %v3690
    %3727 = vmatpush.bf16.msra.mxu0 %v3686
    %3728 = vmatpush.bf16.msra.mxu0 %v3682
    %3729 = vmatpush.bf16.msra.mxu0 %v3678
    %3730 = vmatpush.bf16.msra.mxu0 %v3674
    %3731 = vmatpush.bf16.msra.mxu0 %v3670
    %3732 = vmatpush.bf16.msra.mxu0 %v3666
    %3733 = vmatpush.bf16.msra.mxu0 %v3662
    %3734 = vmatmul.bf16.gmra.mxu0 %v3533
    %v3735 = vpop.f32.mrf.mxu0
    %v3736 = vadd.f32 0.0, %v3735
    %v3737 = vpop.f32.mrf.mxu0
    %3738 = vdwg.mxu0
    %3739 = vmatpush.bf16.msra.mxu0 %v3691
    %3740 = vmatpush.bf16.msra.mxu0 %v3687
    %3741 = vmatpush.bf16.msra.mxu0 %v3683
    %3742 = vmatpush.bf16.msra.mxu0 %v3679
    %3743 = vmatpush.bf16.msra.mxu0 %v3675
    %3744 = vmatpush.bf16.msra.mxu0 %v3671
    %3745 = vmatpush.bf16.msra.mxu0 %v3667
    %3746 = vmatpush.bf16.msra.mxu0 %v3663
    %3747 = vmatmul.bf16.gmra.mxu0 %v3533
    %v3748 = vpop.f32.mrf.mxu0
    %v3749 = vadd.f32 0.0, %v3748
    %v3750 = vpop.f32.mrf.mxu0
    %3751 = vdwg.mxu0
    %3752 = vmatpush.bf16.msra.mxu0 %v3692
    %3753 = vmatpush.bf16.msra.mxu0 %v3688
    %3754 = vmatpush.bf16.msra.mxu0 %v3684
    %3755 = vmatpush.bf16.msra.mxu0 %v3680
    %3756 = vmatpush.bf16.msra.mxu0 %v3676
    %3757 = vmatpush.bf16.msra.mxu0 %v3672
    %3758 = vmatpush.bf16.msra.mxu0 %v3668
    %3759 = vmatpush.bf16.msra.mxu0 %v3664
    %3760 = vmatmul.bf16.gmra.mxu0 %v3533
    %v3761 = vpop.f32.mrf.mxu0
    %v3762 = vadd.f32 0.0, %v3761
    %v3763 = vpop.f32.mrf.mxu0
    %3764 = vdwg.mxu0
    %3765 = vmatpush.bf16.msra.mxu0 %v3693
    %3766 = vmatpush.bf16.msra.mxu0 %v3689
    %3767 = vmatpush.bf16.msra.mxu0 %v3685
    %3768 = vmatpush.bf16.msra.mxu0 %v3681
    %3769 = vmatpush.bf16.msra.mxu0 %v3677
    %3770 = vmatpush.bf16.msra.mxu0 %v3673
    %3771 = vmatpush.bf16.msra.mxu0 %v3669
    %3772 = vmatpush.bf16.msra.mxu0 %v3665
    %3773 = vmatmul.bf16.gmra.mxu0 %v3533
    %v3774 = vpop.f32.mrf.mxu0
    %v3775 = vadd.f32 0.0, %v3774
    %v3776 = vpop.f32.mrf.mxu0
    %3777 = vdwg.mxu0
    %v3778 = vadd.f32 %v3529, %v3736
    %v3779 = vadd.f32 %v3530, %v3749
    %v3780 = vadd.f32 %v3531, %v3762
    %v3781 = vadd.f32 %v3532, %v3775
    %v3782 = vxor.u32 %v3778, 2147483648
    %v3783 = vxor.u32 %v3779, 2147483648
    %v3784 = vmul.f32 %v3782, 1.442695
    %v3785 = vpow.pop %v3784
    %v3786 = vmul.f32 %v3783, 1.442695
    %v3787 = vpow.pop %v3786
    %v3788 = vadd.f32 %v3785, 1.0
    %v3789 = vadd.f32 %v3787, 1.0
    %v3790 = vrcp.pop %v3788
    %v3791 = vmul.f32 %v3788, %v3790
    %v3792 = vsub.f32 1.0, %v3791
    %v3793 = vmul.f32 %v3790, %v3792
    %v3794 = vadd.f32 %v3790, %v3793
    %vm3795 = vweird.f32 %v3788
    %vm3796 = vweird.f32 %v3790
    %vm3797 = vmor %vm3795, %vm3796
    %v3798 = vsel %vm3797, %v3790, %v3794
    %v3799 = vand.u32 2147483647, %v3788
    %vm3800 = vcmp.eq.f32.partialorder %v3799, 8.507059e+37
    %v3801 = vand.u32 %v3788, 2147483648
    %v3802 = vor.u32 1.1754944e-38, %v3801
    %v3803 = vsel %vm3800, %v3802, %v3798
    %v3804 = vmul.f32 1.0, %v3803
    %v3805 = vrcp.pop %v3789
    %v3806 = vmul.f32 %v3789, %v3805
    %v3807 = vsub.f32 1.0, %v3806
    %v3808 = vmul.f32 %v3805, %v3807
    %v3809 = vadd.f32 %v3805, %v3808
    %vm3810 = vweird.f32 %v3789
    %vm3811 = vweird.f32 %v3805
    %vm3812 = vmor %vm3810, %vm3811
    %v3813 = vsel %vm3812, %v3805, %v3809
    %v3814 = vand.u32 2147483647, %v3789
    %vm3815 = vcmp.eq.f32.partialorder %v3814, 8.507059e+37
    %v3816 = vand.u32 %v3789, 2147483648
    %v3817 = vor.u32 1.1754944e-38, %v3816
    %v3818 = vsel %vm3815, %v3817, %v3813
    %v3819 = vmul.f32 1.0, %v3818
    %v3820 = vtanh.pop %v3780
    %v3821 = vmul.f32 %v3819, %v3506
    %v3822 = vmul.f32 %v3804, %v3820
    %v3823 = vadd.f32 %v3821, %v3822
    %v3824 = vtanh.pop %v3823
    %v3825 = vxor.u32 %v3781, 2147483648
    %v3826 = vmul.f32 %v3825, 1.442695
    %v3827 = vpow.pop %v3826
    %v3828 = vadd.f32 %v3827, 1.0
    %v3829 = vrcp.pop %v3828
    %v3830 = vmul.f32 %v3828, %v3829
    %v3831 = vsub.f32 1.0, %v3830
    %v3832 = vmul.f32 %v3829, %v3831
    %v3833 = vadd.f32 %v3829, %v3832
    %vm3834 = vweird.f32 %v3828
    %vm3835 = vweird.f32 %v3829
    %vm3836 = vmor %vm3834, %vm3835
    %v3837 = vsel %vm3836, %v3829, %v3833
    %v3838 = vand.u32 2147483647, %v3828
    %vm3839 = vcmp.eq.f32.partialorder %v3838, 8.507059e+37
    %v3840 = vand.u32 %v3828, 2147483648
    %v3841 = vor.u32 1.1754944e-38, %v3840
    %v3842 = vsel %vm3839, %v3841, %v3837
    %v3843 = vmul.f32 1.0, %v3842
    %v3844 = vmul.f32 %v3843, %v3824
    %3845 = vst [vmem:[#allocation3 + $0x18] sm:$0xff] %v3844
    %v3846 = vld [vmem:[#allocation2 + $0x80] sm:$0xff]
    %v3847 = vld [vmem:[#allocation2 + $0x88] sm:$0xff]
    %v3848 = vld [vmem:[#allocation2 + $0x90] sm:$0xff]
    %v3849 = vld [vmem:[#allocation2 + $0x98] sm:$0xff]
    %v3850 = vpack.c.bf16 %v3844, %v3844
    %v3851 = vld [vmem:[#allocation7] sm:$0xff]
    %v3852 = vld [vmem:[#allocation7 + $0x8] sm:$0xff]
    %v3853 = vld [vmem:[#allocation7 + $0x10] sm:$0xff]
    %v3854 = vld [vmem:[#allocation7 + $0x18] sm:$0xff]
    %v3855 = vld [vmem:[#allocation7 + $0x20] sm:$0xff]
    %v3856 = vld [vmem:[#allocation7 + $0x28] sm:$0xff]
    %v3857 = vld [vmem:[#allocation7 + $0x30] sm:$0xff]
    %v3858 = vld [vmem:[#allocation7 + $0x38] sm:$0xff]
    %v3859 = vld [vmem:[#allocation7 + $0x40] sm:$0xff]
    %v3860 = vld [vmem:[#allocation7 + $0x48] sm:$0xff]
    %v3861 = vld [vmem:[#allocation7 + $0x50] sm:$0xff]
    %v3862 = vld [vmem:[#allocation7 + $0x58] sm:$0xff]
    %v3863 = vld [vmem:[#allocation7 + $0x60] sm:$0xff]
    %v3864 = vld [vmem:[#allocation7 + $0x68] sm:$0xff]
    %v3865 = vld [vmem:[#allocation7 + $0x70] sm:$0xff]
    %v3866 = vld [vmem:[#allocation7 + $0x78] sm:$0xff]
    %v3867 = vld [vmem:[#allocation7 + $0x80] sm:$0xff]
    %v3868 = vld [vmem:[#allocation7 + $0x88] sm:$0xff]
    %v3869 = vld [vmem:[#allocation7 + $0x90] sm:$0xff]
    %v3870 = vld [vmem:[#allocation7 + $0x98] sm:$0xff]
    %v3871 = vld [vmem:[#allocation7 + $0xa0] sm:$0xff]
    %v3872 = vld [vmem:[#allocation7 + $0xa8] sm:$0xff]
    %v3873 = vld [vmem:[#allocation7 + $0xb0] sm:$0xff]
    %v3874 = vld [vmem:[#allocation7 + $0xb8] sm:$0xff]
    %v3875 = vld [vmem:[#allocation7 + $0xc0] sm:$0xff]
    %v3876 = vld [vmem:[#allocation7 + $0xc8] sm:$0xff]
    %v3877 = vld [vmem:[#allocation7 + $0xd0] sm:$0xff]
    %v3878 = vld [vmem:[#allocation7 + $0xd8] sm:$0xff]
    %v3879 = vld [vmem:[#allocation7 + $0xe0] sm:$0xff]
    %v3880 = vld [vmem:[#allocation7 + $0xe8] sm:$0xff]
    %v3881 = vld [vmem:[#allocation7 + $0xf0] sm:$0xff]
    %v3882 = vld [vmem:[#allocation7 + $0xf8] sm:$0xff]
    %v3915 = vunpack.c.l.b16 %v3851
    %v3916 = vunpack.c.h.b16 %v3851
    %v3917 = vunpack.c.l.b16 %v3852
    %v3918 = vunpack.c.h.b16 %v3852
    %v3919 = vunpack.c.l.b16 %v3853
    %v3920 = vunpack.c.h.b16 %v3853
    %v3921 = vunpack.c.l.b16 %v3854
    %v3922 = vunpack.c.h.b16 %v3854
    %v3923 = vunpack.c.l.b16 %v3855
    %v3924 = vunpack.c.h.b16 %v3855
    %v3925 = vunpack.c.l.b16 %v3856
    %v3926 = vunpack.c.h.b16 %v3856
    %v3927 = vunpack.c.l.b16 %v3857
    %v3928 = vunpack.c.h.b16 %v3857
    %v3929 = vunpack.c.l.b16 %v3858
    %v3930 = vunpack.c.h.b16 %v3858
    %v3931 = vunpack.c.l.b16 %v3859
    %v3932 = vunpack.c.h.b16 %v3859
    %v3933 = vunpack.c.l.b16 %v3860
    %v3934 = vunpack.c.h.b16 %v3860
    %v3935 = vunpack.c.l.b16 %v3861
    %v3936 = vunpack.c.h.b16 %v3861
    %v3937 = vunpack.c.l.b16 %v3862
    %v3938 = vunpack.c.h.b16 %v3862
    %v3939 = vunpack.c.l.b16 %v3863
    %v3940 = vunpack.c.h.b16 %v3863
    %v3941 = vunpack.c.l.b16 %v3864
    %v3942 = vunpack.c.h.b16 %v3864
    %v3943 = vunpack.c.l.b16 %v3865
    %v3944 = vunpack.c.h.b16 %v3865
    %v3945 = vunpack.c.l.b16 %v3866
    %v3946 = vunpack.c.h.b16 %v3866
    %v3947 = vunpack.c.l.b16 %v3867
    %v3948 = vunpack.c.h.b16 %v3867
    %v3949 = vunpack.c.l.b16 %v3868
    %v3950 = vunpack.c.h.b16 %v3868
    %v3951 = vunpack.c.l.b16 %v3869
    %v3952 = vunpack.c.h.b16 %v3869
    %v3953 = vunpack.c.l.b16 %v3870
    %v3954 = vunpack.c.h.b16 %v3870
    %v3955 = vunpack.c.l.b16 %v3871
    %v3956 = vunpack.c.h.b16 %v3871
    %v3957 = vunpack.c.l.b16 %v3872
    %v3958 = vunpack.c.h.b16 %v3872
    %v3959 = vunpack.c.l.b16 %v3873
    %v3960 = vunpack.c.h.b16 %v3873
    %v3961 = vunpack.c.l.b16 %v3874
    %v3962 = vunpack.c.h.b16 %v3874
    %v3963 = vunpack.c.l.b16 %v3875
    %v3964 = vunpack.c.h.b16 %v3875
    %v3965 = vunpack.c.l.b16 %v3876
    %v3966 = vunpack.c.h.b16 %v3876
    %v3967 = vunpack.c.l.b16 %v3877
    %v3968 = vunpack.c.h.b16 %v3877
    %v3969 = vunpack.c.l.b16 %v3878
    %v3970 = vunpack.c.h.b16 %v3878
    %v3971 = vunpack.c.l.b16 %v3879
    %v3972 = vunpack.c.h.b16 %v3879
    %v3973 = vunpack.c.l.b16 %v3880
    %v3974 = vunpack.c.h.b16 %v3880
    %v3975 = vunpack.c.l.b16 %v3881
    %v3976 = vunpack.c.h.b16 %v3881
    %v3977 = vunpack.c.l.b16 %v3882
    %v3978 = vunpack.c.h.b16 %v3882
    %v3979 = vpack.c.b16 %v3919, %v3915
    %v3980 = vpack.c.b16 %v3920, %v3916
    %v3981 = vpack.c.b16 %v3921, %v3917
    %v3982 = vpack.c.b16 %v3922, %v3918
    %v3983 = vpack.c.b16 %v3927, %v3923
    %v3984 = vpack.c.b16 %v3928, %v3924
    %v3985 = vpack.c.b16 %v3929, %v3925
    %v3986 = vpack.c.b16 %v3930, %v3926
    %v3987 = vpack.c.b16 %v3935, %v3931
    %v3988 = vpack.c.b16 %v3936, %v3932
    %v3989 = vpack.c.b16 %v3937, %v3933
    %v3990 = vpack.c.b16 %v3938, %v3934
    %v3991 = vpack.c.b16 %v3943, %v3939
    %v3992 = vpack.c.b16 %v3944, %v3940
    %v3993 = vpack.c.b16 %v3945, %v3941
    %v3994 = vpack.c.b16 %v3946, %v3942
    %v3995 = vpack.c.b16 %v3951, %v3947
    %v3996 = vpack.c.b16 %v3952, %v3948
    %v3997 = vpack.c.b16 %v3953, %v3949
    %v3998 = vpack.c.b16 %v3954, %v3950
    %v3999 = vpack.c.b16 %v3959, %v3955
    %v4000 = vpack.c.b16 %v3960, %v3956
    %v4001 = vpack.c.b16 %v3961, %v3957
    %v4002 = vpack.c.b16 %v3962, %v3958
    %v4003 = vpack.c.b16 %v3967, %v3963
    %v4004 = vpack.c.b16 %v3968, %v3964
    %v4005 = vpack.c.b16 %v3969, %v3965
    %v4006 = vpack.c.b16 %v3970, %v3966
    %v4007 = vpack.c.b16 %v3975, %v3971
    %v4008 = vpack.c.b16 %v3976, %v3972
    %v4009 = vpack.c.b16 %v3977, %v3973
    %v4010 = vpack.c.b16 %v3978, %v3974
    %4043 = vmatpush.bf16.msra.mxu0 %v4007
    %4044 = vmatpush.bf16.msra.mxu0 %v4003
    %4045 = vmatpush.bf16.msra.mxu0 %v3999
    %4046 = vmatpush.bf16.msra.mxu0 %v3995
    %4047 = vmatpush.bf16.msra.mxu0 %v3991
    %4048 = vmatpush.bf16.msra.mxu0 %v3987
    %4049 = vmatpush.bf16.msra.mxu0 %v3983
    %4050 = vmatpush.bf16.msra.mxu0 %v3979
    %4051 = vmatmul.bf16.gmra.mxu0 %v3850
    %v4052 = vpop.f32.mrf.mxu0
    %v4053 = vadd.f32 0.0, %v4052
    %v4054 = vpop.f32.mrf.mxu0
    %4055 = vdwg.mxu0
    %4056 = vmatpush.bf16.msra.mxu0 %v4008
    %4057 = vmatpush.bf16.msra.mxu0 %v4004
    %4058 = vmatpush.bf16.msra.mxu0 %v4000
    %4059 = vmatpush.bf16.msra.mxu0 %v3996
    %4060 = vmatpush.bf16.msra.mxu0 %v3992
    %4061 = vmatpush.bf16.msra.mxu0 %v3988
    %4062 = vmatpush.bf16.msra.mxu0 %v3984
    %4063 = vmatpush.bf16.msra.mxu0 %v3980
    %4064 = vmatmul.bf16.gmra.mxu0 %v3850
    %v4065 = vpop.f32.mrf.mxu0
    %v4066 = vadd.f32 0.0, %v4065
    %v4067 = vpop.f32.mrf.mxu0
    %4068 = vdwg.mxu0
    %4069 = vmatpush.bf16.msra.mxu0 %v4009
    %4070 = vmatpush.bf16.msra.mxu0 %v4005
    %4071 = vmatpush.bf16.msra.mxu0 %v4001
    %4072 = vmatpush.bf16.msra.mxu0 %v3997
    %4073 = vmatpush.bf16.msra.mxu0 %v3993
    %4074 = vmatpush.bf16.msra.mxu0 %v3989
    %4075 = vmatpush.bf16.msra.mxu0 %v3985
    %4076 = vmatpush.bf16.msra.mxu0 %v3981
    %4077 = vmatmul.bf16.gmra.mxu0 %v3850
    %v4078 = vpop.f32.mrf.mxu0
    %v4079 = vadd.f32 0.0, %v4078
    %v4080 = vpop.f32.mrf.mxu0
    %4081 = vdwg.mxu0
    %4082 = vmatpush.bf16.msra.mxu0 %v4010
    %4083 = vmatpush.bf16.msra.mxu0 %v4006
    %4084 = vmatpush.bf16.msra.mxu0 %v4002
    %4085 = vmatpush.bf16.msra.mxu0 %v3998
    %4086 = vmatpush.bf16.msra.mxu0 %v3994
    %4087 = vmatpush.bf16.msra.mxu0 %v3990
    %4088 = vmatpush.bf16.msra.mxu0 %v3986
    %4089 = vmatpush.bf16.msra.mxu0 %v3982
    %4090 = vmatmul.bf16.gmra.mxu0 %v3850
    %v4091 = vpop.f32.mrf.mxu0
    %v4092 = vadd.f32 0.0, %v4091
    %v4093 = vpop.f32.mrf.mxu0
    %4094 = vdwg.mxu0
    %v4095 = vadd.f32 %v3846, %v4053
    %v4096 = vadd.f32 %v3847, %v4066
    %v4097 = vadd.f32 %v3848, %v4079
    %v4098 = vadd.f32 %v3849, %v4092
    %v4099 = vxor.u32 %v4095, 2147483648
    %v4100 = vxor.u32 %v4096, 2147483648
    %v4101 = vmul.f32 %v4099, 1.442695
    %v4102 = vpow.pop %v4101
    %v4103 = vmul.f32 %v4100, 1.442695
    %v4104 = vpow.pop %v4103
    %v4105 = vadd.f32 %v4102, 1.0
    %v4106 = vadd.f32 %v4104, 1.0
    %v4107 = vrcp.pop %v4105
    %v4108 = vmul.f32 %v4105, %v4107
    %v4109 = vsub.f32 1.0, %v4108
    %v4110 = vmul.f32 %v4107, %v4109
    %v4111 = vadd.f32 %v4107, %v4110
    %vm4112 = vweird.f32 %v4105
    %vm4113 = vweird.f32 %v4107
    %vm4114 = vmor %vm4112, %vm4113
    %v4115 = vsel %vm4114, %v4107, %v4111
    %v4116 = vand.u32 2147483647, %v4105
    %vm4117 = vcmp.eq.f32.partialorder %v4116, 8.507059e+37
    %v4118 = vand.u32 %v4105, 2147483648
    %v4119 = vor.u32 1.1754944e-38, %v4118
    %v4120 = vsel %vm4117, %v4119, %v4115
    %v4121 = vmul.f32 1.0, %v4120
    %v4122 = vrcp.pop %v4106
    %v4123 = vmul.f32 %v4106, %v4122
    %v4124 = vsub.f32 1.0, %v4123
    %v4125 = vmul.f32 %v4122, %v4124
    %v4126 = vadd.f32 %v4122, %v4125
    %vm4127 = vweird.f32 %v4106
    %vm4128 = vweird.f32 %v4122
    %vm4129 = vmor %vm4127, %vm4128
    %v4130 = vsel %vm4129, %v4122, %v4126
    %v4131 = vand.u32 2147483647, %v4106
    %vm4132 = vcmp.eq.f32.partialorder %v4131, 8.507059e+37
    %v4133 = vand.u32 %v4106, 2147483648
    %v4134 = vor.u32 1.1754944e-38, %v4133
    %v4135 = vsel %vm4132, %v4134, %v4130
    %v4136 = vmul.f32 1.0, %v4135
    %v4137 = vtanh.pop %v4097
    %v4138 = vmul.f32 %v4136, %v3823
    %v4139 = vmul.f32 %v4121, %v4137
    %v4140 = vadd.f32 %v4138, %v4139
    %v4141 = vtanh.pop %v4140
    %v4142 = vxor.u32 %v4098, 2147483648
    %v4143 = vmul.f32 %v4142, 1.442695
    %v4144 = vpow.pop %v4143
    %v4145 = vadd.f32 %v4144, 1.0
    %v4146 = vrcp.pop %v4145
    %v4147 = vmul.f32 %v4145, %v4146
    %v4148 = vsub.f32 1.0, %v4147
    %v4149 = vmul.f32 %v4146, %v4148
    %v4150 = vadd.f32 %v4146, %v4149
    %vm4151 = vweird.f32 %v4145
    %vm4152 = vweird.f32 %v4146
    %vm4153 = vmor %vm4151, %vm4152
    %v4154 = vsel %vm4153, %v4146, %v4150
    %v4155 = vand.u32 2147483647, %v4145
    %vm4156 = vcmp.eq.f32.partialorder %v4155, 8.507059e+37
    %v4157 = vand.u32 %v4145, 2147483648
    %v4158 = vor.u32 1.1754944e-38, %v4157
    %v4159 = vsel %vm4156, %v4158, %v4154
    %v4160 = vmul.f32 1.0, %v4159
    %v4161 = vmul.f32 %v4160, %v4141
    %4162 = vst [vmem:[#allocation3 + $0x20] sm:$0xff] %v4161
    %v4163 = vld [vmem:[#allocation2 + $0xa0] sm:$0xff]
    %v4164 = vld [vmem:[#allocation2 + $0xa8] sm:$0xff]
    %v4165 = vld [vmem:[#allocation2 + $0xb0] sm:$0xff]
    %v4166 = vld [vmem:[#allocation2 + $0xb8] sm:$0xff]
    %v4167 = vpack.c.bf16 %v4161, %v4161
    %v4168 = vld [vmem:[#allocation7] sm:$0xff]
    %v4169 = vld [vmem:[#allocation7 + $0x8] sm:$0xff]
    %v4170 = vld [vmem:[#allocation7 + $0x10] sm:$0xff]
    %v4171 = vld [vmem:[#allocation7 + $0x18] sm:$0xff]
    %v4172 = vld [vmem:[#allocation7 + $0x20] sm:$0xff]
    %v4173 = vld [vmem:[#allocation7 + $0x28] sm:$0xff]
    %v4174 = vld [vmem:[#allocation7 + $0x30] sm:$0xff]
    %v4175 = vld [vmem:[#allocation7 + $0x38] sm:$0xff]
    %v4176 = vld [vmem:[#allocation7 + $0x40] sm:$0xff]
    %v4177 = vld [vmem:[#allocation7 + $0x48] sm:$0xff]
    %v4178 = vld [vmem:[#allocation7 + $0x50] sm:$0xff]
    %v4179 = vld [vmem:[#allocation7 + $0x58] sm:$0xff]
    %v4180 = vld [vmem:[#allocation7 + $0x60] sm:$0xff]
    %v4181 = vld [vmem:[#allocation7 + $0x68] sm:$0xff]
    %v4182 = vld [vmem:[#allocation7 + $0x70] sm:$0xff]
    %v4183 = vld [vmem:[#allocation7 + $0x78] sm:$0xff]
    %v4184 = vld [vmem:[#allocation7 + $0x80] sm:$0xff]
    %v4185 = vld [vmem:[#allocation7 + $0x88] sm:$0xff]
    %v4186 = vld [vmem:[#allocation7 + $0x90] sm:$0xff]
    %v4187 = vld [vmem:[#allocation7 + $0x98] sm:$0xff]
    %v4188 = vld [vmem:[#allocation7 + $0xa0] sm:$0xff]
    %v4189 = vld [vmem:[#allocation7 + $0xa8] sm:$0xff]
    %v4190 = vld [vmem:[#allocation7 + $0xb0] sm:$0xff]
    %v4191 = vld [vmem:[#allocation7 + $0xb8] sm:$0xff]
    %v4192 = vld [vmem:[#allocation7 + $0xc0] sm:$0xff]
    %v4193 = vld [vmem:[#allocation7 + $0xc8] sm:$0xff]
    %v4194 = vld [vmem:[#allocation7 + $0xd0] sm:$0xff]
    %v4195 = vld [vmem:[#allocation7 + $0xd8] sm:$0xff]
    %v4196 = vld [vmem:[#allocation7 + $0xe0] sm:$0xff]
    %v4197 = vld [vmem:[#allocation7 + $0xe8] sm:$0xff]
    %v4198 = vld [vmem:[#allocation7 + $0xf0] sm:$0xff]
    %v4199 = vld [vmem:[#allocation7 + $0xf8] sm:$0xff]
    %v4232 = vunpack.c.l.b16 %v4168
    %v4233 = vunpack.c.h.b16 %v4168
    %v4234 = vunpack.c.l.b16 %v4169
    %v4235 = vunpack.c.h.b16 %v4169
    %v4236 = vunpack.c.l.b16 %v4170
    %v4237 = vunpack.c.h.b16 %v4170
    %v4238 = vunpack.c.l.b16 %v4171
    %v4239 = vunpack.c.h.b16 %v4171
    %v4240 = vunpack.c.l.b16 %v4172
    %v4241 = vunpack.c.h.b16 %v4172
    %v4242 = vunpack.c.l.b16 %v4173
    %v4243 = vunpack.c.h.b16 %v4173
    %v4244 = vunpack.c.l.b16 %v4174
    %v4245 = vunpack.c.h.b16 %v4174
    %v4246 = vunpack.c.l.b16 %v4175
    %v4247 = vunpack.c.h.b16 %v4175
    %v4248 = vunpack.c.l.b16 %v4176
    %v4249 = vunpack.c.h.b16 %v4176
    %v4250 = vunpack.c.l.b16 %v4177
    %v4251 = vunpack.c.h.b16 %v4177
    %v4252 = vunpack.c.l.b16 %v4178
    %v4253 = vunpack.c.h.b16 %v4178
    %v4254 = vunpack.c.l.b16 %v4179
    %v4255 = vunpack.c.h.b16 %v4179
    %v4256 = vunpack.c.l.b16 %v4180
    %v4257 = vunpack.c.h.b16 %v4180
    %v4258 = vunpack.c.l.b16 %v4181
    %v4259 = vunpack.c.h.b16 %v4181
    %v4260 = vunpack.c.l.b16 %v4182
    %v4261 = vunpack.c.h.b16 %v4182
    %v4262 = vunpack.c.l.b16 %v4183
    %v4263 = vunpack.c.h.b16 %v4183
    %v4264 = vunpack.c.l.b16 %v4184
    %v4265 = vunpack.c.h.b16 %v4184
    %v4266 = vunpack.c.l.b16 %v4185
    %v4267 = vunpack.c.h.b16 %v4185
    %v4268 = vunpack.c.l.b16 %v4186
    %v4269 = vunpack.c.h.b16 %v4186
    %v4270 = vunpack.c.l.b16 %v4187
    %v4271 = vunpack.c.h.b16 %v4187
    %v4272 = vunpack.c.l.b16 %v4188
    %v4273 = vunpack.c.h.b16 %v4188
    %v4274 = vunpack.c.l.b16 %v4189
    %v4275 = vunpack.c.h.b16 %v4189
    %v4276 = vunpack.c.l.b16 %v4190
    %v4277 = vunpack.c.h.b16 %v4190
    %v4278 = vunpack.c.l.b16 %v4191
    %v4279 = vunpack.c.h.b16 %v4191
    %v4280 = vunpack.c.l.b16 %v4192
    %v4281 = vunpack.c.h.b16 %v4192
    %v4282 = vunpack.c.l.b16 %v4193
    %v4283 = vunpack.c.h.b16 %v4193
    %v4284 = vunpack.c.l.b16 %v4194
    %v4285 = vunpack.c.h.b16 %v4194
    %v4286 = vunpack.c.l.b16 %v4195
    %v4287 = vunpack.c.h.b16 %v4195
    %v4288 = vunpack.c.l.b16 %v4196
    %v4289 = vunpack.c.h.b16 %v4196
    %v4290 = vunpack.c.l.b16 %v4197
    %v4291 = vunpack.c.h.b16 %v4197
    %v4292 = vunpack.c.l.b16 %v4198
    %v4293 = vunpack.c.h.b16 %v4198
    %v4294 = vunpack.c.l.b16 %v4199
    %v4295 = vunpack.c.h.b16 %v4199
    %v4296 = vpack.c.b16 %v4236, %v4232
    %v4297 = vpack.c.b16 %v4237, %v4233
    %v4298 = vpack.c.b16 %v4238, %v4234
    %v4299 = vpack.c.b16 %v4239, %v4235
    %v4300 = vpack.c.b16 %v4244, %v4240
    %v4301 = vpack.c.b16 %v4245, %v4241
    %v4302 = vpack.c.b16 %v4246, %v4242
    %v4303 = vpack.c.b16 %v4247, %v4243
    %v4304 = vpack.c.b16 %v4252, %v4248
    %v4305 = vpack.c.b16 %v4253, %v4249
    %v4306 = vpack.c.b16 %v4254, %v4250
    %v4307 = vpack.c.b16 %v4255, %v4251
    %v4308 = vpack.c.b16 %v4260, %v4256
    %v4309 = vpack.c.b16 %v4261, %v4257
    %v4310 = vpack.c.b16 %v4262, %v4258
    %v4311 = vpack.c.b16 %v4263, %v4259
    %v4312 = vpack.c.b16 %v4268, %v4264
    %v4313 = vpack.c.b16 %v4269, %v4265
    %v4314 = vpack.c.b16 %v4270, %v4266
    %v4315 = vpack.c.b16 %v4271, %v4267
    %v4316 = vpack.c.b16 %v4276, %v4272
    %v4317 = vpack.c.b16 %v4277, %v4273
    %v4318 = vpack.c.b16 %v4278, %v4274
    %v4319 = vpack.c.b16 %v4279, %v4275
    %v4320 = vpack.c.b16 %v4284, %v4280
    %v4321 = vpack.c.b16 %v4285, %v4281
    %v4322 = vpack.c.b16 %v4286, %v4282
    %v4323 = vpack.c.b16 %v4287, %v4283
    %v4324 = vpack.c.b16 %v4292, %v4288
    %v4325 = vpack.c.b16 %v4293, %v4289
    %v4326 = vpack.c.b16 %v4294, %v4290
    %v4327 = vpack.c.b16 %v4295, %v4291
    %4360 = vmatpush.bf16.msra.mxu0 %v4324
    %4361 = vmatpush.bf16.msra.mxu0 %v4320
    %4362 = vmatpush.bf16.msra.mxu0 %v4316
    %4363 = vmatpush.bf16.msra.mxu0 %v4312
    %4364 = vmatpush.bf16.msra.mxu0 %v4308
    %4365 = vmatpush.bf16.msra.mxu0 %v4304
    %4366 = vmatpush.bf16.msra.mxu0 %v4300
    %4367 = vmatpush.bf16.msra.mxu0 %v4296
    %4368 = vmatmul.bf16.gmra.mxu0 %v4167
    %v4369 = vpop.f32.mrf.mxu0
    %v4370 = vadd.f32 0.0, %v4369
    %v4371 = vpop.f32.mrf.mxu0
    %4372 = vdwg.mxu0
    %4373 = vmatpush.bf16.msra.mxu0 %v4325
    %4374 = vmatpush.bf16.msra.mxu0 %v4321
    %4375 = vmatpush.bf16.msra.mxu0 %v4317
    %4376 = vmatpush.bf16.msra.mxu0 %v4313
    %4377 = vmatpush.bf16.msra.mxu0 %v4309
    %4378 = vmatpush.bf16.msra.mxu0 %v4305
    %4379 = vmatpush.bf16.msra.mxu0 %v4301
    %4380 = vmatpush.bf16.msra.mxu0 %v4297
    %4381 = vmatmul.bf16.gmra.mxu0 %v4167
    %v4382 = vpop.f32.mrf.mxu0
    %v4383 = vadd.f32 0.0, %v4382
    %v4384 = vpop.f32.mrf.mxu0
    %4385 = vdwg.mxu0
    %4386 = vmatpush.bf16.msra.mxu0 %v4326
    %4387 = vmatpush.bf16.msra.mxu0 %v4322
    %4388 = vmatpush.bf16.msra.mxu0 %v4318
    %4389 = vmatpush.bf16.msra.mxu0 %v4314
    %4390 = vmatpush.bf16.msra.mxu0 %v4310
    %4391 = vmatpush.bf16.msra.mxu0 %v4306
    %4392 = vmatpush.bf16.msra.mxu0 %v4302
    %4393 = vmatpush.bf16.msra.mxu0 %v4298
    %4394 = vmatmul.bf16.gmra.mxu0 %v4167
    %v4395 = vpop.f32.mrf.mxu0
    %v4396 = vadd.f32 0.0, %v4395
    %v4397 = vpop.f32.mrf.mxu0
    %4398 = vdwg.mxu0
    %4399 = vmatpush.bf16.msra.mxu0 %v4327
    %4400 = vmatpush.bf16.msra.mxu0 %v4323
    %4401 = vmatpush.bf16.msra.mxu0 %v4319
    %4402 = vmatpush.bf16.msra.mxu0 %v4315
    %4403 = vmatpush.bf16.msra.mxu0 %v4311
    %4404 = vmatpush.bf16.msra.mxu0 %v4307
    %4405 = vmatpush.bf16.msra.mxu0 %v4303
    %4406 = vmatpush.bf16.msra.mxu0 %v4299
    %4407 = vmatmul.bf16.gmra.mxu0 %v4167
    %v4408 = vpop.f32.mrf.mxu0
    %v4409 = vadd.f32 0.0, %v4408
    %v4410 = vpop.f32.mrf.mxu0
    %4411 = vdwg.mxu0
    %v4412 = vadd.f32 %v4163, %v4370
    %v4413 = vadd.f32 %v4164, %v4383
    %v4414 = vadd.f32 %v4165, %v4396
    %v4415 = vadd.f32 %v4166, %v4409
    %v4416 = vxor.u32 %v4412, 2147483648
    %v4417 = vxor.u32 %v4413, 2147483648
    %v4418 = vmul.f32 %v4416, 1.442695
    %v4419 = vpow.pop %v4418
    %v4420 = vmul.f32 %v4417, 1.442695
    %v4421 = vpow.pop %v4420
    %v4422 = vadd.f32 %v4419, 1.0
    %v4423 = vadd.f32 %v4421, 1.0
    %v4424 = vrcp.pop %v4422
    %v4425 = vmul.f32 %v4422, %v4424
    %v4426 = vsub.f32 1.0, %v4425
    %v4427 = vmul.f32 %v4424, %v4426
    %v4428 = vadd.f32 %v4424, %v4427
    %vm4429 = vweird.f32 %v4422
    %vm4430 = vweird.f32 %v4424
    %vm4431 = vmor %vm4429, %vm4430
    %v4432 = vsel %vm4431, %v4424, %v4428
    %v4433 = vand.u32 2147483647, %v4422
    %vm4434 = vcmp.eq.f32.partialorder %v4433, 8.507059e+37
    %v4435 = vand.u32 %v4422, 2147483648
    %v4436 = vor.u32 1.1754944e-38, %v4435
    %v4437 = vsel %vm4434, %v4436, %v4432
    %v4438 = vmul.f32 1.0, %v4437
    %v4439 = vrcp.pop %v4423
    %v4440 = vmul.f32 %v4423, %v4439
    %v4441 = vsub.f32 1.0, %v4440
    %v4442 = vmul.f32 %v4439, %v4441
    %v4443 = vadd.f32 %v4439, %v4442
    %vm4444 = vweird.f32 %v4423
    %vm4445 = vweird.f32 %v4439
    %vm4446 = vmor %vm4444, %vm4445
    %v4447 = vsel %vm4446, %v4439, %v4443
    %v4448 = vand.u32 2147483647, %v4423
    %vm4449 = vcmp.eq.f32.partialorder %v4448, 8.507059e+37
    %v4450 = vand.u32 %v4423, 2147483648
    %v4451 = vor.u32 1.1754944e-38, %v4450
    %v4452 = vsel %vm4449, %v4451, %v4447
    %v4453 = vmul.f32 1.0, %v4452
    %v4454 = vtanh.pop %v4414
    %v4455 = vmul.f32 %v4453, %v4140
    %v4456 = vmul.f32 %v4438, %v4454
    %v4457 = vadd.f32 %v4455, %v4456
    %v4458 = vtanh.pop %v4457
    %v4459 = vxor.u32 %v4415, 2147483648
    %v4460 = vmul.f32 %v4459, 1.442695
    %v4461 = vpow.pop %v4460
    %v4462 = vadd.f32 %v4461, 1.0
    %v4463 = vrcp.pop %v4462
    %v4464 = vmul.f32 %v4462, %v4463
    %v4465 = vsub.f32 1.0, %v4464
    %v4466 = vmul.f32 %v4463, %v4465
    %v4467 = vadd.f32 %v4463, %v4466
    %vm4468 = vweird.f32 %v4462
    %vm4469 = vweird.f32 %v4463
    %vm4470 = vmor %vm4468, %vm4469
    %v4471 = vsel %vm4470, %v4463, %v4467
    %v4472 = vand.u32 2147483647, %v4462
    %vm4473 = vcmp.eq.f32.partialorder %v4472, 8.507059e+37
    %v4474 = vand.u32 %v4462, 2147483648
    %v4475 = vor.u32 1.1754944e-38, %v4474
    %v4476 = vsel %vm4473, %v4475, %v4471
    %v4477 = vmul.f32 1.0, %v4476
    %v4478 = vmul.f32 %v4477, %v4458
    %4479 = vst [vmem:[#allocation3 + $0x28] sm:$0xff] %v4478
    %v4480 = vld [vmem:[#allocation2 + $0xc0] sm:$0xff]
    %v4481 = vld [vmem:[#allocation2 + $0xc8] sm:$0xff]
    %v4482 = vld [vmem:[#allocation2 + $0xd0] sm:$0xff]
    %v4483 = vld [vmem:[#allocation2 + $0xd8] sm:$0xff]
    %v4484 = vpack.c.bf16 %v4478, %v4478
    %v4485 = vld [vmem:[#allocation7] sm:$0xff]
    %v4486 = vld [vmem:[#allocation7 + $0x8] sm:$0xff]
    %v4487 = vld [vmem:[#allocation7 + $0x10] sm:$0xff]
    %v4488 = vld [vmem:[#allocation7 + $0x18] sm:$0xff]
    %v4489 = vld [vmem:[#allocation7 + $0x20] sm:$0xff]
    %v4490 = vld [vmem:[#allocation7 + $0x28] sm:$0xff]
    %v4491 = vld [vmem:[#allocation7 + $0x30] sm:$0xff]
    %v4492 = vld [vmem:[#allocation7 + $0x38] sm:$0xff]
    %v4493 = vld [vmem:[#allocation7 + $0x40] sm:$0xff]
    %v4494 = vld [vmem:[#allocation7 + $0x48] sm:$0xff]
    %v4495 = vld [vmem:[#allocation7 + $0x50] sm:$0xff]
    %v4496 = vld [vmem:[#allocation7 + $0x58] sm:$0xff]
    %v4497 = vld [vmem:[#allocation7 + $0x60] sm:$0xff]
    %v4498 = vld [vmem:[#allocation7 + $0x68] sm:$0xff]
    %v4499 = vld [vmem:[#allocation7 + $0x70] sm:$0xff]
    %v4500 = vld [vmem:[#allocation7 + $0x78] sm:$0xff]
    %v4501 = vld [vmem:[#allocation7 + $0x80] sm:$0xff]
    %v4502 = vld [vmem:[#allocation7 + $0x88] sm:$0xff]
    %v4503 = vld [vmem:[#allocation7 + $0x90] sm:$0xff]
    %v4504 = vld [vmem:[#allocation7 + $0x98] sm:$0xff]
    %v4505 = vld [vmem:[#allocation7 + $0xa0] sm:$0xff]
    %v4506 = vld [vmem:[#allocation7 + $0xa8] sm:$0xff]
    %v4507 = vld [vmem:[#allocation7 + $0xb0] sm:$0xff]
    %v4508 = vld [vmem:[#allocation7 + $0xb8] sm:$0xff]
    %v4509 = vld [vmem:[#allocation7 + $0xc0] sm:$0xff]
    %v4510 = vld [vmem:[#allocation7 + $0xc8] sm:$0xff]
    %v4511 = vld [vmem:[#allocation7 + $0xd0] sm:$0xff]
    %v4512 = vld [vmem:[#allocation7 + $0xd8] sm:$0xff]
    %v4513 = vld [vmem:[#allocation7 + $0xe0] sm:$0xff]
    %v4514 = vld [vmem:[#allocation7 + $0xe8] sm:$0xff]
    %v4515 = vld [vmem:[#allocation7 + $0xf0] sm:$0xff]
    %v4516 = vld [vmem:[#allocation7 + $0xf8] sm:$0xff]
    %v4549 = vunpack.c.l.b16 %v4485
    %v4550 = vunpack.c.h.b16 %v4485
    %v4551 = vunpack.c.l.b16 %v4486
    %v4552 = vunpack.c.h.b16 %v4486
    %v4553 = vunpack.c.l.b16 %v4487
    %v4554 = vunpack.c.h.b16 %v4487
    %v4555 = vunpack.c.l.b16 %v4488
    %v4556 = vunpack.c.h.b16 %v4488
    %v4557 = vunpack.c.l.b16 %v4489
    %v4558 = vunpack.c.h.b16 %v4489
    %v4559 = vunpack.c.l.b16 %v4490
    %v4560 = vunpack.c.h.b16 %v4490
    %v4561 = vunpack.c.l.b16 %v4491
    %v4562 = vunpack.c.h.b16 %v4491
    %v4563 = vunpack.c.l.b16 %v4492
    %v4564 = vunpack.c.h.b16 %v4492
    %v4565 = vunpack.c.l.b16 %v4493
    %v4566 = vunpack.c.h.b16 %v4493
    %v4567 = vunpack.c.l.b16 %v4494
    %v4568 = vunpack.c.h.b16 %v4494
    %v4569 = vunpack.c.l.b16 %v4495
    %v4570 = vunpack.c.h.b16 %v4495
    %v4571 = vunpack.c.l.b16 %v4496
    %v4572 = vunpack.c.h.b16 %v4496
    %v4573 = vunpack.c.l.b16 %v4497
    %v4574 = vunpack.c.h.b16 %v4497
    %v4575 = vunpack.c.l.b16 %v4498
    %v4576 = vunpack.c.h.b16 %v4498
    %v4577 = vunpack.c.l.b16 %v4499
    %v4578 = vunpack.c.h.b16 %v4499
    %v4579 = vunpack.c.l.b16 %v4500
    %v4580 = vunpack.c.h.b16 %v4500
    %v4581 = vunpack.c.l.b16 %v4501
    %v4582 = vunpack.c.h.b16 %v4501
    %v4583 = vunpack.c.l.b16 %v4502
    %v4584 = vunpack.c.h.b16 %v4502
    %v4585 = vunpack.c.l.b16 %v4503
    %v4586 = vunpack.c.h.b16 %v4503
    %v4587 = vunpack.c.l.b16 %v4504
    %v4588 = vunpack.c.h.b16 %v4504
    %v4589 = vunpack.c.l.b16 %v4505
    %v4590 = vunpack.c.h.b16 %v4505
    %v4591 = vunpack.c.l.b16 %v4506
    %v4592 = vunpack.c.h.b16 %v4506
    %v4593 = vunpack.c.l.b16 %v4507
    %v4594 = vunpack.c.h.b16 %v4507
    %v4595 = vunpack.c.l.b16 %v4508
    %v4596 = vunpack.c.h.b16 %v4508
    %v4597 = vunpack.c.l.b16 %v4509
    %v4598 = vunpack.c.h.b16 %v4509
    %v4599 = vunpack.c.l.b16 %v4510
    %v4600 = vunpack.c.h.b16 %v4510
    %v4601 = vunpack.c.l.b16 %v4511
    %v4602 = vunpack.c.h.b16 %v4511
    %v4603 = vunpack.c.l.b16 %v4512
    %v4604 = vunpack.c.h.b16 %v4512
    %v4605 = vunpack.c.l.b16 %v4513
    %v4606 = vunpack.c.h.b16 %v4513
    %v4607 = vunpack.c.l.b16 %v4514
    %v4608 = vunpack.c.h.b16 %v4514
    %v4609 = vunpack.c.l.b16 %v4515
    %v4610 = vunpack.c.h.b16 %v4515
    %v4611 = vunpack.c.l.b16 %v4516
    %v4612 = vunpack.c.h.b16 %v4516
    %v4613 = vpack.c.b16 %v4553, %v4549
    %v4614 = vpack.c.b16 %v4554, %v4550
    %v4615 = vpack.c.b16 %v4555, %v4551
    %v4616 = vpack.c.b16 %v4556, %v4552
    %v4617 = vpack.c.b16 %v4561, %v4557
    %v4618 = vpack.c.b16 %v4562, %v4558
    %v4619 = vpack.c.b16 %v4563, %v4559
    %v4620 = vpack.c.b16 %v4564, %v4560
    %v4621 = vpack.c.b16 %v4569, %v4565
    %v4622 = vpack.c.b16 %v4570, %v4566
    %v4623 = vpack.c.b16 %v4571, %v4567
    %v4624 = vpack.c.b16 %v4572, %v4568
    %v4625 = vpack.c.b16 %v4577, %v4573
    %v4626 = vpack.c.b16 %v4578, %v4574
    %v4627 = vpack.c.b16 %v4579, %v4575
    %v4628 = vpack.c.b16 %v4580, %v4576
    %v4629 = vpack.c.b16 %v4585, %v4581
    %v4630 = vpack.c.b16 %v4586, %v4582
    %v4631 = vpack.c.b16 %v4587, %v4583
    %v4632 = vpack.c.b16 %v4588, %v4584
    %v4633 = vpack.c.b16 %v4593, %v4589
    %v4634 = vpack.c.b16 %v4594, %v4590
    %v4635 = vpack.c.b16 %v4595, %v4591
    %v4636 = vpack.c.b16 %v4596, %v4592
    %v4637 = vpack.c.b16 %v4601, %v4597
    %v4638 = vpack.c.b16 %v4602, %v4598
    %v4639 = vpack.c.b16 %v4603, %v4599
    %v4640 = vpack.c.b16 %v4604, %v4600
    %v4641 = vpack.c.b16 %v4609, %v4605
    %v4642 = vpack.c.b16 %v4610, %v4606
    %v4643 = vpack.c.b16 %v4611, %v4607
    %v4644 = vpack.c.b16 %v4612, %v4608
    %4677 = vmatpush.bf16.msra.mxu0 %v4641
    %4678 = vmatpush.bf16.msra.mxu0 %v4637
    %4679 = vmatpush.bf16.msra.mxu0 %v4633
    %4680 = vmatpush.bf16.msra.mxu0 %v4629
    %4681 = vmatpush.bf16.msra.mxu0 %v4625
    %4682 = vmatpush.bf16.msra.mxu0 %v4621
    %4683 = vmatpush.bf16.msra.mxu0 %v4617
    %4684 = vmatpush.bf16.msra.mxu0 %v4613
    %4685 = vmatmul.bf16.gmra.mxu0 %v4484
    %v4686 = vpop.f32.mrf.mxu0
    %v4687 = vadd.f32 0.0, %v4686
    %v4688 = vpop.f32.mrf.mxu0
    %4689 = vdwg.mxu0
    %4690 = vmatpush.bf16.msra.mxu0 %v4642
    %4691 = vmatpush.bf16.msra.mxu0 %v4638
    %4692 = vmatpush.bf16.msra.mxu0 %v4634
    %4693 = vmatpush.bf16.msra.mxu0 %v4630
    %4694 = vmatpush.bf16.msra.mxu0 %v4626
    %4695 = vmatpush.bf16.msra.mxu0 %v4622
    %4696 = vmatpush.bf16.msra.mxu0 %v4618
    %4697 = vmatpush.bf16.msra.mxu0 %v4614
    %4698 = vmatmul.bf16.gmra.mxu0 %v4484
    %v4699 = vpop.f32.mrf.mxu0
    %v4700 = vadd.f32 0.0, %v4699
    %v4701 = vpop.f32.mrf.mxu0
    %4702 = vdwg.mxu0
    %4703 = vmatpush.bf16.msra.mxu0 %v4643
    %4704 = vmatpush.bf16.msra.mxu0 %v4639
    %4705 = vmatpush.bf16.msra.mxu0 %v4635
    %4706 = vmatpush.bf16.msra.mxu0 %v4631
    %4707 = vmatpush.bf16.msra.mxu0 %v4627
    %4708 = vmatpush.bf16.msra.mxu0 %v4623
    %4709 = vmatpush.bf16.msra.mxu0 %v4619
    %4710 = vmatpush.bf16.msra.mxu0 %v4615
    %4711 = vmatmul.bf16.gmra.mxu0 %v4484
    %v4712 = vpop.f32.mrf.mxu0
    %v4713 = vadd.f32 0.0, %v4712
    %v4714 = vpop.f32.mrf.mxu0
    %4715 = vdwg.mxu0
    %4716 = vmatpush.bf16.msra.mxu0 %v4644
    %4717 = vmatpush.bf16.msra.mxu0 %v4640
    %4718 = vmatpush.bf16.msra.mxu0 %v4636
    %4719 = vmatpush.bf16.msra.mxu0 %v4632
    %4720 = vmatpush.bf16.msra.mxu0 %v4628
    %4721 = vmatpush.bf16.msra.mxu0 %v4624
    %4722 = vmatpush.bf16.msra.mxu0 %v4620
    %4723 = vmatpush.bf16.msra.mxu0 %v4616
    %4724 = vmatmul.bf16.gmra.mxu0 %v4484
    %v4725 = vpop.f32.mrf.mxu0
    %v4726 = vadd.f32 0.0, %v4725
    %v4727 = vpop.f32.mrf.mxu0
    %4728 = vdwg.mxu0
    %v4729 = vadd.f32 %v4480, %v4687
    %v4730 = vadd.f32 %v4481, %v4700
    %v4731 = vadd.f32 %v4482, %v4713
    %v4732 = vadd.f32 %v4483, %v4726
    %v4733 = vxor.u32 %v4729, 2147483648
    %v4734 = vxor.u32 %v4730, 2147483648
    %v4735 = vmul.f32 %v4733, 1.442695
    %v4736 = vpow.pop %v4735
    %v4737 = vmul.f32 %v4734, 1.442695
    %v4738 = vpow.pop %v4737
    %v4739 = vadd.f32 %v4736, 1.0
    %v4740 = vadd.f32 %v4738, 1.0
    %v4741 = vrcp.pop %v4739
    %v4742 = vmul.f32 %v4739, %v4741
    %v4743 = vsub.f32 1.0, %v4742
    %v4744 = vmul.f32 %v4741, %v4743
    %v4745 = vadd.f32 %v4741, %v4744
    %vm4746 = vweird.f32 %v4739
    %vm4747 = vweird.f32 %v4741
    %vm4748 = vmor %vm4746, %vm4747
    %v4749 = vsel %vm4748, %v4741, %v4745
    %v4750 = vand.u32 2147483647, %v4739
    %vm4751 = vcmp.eq.f32.partialorder %v4750, 8.507059e+37
    %v4752 = vand.u32 %v4739, 2147483648
    %v4753 = vor.u32 1.1754944e-38, %v4752
    %v4754 = vsel %vm4751, %v4753, %v4749
    %v4755 = vmul.f32 1.0, %v4754
    %v4756 = vrcp.pop %v4740
    %v4757 = vmul.f32 %v4740, %v4756
    %v4758 = vsub.f32 1.0, %v4757
    %v4759 = vmul.f32 %v4756, %v4758
    %v4760 = vadd.f32 %v4756, %v4759
    %vm4761 = vweird.f32 %v4740
    %vm4762 = vweird.f32 %v4756
    %vm4763 = vmor %vm4761, %vm4762
    %v4764 = vsel %vm4763, %v4756, %v4760
    %v4765 = vand.u32 2147483647, %v4740
    %vm4766 = vcmp.eq.f32.partialorder %v4765, 8.507059e+37
    %v4767 = vand.u32 %v4740, 2147483648
    %v4768 = vor.u32 1.1754944e-38, %v4767
    %v4769 = vsel %vm4766, %v4768, %v4764
    %v4770 = vmul.f32 1.0, %v4769
    %v4771 = vtanh.pop %v4731
    %v4772 = vmul.f32 %v4770, %v4457
    %v4773 = vmul.f32 %v4755, %v4771
    %v4774 = vadd.f32 %v4772, %v4773
    %v4775 = vtanh.pop %v4774
    %v4776 = vxor.u32 %v4732, 2147483648
    %v4777 = vmul.f32 %v4776, 1.442695
    %v4778 = vpow.pop %v4777
    %v4779 = vadd.f32 %v4778, 1.0
    %v4780 = vrcp.pop %v4779
    %v4781 = vmul.f32 %v4779, %v4780
    %v4782 = vsub.f32 1.0, %v4781
    %v4783 = vmul.f32 %v4780, %v4782
    %v4784 = vadd.f32 %v4780, %v4783
    %vm4785 = vweird.f32 %v4779
    %vm4786 = vweird.f32 %v4780
    %vm4787 = vmor %vm4785, %vm4786
    %v4788 = vsel %vm4787, %v4780, %v4784
    %v4789 = vand.u32 2147483647, %v4779
    %vm4790 = vcmp.eq.f32.partialorder %v4789, 8.507059e+37
    %v4791 = vand.u32 %v4779, 2147483648
    %v4792 = vor.u32 1.1754944e-38, %v4791
    %v4793 = vsel %vm4790, %v4792, %v4788
    %v4794 = vmul.f32 1.0, %v4793
    %v4795 = vmul.f32 %v4794, %v4775
    %4796 = vst [vmem:[#allocation3 + $0x30] sm:$0xff] %v4795
    %v4797 = vld [vmem:[#allocation2 + $0xe0] sm:$0xff]
    %v4798 = vld [vmem:[#allocation2 + $0xe8] sm:$0xff]
    %v4799 = vld [vmem:[#allocation2 + $0xf0] sm:$0xff]
    %v4800 = vld [vmem:[#allocation2 + $0xf8] sm:$0xff]
    %v4801 = vpack.c.bf16 %v4795, %v4795
    %v4802 = vld [vmem:[#allocation7] sm:$0xff]
    %v4803 = vld [vmem:[#allocation7 + $0x8] sm:$0xff]
    %v4804 = vld [vmem:[#allocation7 + $0x10] sm:$0xff]
    %v4805 = vld [vmem:[#allocation7 + $0x18] sm:$0xff]
    %v4806 = vld [vmem:[#allocation7 + $0x20] sm:$0xff]
    %v4807 = vld [vmem:[#allocation7 + $0x28] sm:$0xff]
    %v4808 = vld [vmem:[#allocation7 + $0x30] sm:$0xff]
    %v4809 = vld [vmem:[#allocation7 + $0x38] sm:$0xff]
    %v4810 = vld [vmem:[#allocation7 + $0x40] sm:$0xff]
    %v4811 = vld [vmem:[#allocation7 + $0x48] sm:$0xff]
    %v4812 = vld [vmem:[#allocation7 + $0x50] sm:$0xff]
    %v4813 = vld [vmem:[#allocation7 + $0x58] sm:$0xff]
    %v4814 = vld [vmem:[#allocation7 + $0x60] sm:$0xff]
    %v4815 = vld [vmem:[#allocation7 + $0x68] sm:$0xff]
    %v4816 = vld [vmem:[#allocation7 + $0x70] sm:$0xff]
    %v4817 = vld [vmem:[#allocation7 + $0x78] sm:$0xff]
    %v4818 = vld [vmem:[#allocation7 + $0x80] sm:$0xff]
    %v4819 = vld [vmem:[#allocation7 + $0x88] sm:$0xff]
    %v4820 = vld [vmem:[#allocation7 + $0x90] sm:$0xff]
    %v4821 = vld [vmem:[#allocation7 + $0x98] sm:$0xff]
    %v4822 = vld [vmem:[#allocation7 + $0xa0] sm:$0xff]
    %v4823 = vld [vmem:[#allocation7 + $0xa8] sm:$0xff]
    %v4824 = vld [vmem:[#allocation7 + $0xb0] sm:$0xff]
    %v4825 = vld [vmem:[#allocation7 + $0xb8] sm:$0xff]
    %v4826 = vld [vmem:[#allocation7 + $0xc0] sm:$0xff]
    %v4827 = vld [vmem:[#allocation7 + $0xc8] sm:$0xff]
    %v4828 = vld [vmem:[#allocation7 + $0xd0] sm:$0xff]
    %v4829 = vld [vmem:[#allocation7 + $0xd8] sm:$0xff]
    %v4830 = vld [vmem:[#allocation7 + $0xe0] sm:$0xff]
    %v4831 = vld [vmem:[#allocation7 + $0xe8] sm:$0xff]
    %v4832 = vld [vmem:[#allocation7 + $0xf0] sm:$0xff]
    %v4833 = vld [vmem:[#allocation7 + $0xf8] sm:$0xff]
    %v4866 = vunpack.c.l.b16 %v4802
    %v4867 = vunpack.c.h.b16 %v4802
    %v4868 = vunpack.c.l.b16 %v4803
    %v4869 = vunpack.c.h.b16 %v4803
    %v4870 = vunpack.c.l.b16 %v4804
    %v4871 = vunpack.c.h.b16 %v4804
    %v4872 = vunpack.c.l.b16 %v4805
    %v4873 = vunpack.c.h.b16 %v4805
    %v4874 = vunpack.c.l.b16 %v4806
    %v4875 = vunpack.c.h.b16 %v4806
    %v4876 = vunpack.c.l.b16 %v4807
    %v4877 = vunpack.c.h.b16 %v4807
    %v4878 = vunpack.c.l.b16 %v4808
    %v4879 = vunpack.c.h.b16 %v4808
    %v4880 = vunpack.c.l.b16 %v4809
    %v4881 = vunpack.c.h.b16 %v4809
    %v4882 = vunpack.c.l.b16 %v4810
    %v4883 = vunpack.c.h.b16 %v4810
    %v4884 = vunpack.c.l.b16 %v4811
    %v4885 = vunpack.c.h.b16 %v4811
    %v4886 = vunpack.c.l.b16 %v4812
    %v4887 = vunpack.c.h.b16 %v4812
    %v4888 = vunpack.c.l.b16 %v4813
    %v4889 = vunpack.c.h.b16 %v4813
    %v4890 = vunpack.c.l.b16 %v4814
    %v4891 = vunpack.c.h.b16 %v4814
    %v4892 = vunpack.c.l.b16 %v4815
    %v4893 = vunpack.c.h.b16 %v4815
    %v4894 = vunpack.c.l.b16 %v4816
    %v4895 = vunpack.c.h.b16 %v4816
    %v4896 = vunpack.c.l.b16 %v4817
    %v4897 = vunpack.c.h.b16 %v4817
    %v4898 = vunpack.c.l.b16 %v4818
    %v4899 = vunpack.c.h.b16 %v4818
    %v4900 = vunpack.c.l.b16 %v4819
    %v4901 = vunpack.c.h.b16 %v4819
    %v4902 = vunpack.c.l.b16 %v4820
    %v4903 = vunpack.c.h.b16 %v4820
    %v4904 = vunpack.c.l.b16 %v4821
    %v4905 = vunpack.c.h.b16 %v4821
    %v4906 = vunpack.c.l.b16 %v4822
    %v4907 = vunpack.c.h.b16 %v4822
    %v4908 = vunpack.c.l.b16 %v4823
    %v4909 = vunpack.c.h.b16 %v4823
    %v4910 = vunpack.c.l.b16 %v4824
    %v4911 = vunpack.c.h.b16 %v4824
    %v4912 = vunpack.c.l.b16 %v4825
    %v4913 = vunpack.c.h.b16 %v4825
    %v4914 = vunpack.c.l.b16 %v4826
    %v4915 = vunpack.c.h.b16 %v4826
    %v4916 = vunpack.c.l.b16 %v4827
    %v4917 = vunpack.c.h.b16 %v4827
    %v4918 = vunpack.c.l.b16 %v4828
    %v4919 = vunpack.c.h.b16 %v4828
    %v4920 = vunpack.c.l.b16 %v4829
    %v4921 = vunpack.c.h.b16 %v4829
    %v4922 = vunpack.c.l.b16 %v4830
    %v4923 = vunpack.c.h.b16 %v4830
    %v4924 = vunpack.c.l.b16 %v4831
    %v4925 = vunpack.c.h.b16 %v4831
    %v4926 = vunpack.c.l.b16 %v4832
    %v4927 = vunpack.c.h.b16 %v4832
    %v4928 = vunpack.c.l.b16 %v4833
    %v4929 = vunpack.c.h.b16 %v4833
    %v4930 = vpack.c.b16 %v4870, %v4866
    %v4931 = vpack.c.b16 %v4871, %v4867
    %v4932 = vpack.c.b16 %v4872, %v4868
    %v4933 = vpack.c.b16 %v4873, %v4869
    %v4934 = vpack.c.b16 %v4878, %v4874
    %v4935 = vpack.c.b16 %v4879, %v4875
    %v4936 = vpack.c.b16 %v4880, %v4876
    %v4937 = vpack.c.b16 %v4881, %v4877
    %v4938 = vpack.c.b16 %v4886, %v4882
    %v4939 = vpack.c.b16 %v4887, %v4883
    %v4940 = vpack.c.b16 %v4888, %v4884
    %v4941 = vpack.c.b16 %v4889, %v4885
    %v4942 = vpack.c.b16 %v4894, %v4890
    %v4943 = vpack.c.b16 %v4895, %v4891
    %v4944 = vpack.c.b16 %v4896, %v4892
    %v4945 = vpack.c.b16 %v4897, %v4893
    %v4946 = vpack.c.b16 %v4902, %v4898
    %v4947 = vpack.c.b16 %v4903, %v4899
    %v4948 = vpack.c.b16 %v4904, %v4900
    %v4949 = vpack.c.b16 %v4905, %v4901
    %v4950 = vpack.c.b16 %v4910, %v4906
    %v4951 = vpack.c.b16 %v4911, %v4907
    %v4952 = vpack.c.b16 %v4912, %v4908
    %v4953 = vpack.c.b16 %v4913, %v4909
    %v4954 = vpack.c.b16 %v4918, %v4914
    %v4955 = vpack.c.b16 %v4919, %v4915
    %v4956 = vpack.c.b16 %v4920, %v4916
    %v4957 = vpack.c.b16 %v4921, %v4917
    %v4958 = vpack.c.b16 %v4926, %v4922
    %v4959 = vpack.c.b16 %v4927, %v4923
    %v4960 = vpack.c.b16 %v4928, %v4924
    %v4961 = vpack.c.b16 %v4929, %v4925
    %4994 = vmatpush.bf16.msra.mxu0 %v4958
    %4995 = vmatpush.bf16.msra.mxu0 %v4954
    %4996 = vmatpush.bf16.msra.mxu0 %v4950
    %4997 = vmatpush.bf16.msra.mxu0 %v4946
    %4998 = vmatpush.bf16.msra.mxu0 %v4942
    %4999 = vmatpush.bf16.msra.mxu0 %v4938
    %5000 = vmatpush.bf16.msra.mxu0 %v4934
    %5001 = vmatpush.bf16.msra.mxu0 %v4930
    %5002 = vmatmul.bf16.gmra.mxu0 %v4801
    %v5003 = vpop.f32.mrf.mxu0
    %v5004 = vadd.f32 0.0, %v5003
    %v5005 = vpop.f32.mrf.mxu0
    %5006 = vdwg.mxu0
    %5007 = vmatpush.bf16.msra.mxu0 %v4959
    %5008 = vmatpush.bf16.msra.mxu0 %v4955
    %5009 = vmatpush.bf16.msra.mxu0 %v4951
    %5010 = vmatpush.bf16.msra.mxu0 %v4947
    %5011 = vmatpush.bf16.msra.mxu0 %v4943
    %5012 = vmatpush.bf16.msra.mxu0 %v4939
    %5013 = vmatpush.bf16.msra.mxu0 %v4935
    %5014 = vmatpush.bf16.msra.mxu0 %v4931
    %5015 = vmatmul.bf16.gmra.mxu0 %v4801
    %v5016 = vpop.f32.mrf.mxu0
    %v5017 = vadd.f32 0.0, %v5016
    %v5018 = vpop.f32.mrf.mxu0
    %5019 = vdwg.mxu0
    %5020 = vmatpush.bf16.msra.mxu0 %v4960
    %5021 = vmatpush.bf16.msra.mxu0 %v4956
    %5022 = vmatpush.bf16.msra.mxu0 %v4952
    %5023 = vmatpush.bf16.msra.mxu0 %v4948
    %5024 = vmatpush.bf16.msra.mxu0 %v4944
    %5025 = vmatpush.bf16.msra.mxu0 %v4940
    %5026 = vmatpush.bf16.msra.mxu0 %v4936
    %5027 = vmatpush.bf16.msra.mxu0 %v4932
    %5028 = vmatmul.bf16.gmra.mxu0 %v4801
    %v5029 = vpop.f32.mrf.mxu0
    %v5030 = vadd.f32 0.0, %v5029
    %v5031 = vpop.f32.mrf.mxu0
    %5032 = vdwg.mxu0
    %5033 = vmatpush.bf16.msra.mxu0 %v4961
    %5034 = vmatpush.bf16.msra.mxu0 %v4957
    %5035 = vmatpush.bf16.msra.mxu0 %v4953
    %5036 = vmatpush.bf16.msra.mxu0 %v4949
    %5037 = vmatpush.bf16.msra.mxu0 %v4945
    %5038 = vmatpush.bf16.msra.mxu0 %v4941
    %5039 = vmatpush.bf16.msra.mxu0 %v4937
    %5040 = vmatpush.bf16.msra.mxu0 %v4933
    %5041 = vmatmul.bf16.gmra.mxu0 %v4801
    %v5042 = vpop.f32.mrf.mxu0
    %v5043 = vadd.f32 0.0, %v5042
    %v5044 = vpop.f32.mrf.mxu0
    %5045 = vdwg.mxu0
    %v5046 = vadd.f32 %v4797, %v5004
    %v5047 = vadd.f32 %v4798, %v5017
    %v5048 = vadd.f32 %v4799, %v5030
    %v5049 = vadd.f32 %v4800, %v5043
    %v5050 = vxor.u32 %v5046, 2147483648
    %v5051 = vxor.u32 %v5047, 2147483648
    %v5052 = vmul.f32 %v5050, 1.442695
    %v5053 = vpow.pop %v5052
    %v5054 = vmul.f32 %v5051, 1.442695
    %v5055 = vpow.pop %v5054
    %v5056 = vadd.f32 %v5053, 1.0
    %v5057 = vadd.f32 %v5055, 1.0
    %v5058 = vrcp.pop %v5056
    %v5059 = vmul.f32 %v5056, %v5058
    %v5060 = vsub.f32 1.0, %v5059
    %v5061 = vmul.f32 %v5058, %v5060
    %v5062 = vadd.f32 %v5058, %v5061
    %vm5063 = vweird.f32 %v5056
    %vm5064 = vweird.f32 %v5058
    %vm5065 = vmor %vm5063, %vm5064
    %v5066 = vsel %vm5065, %v5058, %v5062
    %v5067 = vand.u32 2147483647, %v5056
    %vm5068 = vcmp.eq.f32.partialorder %v5067, 8.507059e+37
    %v5069 = vand.u32 %v5056, 2147483648
    %v5070 = vor.u32 1.1754944e-38, %v5069
    %v5071 = vsel %vm5068, %v5070, %v5066
    %v5072 = vmul.f32 1.0, %v5071
    %v5073 = vrcp.pop %v5057
    %v5074 = vmul.f32 %v5057, %v5073
    %v5075 = vsub.f32 1.0, %v5074
    %v5076 = vmul.f32 %v5073, %v5075
    %v5077 = vadd.f32 %v5073, %v5076
    %vm5078 = vweird.f32 %v5057
    %vm5079 = vweird.f32 %v5073
    %vm5080 = vmor %vm5078, %vm5079
    %v5081 = vsel %vm5080, %v5073, %v5077
    %v5082 = vand.u32 2147483647, %v5057
    %vm5083 = vcmp.eq.f32.partialorder %v5082, 8.507059e+37
    %v5084 = vand.u32 %v5057, 2147483648
    %v5085 = vor.u32 1.1754944e-38, %v5084
    %v5086 = vsel %vm5083, %v5085, %v5081
    %v5087 = vmul.f32 1.0, %v5086
    %v5088 = vtanh.pop %v5048
    %v5089 = vmul.f32 %v5087, %v4774
    %v5090 = vmul.f32 %v5072, %v5088
    %v5091 = vadd.f32 %v5089, %v5090
    %v5092 = vtanh.pop %v5091
    %v5093 = vxor.u32 %v5049, 2147483648
    %v5094 = vmul.f32 %v5093, 1.442695
    %v5095 = vpow.pop %v5094
    %v5096 = vadd.f32 %v5095, 1.0
    %v5097 = vrcp.pop %v5096
    %v5098 = vmul.f32 %v5096, %v5097
    %v5099 = vsub.f32 1.0, %v5098
    %v5100 = vmul.f32 %v5097, %v5099
    %v5101 = vadd.f32 %v5097, %v5100
    %vm5102 = vweird.f32 %v5096
    %vm5103 = vweird.f32 %v5097
    %vm5104 = vmor %vm5102, %vm5103
    %v5105 = vsel %vm5104, %v5097, %v5101
    %v5106 = vand.u32 2147483647, %v5096
    %vm5107 = vcmp.eq.f32.partialorder %v5106, 8.507059e+37
    %v5108 = vand.u32 %v5096, 2147483648
    %v5109 = vor.u32 1.1754944e-38, %v5108
    %v5110 = vsel %vm5107, %v5109, %v5105
    %v5111 = vmul.f32 1.0, %v5110
    %v5112 = vmul.f32 %v5111, %v5092
    %5113 = vst [vmem:[#allocation3 + $0x38] sm:$0xff] %v5112
    %v5114 = vld [vmem:[#allocation2 + $0x100] sm:$0xff]
    %v5115 = vld [vmem:[#allocation2 + $0x108] sm:$0xff]
    %v5116 = vld [vmem:[#allocation2 + $0x110] sm:$0xff]
    %v5117 = vld [vmem:[#allocation2 + $0x118] sm:$0xff]
    %v5118 = vpack.c.bf16 %v5112, %v5112
    %v5119 = vld [vmem:[#allocation7] sm:$0xff]
    %v5120 = vld [vmem:[#allocation7 + $0x8] sm:$0xff]
    %v5121 = vld [vmem:[#allocation7 + $0x10] sm:$0xff]
    %v5122 = vld [vmem:[#allocation7 + $0x18] sm:$0xff]
    %v5123 = vld [vmem:[#allocation7 + $0x20] sm:$0xff]
    %v5124 = vld [vmem:[#allocation7 + $0x28] sm:$0xff]
    %v5125 = vld [vmem:[#allocation7 + $0x30] sm:$0xff]
    %v5126 = vld [vmem:[#allocation7 + $0x38] sm:$0xff]
    %v5127 = vld [vmem:[#allocation7 + $0x40] sm:$0xff]
    %v5128 = vld [vmem:[#allocation7 + $0x48] sm:$0xff]
    %v5129 = vld [vmem:[#allocation7 + $0x50] sm:$0xff]
    %v5130 = vld [vmem:[#allocation7 + $0x58] sm:$0xff]
    %v5131 = vld [vmem:[#allocation7 + $0x60] sm:$0xff]
    %v5132 = vld [vmem:[#allocation7 + $0x68] sm:$0xff]
    %v5133 = vld [vmem:[#allocation7 + $0x70] sm:$0xff]
    %v5134 = vld [vmem:[#allocation7 + $0x78] sm:$0xff]
    %v5135 = vld [vmem:[#allocation7 + $0x80] sm:$0xff]
    %v5136 = vld [vmem:[#allocation7 + $0x88] sm:$0xff]
    %v5137 = vld [vmem:[#allocation7 + $0x90] sm:$0xff]
    %v5138 = vld [vmem:[#allocation7 + $0x98] sm:$0xff]
    %v5139 = vld [vmem:[#allocation7 + $0xa0] sm:$0xff]
    %v5140 = vld [vmem:[#allocation7 + $0xa8] sm:$0xff]
    %v5141 = vld [vmem:[#allocation7 + $0xb0] sm:$0xff]
    %v5142 = vld [vmem:[#allocation7 + $0xb8] sm:$0xff]
    %v5143 = vld [vmem:[#allocation7 + $0xc0] sm:$0xff]
    %v5144 = vld [vmem:[#allocation7 + $0xc8] sm:$0xff]
    %v5145 = vld [vmem:[#allocation7 + $0xd0] sm:$0xff]
    %v5146 = vld [vmem:[#allocation7 + $0xd8] sm:$0xff]
    %v5147 = vld [vmem:[#allocation7 + $0xe0] sm:$0xff]
    %v5148 = vld [vmem:[#allocation7 + $0xe8] sm:$0xff]
    %v5149 = vld [vmem:[#allocation7 + $0xf0] sm:$0xff]
    %v5150 = vld [vmem:[#allocation7 + $0xf8] sm:$0xff]
    %v5183 = vunpack.c.l.b16 %v5119
    %v5184 = vunpack.c.h.b16 %v5119
    %v5185 = vunpack.c.l.b16 %v5120
    %v5186 = vunpack.c.h.b16 %v5120
    %v5187 = vunpack.c.l.b16 %v5121
    %v5188 = vunpack.c.h.b16 %v5121
    %v5189 = vunpack.c.l.b16 %v5122
    %v5190 = vunpack.c.h.b16 %v5122
    %v5191 = vunpack.c.l.b16 %v5123
    %v5192 = vunpack.c.h.b16 %v5123
    %v5193 = vunpack.c.l.b16 %v5124
    %v5194 = vunpack.c.h.b16 %v5124
    %v5195 = vunpack.c.l.b16 %v5125
    %v5196 = vunpack.c.h.b16 %v5125
    %v5197 = vunpack.c.l.b16 %v5126
    %v5198 = vunpack.c.h.b16 %v5126
    %v5199 = vunpack.c.l.b16 %v5127
    %v5200 = vunpack.c.h.b16 %v5127
    %v5201 = vunpack.c.l.b16 %v5128
    %v5202 = vunpack.c.h.b16 %v5128
    %v5203 = vunpack.c.l.b16 %v5129
    %v5204 = vunpack.c.h.b16 %v5129
    %v5205 = vunpack.c.l.b16 %v5130
    %v5206 = vunpack.c.h.b16 %v5130
    %v5207 = vunpack.c.l.b16 %v5131
    %v5208 = vunpack.c.h.b16 %v5131
    %v5209 = vunpack.c.l.b16 %v5132
    %v5210 = vunpack.c.h.b16 %v5132
    %v5211 = vunpack.c.l.b16 %v5133
    %v5212 = vunpack.c.h.b16 %v5133
    %v5213 = vunpack.c.l.b16 %v5134
    %v5214 = vunpack.c.h.b16 %v5134
    %v5215 = vunpack.c.l.b16 %v5135
    %v5216 = vunpack.c.h.b16 %v5135
    %v5217 = vunpack.c.l.b16 %v5136
    %v5218 = vunpack.c.h.b16 %v5136
    %v5219 = vunpack.c.l.b16 %v5137
    %v5220 = vunpack.c.h.b16 %v5137
    %v5221 = vunpack.c.l.b16 %v5138
    %v5222 = vunpack.c.h.b16 %v5138
    %v5223 = vunpack.c.l.b16 %v5139
    %v5224 = vunpack.c.h.b16 %v5139
    %v5225 = vunpack.c.l.b16 %v5140
    %v5226 = vunpack.c.h.b16 %v5140
    %v5227 = vunpack.c.l.b16 %v5141
    %v5228 = vunpack.c.h.b16 %v5141
    %v5229 = vunpack.c.l.b16 %v5142
    %v5230 = vunpack.c.h.b16 %v5142
    %v5231 = vunpack.c.l.b16 %v5143
    %v5232 = vunpack.c.h.b16 %v5143
    %v5233 = vunpack.c.l.b16 %v5144
    %v5234 = vunpack.c.h.b16 %v5144
    %v5235 = vunpack.c.l.b16 %v5145
    %v5236 = vunpack.c.h.b16 %v5145
    %v5237 = vunpack.c.l.b16 %v5146
    %v5238 = vunpack.c.h.b16 %v5146
    %v5239 = vunpack.c.l.b16 %v5147
    %v5240 = vunpack.c.h.b16 %v5147
    %v5241 = vunpack.c.l.b16 %v5148
    %v5242 = vunpack.c.h.b16 %v5148
    %v5243 = vunpack.c.l.b16 %v5149
    %v5244 = vunpack.c.h.b16 %v5149
    %v5245 = vunpack.c.l.b16 %v5150
    %v5246 = vunpack.c.h.b16 %v5150
    %v5247 = vpack.c.b16 %v5187, %v5183
    %v5248 = vpack.c.b16 %v5188, %v5184
    %v5249 = vpack.c.b16 %v5189, %v5185
    %v5250 = vpack.c.b16 %v5190, %v5186
    %v5251 = vpack.c.b16 %v5195, %v5191
    %v5252 = vpack.c.b16 %v5196, %v5192
    %v5253 = vpack.c.b16 %v5197, %v5193
    %v5254 = vpack.c.b16 %v5198, %v5194
    %v5255 = vpack.c.b16 %v5203, %v5199
    %v5256 = vpack.c.b16 %v5204, %v5200
    %v5257 = vpack.c.b16 %v5205, %v5201
    %v5258 = vpack.c.b16 %v5206, %v5202
    %v5259 = vpack.c.b16 %v5211, %v5207
    %v5260 = vpack.c.b16 %v5212, %v5208
    %v5261 = vpack.c.b16 %v5213, %v5209
    %v5262 = vpack.c.b16 %v5214, %v5210
    %v5263 = vpack.c.b16 %v5219, %v5215
    %v5264 = vpack.c.b16 %v5220, %v5216
    %v5265 = vpack.c.b16 %v5221, %v5217
    %v5266 = vpack.c.b16 %v5222, %v5218
    %v5267 = vpack.c.b16 %v5227, %v5223
    %v5268 = vpack.c.b16 %v5228, %v5224
    %v5269 = vpack.c.b16 %v5229, %v5225
    %v5270 = vpack.c.b16 %v5230, %v5226
    %v5271 = vpack.c.b16 %v5235, %v5231
    %v5272 = vpack.c.b16 %v5236, %v5232
    %v5273 = vpack.c.b16 %v5237, %v5233
    %v5274 = vpack.c.b16 %v5238, %v5234
    %v5275 = vpack.c.b16 %v5243, %v5239
    %v5276 = vpack.c.b16 %v5244, %v5240
    %v5277 = vpack.c.b16 %v5245, %v5241
    %v5278 = vpack.c.b16 %v5246, %v5242
    %5311 = vmatpush.bf16.msra.mxu0 %v5275
    %5312 = vmatpush.bf16.msra.mxu0 %v5271
    %5313 = vmatpush.bf16.msra.mxu0 %v5267
    %5314 = vmatpush.bf16.msra.mxu0 %v5263
    %5315 = vmatpush.bf16.msra.mxu0 %v5259
    %5316 = vmatpush.bf16.msra.mxu0 %v5255
    %5317 = vmatpush.bf16.msra.mxu0 %v5251
    %5318 = vmatpush.bf16.msra.mxu0 %v5247
    %5319 = vmatmul.bf16.gmra.mxu0 %v5118
    %v5320 = vpop.f32.mrf.mxu0
    %v5321 = vadd.f32 0.0, %v5320
    %v5322 = vpop.f32.mrf.mxu0
    %5323 = vdwg.mxu0
    %5324 = vmatpush.bf16.msra.mxu0 %v5276
    %5325 = vmatpush.bf16.msra.mxu0 %v5272
    %5326 = vmatpush.bf16.msra.mxu0 %v5268
    %5327 = vmatpush.bf16.msra.mxu0 %v5264
    %5328 = vmatpush.bf16.msra.mxu0 %v5260
    %5329 = vmatpush.bf16.msra.mxu0 %v5256
    %5330 = vmatpush.bf16.msra.mxu0 %v5252
    %5331 = vmatpush.bf16.msra.mxu0 %v5248
    %5332 = vmatmul.bf16.gmra.mxu0 %v5118
    %v5333 = vpop.f32.mrf.mxu0
    %v5334 = vadd.f32 0.0, %v5333
    %v5335 = vpop.f32.mrf.mxu0
    %5336 = vdwg.mxu0
    %5337 = vmatpush.bf16.msra.mxu0 %v5277
    %5338 = vmatpush.bf16.msra.mxu0 %v5273
    %5339 = vmatpush.bf16.msra.mxu0 %v5269
    %5340 = vmatpush.bf16.msra.mxu0 %v5265
    %5341 = vmatpush.bf16.msra.mxu0 %v5261
    %5342 = vmatpush.bf16.msra.mxu0 %v5257
    %5343 = vmatpush.bf16.msra.mxu0 %v5253
    %5344 = vmatpush.bf16.msra.mxu0 %v5249
    %5345 = vmatmul.bf16.gmra.mxu0 %v5118
    %v5346 = vpop.f32.mrf.mxu0
    %v5347 = vadd.f32 0.0, %v5346
    %v5348 = vpop.f32.mrf.mxu0
    %5349 = vdwg.mxu0
    %5350 = vmatpush.bf16.msra.mxu0 %v5278
    %5351 = vmatpush.bf16.msra.mxu0 %v5274
    %5352 = vmatpush.bf16.msra.mxu0 %v5270
    %5353 = vmatpush.bf16.msra.mxu0 %v5266
    %5354 = vmatpush.bf16.msra.mxu0 %v5262
    %5355 = vmatpush.bf16.msra.mxu0 %v5258
    %5356 = vmatpush.bf16.msra.mxu0 %v5254
    %5357 = vmatpush.bf16.msra.mxu0 %v5250
    %5358 = vmatmul.bf16.gmra.mxu0 %v5118
    %v5359 = vpop.f32.mrf.mxu0
    %v5360 = vadd.f32 0.0, %v5359
    %v5361 = vpop.f32.mrf.mxu0
    %5362 = vdwg.mxu0
    %v5363 = vadd.f32 %v5114, %v5321
    %v5364 = vadd.f32 %v5115, %v5334
    %v5365 = vadd.f32 %v5116, %v5347
    %v5366 = vadd.f32 %v5117, %v5360
    %v5367 = vxor.u32 %v5363, 2147483648
    %v5368 = vxor.u32 %v5364, 2147483648
    %v5369 = vmul.f32 %v5367, 1.442695
    %v5370 = vpow.pop %v5369
    %v5371 = vmul.f32 %v5368, 1.442695
    %v5372 = vpow.pop %v5371
    %v5373 = vadd.f32 %v5370, 1.0
    %v5374 = vadd.f32 %v5372, 1.0
    %v5375 = vrcp.pop %v5373
    %v5376 = vmul.f32 %v5373, %v5375
    %v5377 = vsub.f32 1.0, %v5376
    %v5378 = vmul.f32 %v5375, %v5377
    %v5379 = vadd.f32 %v5375, %v5378
    %vm5380 = vweird.f32 %v5373
    %vm5381 = vweird.f32 %v5375
    %vm5382 = vmor %vm5380, %vm5381
    %v5383 = vsel %vm5382, %v5375, %v5379
    %v5384 = vand.u32 2147483647, %v5373
    %vm5385 = vcmp.eq.f32.partialorder %v5384, 8.507059e+37
    %v5386 = vand.u32 %v5373, 2147483648
    %v5387 = vor.u32 1.1754944e-38, %v5386
    %v5388 = vsel %vm5385, %v5387, %v5383
    %v5389 = vmul.f32 1.0, %v5388
    %v5390 = vrcp.pop %v5374
    %v5391 = vmul.f32 %v5374, %v5390
    %v5392 = vsub.f32 1.0, %v5391
    %v5393 = vmul.f32 %v5390, %v5392
    %v5394 = vadd.f32 %v5390, %v5393
    %vm5395 = vweird.f32 %v5374
    %vm5396 = vweird.f32 %v5390
    %vm5397 = vmor %vm5395, %vm5396
    %v5398 = vsel %vm5397, %v5390, %v5394
    %v5399 = vand.u32 2147483647, %v5374
    %vm5400 = vcmp.eq.f32.partialorder %v5399, 8.507059e+37
    %v5401 = vand.u32 %v5374, 2147483648
    %v5402 = vor.u32 1.1754944e-38, %v5401
    %v5403 = vsel %vm5400, %v5402, %v5398
    %v5404 = vmul.f32 1.0, %v5403
    %v5405 = vtanh.pop %v5365
    %v5406 = vmul.f32 %v5404, %v5091
    %v5407 = vmul.f32 %v5389, %v5405
    %v5408 = vadd.f32 %v5406, %v5407
    %v5409 = vtanh.pop %v5408
    %v5410 = vxor.u32 %v5366, 2147483648
    %v5411 = vmul.f32 %v5410, 1.442695
    %v5412 = vpow.pop %v5411
    %v5413 = vadd.f32 %v5412, 1.0
    %v5414 = vrcp.pop %v5413
    %v5415 = vmul.f32 %v5413, %v5414
    %v5416 = vsub.f32 1.0, %v5415
    %v5417 = vmul.f32 %v5414, %v5416
    %v5418 = vadd.f32 %v5414, %v5417
    %vm5419 = vweird.f32 %v5413
    %vm5420 = vweird.f32 %v5414
    %vm5421 = vmor %vm5419, %vm5420
    %v5422 = vsel %vm5421, %v5414, %v5418
    %v5423 = vand.u32 2147483647, %v5413
    %vm5424 = vcmp.eq.f32.partialorder %v5423, 8.507059e+37
    %v5425 = vand.u32 %v5413, 2147483648
    %v5426 = vor.u32 1.1754944e-38, %v5425
    %v5427 = vsel %vm5424, %v5426, %v5422
    %v5428 = vmul.f32 1.0, %v5427
    %v5429 = vmul.f32 %v5428, %v5409
    %5430 = vst [vmem:[#allocation3 + $0x40] sm:$0xff] %v5429
    %v5431 = vld [vmem:[#allocation2 + $0x120] sm:$0xff]
    %v5432 = vld [vmem:[#allocation2 + $0x128] sm:$0xff]
    %v5433 = vld [vmem:[#allocation2 + $0x130] sm:$0xff]
    %v5434 = vld [vmem:[#allocation2 + $0x138] sm:$0xff]
    %v5435 = vpack.c.bf16 %v5429, %v5429
    %v5436 = vld [vmem:[#allocation7] sm:$0xff]
    %v5437 = vld [vmem:[#allocation7 + $0x8] sm:$0xff]
    %v5438 = vld [vmem:[#allocation7 + $0x10] sm:$0xff]
    %v5439 = vld [vmem:[#allocation7 + $0x18] sm:$0xff]
    %v5440 = vld [vmem:[#allocation7 + $0x20] sm:$0xff]
    %v5441 = vld [vmem:[#allocation7 + $0x28] sm:$0xff]
    %v5442 = vld [vmem:[#allocation7 + $0x30] sm:$0xff]
    %v5443 = vld [vmem:[#allocation7 + $0x38] sm:$0xff]
    %v5444 = vld [vmem:[#allocation7 + $0x40] sm:$0xff]
    %v5445 = vld [vmem:[#allocation7 + $0x48] sm:$0xff]
    %v5446 = vld [vmem:[#allocation7 + $0x50] sm:$0xff]
    %v5447 = vld [vmem:[#allocation7 + $0x58] sm:$0xff]
    %v5448 = vld [vmem:[#allocation7 + $0x60] sm:$0xff]
    %v5449 = vld [vmem:[#allocation7 + $0x68] sm:$0xff]
    %v5450 = vld [vmem:[#allocation7 + $0x70] sm:$0xff]
    %v5451 = vld [vmem:[#allocation7 + $0x78] sm:$0xff]
    %v5452 = vld [vmem:[#allocation7 + $0x80] sm:$0xff]
    %v5453 = vld [vmem:[#allocation7 + $0x88] sm:$0xff]
    %v5454 = vld [vmem:[#allocation7 + $0x90] sm:$0xff]
    %v5455 = vld [vmem:[#allocation7 + $0x98] sm:$0xff]
    %v5456 = vld [vmem:[#allocation7 + $0xa0] sm:$0xff]
    %v5457 = vld [vmem:[#allocation7 + $0xa8] sm:$0xff]
    %v5458 = vld [vmem:[#allocation7 + $0xb0] sm:$0xff]
    %v5459 = vld [vmem:[#allocation7 + $0xb8] sm:$0xff]
    %v5460 = vld [vmem:[#allocation7 + $0xc0] sm:$0xff]
    %v5461 = vld [vmem:[#allocation7 + $0xc8] sm:$0xff]
    %v5462 = vld [vmem:[#allocation7 + $0xd0] sm:$0xff]
    %v5463 = vld [vmem:[#allocation7 + $0xd8] sm:$0xff]
    %v5464 = vld [vmem:[#allocation7 + $0xe0] sm:$0xff]
    %v5465 = vld [vmem:[#allocation7 + $0xe8] sm:$0xff]
    %v5466 = vld [vmem:[#allocation7 + $0xf0] sm:$0xff]
    %v5467 = vld [vmem:[#allocation7 + $0xf8] sm:$0xff]
    %v5500 = vunpack.c.l.b16 %v5436
    %v5501 = vunpack.c.h.b16 %v5436
    %v5502 = vunpack.c.l.b16 %v5437
    %v5503 = vunpack.c.h.b16 %v5437
    %v5504 = vunpack.c.l.b16 %v5438
    %v5505 = vunpack.c.h.b16 %v5438
    %v5506 = vunpack.c.l.b16 %v5439
    %v5507 = vunpack.c.h.b16 %v5439
    %v5508 = vunpack.c.l.b16 %v5440
    %v5509 = vunpack.c.h.b16 %v5440
    %v5510 = vunpack.c.l.b16 %v5441
    %v5511 = vunpack.c.h.b16 %v5441
    %v5512 = vunpack.c.l.b16 %v5442
    %v5513 = vunpack.c.h.b16 %v5442
    %v5514 = vunpack.c.l.b16 %v5443
    %v5515 = vunpack.c.h.b16 %v5443
    %v5516 = vunpack.c.l.b16 %v5444
    %v5517 = vunpack.c.h.b16 %v5444
    %v5518 = vunpack.c.l.b16 %v5445
    %v5519 = vunpack.c.h.b16 %v5445
    %v5520 = vunpack.c.l.b16 %v5446
    %v5521 = vunpack.c.h.b16 %v5446
    %v5522 = vunpack.c.l.b16 %v5447
    %v5523 = vunpack.c.h.b16 %v5447
    %v5524 = vunpack.c.l.b16 %v5448
    %v5525 = vunpack.c.h.b16 %v5448
    %v5526 = vunpack.c.l.b16 %v5449
    %v5527 = vunpack.c.h.b16 %v5449
    %v5528 = vunpack.c.l.b16 %v5450
    %v5529 = vunpack.c.h.b16 %v5450
    %v5530 = vunpack.c.l.b16 %v5451
    %v5531 = vunpack.c.h.b16 %v5451
    %v5532 = vunpack.c.l.b16 %v5452
    %v5533 = vunpack.c.h.b16 %v5452
    %v5534 = vunpack.c.l.b16 %v5453
    %v5535 = vunpack.c.h.b16 %v5453
    %v5536 = vunpack.c.l.b16 %v5454
    %v5537 = vunpack.c.h.b16 %v5454
    %v5538 = vunpack.c.l.b16 %v5455
    %v5539 = vunpack.c.h.b16 %v5455
    %v5540 = vunpack.c.l.b16 %v5456
    %v5541 = vunpack.c.h.b16 %v5456
    %v5542 = vunpack.c.l.b16 %v5457
    %v5543 = vunpack.c.h.b16 %v5457
    %v5544 = vunpack.c.l.b16 %v5458
    %v5545 = vunpack.c.h.b16 %v5458
    %v5546 = vunpack.c.l.b16 %v5459
    %v5547 = vunpack.c.h.b16 %v5459
    %v5548 = vunpack.c.l.b16 %v5460
    %v5549 = vunpack.c.h.b16 %v5460
    %v5550 = vunpack.c.l.b16 %v5461
    %v5551 = vunpack.c.h.b16 %v5461
    %v5552 = vunpack.c.l.b16 %v5462
    %v5553 = vunpack.c.h.b16 %v5462
    %v5554 = vunpack.c.l.b16 %v5463
    %v5555 = vunpack.c.h.b16 %v5463
    %v5556 = vunpack.c.l.b16 %v5464
    %v5557 = vunpack.c.h.b16 %v5464
    %v5558 = vunpack.c.l.b16 %v5465
    %v5559 = vunpack.c.h.b16 %v5465
    %v5560 = vunpack.c.l.b16 %v5466
    %v5561 = vunpack.c.h.b16 %v5466
    %v5562 = vunpack.c.l.b16 %v5467
    %v5563 = vunpack.c.h.b16 %v5467
    %v5564 = vpack.c.b16 %v5504, %v5500
    %v5565 = vpack.c.b16 %v5505, %v5501
    %v5566 = vpack.c.b16 %v5506, %v5502
    %v5567 = vpack.c.b16 %v5507, %v5503
    %v5568 = vpack.c.b16 %v5512, %v5508
    %v5569 = vpack.c.b16 %v5513, %v5509
    %v5570 = vpack.c.b16 %v5514, %v5510
    %v5571 = vpack.c.b16 %v5515, %v5511
    %v5572 = vpack.c.b16 %v5520, %v5516
    %v5573 = vpack.c.b16 %v5521, %v5517
    %v5574 = vpack.c.b16 %v5522, %v5518
    %v5575 = vpack.c.b16 %v5523, %v5519
    %v5576 = vpack.c.b16 %v5528, %v5524
    %v5577 = vpack.c.b16 %v5529, %v5525
    %v5578 = vpack.c.b16 %v5530, %v5526
    %v5579 = vpack.c.b16 %v5531, %v5527
    %v5580 = vpack.c.b16 %v5536, %v5532
    %v5581 = vpack.c.b16 %v5537, %v5533
    %v5582 = vpack.c.b16 %v5538, %v5534
    %v5583 = vpack.c.b16 %v5539, %v5535
    %v5584 = vpack.c.b16 %v5544, %v5540
    %v5585 = vpack.c.b16 %v5545, %v5541
    %v5586 = vpack.c.b16 %v5546, %v5542
    %v5587 = vpack.c.b16 %v5547, %v5543
    %v5588 = vpack.c.b16 %v5552, %v5548
    %v5589 = vpack.c.b16 %v5553, %v5549
    %v5590 = vpack.c.b16 %v5554, %v5550
    %v5591 = vpack.c.b16 %v5555, %v5551
    %v5592 = vpack.c.b16 %v5560, %v5556
    %v5593 = vpack.c.b16 %v5561, %v5557
    %v5594 = vpack.c.b16 %v5562, %v5558
    %v5595 = vpack.c.b16 %v5563, %v5559
    %5628 = vmatpush.bf16.msra.mxu0 %v5592
    %5629 = vmatpush.bf16.msra.mxu0 %v5588
    %5630 = vmatpush.bf16.msra.mxu0 %v5584
    %5631 = vmatpush.bf16.msra.mxu0 %v5580
    %5632 = vmatpush.bf16.msra.mxu0 %v5576
    %5633 = vmatpush.bf16.msra.mxu0 %v5572
    %5634 = vmatpush.bf16.msra.mxu0 %v5568
    %5635 = vmatpush.bf16.msra.mxu0 %v5564
    %5636 = vmatmul.bf16.gmra.mxu0 %v5435
    %v5637 = vpop.f32.mrf.mxu0
    %v5638 = vadd.f32 0.0, %v5637
    %v5639 = vpop.f32.mrf.mxu0
    %5640 = vdwg.mxu0
    %5641 = vmatpush.bf16.msra.mxu0 %v5593
    %5642 = vmatpush.bf16.msra.mxu0 %v5589
    %5643 = vmatpush.bf16.msra.mxu0 %v5585
    %5644 = vmatpush.bf16.msra.mxu0 %v5581
    %5645 = vmatpush.bf16.msra.mxu0 %v5577
    %5646 = vmatpush.bf16.msra.mxu0 %v5573
    %5647 = vmatpush.bf16.msra.mxu0 %v5569
    %5648 = vmatpush.bf16.msra.mxu0 %v5565
    %5649 = vmatmul.bf16.gmra.mxu0 %v5435
    %v5650 = vpop.f32.mrf.mxu0
    %v5651 = vadd.f32 0.0, %v5650
    %v5652 = vpop.f32.mrf.mxu0
    %5653 = vdwg.mxu0
    %5654 = vmatpush.bf16.msra.mxu0 %v5594
    %5655 = vmatpush.bf16.msra.mxu0 %v5590
    %5656 = vmatpush.bf16.msra.mxu0 %v5586
    %5657 = vmatpush.bf16.msra.mxu0 %v5582
    %5658 = vmatpush.bf16.msra.mxu0 %v5578
    %5659 = vmatpush.bf16.msra.mxu0 %v5574
    %5660 = vmatpush.bf16.msra.mxu0 %v5570
    %5661 = vmatpush.bf16.msra.mxu0 %v5566
    %5662 = vmatmul.bf16.gmra.mxu0 %v5435
    %v5663 = vpop.f32.mrf.mxu0
    %v5664 = vadd.f32 0.0, %v5663
    %v5665 = vpop.f32.mrf.mxu0
    %5666 = vdwg.mxu0
    %5667 = vmatpush.bf16.msra.mxu0 %v5595
    %5668 = vmatpush.bf16.msra.mxu0 %v5591
    %5669 = vmatpush.bf16.msra.mxu0 %v5587
    %5670 = vmatpush.bf16.msra.mxu0 %v5583
    %5671 = vmatpush.bf16.msra.mxu0 %v5579
    %5672 = vmatpush.bf16.msra.mxu0 %v5575
    %5673 = vmatpush.bf16.msra.mxu0 %v5571
    %5674 = vmatpush.bf16.msra.mxu0 %v5567
    %5675 = vmatmul.bf16.gmra.mxu0 %v5435
    %v5676 = vpop.f32.mrf.mxu0
    %v5677 = vadd.f32 0.0, %v5676
    %v5678 = vpop.f32.mrf.mxu0
    %5679 = vdwg.mxu0
    %v5680 = vadd.f32 %v5431, %v5638
    %v5681 = vadd.f32 %v5432, %v5651
    %v5682 = vadd.f32 %v5433, %v5664
    %v5683 = vadd.f32 %v5434, %v5677
    %v5684 = vxor.u32 %v5680, 2147483648
    %v5685 = vxor.u32 %v5681, 2147483648
    %v5686 = vmul.f32 %v5684, 1.442695
    %v5687 = vpow.pop %v5686
    %v5688 = vmul.f32 %v5685, 1.442695
    %v5689 = vpow.pop %v5688
    %v5690 = vadd.f32 %v5687, 1.0
    %v5691 = vadd.f32 %v5689, 1.0
    %v5692 = vrcp.pop %v5690
    %v5693 = vmul.f32 %v5690, %v5692
    %v5694 = vsub.f32 1.0, %v5693
    %v5695 = vmul.f32 %v5692, %v5694
    %v5696 = vadd.f32 %v5692, %v5695
    %vm5697 = vweird.f32 %v5690
    %vm5698 = vweird.f32 %v5692
    %vm5699 = vmor %vm5697, %vm5698
    %v5700 = vsel %vm5699, %v5692, %v5696
    %v5701 = vand.u32 2147483647, %v5690
    %vm5702 = vcmp.eq.f32.partialorder %v5701, 8.507059e+37
    %v5703 = vand.u32 %v5690, 2147483648
    %v5704 = vor.u32 1.1754944e-38, %v5703
    %v5705 = vsel %vm5702, %v5704, %v5700
    %v5706 = vmul.f32 1.0, %v5705
    %v5707 = vrcp.pop %v5691
    %v5708 = vmul.f32 %v5691, %v5707
    %v5709 = vsub.f32 1.0, %v5708
    %v5710 = vmul.f32 %v5707, %v5709
    %v5711 = vadd.f32 %v5707, %v5710
    %vm5712 = vweird.f32 %v5691
    %vm5713 = vweird.f32 %v5707
    %vm5714 = vmor %vm5712, %vm5713
    %v5715 = vsel %vm5714, %v5707, %v5711
    %v5716 = vand.u32 2147483647, %v5691
    %vm5717 = vcmp.eq.f32.partialorder %v5716, 8.507059e+37
    %v5718 = vand.u32 %v5691, 2147483648
    %v5719 = vor.u32 1.1754944e-38, %v5718
    %v5720 = vsel %vm5717, %v5719, %v5715
    %v5721 = vmul.f32 1.0, %v5720
    %v5722 = vtanh.pop %v5682
    %v5723 = vmul.f32 %v5721, %v5408
    %v5724 = vmul.f32 %v5706, %v5722
    %v5725 = vadd.f32 %v5723, %v5724
    %v5726 = vtanh.pop %v5725
    %v5727 = vxor.u32 %v5683, 2147483648
    %v5728 = vmul.f32 %v5727, 1.442695
    %v5729 = vpow.pop %v5728
    %v5730 = vadd.f32 %v5729, 1.0
    %v5731 = vrcp.pop %v5730
    %v5732 = vmul.f32 %v5730, %v5731
    %v5733 = vsub.f32 1.0, %v5732
    %v5734 = vmul.f32 %v5731, %v5733
    %v5735 = vadd.f32 %v5731, %v5734
    %vm5736 = vweird.f32 %v5730
    %vm5737 = vweird.f32 %v5731
    %vm5738 = vmor %vm5736, %vm5737
    %v5739 = vsel %vm5738, %v5731, %v5735
    %v5740 = vand.u32 2147483647, %v5730
    %vm5741 = vcmp.eq.f32.partialorder %v5740, 8.507059e+37
    %v5742 = vand.u32 %v5730, 2147483648
    %v5743 = vor.u32 1.1754944e-38, %v5742
    %v5744 = vsel %vm5741, %v5743, %v5739
    %v5745 = vmul.f32 1.0, %v5744
    %v5746 = vmul.f32 %v5745, %v5726
    %5747 = vst [vmem:[#allocation3 + $0x48] sm:$0xff] %v5746
    %v5748 = vld [vmem:[#allocation2 + $0x140] sm:$0xff]
    %v5749 = vld [vmem:[#allocation2 + $0x148] sm:$0xff]
    %v5750 = vld [vmem:[#allocation2 + $0x150] sm:$0xff]
    %v5751 = vld [vmem:[#allocation2 + $0x158] sm:$0xff]
    %v5752 = vpack.c.bf16 %v5746, %v5746
    %v5753 = vld [vmem:[#allocation7] sm:$0xff]
    %v5754 = vld [vmem:[#allocation7 + $0x8] sm:$0xff]
    %v5755 = vld [vmem:[#allocation7 + $0x10] sm:$0xff]
    %v5756 = vld [vmem:[#allocation7 + $0x18] sm:$0xff]
    %v5757 = vld [vmem:[#allocation7 + $0x20] sm:$0xff]
    %v5758 = vld [vmem:[#allocation7 + $0x28] sm:$0xff]
    %v5759 = vld [vmem:[#allocation7 + $0x30] sm:$0xff]
    %v5760 = vld [vmem:[#allocation7 + $0x38] sm:$0xff]
    %v5761 = vld [vmem:[#allocation7 + $0x40] sm:$0xff]
    %v5762 = vld [vmem:[#allocation7 + $0x48] sm:$0xff]
    %v5763 = vld [vmem:[#allocation7 + $0x50] sm:$0xff]
    %v5764 = vld [vmem:[#allocation7 + $0x58] sm:$0xff]
    %v5765 = vld [vmem:[#allocation7 + $0x60] sm:$0xff]
    %v5766 = vld [vmem:[#allocation7 + $0x68] sm:$0xff]
    %v5767 = vld [vmem:[#allocation7 + $0x70] sm:$0xff]
    %v5768 = vld [vmem:[#allocation7 + $0x78] sm:$0xff]
    %v5769 = vld [vmem:[#allocation7 + $0x80] sm:$0xff]
    %v5770 = vld [vmem:[#allocation7 + $0x88] sm:$0xff]
    %v5771 = vld [vmem:[#allocation7 + $0x90] sm:$0xff]
    %v5772 = vld [vmem:[#allocation7 + $0x98] sm:$0xff]
    %v5773 = vld [vmem:[#allocation7 + $0xa0] sm:$0xff]
    %v5774 = vld [vmem:[#allocation7 + $0xa8] sm:$0xff]
    %v5775 = vld [vmem:[#allocation7 + $0xb0] sm:$0xff]
    %v5776 = vld [vmem:[#allocation7 + $0xb8] sm:$0xff]
    %v5777 = vld [vmem:[#allocation7 + $0xc0] sm:$0xff]
    %v5778 = vld [vmem:[#allocation7 + $0xc8] sm:$0xff]
    %v5779 = vld [vmem:[#allocation7 + $0xd0] sm:$0xff]
    %v5780 = vld [vmem:[#allocation7 + $0xd8] sm:$0xff]
    %v5781 = vld [vmem:[#allocation7 + $0xe0] sm:$0xff]
    %v5782 = vld [vmem:[#allocation7 + $0xe8] sm:$0xff]
    %v5783 = vld [vmem:[#allocation7 + $0xf0] sm:$0xff]
    %v5784 = vld [vmem:[#allocation7 + $0xf8] sm:$0xff]
    %v5817 = vunpack.c.l.b16 %v5753
    %v5818 = vunpack.c.h.b16 %v5753
    %v5819 = vunpack.c.l.b16 %v5754
    %v5820 = vunpack.c.h.b16 %v5754
    %v5821 = vunpack.c.l.b16 %v5755
    %v5822 = vunpack.c.h.b16 %v5755
    %v5823 = vunpack.c.l.b16 %v5756
    %v5824 = vunpack.c.h.b16 %v5756
    %v5825 = vunpack.c.l.b16 %v5757
    %v5826 = vunpack.c.h.b16 %v5757
    %v5827 = vunpack.c.l.b16 %v5758
    %v5828 = vunpack.c.h.b16 %v5758
    %v5829 = vunpack.c.l.b16 %v5759
    %v5830 = vunpack.c.h.b16 %v5759
    %v5831 = vunpack.c.l.b16 %v5760
    %v5832 = vunpack.c.h.b16 %v5760
    %v5833 = vunpack.c.l.b16 %v5761
    %v5834 = vunpack.c.h.b16 %v5761
    %v5835 = vunpack.c.l.b16 %v5762
    %v5836 = vunpack.c.h.b16 %v5762
    %v5837 = vunpack.c.l.b16 %v5763
    %v5838 = vunpack.c.h.b16 %v5763
    %v5839 = vunpack.c.l.b16 %v5764
    %v5840 = vunpack.c.h.b16 %v5764
    %v5841 = vunpack.c.l.b16 %v5765
    %v5842 = vunpack.c.h.b16 %v5765
    %v5843 = vunpack.c.l.b16 %v5766
    %v5844 = vunpack.c.h.b16 %v5766
    %v5845 = vunpack.c.l.b16 %v5767
    %v5846 = vunpack.c.h.b16 %v5767
    %v5847 = vunpack.c.l.b16 %v5768
    %v5848 = vunpack.c.h.b16 %v5768
    %v5849 = vunpack.c.l.b16 %v5769
    %v5850 = vunpack.c.h.b16 %v5769
    %v5851 = vunpack.c.l.b16 %v5770
    %v5852 = vunpack.c.h.b16 %v5770
    %v5853 = vunpack.c.l.b16 %v5771
    %v5854 = vunpack.c.h.b16 %v5771
    %v5855 = vunpack.c.l.b16 %v5772
    %v5856 = vunpack.c.h.b16 %v5772
    %v5857 = vunpack.c.l.b16 %v5773
    %v5858 = vunpack.c.h.b16 %v5773
    %v5859 = vunpack.c.l.b16 %v5774
    %v5860 = vunpack.c.h.b16 %v5774
    %v5861 = vunpack.c.l.b16 %v5775
    %v5862 = vunpack.c.h.b16 %v5775
    %v5863 = vunpack.c.l.b16 %v5776
    %v5864 = vunpack.c.h.b16 %v5776
    %v5865 = vunpack.c.l.b16 %v5777
    %v5866 = vunpack.c.h.b16 %v5777
    %v5867 = vunpack.c.l.b16 %v5778
    %v5868 = vunpack.c.h.b16 %v5778
    %v5869 = vunpack.c.l.b16 %v5779
    %v5870 = vunpack.c.h.b16 %v5779
    %v5871 = vunpack.c.l.b16 %v5780
    %v5872 = vunpack.c.h.b16 %v5780
    %v5873 = vunpack.c.l.b16 %v5781
    %v5874 = vunpack.c.h.b16 %v5781
    %v5875 = vunpack.c.l.b16 %v5782
    %v5876 = vunpack.c.h.b16 %v5782
    %v5877 = vunpack.c.l.b16 %v5783
    %v5878 = vunpack.c.h.b16 %v5783
    %v5879 = vunpack.c.l.b16 %v5784
    %v5880 = vunpack.c.h.b16 %v5784
    %v5881 = vpack.c.b16 %v5821, %v5817
    %v5882 = vpack.c.b16 %v5822, %v5818
    %v5883 = vpack.c.b16 %v5823, %v5819
    %v5884 = vpack.c.b16 %v5824, %v5820
    %v5885 = vpack.c.b16 %v5829, %v5825
    %v5886 = vpack.c.b16 %v5830, %v5826
    %v5887 = vpack.c.b16 %v5831, %v5827
    %v5888 = vpack.c.b16 %v5832, %v5828
    %v5889 = vpack.c.b16 %v5837, %v5833
    %v5890 = vpack.c.b16 %v5838, %v5834
    %v5891 = vpack.c.b16 %v5839, %v5835
    %v5892 = vpack.c.b16 %v5840, %v5836
    %v5893 = vpack.c.b16 %v5845, %v5841
    %v5894 = vpack.c.b16 %v5846, %v5842
    %v5895 = vpack.c.b16 %v5847, %v5843
    %v5896 = vpack.c.b16 %v5848, %v5844
    %v5897 = vpack.c.b16 %v5853, %v5849
    %v5898 = vpack.c.b16 %v5854, %v5850
    %v5899 = vpack.c.b16 %v5855, %v5851
    %v5900 = vpack.c.b16 %v5856, %v5852
    %v5901 = vpack.c.b16 %v5861, %v5857
    %v5902 = vpack.c.b16 %v5862, %v5858
    %v5903 = vpack.c.b16 %v5863, %v5859
    %v5904 = vpack.c.b16 %v5864, %v5860
    %v5905 = vpack.c.b16 %v5869, %v5865
    %v5906 = vpack.c.b16 %v5870, %v5866
    %v5907 = vpack.c.b16 %v5871, %v5867
    %v5908 = vpack.c.b16 %v5872, %v5868
    %v5909 = vpack.c.b16 %v5877, %v5873
    %v5910 = vpack.c.b16 %v5878, %v5874
    %v5911 = vpack.c.b16 %v5879, %v5875
    %v5912 = vpack.c.b16 %v5880, %v5876
    %5945 = vmatpush.bf16.msra.mxu0 %v5909
    %5946 = vmatpush.bf16.msra.mxu0 %v5905
    %5947 = vmatpush.bf16.msra.mxu0 %v5901
    %5948 = vmatpush.bf16.msra.mxu0 %v5897
    %5949 = vmatpush.bf16.msra.mxu0 %v5893
    %5950 = vmatpush.bf16.msra.mxu0 %v5889
    %5951 = vmatpush.bf16.msra.mxu0 %v5885
    %5952 = vmatpush.bf16.msra.mxu0 %v5881
    %5953 = vmatmul.bf16.gmra.mxu0 %v5752
    %v5954 = vpop.f32.mrf.mxu0
    %v5955 = vadd.f32 0.0, %v5954
    %v5956 = vpop.f32.mrf.mxu0
    %5957 = vdwg.mxu0
    %5958 = vmatpush.bf16.msra.mxu0 %v5910
    %5959 = vmatpush.bf16.msra.mxu0 %v5906
    %5960 = vmatpush.bf16.msra.mxu0 %v5902
    %5961 = vmatpush.bf16.msra.mxu0 %v5898
    %5962 = vmatpush.bf16.msra.mxu0 %v5894
    %5963 = vmatpush.bf16.msra.mxu0 %v5890
    %5964 = vmatpush.bf16.msra.mxu0 %v5886
    %5965 = vmatpush.bf16.msra.mxu0 %v5882
    %5966 = vmatmul.bf16.gmra.mxu0 %v5752
    %v5967 = vpop.f32.mrf.mxu0
    %v5968 = vadd.f32 0.0, %v5967
    %v5969 = vpop.f32.mrf.mxu0
    %5970 = vdwg.mxu0
    %5971 = vmatpush.bf16.msra.mxu0 %v5911
    %5972 = vmatpush.bf16.msra.mxu0 %v5907
    %5973 = vmatpush.bf16.msra.mxu0 %v5903
    %5974 = vmatpush.bf16.msra.mxu0 %v5899
    %5975 = vmatpush.bf16.msra.mxu0 %v5895
    %5976 = vmatpush.bf16.msra.mxu0 %v5891
    %5977 = vmatpush.bf16.msra.mxu0 %v5887
    %5978 = vmatpush.bf16.msra.mxu0 %v5883
    %5979 = vmatmul.bf16.gmra.mxu0 %v5752
    %v5980 = vpop.f32.mrf.mxu0
    %v5981 = vadd.f32 0.0, %v5980
    %v5982 = vpop.f32.mrf.mxu0
    %5983 = vdwg.mxu0
    %5984 = vmatpush.bf16.msra.mxu0 %v5912
    %5985 = vmatpush.bf16.msra.mxu0 %v5908
    %5986 = vmatpush.bf16.msra.mxu0 %v5904
    %5987 = vmatpush.bf16.msra.mxu0 %v5900
    %5988 = vmatpush.bf16.msra.mxu0 %v5896
    %5989 = vmatpush.bf16.msra.mxu0 %v5892
    %5990 = vmatpush.bf16.msra.mxu0 %v5888
    %5991 = vmatpush.bf16.msra.mxu0 %v5884
    %5992 = vmatmul.bf16.gmra.mxu0 %v5752
    %v5993 = vpop.f32.mrf.mxu0
    %v5994 = vadd.f32 0.0, %v5993
    %v5995 = vpop.f32.mrf.mxu0
    %5996 = vdwg.mxu0
    %v5997 = vadd.f32 %v5748, %v5955
    %v5998 = vadd.f32 %v5749, %v5968
    %v5999 = vadd.f32 %v5750, %v5981
    %v6000 = vadd.f32 %v5751, %v5994
    %v6001 = vxor.u32 %v5997, 2147483648
    %v6002 = vxor.u32 %v5998, 2147483648
    %v6003 = vmul.f32 %v6001, 1.442695
    %v6004 = vpow.pop %v6003
    %v6005 = vmul.f32 %v6002, 1.442695
    %v6006 = vpow.pop %v6005
    %v6007 = vadd.f32 %v6004, 1.0
    %v6008 = vadd.f32 %v6006, 1.0
    %v6009 = vrcp.pop %v6007
    %v6010 = vmul.f32 %v6007, %v6009
    %v6011 = vsub.f32 1.0, %v6010
    %v6012 = vmul.f32 %v6009, %v6011
    %v6013 = vadd.f32 %v6009, %v6012
    %vm6014 = vweird.f32 %v6007
    %vm6015 = vweird.f32 %v6009
    %vm6016 = vmor %vm6014, %vm6015
    %v6017 = vsel %vm6016, %v6009, %v6013
    %v6018 = vand.u32 2147483647, %v6007
    %vm6019 = vcmp.eq.f32.partialorder %v6018, 8.507059e+37
    %v6020 = vand.u32 %v6007, 2147483648
    %v6021 = vor.u32 1.1754944e-38, %v6020
    %v6022 = vsel %vm6019, %v6021, %v6017
    %v6023 = vmul.f32 1.0, %v6022
    %v6024 = vrcp.pop %v6008
    %v6025 = vmul.f32 %v6008, %v6024
    %v6026 = vsub.f32 1.0, %v6025
    %v6027 = vmul.f32 %v6024, %v6026
    %v6028 = vadd.f32 %v6024, %v6027
    %vm6029 = vweird.f32 %v6008
    %vm6030 = vweird.f32 %v6024
    %vm6031 = vmor %vm6029, %vm6030
    %v6032 = vsel %vm6031, %v6024, %v6028
    %v6033 = vand.u32 2147483647, %v6008
    %vm6034 = vcmp.eq.f32.partialorder %v6033, 8.507059e+37
    %v6035 = vand.u32 %v6008, 2147483648
    %v6036 = vor.u32 1.1754944e-38, %v6035
    %v6037 = vsel %vm6034, %v6036, %v6032
    %v6038 = vmul.f32 1.0, %v6037
    %v6039 = vtanh.pop %v5999
    %v6040 = vmul.f32 %v6038, %v5725
    %v6041 = vmul.f32 %v6023, %v6039
    %v6042 = vadd.f32 %v6040, %v6041
    %v6043 = vtanh.pop %v6042
    %v6044 = vxor.u32 %v6000, 2147483648
    %v6045 = vmul.f32 %v6044, 1.442695
    %v6046 = vpow.pop %v6045
    %v6047 = vadd.f32 %v6046, 1.0
    %v6048 = vrcp.pop %v6047
    %v6049 = vmul.f32 %v6047, %v6048
    %v6050 = vsub.f32 1.0, %v6049
    %v6051 = vmul.f32 %v6048, %v6050
    %v6052 = vadd.f32 %v6048, %v6051
    %vm6053 = vweird.f32 %v6047
    %vm6054 = vweird.f32 %v6048
    %vm6055 = vmor %vm6053, %vm6054
    %v6056 = vsel %vm6055, %v6048, %v6052
    %v6057 = vand.u32 2147483647, %v6047
    %vm6058 = vcmp.eq.f32.partialorder %v6057, 8.507059e+37
    %v6059 = vand.u32 %v6047, 2147483648
    %v6060 = vor.u32 1.1754944e-38, %v6059
    %v6061 = vsel %vm6058, %v6060, %v6056
    %v6062 = vmul.f32 1.0, %v6061
    %v6063 = vmul.f32 %v6062, %v6043
    %6064 = vst [vmem:[#allocation3 + $0x50] sm:$0xff] %v6063
    %v6065 = vld [vmem:[#allocation2 + $0x160] sm:$0xff]
    %v6066 = vld [vmem:[#allocation2 + $0x168] sm:$0xff]
    %v6067 = vld [vmem:[#allocation2 + $0x170] sm:$0xff]
    %v6068 = vld [vmem:[#allocation2 + $0x178] sm:$0xff]
    %v6069 = vpack.c.bf16 %v6063, %v6063
    %v6070 = vld [vmem:[#allocation7] sm:$0xff]
    %v6071 = vld [vmem:[#allocation7 + $0x8] sm:$0xff]
    %v6072 = vld [vmem:[#allocation7 + $0x10] sm:$0xff]
    %v6073 = vld [vmem:[#allocation7 + $0x18] sm:$0xff]
    %v6074 = vld [vmem:[#allocation7 + $0x20] sm:$0xff]
    %v6075 = vld [vmem:[#allocation7 + $0x28] sm:$0xff]
    %v6076 = vld [vmem:[#allocation7 + $0x30] sm:$0xff]
    %v6077 = vld [vmem:[#allocation7 + $0x38] sm:$0xff]
    %v6078 = vld [vmem:[#allocation7 + $0x40] sm:$0xff]
    %v6079 = vld [vmem:[#allocation7 + $0x48] sm:$0xff]
    %v6080 = vld [vmem:[#allocation7 + $0x50] sm:$0xff]
    %v6081 = vld [vmem:[#allocation7 + $0x58] sm:$0xff]
    %v6082 = vld [vmem:[#allocation7 + $0x60] sm:$0xff]
    %v6083 = vld [vmem:[#allocation7 + $0x68] sm:$0xff]
    %v6084 = vld [vmem:[#allocation7 + $0x70] sm:$0xff]
    %v6085 = vld [vmem:[#allocation7 + $0x78] sm:$0xff]
    %v6086 = vld [vmem:[#allocation7 + $0x80] sm:$0xff]
    %v6087 = vld [vmem:[#allocation7 + $0x88] sm:$0xff]
    %v6088 = vld [vmem:[#allocation7 + $0x90] sm:$0xff]
    %v6089 = vld [vmem:[#allocation7 + $0x98] sm:$0xff]
    %v6090 = vld [vmem:[#allocation7 + $0xa0] sm:$0xff]
    %v6091 = vld [vmem:[#allocation7 + $0xa8] sm:$0xff]
    %v6092 = vld [vmem:[#allocation7 + $0xb0] sm:$0xff]
    %v6093 = vld [vmem:[#allocation7 + $0xb8] sm:$0xff]
    %v6094 = vld [vmem:[#allocation7 + $0xc0] sm:$0xff]
    %v6095 = vld [vmem:[#allocation7 + $0xc8] sm:$0xff]
    %v6096 = vld [vmem:[#allocation7 + $0xd0] sm:$0xff]
    %v6097 = vld [vmem:[#allocation7 + $0xd8] sm:$0xff]
    %v6098 = vld [vmem:[#allocation7 + $0xe0] sm:$0xff]
    %v6099 = vld [vmem:[#allocation7 + $0xe8] sm:$0xff]
    %v6100 = vld [vmem:[#allocation7 + $0xf0] sm:$0xff]
    %v6101 = vld [vmem:[#allocation7 + $0xf8] sm:$0xff]
    %v6134 = vunpack.c.l.b16 %v6070
    %v6135 = vunpack.c.h.b16 %v6070
    %v6136 = vunpack.c.l.b16 %v6071
    %v6137 = vunpack.c.h.b16 %v6071
    %v6138 = vunpack.c.l.b16 %v6072
    %v6139 = vunpack.c.h.b16 %v6072
    %v6140 = vunpack.c.l.b16 %v6073
    %v6141 = vunpack.c.h.b16 %v6073
    %v6142 = vunpack.c.l.b16 %v6074
    %v6143 = vunpack.c.h.b16 %v6074
    %v6144 = vunpack.c.l.b16 %v6075
    %v6145 = vunpack.c.h.b16 %v6075
    %v6146 = vunpack.c.l.b16 %v6076
    %v6147 = vunpack.c.h.b16 %v6076
    %v6148 = vunpack.c.l.b16 %v6077
    %v6149 = vunpack.c.h.b16 %v6077
    %v6150 = vunpack.c.l.b16 %v6078
    %v6151 = vunpack.c.h.b16 %v6078
    %v6152 = vunpack.c.l.b16 %v6079
    %v6153 = vunpack.c.h.b16 %v6079
    %v6154 = vunpack.c.l.b16 %v6080
    %v6155 = vunpack.c.h.b16 %v6080
    %v6156 = vunpack.c.l.b16 %v6081
    %v6157 = vunpack.c.h.b16 %v6081
    %v6158 = vunpack.c.l.b16 %v6082
    %v6159 = vunpack.c.h.b16 %v6082
    %v6160 = vunpack.c.l.b16 %v6083
    %v6161 = vunpack.c.h.b16 %v6083
    %v6162 = vunpack.c.l.b16 %v6084
    %v6163 = vunpack.c.h.b16 %v6084
    %v6164 = vunpack.c.l.b16 %v6085
    %v6165 = vunpack.c.h.b16 %v6085
    %v6166 = vunpack.c.l.b16 %v6086
    %v6167 = vunpack.c.h.b16 %v6086
    %v6168 = vunpack.c.l.b16 %v6087
    %v6169 = vunpack.c.h.b16 %v6087
    %v6170 = vunpack.c.l.b16 %v6088
    %v6171 = vunpack.c.h.b16 %v6088
    %v6172 = vunpack.c.l.b16 %v6089
    %v6173 = vunpack.c.h.b16 %v6089
    %v6174 = vunpack.c.l.b16 %v6090
    %v6175 = vunpack.c.h.b16 %v6090
    %v6176 = vunpack.c.l.b16 %v6091
    %v6177 = vunpack.c.h.b16 %v6091
    %v6178 = vunpack.c.l.b16 %v6092
    %v6179 = vunpack.c.h.b16 %v6092
    %v6180 = vunpack.c.l.b16 %v6093
    %v6181 = vunpack.c.h.b16 %v6093
    %v6182 = vunpack.c.l.b16 %v6094
    %v6183 = vunpack.c.h.b16 %v6094
    %v6184 = vunpack.c.l.b16 %v6095
    %v6185 = vunpack.c.h.b16 %v6095
    %v6186 = vunpack.c.l.b16 %v6096
    %v6187 = vunpack.c.h.b16 %v6096
    %v6188 = vunpack.c.l.b16 %v6097
    %v6189 = vunpack.c.h.b16 %v6097
    %v6190 = vunpack.c.l.b16 %v6098
    %v6191 = vunpack.c.h.b16 %v6098
    %v6192 = vunpack.c.l.b16 %v6099
    %v6193 = vunpack.c.h.b16 %v6099
    %v6194 = vunpack.c.l.b16 %v6100
    %v6195 = vunpack.c.h.b16 %v6100
    %v6196 = vunpack.c.l.b16 %v6101
    %v6197 = vunpack.c.h.b16 %v6101
    %v6198 = vpack.c.b16 %v6138, %v6134
    %v6199 = vpack.c.b16 %v6139, %v6135
    %v6200 = vpack.c.b16 %v6140, %v6136
    %v6201 = vpack.c.b16 %v6141, %v6137
    %v6202 = vpack.c.b16 %v6146, %v6142
    %v6203 = vpack.c.b16 %v6147, %v6143
    %v6204 = vpack.c.b16 %v6148, %v6144
    %v6205 = vpack.c.b16 %v6149, %v6145
    %v6206 = vpack.c.b16 %v6154, %v6150
    %v6207 = vpack.c.b16 %v6155, %v6151
    %v6208 = vpack.c.b16 %v6156, %v6152
    %v6209 = vpack.c.b16 %v6157, %v6153
    %v6210 = vpack.c.b16 %v6162, %v6158
    %v6211 = vpack.c.b16 %v6163, %v6159
    %v6212 = vpack.c.b16 %v6164, %v6160
    %v6213 = vpack.c.b16 %v6165, %v6161
    %v6214 = vpack.c.b16 %v6170, %v6166
    %v6215 = vpack.c.b16 %v6171, %v6167
    %v6216 = vpack.c.b16 %v6172, %v6168
    %v6217 = vpack.c.b16 %v6173, %v6169
    %v6218 = vpack.c.b16 %v6178, %v6174
    %v6219 = vpack.c.b16 %v6179, %v6175
    %v6220 = vpack.c.b16 %v6180, %v6176
    %v6221 = vpack.c.b16 %v6181, %v6177
    %v6222 = vpack.c.b16 %v6186, %v6182
    %v6223 = vpack.c.b16 %v6187, %v6183
    %v6224 = vpack.c.b16 %v6188, %v6184
    %v6225 = vpack.c.b16 %v6189, %v6185
    %v6226 = vpack.c.b16 %v6194, %v6190
    %v6227 = vpack.c.b16 %v6195, %v6191
    %v6228 = vpack.c.b16 %v6196, %v6192
    %v6229 = vpack.c.b16 %v6197, %v6193
    %6262 = vmatpush.bf16.msra.mxu0 %v6226
    %6263 = vmatpush.bf16.msra.mxu0 %v6222
    %6264 = vmatpush.bf16.msra.mxu0 %v6218
    %6265 = vmatpush.bf16.msra.mxu0 %v6214
    %6266 = vmatpush.bf16.msra.mxu0 %v6210
    %6267 = vmatpush.bf16.msra.mxu0 %v6206
    %6268 = vmatpush.bf16.msra.mxu0 %v6202
    %6269 = vmatpush.bf16.msra.mxu0 %v6198
    %6270 = vmatmul.bf16.gmra.mxu0 %v6069
    %v6271 = vpop.f32.mrf.mxu0
    %v6272 = vadd.f32 0.0, %v6271
    %v6273 = vpop.f32.mrf.mxu0
    %6274 = vdwg.mxu0
    %6275 = vmatpush.bf16.msra.mxu0 %v6227
    %6276 = vmatpush.bf16.msra.mxu0 %v6223
    %6277 = vmatpush.bf16.msra.mxu0 %v6219
    %6278 = vmatpush.bf16.msra.mxu0 %v6215
    %6279 = vmatpush.bf16.msra.mxu0 %v6211
    %6280 = vmatpush.bf16.msra.mxu0 %v6207
    %6281 = vmatpush.bf16.msra.mxu0 %v6203
    %6282 = vmatpush.bf16.msra.mxu0 %v6199
    %6283 = vmatmul.bf16.gmra.mxu0 %v6069
    %v6284 = vpop.f32.mrf.mxu0
    %v6285 = vadd.f32 0.0, %v6284
    %v6286 = vpop.f32.mrf.mxu0
    %6287 = vdwg.mxu0
    %6288 = vmatpush.bf16.msra.mxu0 %v6228
    %6289 = vmatpush.bf16.msra.mxu0 %v6224
    %6290 = vmatpush.bf16.msra.mxu0 %v6220
    %6291 = vmatpush.bf16.msra.mxu0 %v6216
    %6292 = vmatpush.bf16.msra.mxu0 %v6212
    %6293 = vmatpush.bf16.msra.mxu0 %v6208
    %6294 = vmatpush.bf16.msra.mxu0 %v6204
    %6295 = vmatpush.bf16.msra.mxu0 %v6200
    %6296 = vmatmul.bf16.gmra.mxu0 %v6069
    %v6297 = vpop.f32.mrf.mxu0
    %v6298 = vadd.f32 0.0, %v6297
    %v6299 = vpop.f32.mrf.mxu0
    %6300 = vdwg.mxu0
    %6301 = vmatpush.bf16.msra.mxu0 %v6229
    %6302 = vmatpush.bf16.msra.mxu0 %v6225
    %6303 = vmatpush.bf16.msra.mxu0 %v6221
    %6304 = vmatpush.bf16.msra.mxu0 %v6217
    %6305 = vmatpush.bf16.msra.mxu0 %v6213
    %6306 = vmatpush.bf16.msra.mxu0 %v6209
    %6307 = vmatpush.bf16.msra.mxu0 %v6205
    %6308 = vmatpush.bf16.msra.mxu0 %v6201
    %6309 = vmatmul.bf16.gmra.mxu0 %v6069
    %v6310 = vpop.f32.mrf.mxu0
    %v6311 = vadd.f32 0.0, %v6310
    %v6312 = vpop.f32.mrf.mxu0
    %6313 = vdwg.mxu0
    %v6314 = vadd.f32 %v6065, %v6272
    %v6315 = vadd.f32 %v6066, %v6285
    %v6316 = vadd.f32 %v6067, %v6298
    %v6317 = vadd.f32 %v6068, %v6311
    %v6318 = vxor.u32 %v6314, 2147483648
    %v6319 = vxor.u32 %v6315, 2147483648
    %v6320 = vmul.f32 %v6318, 1.442695
    %v6321 = vpow.pop %v6320
    %v6322 = vmul.f32 %v6319, 1.442695
    %v6323 = vpow.pop %v6322
    %v6324 = vadd.f32 %v6321, 1.0
    %v6325 = vadd.f32 %v6323, 1.0
    %v6326 = vrcp.pop %v6324
    %v6327 = vmul.f32 %v6324, %v6326
    %v6328 = vsub.f32 1.0, %v6327
    %v6329 = vmul.f32 %v6326, %v6328
    %v6330 = vadd.f32 %v6326, %v6329
    %vm6331 = vweird.f32 %v6324
    %vm6332 = vweird.f32 %v6326
    %vm6333 = vmor %vm6331, %vm6332
    %v6334 = vsel %vm6333, %v6326, %v6330
    %v6335 = vand.u32 2147483647, %v6324
    %vm6336 = vcmp.eq.f32.partialorder %v6335, 8.507059e+37
    %v6337 = vand.u32 %v6324, 2147483648
    %v6338 = vor.u32 1.1754944e-38, %v6337
    %v6339 = vsel %vm6336, %v6338, %v6334
    %v6340 = vmul.f32 1.0, %v6339
    %v6341 = vrcp.pop %v6325
    %v6342 = vmul.f32 %v6325, %v6341
    %v6343 = vsub.f32 1.0, %v6342
    %v6344 = vmul.f32 %v6341, %v6343
    %v6345 = vadd.f32 %v6341, %v6344
    %vm6346 = vweird.f32 %v6325
    %vm6347 = vweird.f32 %v6341
    %vm6348 = vmor %vm6346, %vm6347
    %v6349 = vsel %vm6348, %v6341, %v6345
    %v6350 = vand.u32 2147483647, %v6325
    %vm6351 = vcmp.eq.f32.partialorder %v6350, 8.507059e+37
    %v6352 = vand.u32 %v6325, 2147483648
    %v6353 = vor.u32 1.1754944e-38, %v6352
    %v6354 = vsel %vm6351, %v6353, %v6349
    %v6355 = vmul.f32 1.0, %v6354
    %v6356 = vtanh.pop %v6316
    %v6357 = vmul.f32 %v6355, %v6042
    %v6358 = vmul.f32 %v6340, %v6356
    %v6359 = vadd.f32 %v6357, %v6358
    %v6360 = vtanh.pop %v6359
    %v6361 = vxor.u32 %v6317, 2147483648
    %v6362 = vmul.f32 %v6361, 1.442695
    %v6363 = vpow.pop %v6362
    %v6364 = vadd.f32 %v6363, 1.0
    %v6365 = vrcp.pop %v6364
    %v6366 = vmul.f32 %v6364, %v6365
    %v6367 = vsub.f32 1.0, %v6366
    %v6368 = vmul.f32 %v6365, %v6367
    %v6369 = vadd.f32 %v6365, %v6368
    %vm6370 = vweird.f32 %v6364
    %vm6371 = vweird.f32 %v6365
    %vm6372 = vmor %vm6370, %vm6371
    %v6373 = vsel %vm6372, %v6365, %v6369
    %v6374 = vand.u32 2147483647, %v6364
    %vm6375 = vcmp.eq.f32.partialorder %v6374, 8.507059e+37
    %v6376 = vand.u32 %v6364, 2147483648
    %v6377 = vor.u32 1.1754944e-38, %v6376
    %v6378 = vsel %vm6375, %v6377, %v6373
    %v6379 = vmul.f32 1.0, %v6378
    %v6380 = vmul.f32 %v6379, %v6360
    %6381 = vst [vmem:[#allocation3 + $0x58] sm:$0xff] %v6380
    %v6382 = vld [vmem:[#allocation2 + $0x180] sm:$0xff]
    %v6383 = vld [vmem:[#allocation2 + $0x188] sm:$0xff]
    %v6384 = vld [vmem:[#allocation2 + $0x190] sm:$0xff]
    %v6385 = vld [vmem:[#allocation2 + $0x198] sm:$0xff]
    %v6386 = vpack.c.bf16 %v6380, %v6380
    %v6387 = vld [vmem:[#allocation7] sm:$0xff]
    %v6388 = vld [vmem:[#allocation7 + $0x8] sm:$0xff]
    %v6389 = vld [vmem:[#allocation7 + $0x10] sm:$0xff]
    %v6390 = vld [vmem:[#allocation7 + $0x18] sm:$0xff]
    %v6391 = vld [vmem:[#allocation7 + $0x20] sm:$0xff]
    %v6392 = vld [vmem:[#allocation7 + $0x28] sm:$0xff]
    %v6393 = vld [vmem:[#allocation7 + $0x30] sm:$0xff]
    %v6394 = vld [vmem:[#allocation7 + $0x38] sm:$0xff]
    %v6395 = vld [vmem:[#allocation7 + $0x40] sm:$0xff]
    %v6396 = vld [vmem:[#allocation7 + $0x48] sm:$0xff]
    %v6397 = vld [vmem:[#allocation7 + $0x50] sm:$0xff]
    %v6398 = vld [vmem:[#allocation7 + $0x58] sm:$0xff]
    %v6399 = vld [vmem:[#allocation7 + $0x60] sm:$0xff]
    %v6400 = vld [vmem:[#allocation7 + $0x68] sm:$0xff]
    %v6401 = vld [vmem:[#allocation7 + $0x70] sm:$0xff]
    %v6402 = vld [vmem:[#allocation7 + $0x78] sm:$0xff]
    %v6403 = vld [vmem:[#allocation7 + $0x80] sm:$0xff]
    %v6404 = vld [vmem:[#allocation7 + $0x88] sm:$0xff]
    %v6405 = vld [vmem:[#allocation7 + $0x90] sm:$0xff]
    %v6406 = vld [vmem:[#allocation7 + $0x98] sm:$0xff]
    %v6407 = vld [vmem:[#allocation7 + $0xa0] sm:$0xff]
    %v6408 = vld [vmem:[#allocation7 + $0xa8] sm:$0xff]
    %v6409 = vld [vmem:[#allocation7 + $0xb0] sm:$0xff]
    %v6410 = vld [vmem:[#allocation7 + $0xb8] sm:$0xff]
    %v6411 = vld [vmem:[#allocation7 + $0xc0] sm:$0xff]
    %v6412 = vld [vmem:[#allocation7 + $0xc8] sm:$0xff]
    %v6413 = vld [vmem:[#allocation7 + $0xd0] sm:$0xff]
    %v6414 = vld [vmem:[#allocation7 + $0xd8] sm:$0xff]
    %v6415 = vld [vmem:[#allocation7 + $0xe0] sm:$0xff]
    %v6416 = vld [vmem:[#allocation7 + $0xe8] sm:$0xff]
    %v6417 = vld [vmem:[#allocation7 + $0xf0] sm:$0xff]
    %v6418 = vld [vmem:[#allocation7 + $0xf8] sm:$0xff]
    %v6451 = vunpack.c.l.b16 %v6387
    %v6452 = vunpack.c.h.b16 %v6387
    %v6453 = vunpack.c.l.b16 %v6388
    %v6454 = vunpack.c.h.b16 %v6388
    %v6455 = vunpack.c.l.b16 %v6389
    %v6456 = vunpack.c.h.b16 %v6389
    %v6457 = vunpack.c.l.b16 %v6390
    %v6458 = vunpack.c.h.b16 %v6390
    %v6459 = vunpack.c.l.b16 %v6391
    %v6460 = vunpack.c.h.b16 %v6391
    %v6461 = vunpack.c.l.b16 %v6392
    %v6462 = vunpack.c.h.b16 %v6392
    %v6463 = vunpack.c.l.b16 %v6393
    %v6464 = vunpack.c.h.b16 %v6393
    %v6465 = vunpack.c.l.b16 %v6394
    %v6466 = vunpack.c.h.b16 %v6394
    %v6467 = vunpack.c.l.b16 %v6395
    %v6468 = vunpack.c.h.b16 %v6395
    %v6469 = vunpack.c.l.b16 %v6396
    %v6470 = vunpack.c.h.b16 %v6396
    %v6471 = vunpack.c.l.b16 %v6397
    %v6472 = vunpack.c.h.b16 %v6397
    %v6473 = vunpack.c.l.b16 %v6398
    %v6474 = vunpack.c.h.b16 %v6398
    %v6475 = vunpack.c.l.b16 %v6399
    %v6476 = vunpack.c.h.b16 %v6399
    %v6477 = vunpack.c.l.b16 %v6400
    %v6478 = vunpack.c.h.b16 %v6400
    %v6479 = vunpack.c.l.b16 %v6401
    %v6480 = vunpack.c.h.b16 %v6401
    %v6481 = vunpack.c.l.b16 %v6402
    %v6482 = vunpack.c.h.b16 %v6402
    %v6483 = vunpack.c.l.b16 %v6403
    %v6484 = vunpack.c.h.b16 %v6403
    %v6485 = vunpack.c.l.b16 %v6404
    %v6486 = vunpack.c.h.b16 %v6404
    %v6487 = vunpack.c.l.b16 %v6405
    %v6488 = vunpack.c.h.b16 %v6405
    %v6489 = vunpack.c.l.b16 %v6406
    %v6490 = vunpack.c.h.b16 %v6406
    %v6491 = vunpack.c.l.b16 %v6407
    %v6492 = vunpack.c.h.b16 %v6407
    %v6493 = vunpack.c.l.b16 %v6408
    %v6494 = vunpack.c.h.b16 %v6408
    %v6495 = vunpack.c.l.b16 %v6409
    %v6496 = vunpack.c.h.b16 %v6409
    %v6497 = vunpack.c.l.b16 %v6410
    %v6498 = vunpack.c.h.b16 %v6410
    %v6499 = vunpack.c.l.b16 %v6411
    %v6500 = vunpack.c.h.b16 %v6411
    %v6501 = vunpack.c.l.b16 %v6412
    %v6502 = vunpack.c.h.b16 %v6412
    %v6503 = vunpack.c.l.b16 %v6413
    %v6504 = vunpack.c.h.b16 %v6413
    %v6505 = vunpack.c.l.b16 %v6414
    %v6506 = vunpack.c.h.b16 %v6414
    %v6507 = vunpack.c.l.b16 %v6415
    %v6508 = vunpack.c.h.b16 %v6415
    %v6509 = vunpack.c.l.b16 %v6416
    %v6510 = vunpack.c.h.b16 %v6416
    %v6511 = vunpack.c.l.b16 %v6417
    %v6512 = vunpack.c.h.b16 %v6417
    %v6513 = vunpack.c.l.b16 %v6418
    %v6514 = vunpack.c.h.b16 %v6418
    %v6515 = vpack.c.b16 %v6455, %v6451
    %v6516 = vpack.c.b16 %v6456, %v6452
    %v6517 = vpack.c.b16 %v6457, %v6453
    %v6518 = vpack.c.b16 %v6458, %v6454
    %v6519 = vpack.c.b16 %v6463, %v6459
    %v6520 = vpack.c.b16 %v6464, %v6460
    %v6521 = vpack.c.b16 %v6465, %v6461
    %v6522 = vpack.c.b16 %v6466, %v6462
    %v6523 = vpack.c.b16 %v6471, %v6467
    %v6524 = vpack.c.b16 %v6472, %v6468
    %v6525 = vpack.c.b16 %v6473, %v6469
    %v6526 = vpack.c.b16 %v6474, %v6470
    %v6527 = vpack.c.b16 %v6479, %v6475
    %v6528 = vpack.c.b16 %v6480, %v6476
    %v6529 = vpack.c.b16 %v6481, %v6477
    %v6530 = vpack.c.b16 %v6482, %v6478
    %v6531 = vpack.c.b16 %v6487, %v6483
    %v6532 = vpack.c.b16 %v6488, %v6484
    %v6533 = vpack.c.b16 %v6489, %v6485
    %v6534 = vpack.c.b16 %v6490, %v6486
    %v6535 = vpack.c.b16 %v6495, %v6491
    %v6536 = vpack.c.b16 %v6496, %v6492
    %v6537 = vpack.c.b16 %v6497, %v6493
    %v6538 = vpack.c.b16 %v6498, %v6494
    %v6539 = vpack.c.b16 %v6503, %v6499
    %v6540 = vpack.c.b16 %v6504, %v6500
    %v6541 = vpack.c.b16 %v6505, %v6501
    %v6542 = vpack.c.b16 %v6506, %v6502
    %v6543 = vpack.c.b16 %v6511, %v6507
    %v6544 = vpack.c.b16 %v6512, %v6508
    %v6545 = vpack.c.b16 %v6513, %v6509
    %v6546 = vpack.c.b16 %v6514, %v6510
    %6579 = vmatpush.bf16.msra.mxu0 %v6543
    %6580 = vmatpush.bf16.msra.mxu0 %v6539
    %6581 = vmatpush.bf16.msra.mxu0 %v6535
    %6582 = vmatpush.bf16.msra.mxu0 %v6531
    %6583 = vmatpush.bf16.msra.mxu0 %v6527
    %6584 = vmatpush.bf16.msra.mxu0 %v6523
    %6585 = vmatpush.bf16.msra.mxu0 %v6519
    %6586 = vmatpush.bf16.msra.mxu0 %v6515
    %6587 = vmatmul.bf16.gmra.mxu0 %v6386
    %v6588 = vpop.f32.mrf.mxu0
    %v6589 = vadd.f32 0.0, %v6588
    %v6590 = vpop.f32.mrf.mxu0
    %6591 = vdwg.mxu0
    %6592 = vmatpush.bf16.msra.mxu0 %v6544
    %6593 = vmatpush.bf16.msra.mxu0 %v6540
    %6594 = vmatpush.bf16.msra.mxu0 %v6536
    %6595 = vmatpush.bf16.msra.mxu0 %v6532
    %6596 = vmatpush.bf16.msra.mxu0 %v6528
    %6597 = vmatpush.bf16.msra.mxu0 %v6524
    %6598 = vmatpush.bf16.msra.mxu0 %v6520
    %6599 = vmatpush.bf16.msra.mxu0 %v6516
    %6600 = vmatmul.bf16.gmra.mxu0 %v6386
    %v6601 = vpop.f32.mrf.mxu0
    %v6602 = vadd.f32 0.0, %v6601
    %v6603 = vpop.f32.mrf.mxu0
    %6604 = vdwg.mxu0
    %6605 = vmatpush.bf16.msra.mxu0 %v6545
    %6606 = vmatpush.bf16.msra.mxu0 %v6541
    %6607 = vmatpush.bf16.msra.mxu0 %v6537
    %6608 = vmatpush.bf16.msra.mxu0 %v6533
    %6609 = vmatpush.bf16.msra.mxu0 %v6529
    %6610 = vmatpush.bf16.msra.mxu0 %v6525
    %6611 = vmatpush.bf16.msra.mxu0 %v6521
    %6612 = vmatpush.bf16.msra.mxu0 %v6517
    %6613 = vmatmul.bf16.gmra.mxu0 %v6386
    %v6614 = vpop.f32.mrf.mxu0
    %v6615 = vadd.f32 0.0, %v6614
    %v6616 = vpop.f32.mrf.mxu0
    %6617 = vdwg.mxu0
    %6618 = vmatpush.bf16.msra.mxu0 %v6546
    %6619 = vmatpush.bf16.msra.mxu0 %v6542
    %6620 = vmatpush.bf16.msra.mxu0 %v6538
    %6621 = vmatpush.bf16.msra.mxu0 %v6534
    %6622 = vmatpush.bf16.msra.mxu0 %v6530
    %6623 = vmatpush.bf16.msra.mxu0 %v6526
    %6624 = vmatpush.bf16.msra.mxu0 %v6522
    %6625 = vmatpush.bf16.msra.mxu0 %v6518
    %6626 = vmatmul.bf16.gmra.mxu0 %v6386
    %v6627 = vpop.f32.mrf.mxu0
    %v6628 = vadd.f32 0.0, %v6627
    %v6629 = vpop.f32.mrf.mxu0
    %6630 = vdwg.mxu0
    %v6631 = vadd.f32 %v6382, %v6589
    %v6632 = vadd.f32 %v6383, %v6602
    %v6633 = vadd.f32 %v6384, %v6615
    %v6634 = vadd.f32 %v6385, %v6628
    %v6635 = vxor.u32 %v6631, 2147483648
    %v6636 = vxor.u32 %v6632, 2147483648
    %v6637 = vmul.f32 %v6635, 1.442695
    %v6638 = vpow.pop %v6637
    %v6639 = vmul.f32 %v6636, 1.442695
    %v6640 = vpow.pop %v6639
    %v6641 = vadd.f32 %v6638, 1.0
    %v6642 = vadd.f32 %v6640, 1.0
    %v6643 = vrcp.pop %v6641
    %v6644 = vmul.f32 %v6641, %v6643
    %v6645 = vsub.f32 1.0, %v6644
    %v6646 = vmul.f32 %v6643, %v6645
    %v6647 = vadd.f32 %v6643, %v6646
    %vm6648 = vweird.f32 %v6641
    %vm6649 = vweird.f32 %v6643
    %vm6650 = vmor %vm6648, %vm6649
    %v6651 = vsel %vm6650, %v6643, %v6647
    %v6652 = vand.u32 2147483647, %v6641
    %vm6653 = vcmp.eq.f32.partialorder %v6652, 8.507059e+37
    %v6654 = vand.u32 %v6641, 2147483648
    %v6655 = vor.u32 1.1754944e-38, %v6654
    %v6656 = vsel %vm6653, %v6655, %v6651
    %v6657 = vmul.f32 1.0, %v6656
    %v6658 = vrcp.pop %v6642
    %v6659 = vmul.f32 %v6642, %v6658
    %v6660 = vsub.f32 1.0, %v6659
    %v6661 = vmul.f32 %v6658, %v6660
    %v6662 = vadd.f32 %v6658, %v6661
    %vm6663 = vweird.f32 %v6642
    %vm6664 = vweird.f32 %v6658
    %vm6665 = vmor %vm6663, %vm6664
    %v6666 = vsel %vm6665, %v6658, %v6662
    %v6667 = vand.u32 2147483647, %v6642
    %vm6668 = vcmp.eq.f32.partialorder %v6667, 8.507059e+37
    %v6669 = vand.u32 %v6642, 2147483648
    %v6670 = vor.u32 1.1754944e-38, %v6669
    %v6671 = vsel %vm6668, %v6670, %v6666
    %v6672 = vmul.f32 1.0, %v6671
    %v6673 = vtanh.pop %v6633
    %v6674 = vmul.f32 %v6672, %v6359
    %v6675 = vmul.f32 %v6657, %v6673
    %v6676 = vadd.f32 %v6674, %v6675
    %v6677 = vtanh.pop %v6676
    %v6678 = vxor.u32 %v6634, 2147483648
    %v6679 = vmul.f32 %v6678, 1.442695
    %v6680 = vpow.pop %v6679
    %v6681 = vadd.f32 %v6680, 1.0
    %v6682 = vrcp.pop %v6681
    %v6683 = vmul.f32 %v6681, %v6682
    %v6684 = vsub.f32 1.0, %v6683
    %v6685 = vmul.f32 %v6682, %v6684
    %v6686 = vadd.f32 %v6682, %v6685
    %vm6687 = vweird.f32 %v6681
    %vm6688 = vweird.f32 %v6682
    %vm6689 = vmor %vm6687, %vm6688
    %v6690 = vsel %vm6689, %v6682, %v6686
    %v6691 = vand.u32 2147483647, %v6681
    %vm6692 = vcmp.eq.f32.partialorder %v6691, 8.507059e+37
    %v6693 = vand.u32 %v6681, 2147483648
    %v6694 = vor.u32 1.1754944e-38, %v6693
    %v6695 = vsel %vm6692, %v6694, %v6690
    %v6696 = vmul.f32 1.0, %v6695
    %v6697 = vmul.f32 %v6696, %v6677
    %6698 = vst [vmem:[#allocation3 + $0x60] sm:$0xff] %v6697
    %v6699 = vld [vmem:[#allocation2 + $0x1a0] sm:$0xff]
    %v6700 = vld [vmem:[#allocation2 + $0x1a8] sm:$0xff]
    %v6701 = vld [vmem:[#allocation2 + $0x1b0] sm:$0xff]
    %v6702 = vld [vmem:[#allocation2 + $0x1b8] sm:$0xff]
    %v6703 = vpack.c.bf16 %v6697, %v6697
    %v6704 = vld [vmem:[#allocation7] sm:$0xff]
    %v6705 = vld [vmem:[#allocation7 + $0x8] sm:$0xff]
    %v6706 = vld [vmem:[#allocation7 + $0x10] sm:$0xff]
    %v6707 = vld [vmem:[#allocation7 + $0x18] sm:$0xff]
    %v6708 = vld [vmem:[#allocation7 + $0x20] sm:$0xff]
    %v6709 = vld [vmem:[#allocation7 + $0x28] sm:$0xff]
    %v6710 = vld [vmem:[#allocation7 + $0x30] sm:$0xff]
    %v6711 = vld [vmem:[#allocation7 + $0x38] sm:$0xff]
    %v6712 = vld [vmem:[#allocation7 + $0x40] sm:$0xff]
    %v6713 = vld [vmem:[#allocation7 + $0x48] sm:$0xff]
    %v6714 = vld [vmem:[#allocation7 + $0x50] sm:$0xff]
    %v6715 = vld [vmem:[#allocation7 + $0x58] sm:$0xff]
    %v6716 = vld [vmem:[#allocation7 + $0x60] sm:$0xff]
    %v6717 = vld [vmem:[#allocation7 + $0x68] sm:$0xff]
    %v6718 = vld [vmem:[#allocation7 + $0x70] sm:$0xff]
    %v6719 = vld [vmem:[#allocation7 + $0x78] sm:$0xff]
    %v6720 = vld [vmem:[#allocation7 + $0x80] sm:$0xff]
    %v6721 = vld [vmem:[#allocation7 + $0x88] sm:$0xff]
    %v6722 = vld [vmem:[#allocation7 + $0x90] sm:$0xff]
    %v6723 = vld [vmem:[#allocation7 + $0x98] sm:$0xff]
    %v6724 = vld [vmem:[#allocation7 + $0xa0] sm:$0xff]
    %v6725 = vld [vmem:[#allocation7 + $0xa8] sm:$0xff]
    %v6726 = vld [vmem:[#allocation7 + $0xb0] sm:$0xff]
    %v6727 = vld [vmem:[#allocation7 + $0xb8] sm:$0xff]
    %v6728 = vld [vmem:[#allocation7 + $0xc0] sm:$0xff]
    %v6729 = vld [vmem:[#allocation7 + $0xc8] sm:$0xff]
    %v6730 = vld [vmem:[#allocation7 + $0xd0] sm:$0xff]
    %v6731 = vld [vmem:[#allocation7 + $0xd8] sm:$0xff]
    %v6732 = vld [vmem:[#allocation7 + $0xe0] sm:$0xff]
    %v6733 = vld [vmem:[#allocation7 + $0xe8] sm:$0xff]
    %v6734 = vld [vmem:[#allocation7 + $0xf0] sm:$0xff]
    %v6735 = vld [vmem:[#allocation7 + $0xf8] sm:$0xff]
    %v6768 = vunpack.c.l.b16 %v6704
    %v6769 = vunpack.c.h.b16 %v6704
    %v6770 = vunpack.c.l.b16 %v6705
    %v6771 = vunpack.c.h.b16 %v6705
    %v6772 = vunpack.c.l.b16 %v6706
    %v6773 = vunpack.c.h.b16 %v6706
    %v6774 = vunpack.c.l.b16 %v6707
    %v6775 = vunpack.c.h.b16 %v6707
    %v6776 = vunpack.c.l.b16 %v6708
    %v6777 = vunpack.c.h.b16 %v6708
    %v6778 = vunpack.c.l.b16 %v6709
    %v6779 = vunpack.c.h.b16 %v6709
    %v6780 = vunpack.c.l.b16 %v6710
    %v6781 = vunpack.c.h.b16 %v6710
    %v6782 = vunpack.c.l.b16 %v6711
    %v6783 = vunpack.c.h.b16 %v6711
    %v6784 = vunpack.c.l.b16 %v6712
    %v6785 = vunpack.c.h.b16 %v6712
    %v6786 = vunpack.c.l.b16 %v6713
    %v6787 = vunpack.c.h.b16 %v6713
    %v6788 = vunpack.c.l.b16 %v6714
    %v6789 = vunpack.c.h.b16 %v6714
    %v6790 = vunpack.c.l.b16 %v6715
    %v6791 = vunpack.c.h.b16 %v6715
    %v6792 = vunpack.c.l.b16 %v6716
    %v6793 = vunpack.c.h.b16 %v6716
    %v6794 = vunpack.c.l.b16 %v6717
    %v6795 = vunpack.c.h.b16 %v6717
    %v6796 = vunpack.c.l.b16 %v6718
    %v6797 = vunpack.c.h.b16 %v6718
    %v6798 = vunpack.c.l.b16 %v6719
    %v6799 = vunpack.c.h.b16 %v6719
    %v6800 = vunpack.c.l.b16 %v6720
    %v6801 = vunpack.c.h.b16 %v6720
    %v6802 = vunpack.c.l.b16 %v6721
    %v6803 = vunpack.c.h.b16 %v6721
    %v6804 = vunpack.c.l.b16 %v6722
    %v6805 = vunpack.c.h.b16 %v6722
    %v6806 = vunpack.c.l.b16 %v6723
    %v6807 = vunpack.c.h.b16 %v6723
    %v6808 = vunpack.c.l.b16 %v6724
    %v6809 = vunpack.c.h.b16 %v6724
    %v6810 = vunpack.c.l.b16 %v6725
    %v6811 = vunpack.c.h.b16 %v6725
    %v6812 = vunpack.c.l.b16 %v6726
    %v6813 = vunpack.c.h.b16 %v6726
    %v6814 = vunpack.c.l.b16 %v6727
    %v6815 = vunpack.c.h.b16 %v6727
    %v6816 = vunpack.c.l.b16 %v6728
    %v6817 = vunpack.c.h.b16 %v6728
    %v6818 = vunpack.c.l.b16 %v6729
    %v6819 = vunpack.c.h.b16 %v6729
    %v6820 = vunpack.c.l.b16 %v6730
    %v6821 = vunpack.c.h.b16 %v6730
    %v6822 = vunpack.c.l.b16 %v6731
    %v6823 = vunpack.c.h.b16 %v6731
    %v6824 = vunpack.c.l.b16 %v6732
    %v6825 = vunpack.c.h.b16 %v6732
    %v6826 = vunpack.c.l.b16 %v6733
    %v6827 = vunpack.c.h.b16 %v6733
    %v6828 = vunpack.c.l.b16 %v6734
    %v6829 = vunpack.c.h.b16 %v6734
    %v6830 = vunpack.c.l.b16 %v6735
    %v6831 = vunpack.c.h.b16 %v6735
    %v6832 = vpack.c.b16 %v6772, %v6768
    %v6833 = vpack.c.b16 %v6773, %v6769
    %v6834 = vpack.c.b16 %v6774, %v6770
    %v6835 = vpack.c.b16 %v6775, %v6771
    %v6836 = vpack.c.b16 %v6780, %v6776
    %v6837 = vpack.c.b16 %v6781, %v6777
    %v6838 = vpack.c.b16 %v6782, %v6778
    %v6839 = vpack.c.b16 %v6783, %v6779
    %v6840 = vpack.c.b16 %v6788, %v6784
    %v6841 = vpack.c.b16 %v6789, %v6785
    %v6842 = vpack.c.b16 %v6790, %v6786
    %v6843 = vpack.c.b16 %v6791, %v6787
    %v6844 = vpack.c.b16 %v6796, %v6792
    %v6845 = vpack.c.b16 %v6797, %v6793
    %v6846 = vpack.c.b16 %v6798, %v6794
    %v6847 = vpack.c.b16 %v6799, %v6795
    %v6848 = vpack.c.b16 %v6804, %v6800
    %v6849 = vpack.c.b16 %v6805, %v6801
    %v6850 = vpack.c.b16 %v6806, %v6802
    %v6851 = vpack.c.b16 %v6807, %v6803
    %v6852 = vpack.c.b16 %v6812, %v6808
    %v6853 = vpack.c.b16 %v6813, %v6809
    %v6854 = vpack.c.b16 %v6814, %v6810
    %v6855 = vpack.c.b16 %v6815, %v6811
    %v6856 = vpack.c.b16 %v6820, %v6816
    %v6857 = vpack.c.b16 %v6821, %v6817
    %v6858 = vpack.c.b16 %v6822, %v6818
    %v6859 = vpack.c.b16 %v6823, %v6819
    %v6860 = vpack.c.b16 %v6828, %v6824
    %v6861 = vpack.c.b16 %v6829, %v6825
    %v6862 = vpack.c.b16 %v6830, %v6826
    %v6863 = vpack.c.b16 %v6831, %v6827
    %6896 = vmatpush.bf16.msra.mxu0 %v6860
    %6897 = vmatpush.bf16.msra.mxu0 %v6856
    %6898 = vmatpush.bf16.msra.mxu0 %v6852
    %6899 = vmatpush.bf16.msra.mxu0 %v6848
    %6900 = vmatpush.bf16.msra.mxu0 %v6844
    %6901 = vmatpush.bf16.msra.mxu0 %v6840
    %6902 = vmatpush.bf16.msra.mxu0 %v6836
    %6903 = vmatpush.bf16.msra.mxu0 %v6832
    %6904 = vmatmul.bf16.gmra.mxu0 %v6703
    %v6905 = vpop.f32.mrf.mxu0
    %v6906 = vadd.f32 0.0, %v6905
    %v6907 = vpop.f32.mrf.mxu0
    %6908 = vdwg.mxu0
    %6909 = vmatpush.bf16.msra.mxu0 %v6861
    %6910 = vmatpush.bf16.msra.mxu0 %v6857
    %6911 = vmatpush.bf16.msra.mxu0 %v6853
    %6912 = vmatpush.bf16.msra.mxu0 %v6849
    %6913 = vmatpush.bf16.msra.mxu0 %v6845
    %6914 = vmatpush.bf16.msra.mxu0 %v6841
    %6915 = vmatpush.bf16.msra.mxu0 %v6837
    %6916 = vmatpush.bf16.msra.mxu0 %v6833
    %6917 = vmatmul.bf16.gmra.mxu0 %v6703
    %v6918 = vpop.f32.mrf.mxu0
    %v6919 = vadd.f32 0.0, %v6918
    %v6920 = vpop.f32.mrf.mxu0
    %6921 = vdwg.mxu0
    %6922 = vmatpush.bf16.msra.mxu0 %v6862
    %6923 = vmatpush.bf16.msra.mxu0 %v6858
    %6924 = vmatpush.bf16.msra.mxu0 %v6854
    %6925 = vmatpush.bf16.msra.mxu0 %v6850
    %6926 = vmatpush.bf16.msra.mxu0 %v6846
    %6927 = vmatpush.bf16.msra.mxu0 %v6842
    %6928 = vmatpush.bf16.msra.mxu0 %v6838
    %6929 = vmatpush.bf16.msra.mxu0 %v6834
    %6930 = vmatmul.bf16.gmra.mxu0 %v6703
    %v6931 = vpop.f32.mrf.mxu0
    %v6932 = vadd.f32 0.0, %v6931
    %v6933 = vpop.f32.mrf.mxu0
    %6934 = vdwg.mxu0
    %6935 = vmatpush.bf16.msra.mxu0 %v6863
    %6936 = vmatpush.bf16.msra.mxu0 %v6859
    %6937 = vmatpush.bf16.msra.mxu0 %v6855
    %6938 = vmatpush.bf16.msra.mxu0 %v6851
    %6939 = vmatpush.bf16.msra.mxu0 %v6847
    %6940 = vmatpush.bf16.msra.mxu0 %v6843
    %6941 = vmatpush.bf16.msra.mxu0 %v6839
    %6942 = vmatpush.bf16.msra.mxu0 %v6835
    %6943 = vmatmul.bf16.gmra.mxu0 %v6703
    %v6944 = vpop.f32.mrf.mxu0
    %v6945 = vadd.f32 0.0, %v6944
    %v6946 = vpop.f32.mrf.mxu0
    %6947 = vdwg.mxu0
    %v6948 = vadd.f32 %v6699, %v6906
    %v6949 = vadd.f32 %v6700, %v6919
    %v6950 = vadd.f32 %v6701, %v6932
    %v6951 = vadd.f32 %v6702, %v6945
    %v6952 = vxor.u32 %v6948, 2147483648
    %v6953 = vxor.u32 %v6949, 2147483648
    %v6954 = vmul.f32 %v6952, 1.442695
    %v6955 = vpow.pop %v6954
    %v6956 = vmul.f32 %v6953, 1.442695
    %v6957 = vpow.pop %v6956
    %v6958 = vadd.f32 %v6955, 1.0
    %v6959 = vadd.f32 %v6957, 1.0
    %v6960 = vrcp.pop %v6958
    %v6961 = vmul.f32 %v6958, %v6960
    %v6962 = vsub.f32 1.0, %v6961
    %v6963 = vmul.f32 %v6960, %v6962
    %v6964 = vadd.f32 %v6960, %v6963
    %vm6965 = vweird.f32 %v6958
    %vm6966 = vweird.f32 %v6960
    %vm6967 = vmor %vm6965, %vm6966
    %v6968 = vsel %vm6967, %v6960, %v6964
    %v6969 = vand.u32 2147483647, %v6958
    %vm6970 = vcmp.eq.f32.partialorder %v6969, 8.507059e+37
    %v6971 = vand.u32 %v6958, 2147483648
    %v6972 = vor.u32 1.1754944e-38, %v6971
    %v6973 = vsel %vm6970, %v6972, %v6968
    %v6974 = vmul.f32 1.0, %v6973
    %v6975 = vrcp.pop %v6959
    %v6976 = vmul.f32 %v6959, %v6975
    %v6977 = vsub.f32 1.0, %v6976
    %v6978 = vmul.f32 %v6975, %v6977
    %v6979 = vadd.f32 %v6975, %v6978
    %vm6980 = vweird.f32 %v6959
    %vm6981 = vweird.f32 %v6975
    %vm6982 = vmor %vm6980, %vm6981
    %v6983 = vsel %vm6982, %v6975, %v6979
    %v6984 = vand.u32 2147483647, %v6959
    %vm6985 = vcmp.eq.f32.partialorder %v6984, 8.507059e+37
    %v6986 = vand.u32 %v6959, 2147483648
    %v6987 = vor.u32 1.1754944e-38, %v6986
    %v6988 = vsel %vm6985, %v6987, %v6983
    %v6989 = vmul.f32 1.0, %v6988
    %v6990 = vtanh.pop %v6950
    %v6991 = vmul.f32 %v6989, %v6676
    %v6992 = vmul.f32 %v6974, %v6990
    %v6993 = vadd.f32 %v6991, %v6992
    %v6994 = vtanh.pop %v6993
    %v6995 = vxor.u32 %v6951, 2147483648
    %v6996 = vmul.f32 %v6995, 1.442695
    %v6997 = vpow.pop %v6996
    %v6998 = vadd.f32 %v6997, 1.0
    %v6999 = vrcp.pop %v6998
    %v7000 = vmul.f32 %v6998, %v6999
    %v7001 = vsub.f32 1.0, %v7000
    %v7002 = vmul.f32 %v6999, %v7001
    %v7003 = vadd.f32 %v6999, %v7002
    %vm7004 = vweird.f32 %v6998
    %vm7005 = vweird.f32 %v6999
    %vm7006 = vmor %vm7004, %vm7005
    %v7007 = vsel %vm7006, %v6999, %v7003
    %v7008 = vand.u32 2147483647, %v6998
    %vm7009 = vcmp.eq.f32.partialorder %v7008, 8.507059e+37
    %v7010 = vand.u32 %v6998, 2147483648
    %v7011 = vor.u32 1.1754944e-38, %v7010
    %v7012 = vsel %vm7009, %v7011, %v7007
    %v7013 = vmul.f32 1.0, %v7012
    %v7014 = vmul.f32 %v7013, %v6994
    %7015 = vst [vmem:[#allocation3 + $0x68] sm:$0xff] %v7014
    %v7016 = vld [vmem:[#allocation2 + $0x1c0] sm:$0xff]
    %v7017 = vld [vmem:[#allocation2 + $0x1c8] sm:$0xff]
    %v7018 = vld [vmem:[#allocation2 + $0x1d0] sm:$0xff]
    %v7019 = vld [vmem:[#allocation2 + $0x1d8] sm:$0xff]
    %v7020 = vpack.c.bf16 %v7014, %v7014
    %v7021 = vld [vmem:[#allocation7] sm:$0xff]
    %v7022 = vld [vmem:[#allocation7 + $0x8] sm:$0xff]
    %v7023 = vld [vmem:[#allocation7 + $0x10] sm:$0xff]
    %v7024 = vld [vmem:[#allocation7 + $0x18] sm:$0xff]
    %v7025 = vld [vmem:[#allocation7 + $0x20] sm:$0xff]
    %v7026 = vld [vmem:[#allocation7 + $0x28] sm:$0xff]
    %v7027 = vld [vmem:[#allocation7 + $0x30] sm:$0xff]
    %v7028 = vld [vmem:[#allocation7 + $0x38] sm:$0xff]
    %v7029 = vld [vmem:[#allocation7 + $0x40] sm:$0xff]
    %v7030 = vld [vmem:[#allocation7 + $0x48] sm:$0xff]
    %v7031 = vld [vmem:[#allocation7 + $0x50] sm:$0xff]
    %v7032 = vld [vmem:[#allocation7 + $0x58] sm:$0xff]
    %v7033 = vld [vmem:[#allocation7 + $0x60] sm:$0xff]
    %v7034 = vld [vmem:[#allocation7 + $0x68] sm:$0xff]
    %v7035 = vld [vmem:[#allocation7 + $0x70] sm:$0xff]
    %v7036 = vld [vmem:[#allocation7 + $0x78] sm:$0xff]
    %v7037 = vld [vmem:[#allocation7 + $0x80] sm:$0xff]
    %v7038 = vld [vmem:[#allocation7 + $0x88] sm:$0xff]
    %v7039 = vld [vmem:[#allocation7 + $0x90] sm:$0xff]
    %v7040 = vld [vmem:[#allocation7 + $0x98] sm:$0xff]
    %v7041 = vld [vmem:[#allocation7 + $0xa0] sm:$0xff]
    %v7042 = vld [vmem:[#allocation7 + $0xa8] sm:$0xff]
    %v7043 = vld [vmem:[#allocation7 + $0xb0] sm:$0xff]
    %v7044 = vld [vmem:[#allocation7 + $0xb8] sm:$0xff]
    %v7045 = vld [vmem:[#allocation7 + $0xc0] sm:$0xff]
    %v7046 = vld [vmem:[#allocation7 + $0xc8] sm:$0xff]
    %v7047 = vld [vmem:[#allocation7 + $0xd0] sm:$0xff]
    %v7048 = vld [vmem:[#allocation7 + $0xd8] sm:$0xff]
    %v7049 = vld [vmem:[#allocation7 + $0xe0] sm:$0xff]
    %v7050 = vld [vmem:[#allocation7 + $0xe8] sm:$0xff]
    %v7051 = vld [vmem:[#allocation7 + $0xf0] sm:$0xff]
    %v7052 = vld [vmem:[#allocation7 + $0xf8] sm:$0xff]
    %v7085 = vunpack.c.l.b16 %v7021
    %v7086 = vunpack.c.h.b16 %v7021
    %v7087 = vunpack.c.l.b16 %v7022
    %v7088 = vunpack.c.h.b16 %v7022
    %v7089 = vunpack.c.l.b16 %v7023
    %v7090 = vunpack.c.h.b16 %v7023
    %v7091 = vunpack.c.l.b16 %v7024
    %v7092 = vunpack.c.h.b16 %v7024
    %v7093 = vunpack.c.l.b16 %v7025
    %v7094 = vunpack.c.h.b16 %v7025
    %v7095 = vunpack.c.l.b16 %v7026
    %v7096 = vunpack.c.h.b16 %v7026
    %v7097 = vunpack.c.l.b16 %v7027
    %v7098 = vunpack.c.h.b16 %v7027
    %v7099 = vunpack.c.l.b16 %v7028
    %v7100 = vunpack.c.h.b16 %v7028
    %v7101 = vunpack.c.l.b16 %v7029
    %v7102 = vunpack.c.h.b16 %v7029
    %v7103 = vunpack.c.l.b16 %v7030
    %v7104 = vunpack.c.h.b16 %v7030
    %v7105 = vunpack.c.l.b16 %v7031
    %v7106 = vunpack.c.h.b16 %v7031
    %v7107 = vunpack.c.l.b16 %v7032
    %v7108 = vunpack.c.h.b16 %v7032
    %v7109 = vunpack.c.l.b16 %v7033
    %v7110 = vunpack.c.h.b16 %v7033
    %v7111 = vunpack.c.l.b16 %v7034
    %v7112 = vunpack.c.h.b16 %v7034
    %v7113 = vunpack.c.l.b16 %v7035
    %v7114 = vunpack.c.h.b16 %v7035
    %v7115 = vunpack.c.l.b16 %v7036
    %v7116 = vunpack.c.h.b16 %v7036
    %v7117 = vunpack.c.l.b16 %v7037
    %v7118 = vunpack.c.h.b16 %v7037
    %v7119 = vunpack.c.l.b16 %v7038
    %v7120 = vunpack.c.h.b16 %v7038
    %v7121 = vunpack.c.l.b16 %v7039
    %v7122 = vunpack.c.h.b16 %v7039
    %v7123 = vunpack.c.l.b16 %v7040
    %v7124 = vunpack.c.h.b16 %v7040
    %v7125 = vunpack.c.l.b16 %v7041
    %v7126 = vunpack.c.h.b16 %v7041
    %v7127 = vunpack.c.l.b16 %v7042
    %v7128 = vunpack.c.h.b16 %v7042
    %v7129 = vunpack.c.l.b16 %v7043
    %v7130 = vunpack.c.h.b16 %v7043
    %v7131 = vunpack.c.l.b16 %v7044
    %v7132 = vunpack.c.h.b16 %v7044
    %v7133 = vunpack.c.l.b16 %v7045
    %v7134 = vunpack.c.h.b16 %v7045
    %v7135 = vunpack.c.l.b16 %v7046
    %v7136 = vunpack.c.h.b16 %v7046
    %v7137 = vunpack.c.l.b16 %v7047
    %v7138 = vunpack.c.h.b16 %v7047
    %v7139 = vunpack.c.l.b16 %v7048
    %v7140 = vunpack.c.h.b16 %v7048
    %v7141 = vunpack.c.l.b16 %v7049
    %v7142 = vunpack.c.h.b16 %v7049
    %v7143 = vunpack.c.l.b16 %v7050
    %v7144 = vunpack.c.h.b16 %v7050
    %v7145 = vunpack.c.l.b16 %v7051
    %v7146 = vunpack.c.h.b16 %v7051
    %v7147 = vunpack.c.l.b16 %v7052
    %v7148 = vunpack.c.h.b16 %v7052
    %v7149 = vpack.c.b16 %v7089, %v7085
    %v7150 = vpack.c.b16 %v7090, %v7086
    %v7151 = vpack.c.b16 %v7091, %v7087
    %v7152 = vpack.c.b16 %v7092, %v7088
    %v7153 = vpack.c.b16 %v7097, %v7093
    %v7154 = vpack.c.b16 %v7098, %v7094
    %v7155 = vpack.c.b16 %v7099, %v7095
    %v7156 = vpack.c.b16 %v7100, %v7096
    %v7157 = vpack.c.b16 %v7105, %v7101
    %v7158 = vpack.c.b16 %v7106, %v7102
    %v7159 = vpack.c.b16 %v7107, %v7103
    %v7160 = vpack.c.b16 %v7108, %v7104
    %v7161 = vpack.c.b16 %v7113, %v7109
    %v7162 = vpack.c.b16 %v7114, %v7110
    %v7163 = vpack.c.b16 %v7115, %v7111
    %v7164 = vpack.c.b16 %v7116, %v7112
    %v7165 = vpack.c.b16 %v7121, %v7117
    %v7166 = vpack.c.b16 %v7122, %v7118
    %v7167 = vpack.c.b16 %v7123, %v7119
    %v7168 = vpack.c.b16 %v7124, %v7120
    %v7169 = vpack.c.b16 %v7129, %v7125
    %v7170 = vpack.c.b16 %v7130, %v7126
    %v7171 = vpack.c.b16 %v7131, %v7127
    %v7172 = vpack.c.b16 %v7132, %v7128
    %v7173 = vpack.c.b16 %v7137, %v7133
    %v7174 = vpack.c.b16 %v7138, %v7134
    %v7175 = vpack.c.b16 %v7139, %v7135
    %v7176 = vpack.c.b16 %v7140, %v7136
    %v7177 = vpack.c.b16 %v7145, %v7141
    %v7178 = vpack.c.b16 %v7146, %v7142
    %v7179 = vpack.c.b16 %v7147, %v7143
    %v7180 = vpack.c.b16 %v7148, %v7144
    %7213 = vmatpush.bf16.msra.mxu0 %v7177
    %7214 = vmatpush.bf16.msra.mxu0 %v7173
    %7215 = vmatpush.bf16.msra.mxu0 %v7169
    %7216 = vmatpush.bf16.msra.mxu0 %v7165
    %7217 = vmatpush.bf16.msra.mxu0 %v7161
    %7218 = vmatpush.bf16.msra.mxu0 %v7157
    %7219 = vmatpush.bf16.msra.mxu0 %v7153
    %7220 = vmatpush.bf16.msra.mxu0 %v7149
    %7221 = vmatmul.bf16.gmra.mxu0 %v7020
    %v7222 = vpop.f32.mrf.mxu0
    %v7223 = vadd.f32 0.0, %v7222
    %v7224 = vpop.f32.mrf.mxu0
    %7225 = vdwg.mxu0
    %7226 = vmatpush.bf16.msra.mxu0 %v7178
    %7227 = vmatpush.bf16.msra.mxu0 %v7174
    %7228 = vmatpush.bf16.msra.mxu0 %v7170
    %7229 = vmatpush.bf16.msra.mxu0 %v7166
    %7230 = vmatpush.bf16.msra.mxu0 %v7162
    %7231 = vmatpush.bf16.msra.mxu0 %v7158
    %7232 = vmatpush.bf16.msra.mxu0 %v7154
    %7233 = vmatpush.bf16.msra.mxu0 %v7150
    %7234 = vmatmul.bf16.gmra.mxu0 %v7020
    %v7235 = vpop.f32.mrf.mxu0
    %v7236 = vadd.f32 0.0, %v7235
    %v7237 = vpop.f32.mrf.mxu0
    %7238 = vdwg.mxu0
    %7239 = vmatpush.bf16.msra.mxu0 %v7179
    %7240 = vmatpush.bf16.msra.mxu0 %v7175
    %7241 = vmatpush.bf16.msra.mxu0 %v7171
    %7242 = vmatpush.bf16.msra.mxu0 %v7167
    %7243 = vmatpush.bf16.msra.mxu0 %v7163
    %7244 = vmatpush.bf16.msra.mxu0 %v7159
    %7245 = vmatpush.bf16.msra.mxu0 %v7155
    %7246 = vmatpush.bf16.msra.mxu0 %v7151
    %7247 = vmatmul.bf16.gmra.mxu0 %v7020
    %v7248 = vpop.f32.mrf.mxu0
    %v7249 = vadd.f32 0.0, %v7248
    %v7250 = vpop.f32.mrf.mxu0
    %7251 = vdwg.mxu0
    %7252 = vmatpush.bf16.msra.mxu0 %v7180
    %7253 = vmatpush.bf16.msra.mxu0 %v7176
    %7254 = vmatpush.bf16.msra.mxu0 %v7172
    %7255 = vmatpush.bf16.msra.mxu0 %v7168
    %7256 = vmatpush.bf16.msra.mxu0 %v7164
    %7257 = vmatpush.bf16.msra.mxu0 %v7160
    %7258 = vmatpush.bf16.msra.mxu0 %v7156
    %7259 = vmatpush.bf16.msra.mxu0 %v7152
    %7260 = vmatmul.bf16.gmra.mxu0 %v7020
    %v7261 = vpop.f32.mrf.mxu0
    %v7262 = vadd.f32 0.0, %v7261
    %v7263 = vpop.f32.mrf.mxu0
    %7264 = vdwg.mxu0
    %v7265 = vadd.f32 %v7016, %v7223
    %v7266 = vadd.f32 %v7017, %v7236
    %v7267 = vadd.f32 %v7018, %v7249
    %v7268 = vadd.f32 %v7019, %v7262
    %v7269 = vxor.u32 %v7265, 2147483648
    %v7270 = vxor.u32 %v7266, 2147483648
    %v7271 = vmul.f32 %v7269, 1.442695
    %v7272 = vpow.pop %v7271
    %v7273 = vmul.f32 %v7270, 1.442695
    %v7274 = vpow.pop %v7273
    %v7275 = vadd.f32 %v7272, 1.0
    %v7276 = vadd.f32 %v7274, 1.0
    %v7277 = vrcp.pop %v7275
    %v7278 = vmul.f32 %v7275, %v7277
    %v7279 = vsub.f32 1.0, %v7278
    %v7280 = vmul.f32 %v7277, %v7279
    %v7281 = vadd.f32 %v7277, %v7280
    %vm7282 = vweird.f32 %v7275
    %vm7283 = vweird.f32 %v7277
    %vm7284 = vmor %vm7282, %vm7283
    %v7285 = vsel %vm7284, %v7277, %v7281
    %v7286 = vand.u32 2147483647, %v7275
    %vm7287 = vcmp.eq.f32.partialorder %v7286, 8.507059e+37
    %v7288 = vand.u32 %v7275, 2147483648
    %v7289 = vor.u32 1.1754944e-38, %v7288
    %v7290 = vsel %vm7287, %v7289, %v7285
    %v7291 = vmul.f32 1.0, %v7290
    %v7292 = vrcp.pop %v7276
    %v7293 = vmul.f32 %v7276, %v7292
    %v7294 = vsub.f32 1.0, %v7293
    %v7295 = vmul.f32 %v7292, %v7294
    %v7296 = vadd.f32 %v7292, %v7295
    %vm7297 = vweird.f32 %v7276
    %vm7298 = vweird.f32 %v7292
    %vm7299 = vmor %vm7297, %vm7298
    %v7300 = vsel %vm7299, %v7292, %v7296
    %v7301 = vand.u32 2147483647, %v7276
    %vm7302 = vcmp.eq.f32.partialorder %v7301, 8.507059e+37
    %v7303 = vand.u32 %v7276, 2147483648
    %v7304 = vor.u32 1.1754944e-38, %v7303
    %v7305 = vsel %vm7302, %v7304, %v7300
    %v7306 = vmul.f32 1.0, %v7305
    %v7307 = vtanh.pop %v7267
    %v7308 = vmul.f32 %v7306, %v6993
    %v7309 = vmul.f32 %v7291, %v7307
    %v7310 = vadd.f32 %v7308, %v7309
    %v7311 = vtanh.pop %v7310
    %v7312 = vxor.u32 %v7268, 2147483648
    %v7313 = vmul.f32 %v7312, 1.442695
    %v7314 = vpow.pop %v7313
    %v7315 = vadd.f32 %v7314, 1.0
    %v7316 = vrcp.pop %v7315
    %v7317 = vmul.f32 %v7315, %v7316
    %v7318 = vsub.f32 1.0, %v7317
    %v7319 = vmul.f32 %v7316, %v7318
    %v7320 = vadd.f32 %v7316, %v7319
    %vm7321 = vweird.f32 %v7315
    %vm7322 = vweird.f32 %v7316
    %vm7323 = vmor %vm7321, %vm7322
    %v7324 = vsel %vm7323, %v7316, %v7320
    %v7325 = vand.u32 2147483647, %v7315
    %vm7326 = vcmp.eq.f32.partialorder %v7325, 8.507059e+37
    %v7327 = vand.u32 %v7315, 2147483648
    %v7328 = vor.u32 1.1754944e-38, %v7327
    %v7329 = vsel %vm7326, %v7328, %v7324
    %v7330 = vmul.f32 1.0, %v7329
    %v7331 = vmul.f32 %v7330, %v7311
    %7332 = vst [vmem:[#allocation3 + $0x70] sm:$0xff] %v7331
    %v7333 = vld [vmem:[#allocation2 + $0x1e0] sm:$0xff]
    %v7334 = vld [vmem:[#allocation2 + $0x1e8] sm:$0xff]
    %v7335 = vld [vmem:[#allocation2 + $0x1f0] sm:$0xff]
    %v7336 = vld [vmem:[#allocation2 + $0x1f8] sm:$0xff]
    %v7337 = vpack.c.bf16 %v7331, %v7331
    %v7338 = vld [vmem:[#allocation7] sm:$0xff]
    %v7339 = vld [vmem:[#allocation7 + $0x8] sm:$0xff]
    %v7340 = vld [vmem:[#allocation7 + $0x10] sm:$0xff]
    %v7341 = vld [vmem:[#allocation7 + $0x18] sm:$0xff]
    %v7342 = vld [vmem:[#allocation7 + $0x20] sm:$0xff]
    %v7343 = vld [vmem:[#allocation7 + $0x28] sm:$0xff]
    %v7344 = vld [vmem:[#allocation7 + $0x30] sm:$0xff]
    %v7345 = vld [vmem:[#allocation7 + $0x38] sm:$0xff]
    %v7346 = vld [vmem:[#allocation7 + $0x40] sm:$0xff]
    %v7347 = vld [vmem:[#allocation7 + $0x48] sm:$0xff]
    %v7348 = vld [vmem:[#allocation7 + $0x50] sm:$0xff]
    %v7349 = vld [vmem:[#allocation7 + $0x58] sm:$0xff]
    %v7350 = vld [vmem:[#allocation7 + $0x60] sm:$0xff]
    %v7351 = vld [vmem:[#allocation7 + $0x68] sm:$0xff]
    %v7352 = vld [vmem:[#allocation7 + $0x70] sm:$0xff]
    %v7353 = vld [vmem:[#allocation7 + $0x78] sm:$0xff]
    %v7354 = vld [vmem:[#allocation7 + $0x80] sm:$0xff]
    %v7355 = vld [vmem:[#allocation7 + $0x88] sm:$0xff]
    %v7356 = vld [vmem:[#allocation7 + $0x90] sm:$0xff]
    %v7357 = vld [vmem:[#allocation7 + $0x98] sm:$0xff]
    %v7358 = vld [vmem:[#allocation7 + $0xa0] sm:$0xff]
    %v7359 = vld [vmem:[#allocation7 + $0xa8] sm:$0xff]
    %v7360 = vld [vmem:[#allocation7 + $0xb0] sm:$0xff]
    %v7361 = vld [vmem:[#allocation7 + $0xb8] sm:$0xff]
    %v7362 = vld [vmem:[#allocation7 + $0xc0] sm:$0xff]
    %v7363 = vld [vmem:[#allocation7 + $0xc8] sm:$0xff]
    %v7364 = vld [vmem:[#allocation7 + $0xd0] sm:$0xff]
    %v7365 = vld [vmem:[#allocation7 + $0xd8] sm:$0xff]
    %v7366 = vld [vmem:[#allocation7 + $0xe0] sm:$0xff]
    %v7367 = vld [vmem:[#allocation7 + $0xe8] sm:$0xff]
    %v7368 = vld [vmem:[#allocation7 + $0xf0] sm:$0xff]
    %v7369 = vld [vmem:[#allocation7 + $0xf8] sm:$0xff]
    %v7402 = vunpack.c.l.b16 %v7338
    %v7403 = vunpack.c.h.b16 %v7338
    %v7404 = vunpack.c.l.b16 %v7339
    %v7405 = vunpack.c.h.b16 %v7339
    %v7406 = vunpack.c.l.b16 %v7340
    %v7407 = vunpack.c.h.b16 %v7340
    %v7408 = vunpack.c.l.b16 %v7341
    %v7409 = vunpack.c.h.b16 %v7341
    %v7410 = vunpack.c.l.b16 %v7342
    %v7411 = vunpack.c.h.b16 %v7342
    %v7412 = vunpack.c.l.b16 %v7343
    %v7413 = vunpack.c.h.b16 %v7343
    %v7414 = vunpack.c.l.b16 %v7344
    %v7415 = vunpack.c.h.b16 %v7344
    %v7416 = vunpack.c.l.b16 %v7345
    %v7417 = vunpack.c.h.b16 %v7345
    %v7418 = vunpack.c.l.b16 %v7346
    %v7419 = vunpack.c.h.b16 %v7346
    %v7420 = vunpack.c.l.b16 %v7347
    %v7421 = vunpack.c.h.b16 %v7347
    %v7422 = vunpack.c.l.b16 %v7348
    %v7423 = vunpack.c.h.b16 %v7348
    %v7424 = vunpack.c.l.b16 %v7349
    %v7425 = vunpack.c.h.b16 %v7349
    %v7426 = vunpack.c.l.b16 %v7350
    %v7427 = vunpack.c.h.b16 %v7350
    %v7428 = vunpack.c.l.b16 %v7351
    %v7429 = vunpack.c.h.b16 %v7351
    %v7430 = vunpack.c.l.b16 %v7352
    %v7431 = vunpack.c.h.b16 %v7352
    %v7432 = vunpack.c.l.b16 %v7353
    %v7433 = vunpack.c.h.b16 %v7353
    %v7434 = vunpack.c.l.b16 %v7354
    %v7435 = vunpack.c.h.b16 %v7354
    %v7436 = vunpack.c.l.b16 %v7355
    %v7437 = vunpack.c.h.b16 %v7355
    %v7438 = vunpack.c.l.b16 %v7356
    %v7439 = vunpack.c.h.b16 %v7356
    %v7440 = vunpack.c.l.b16 %v7357
    %v7441 = vunpack.c.h.b16 %v7357
    %v7442 = vunpack.c.l.b16 %v7358
    %v7443 = vunpack.c.h.b16 %v7358
    %v7444 = vunpack.c.l.b16 %v7359
    %v7445 = vunpack.c.h.b16 %v7359
    %v7446 = vunpack.c.l.b16 %v7360
    %v7447 = vunpack.c.h.b16 %v7360
    %v7448 = vunpack.c.l.b16 %v7361
    %v7449 = vunpack.c.h.b16 %v7361
    %v7450 = vunpack.c.l.b16 %v7362
    %v7451 = vunpack.c.h.b16 %v7362
    %v7452 = vunpack.c.l.b16 %v7363
    %v7453 = vunpack.c.h.b16 %v7363
    %v7454 = vunpack.c.l.b16 %v7364
    %v7455 = vunpack.c.h.b16 %v7364
    %v7456 = vunpack.c.l.b16 %v7365
    %v7457 = vunpack.c.h.b16 %v7365
    %v7458 = vunpack.c.l.b16 %v7366
    %v7459 = vunpack.c.h.b16 %v7366
    %v7460 = vunpack.c.l.b16 %v7367
    %v7461 = vunpack.c.h.b16 %v7367
    %v7462 = vunpack.c.l.b16 %v7368
    %v7463 = vunpack.c.h.b16 %v7368
    %v7464 = vunpack.c.l.b16 %v7369
    %v7465 = vunpack.c.h.b16 %v7369
    %v7466 = vpack.c.b16 %v7406, %v7402
    %v7467 = vpack.c.b16 %v7407, %v7403
    %v7468 = vpack.c.b16 %v7408, %v7404
    %v7469 = vpack.c.b16 %v7409, %v7405
    %v7470 = vpack.c.b16 %v7414, %v7410
    %v7471 = vpack.c.b16 %v7415, %v7411
    %v7472 = vpack.c.b16 %v7416, %v7412
    %v7473 = vpack.c.b16 %v7417, %v7413
    %v7474 = vpack.c.b16 %v7422, %v7418
    %v7475 = vpack.c.b16 %v7423, %v7419
    %v7476 = vpack.c.b16 %v7424, %v7420
    %v7477 = vpack.c.b16 %v7425, %v7421
    %v7478 = vpack.c.b16 %v7430, %v7426
    %v7479 = vpack.c.b16 %v7431, %v7427
    %v7480 = vpack.c.b16 %v7432, %v7428
    %v7481 = vpack.c.b16 %v7433, %v7429
    %v7482 = vpack.c.b16 %v7438, %v7434
    %v7483 = vpack.c.b16 %v7439, %v7435
    %v7484 = vpack.c.b16 %v7440, %v7436
    %v7485 = vpack.c.b16 %v7441, %v7437
    %v7486 = vpack.c.b16 %v7446, %v7442
    %v7487 = vpack.c.b16 %v7447, %v7443
    %v7488 = vpack.c.b16 %v7448, %v7444
    %v7489 = vpack.c.b16 %v7449, %v7445
    %v7490 = vpack.c.b16 %v7454, %v7450
    %v7491 = vpack.c.b16 %v7455, %v7451
    %v7492 = vpack.c.b16 %v7456, %v7452
    %v7493 = vpack.c.b16 %v7457, %v7453
    %v7494 = vpack.c.b16 %v7462, %v7458
    %v7495 = vpack.c.b16 %v7463, %v7459
    %v7496 = vpack.c.b16 %v7464, %v7460
    %v7497 = vpack.c.b16 %v7465, %v7461
    %7530 = vmatpush.bf16.msra.mxu0 %v7494
    %7531 = vmatpush.bf16.msra.mxu0 %v7490
    %7532 = vmatpush.bf16.msra.mxu0 %v7486
    %7533 = vmatpush.bf16.msra.mxu0 %v7482
    %7534 = vmatpush.bf16.msra.mxu0 %v7478
    %7535 = vmatpush.bf16.msra.mxu0 %v7474
    %7536 = vmatpush.bf16.msra.mxu0 %v7470
    %7537 = vmatpush.bf16.msra.mxu0 %v7466
    %7538 = vmatmul.bf16.gmra.mxu0 %v7337
    %v7539 = vpop.f32.mrf.mxu0
    %v7540 = vadd.f32 0.0, %v7539
    %v7541 = vpop.f32.mrf.mxu0
    %7542 = vdwg.mxu0
    %7543 = vmatpush.bf16.msra.mxu0 %v7495
    %7544 = vmatpush.bf16.msra.mxu0 %v7491
    %7545 = vmatpush.bf16.msra.mxu0 %v7487
    %7546 = vmatpush.bf16.msra.mxu0 %v7483
    %7547 = vmatpush.bf16.msra.mxu0 %v7479
    %7548 = vmatpush.bf16.msra.mxu0 %v7475
    %7549 = vmatpush.bf16.msra.mxu0 %v7471
    %7550 = vmatpush.bf16.msra.mxu0 %v7467
    %7551 = vmatmul.bf16.gmra.mxu0 %v7337
    %v7552 = vpop.f32.mrf.mxu0
    %v7553 = vadd.f32 0.0, %v7552
    %v7554 = vpop.f32.mrf.mxu0
    %7555 = vdwg.mxu0
    %7556 = vmatpush.bf16.msra.mxu0 %v7496
    %7557 = vmatpush.bf16.msra.mxu0 %v7492
    %7558 = vmatpush.bf16.msra.mxu0 %v7488
    %7559 = vmatpush.bf16.msra.mxu0 %v7484
    %7560 = vmatpush.bf16.msra.mxu0 %v7480
    %7561 = vmatpush.bf16.msra.mxu0 %v7476
    %7562 = vmatpush.bf16.msra.mxu0 %v7472
    %7563 = vmatpush.bf16.msra.mxu0 %v7468
    %7564 = vmatmul.bf16.gmra.mxu0 %v7337
    %v7565 = vpop.f32.mrf.mxu0
    %v7566 = vadd.f32 0.0, %v7565
    %v7567 = vpop.f32.mrf.mxu0
    %7568 = vdwg.mxu0
    %7569 = vmatpush.bf16.msra.mxu0 %v7497
    %7570 = vmatpush.bf16.msra.mxu0 %v7493
    %7571 = vmatpush.bf16.msra.mxu0 %v7489
    %7572 = vmatpush.bf16.msra.mxu0 %v7485
    %7573 = vmatpush.bf16.msra.mxu0 %v7481
    %7574 = vmatpush.bf16.msra.mxu0 %v7477
    %7575 = vmatpush.bf16.msra.mxu0 %v7473
    %7576 = vmatpush.bf16.msra.mxu0 %v7469
    %7577 = vmatmul.bf16.gmra.mxu0 %v7337
    %v7578 = vpop.f32.mrf.mxu0
    %v7579 = vadd.f32 0.0, %v7578
    %v7580 = vpop.f32.mrf.mxu0
    %7581 = vdwg.mxu0
    %v7582 = vadd.f32 %v7333, %v7540
    %v7583 = vadd.f32 %v7334, %v7553
    %v7584 = vadd.f32 %v7335, %v7566
    %v7585 = vadd.f32 %v7336, %v7579
    %v7586 = vxor.u32 %v7582, 2147483648
    %v7587 = vxor.u32 %v7583, 2147483648
    %v7588 = vmul.f32 %v7586, 1.442695
    %v7589 = vpow.pop %v7588
    %v7590 = vmul.f32 %v7587, 1.442695
    %v7591 = vpow.pop %v7590
    %v7592 = vadd.f32 %v7589, 1.0
    %v7593 = vadd.f32 %v7591, 1.0
    %v7594 = vrcp.pop %v7592
    %v7595 = vmul.f32 %v7592, %v7594
    %v7596 = vsub.f32 1.0, %v7595
    %v7597 = vmul.f32 %v7594, %v7596
    %v7598 = vadd.f32 %v7594, %v7597
    %vm7599 = vweird.f32 %v7592
    %vm7600 = vweird.f32 %v7594
    %vm7601 = vmor %vm7599, %vm7600
    %v7602 = vsel %vm7601, %v7594, %v7598
    %v7603 = vand.u32 2147483647, %v7592
    %vm7604 = vcmp.eq.f32.partialorder %v7603, 8.507059e+37
    %v7605 = vand.u32 %v7592, 2147483648
    %v7606 = vor.u32 1.1754944e-38, %v7605
    %v7607 = vsel %vm7604, %v7606, %v7602
    %v7608 = vmul.f32 1.0, %v7607
    %v7609 = vrcp.pop %v7593
    %v7610 = vmul.f32 %v7593, %v7609
    %v7611 = vsub.f32 1.0, %v7610
    %v7612 = vmul.f32 %v7609, %v7611
    %v7613 = vadd.f32 %v7609, %v7612
    %vm7614 = vweird.f32 %v7593
    %vm7615 = vweird.f32 %v7609
    %vm7616 = vmor %vm7614, %vm7615
    %v7617 = vsel %vm7616, %v7609, %v7613
    %v7618 = vand.u32 2147483647, %v7593
    %vm7619 = vcmp.eq.f32.partialorder %v7618, 8.507059e+37
    %v7620 = vand.u32 %v7593, 2147483648
    %v7621 = vor.u32 1.1754944e-38, %v7620
    %v7622 = vsel %vm7619, %v7621, %v7617
    %v7623 = vmul.f32 1.0, %v7622
    %v7624 = vtanh.pop %v7584
    %v7625 = vmul.f32 %v7623, %v7310
    %v7626 = vmul.f32 %v7608, %v7624
    %v7627 = vadd.f32 %v7625, %v7626
    %v7628 = vtanh.pop %v7627
    %v7629 = vxor.u32 %v7585, 2147483648
    %v7630 = vmul.f32 %v7629, 1.442695
    %v7631 = vpow.pop %v7630
    %v7632 = vadd.f32 %v7631, 1.0
    %v7633 = vrcp.pop %v7632
    %v7634 = vmul.f32 %v7632, %v7633
    %v7635 = vsub.f32 1.0, %v7634
    %v7636 = vmul.f32 %v7633, %v7635
    %v7637 = vadd.f32 %v7633, %v7636
    %vm7638 = vweird.f32 %v7632
    %vm7639 = vweird.f32 %v7633
    %vm7640 = vmor %vm7638, %vm7639
    %v7641 = vsel %vm7640, %v7633, %v7637
    %v7642 = vand.u32 2147483647, %v7632
    %vm7643 = vcmp.eq.f32.partialorder %v7642, 8.507059e+37
    %v7644 = vand.u32 %v7632, 2147483648
    %v7645 = vor.u32 1.1754944e-38, %v7644
    %v7646 = vsel %vm7643, %v7645, %v7641
    %v7647 = vmul.f32 1.0, %v7646
    %v7648 = vmul.f32 %v7647, %v7628
    %7649 = vst [vmem:[#allocation3 + $0x78] sm:$0xff] %v7648
    %v7650 = vld [vmem:[#allocation2 + $0x200] sm:$0xff]
    %v7651 = vld [vmem:[#allocation2 + $0x208] sm:$0xff]
    %v7652 = vld [vmem:[#allocation2 + $0x210] sm:$0xff]
    %v7653 = vld [vmem:[#allocation2 + $0x218] sm:$0xff]
    %v7654 = vpack.c.bf16 %v7648, %v7648
    %v7655 = vld [vmem:[#allocation7] sm:$0xff]
    %v7656 = vld [vmem:[#allocation7 + $0x8] sm:$0xff]
    %v7657 = vld [vmem:[#allocation7 + $0x10] sm:$0xff]
    %v7658 = vld [vmem:[#allocation7 + $0x18] sm:$0xff]
    %v7659 = vld [vmem:[#allocation7 + $0x20] sm:$0xff]
    %v7660 = vld [vmem:[#allocation7 + $0x28] sm:$0xff]
    %v7661 = vld [vmem:[#allocation7 + $0x30] sm:$0xff]
    %v7662 = vld [vmem:[#allocation7 + $0x38] sm:$0xff]
    %v7663 = vld [vmem:[#allocation7 + $0x40] sm:$0xff]
    %v7664 = vld [vmem:[#allocation7 + $0x48] sm:$0xff]
    %v7665 = vld [vmem:[#allocation7 + $0x50] sm:$0xff]
    %v7666 = vld [vmem:[#allocation7 + $0x58] sm:$0xff]
    %v7667 = vld [vmem:[#allocation7 + $0x60] sm:$0xff]
    %v7668 = vld [vmem:[#allocation7 + $0x68] sm:$0xff]
    %v7669 = vld [vmem:[#allocation7 + $0x70] sm:$0xff]
    %v7670 = vld [vmem:[#allocation7 + $0x78] sm:$0xff]
    %v7671 = vld [vmem:[#allocation7 + $0x80] sm:$0xff]
    %v7672 = vld [vmem:[#allocation7 + $0x88] sm:$0xff]
    %v7673 = vld [vmem:[#allocation7 + $0x90] sm:$0xff]
    %v7674 = vld [vmem:[#allocation7 + $0x98] sm:$0xff]
    %v7675 = vld [vmem:[#allocation7 + $0xa0] sm:$0xff]
    %v7676 = vld [vmem:[#allocation7 + $0xa8] sm:$0xff]
    %v7677 = vld [vmem:[#allocation7 + $0xb0] sm:$0xff]
    %v7678 = vld [vmem:[#allocation7 + $0xb8] sm:$0xff]
    %v7679 = vld [vmem:[#allocation7 + $0xc0] sm:$0xff]
    %v7680 = vld [vmem:[#allocation7 + $0xc8] sm:$0xff]
    %v7681 = vld [vmem:[#allocation7 + $0xd0] sm:$0xff]
    %v7682 = vld [vmem:[#allocation7 + $0xd8] sm:$0xff]
    %v7683 = vld [vmem:[#allocation7 + $0xe0] sm:$0xff]
    %v7684 = vld [vmem:[#allocation7 + $0xe8] sm:$0xff]
    %v7685 = vld [vmem:[#allocation7 + $0xf0] sm:$0xff]
    %v7686 = vld [vmem:[#allocation7 + $0xf8] sm:$0xff]
    %v7719 = vunpack.c.l.b16 %v7655
    %v7720 = vunpack.c.h.b16 %v7655
    %v7721 = vunpack.c.l.b16 %v7656
    %v7722 = vunpack.c.h.b16 %v7656
    %v7723 = vunpack.c.l.b16 %v7657
    %v7724 = vunpack.c.h.b16 %v7657
    %v7725 = vunpack.c.l.b16 %v7658
    %v7726 = vunpack.c.h.b16 %v7658
    %v7727 = vunpack.c.l.b16 %v7659
    %v7728 = vunpack.c.h.b16 %v7659
    %v7729 = vunpack.c.l.b16 %v7660
    %v7730 = vunpack.c.h.b16 %v7660
    %v7731 = vunpack.c.l.b16 %v7661
    %v7732 = vunpack.c.h.b16 %v7661
    %v7733 = vunpack.c.l.b16 %v7662
    %v7734 = vunpack.c.h.b16 %v7662
    %v7735 = vunpack.c.l.b16 %v7663
    %v7736 = vunpack.c.h.b16 %v7663
    %v7737 = vunpack.c.l.b16 %v7664
    %v7738 = vunpack.c.h.b16 %v7664
    %v7739 = vunpack.c.l.b16 %v7665
    %v7740 = vunpack.c.h.b16 %v7665
    %v7741 = vunpack.c.l.b16 %v7666
    %v7742 = vunpack.c.h.b16 %v7666
    %v7743 = vunpack.c.l.b16 %v7667
    %v7744 = vunpack.c.h.b16 %v7667
    %v7745 = vunpack.c.l.b16 %v7668
    %v7746 = vunpack.c.h.b16 %v7668
    %v7747 = vunpack.c.l.b16 %v7669
    %v7748 = vunpack.c.h.b16 %v7669
    %v7749 = vunpack.c.l.b16 %v7670
    %v7750 = vunpack.c.h.b16 %v7670
    %v7751 = vunpack.c.l.b16 %v7671
    %v7752 = vunpack.c.h.b16 %v7671
    %v7753 = vunpack.c.l.b16 %v7672
    %v7754 = vunpack.c.h.b16 %v7672
    %v7755 = vunpack.c.l.b16 %v7673
    %v7756 = vunpack.c.h.b16 %v7673
    %v7757 = vunpack.c.l.b16 %v7674
    %v7758 = vunpack.c.h.b16 %v7674
    %v7759 = vunpack.c.l.b16 %v7675
    %v7760 = vunpack.c.h.b16 %v7675
    %v7761 = vunpack.c.l.b16 %v7676
    %v7762 = vunpack.c.h.b16 %v7676
    %v7763 = vunpack.c.l.b16 %v7677
    %v7764 = vunpack.c.h.b16 %v7677
    %v7765 = vunpack.c.l.b16 %v7678
    %v7766 = vunpack.c.h.b16 %v7678
    %v7767 = vunpack.c.l.b16 %v7679
    %v7768 = vunpack.c.h.b16 %v7679
    %v7769 = vunpack.c.l.b16 %v7680
    %v7770 = vunpack.c.h.b16 %v7680
    %v7771 = vunpack.c.l.b16 %v7681
    %v7772 = vunpack.c.h.b16 %v7681
    %v7773 = vunpack.c.l.b16 %v7682
    %v7774 = vunpack.c.h.b16 %v7682
    %v7775 = vunpack.c.l.b16 %v7683
    %v7776 = vunpack.c.h.b16 %v7683
    %v7777 = vunpack.c.l.b16 %v7684
    %v7778 = vunpack.c.h.b16 %v7684
    %v7779 = vunpack.c.l.b16 %v7685
    %v7780 = vunpack.c.h.b16 %v7685
    %v7781 = vunpack.c.l.b16 %v7686
    %v7782 = vunpack.c.h.b16 %v7686
    %v7783 = vpack.c.b16 %v7723, %v7719
    %v7784 = vpack.c.b16 %v7724, %v7720
    %v7785 = vpack.c.b16 %v7725, %v7721
    %v7786 = vpack.c.b16 %v7726, %v7722
    %v7787 = vpack.c.b16 %v7731, %v7727
    %v7788 = vpack.c.b16 %v7732, %v7728
    %v7789 = vpack.c.b16 %v7733, %v7729
    %v7790 = vpack.c.b16 %v7734, %v7730
    %v7791 = vpack.c.b16 %v7739, %v7735
    %v7792 = vpack.c.b16 %v7740, %v7736
    %v7793 = vpack.c.b16 %v7741, %v7737
    %v7794 = vpack.c.b16 %v7742, %v7738
    %v7795 = vpack.c.b16 %v7747, %v7743
    %v7796 = vpack.c.b16 %v7748, %v7744
    %v7797 = vpack.c.b16 %v7749, %v7745
    %v7798 = vpack.c.b16 %v7750, %v7746
    %v7799 = vpack.c.b16 %v7755, %v7751
    %v7800 = vpack.c.b16 %v7756, %v7752
    %v7801 = vpack.c.b16 %v7757, %v7753
    %v7802 = vpack.c.b16 %v7758, %v7754
    %v7803 = vpack.c.b16 %v7763, %v7759
    %v7804 = vpack.c.b16 %v7764, %v7760
    %v7805 = vpack.c.b16 %v7765, %v7761
    %v7806 = vpack.c.b16 %v7766, %v7762
    %v7807 = vpack.c.b16 %v7771, %v7767
    %v7808 = vpack.c.b16 %v7772, %v7768
    %v7809 = vpack.c.b16 %v7773, %v7769
    %v7810 = vpack.c.b16 %v7774, %v7770
    %v7811 = vpack.c.b16 %v7779, %v7775
    %v7812 = vpack.c.b16 %v7780, %v7776
    %v7813 = vpack.c.b16 %v7781, %v7777
    %v7814 = vpack.c.b16 %v7782, %v7778
    %7847 = vmatpush.bf16.msra.mxu0 %v7811
    %7848 = vmatpush.bf16.msra.mxu0 %v7807
    %7849 = vmatpush.bf16.msra.mxu0 %v7803
    %7850 = vmatpush.bf16.msra.mxu0 %v7799
    %7851 = vmatpush.bf16.msra.mxu0 %v7795
    %7852 = vmatpush.bf16.msra.mxu0 %v7791
    %7853 = vmatpush.bf16.msra.mxu0 %v7787
    %7854 = vmatpush.bf16.msra.mxu0 %v7783
    %7855 = vmatmul.bf16.gmra.mxu0 %v7654
    %v7856 = vpop.f32.mrf.mxu0
    %v7857 = vadd.f32 0.0, %v7856
    %v7858 = vpop.f32.mrf.mxu0
    %7859 = vdwg.mxu0
    %7860 = vmatpush.bf16.msra.mxu0 %v7812
    %7861 = vmatpush.bf16.msra.mxu0 %v7808
    %7862 = vmatpush.bf16.msra.mxu0 %v7804
    %7863 = vmatpush.bf16.msra.mxu0 %v7800
    %7864 = vmatpush.bf16.msra.mxu0 %v7796
    %7865 = vmatpush.bf16.msra.mxu0 %v7792
    %7866 = vmatpush.bf16.msra.mxu0 %v7788
    %7867 = vmatpush.bf16.msra.mxu0 %v7784
    %7868 = vmatmul.bf16.gmra.mxu0 %v7654
    %v7869 = vpop.f32.mrf.mxu0
    %v7870 = vadd.f32 0.0, %v7869
    %v7871 = vpop.f32.mrf.mxu0
    %7872 = vdwg.mxu0
    %7873 = vmatpush.bf16.msra.mxu0 %v7813
    %7874 = vmatpush.bf16.msra.mxu0 %v7809
    %7875 = vmatpush.bf16.msra.mxu0 %v7805
    %7876 = vmatpush.bf16.msra.mxu0 %v7801
    %7877 = vmatpush.bf16.msra.mxu0 %v7797
    %7878 = vmatpush.bf16.msra.mxu0 %v7793
    %7879 = vmatpush.bf16.msra.mxu0 %v7789
    %7880 = vmatpush.bf16.msra.mxu0 %v7785
    %7881 = vmatmul.bf16.gmra.mxu0 %v7654
    %v7882 = vpop.f32.mrf.mxu0
    %v7883 = vadd.f32 0.0, %v7882
    %v7884 = vpop.f32.mrf.mxu0
    %7885 = vdwg.mxu0
    %7886 = vmatpush.bf16.msra.mxu0 %v7814
    %7887 = vmatpush.bf16.msra.mxu0 %v7810
    %7888 = vmatpush.bf16.msra.mxu0 %v7806
    %7889 = vmatpush.bf16.msra.mxu0 %v7802
    %7890 = vmatpush.bf16.msra.mxu0 %v7798
    %7891 = vmatpush.bf16.msra.mxu0 %v7794
    %7892 = vmatpush.bf16.msra.mxu0 %v7790
    %7893 = vmatpush.bf16.msra.mxu0 %v7786
    %7894 = vmatmul.bf16.gmra.mxu0 %v7654
    %v7895 = vpop.f32.mrf.mxu0
    %v7896 = vadd.f32 0.0, %v7895
    %v7897 = vpop.f32.mrf.mxu0
    %7898 = vdwg.mxu0
    %v7899 = vadd.f32 %v7650, %v7857
    %v7900 = vadd.f32 %v7651, %v7870
    %v7901 = vadd.f32 %v7652, %v7883
    %v7902 = vadd.f32 %v7653, %v7896
    %v7903 = vxor.u32 %v7899, 2147483648
    %v7904 = vxor.u32 %v7900, 2147483648
    %v7905 = vmul.f32 %v7903, 1.442695
    %v7906 = vpow.pop %v7905
    %v7907 = vmul.f32 %v7904, 1.442695
    %v7908 = vpow.pop %v7907
    %v7909 = vadd.f32 %v7906, 1.0
    %v7910 = vadd.f32 %v7908, 1.0
    %v7911 = vrcp.pop %v7909
    %v7912 = vmul.f32 %v7909, %v7911
    %v7913 = vsub.f32 1.0, %v7912
    %v7914 = vmul.f32 %v7911, %v7913
    %v7915 = vadd.f32 %v7911, %v7914
    %vm7916 = vweird.f32 %v7909
    %vm7917 = vweird.f32 %v7911
    %vm7918 = vmor %vm7916, %vm7917
    %v7919 = vsel %vm7918, %v7911, %v7915
    %v7920 = vand.u32 2147483647, %v7909
    %vm7921 = vcmp.eq.f32.partialorder %v7920, 8.507059e+37
    %v7922 = vand.u32 %v7909, 2147483648
    %v7923 = vor.u32 1.1754944e-38, %v7922
    %v7924 = vsel %vm7921, %v7923, %v7919
    %v7925 = vmul.f32 1.0, %v7924
    %v7926 = vrcp.pop %v7910
    %v7927 = vmul.f32 %v7910, %v7926
    %v7928 = vsub.f32 1.0, %v7927
    %v7929 = vmul.f32 %v7926, %v7928
    %v7930 = vadd.f32 %v7926, %v7929
    %vm7931 = vweird.f32 %v7910
    %vm7932 = vweird.f32 %v7926
    %vm7933 = vmor %vm7931, %vm7932
    %v7934 = vsel %vm7933, %v7926, %v7930
    %v7935 = vand.u32 2147483647, %v7910
    %vm7936 = vcmp.eq.f32.partialorder %v7935, 8.507059e+37
    %v7937 = vand.u32 %v7910, 2147483648
    %v7938 = vor.u32 1.1754944e-38, %v7937
    %v7939 = vsel %vm7936, %v7938, %v7934
    %v7940 = vmul.f32 1.0, %v7939
    %v7941 = vtanh.pop %v7901
    %v7942 = vmul.f32 %v7940, %v7627
    %v7943 = vmul.f32 %v7925, %v7941
    %v7944 = vadd.f32 %v7942, %v7943
    %v7945 = vtanh.pop %v7944
    %v7946 = vxor.u32 %v7902, 2147483648
    %v7947 = vmul.f32 %v7946, 1.442695
    %v7948 = vpow.pop %v7947
    %v7949 = vadd.f32 %v7948, 1.0
    %v7950 = vrcp.pop %v7949
    %v7951 = vmul.f32 %v7949, %v7950
    %v7952 = vsub.f32 1.0, %v7951
    %v7953 = vmul.f32 %v7950, %v7952
    %v7954 = vadd.f32 %v7950, %v7953
    %vm7955 = vweird.f32 %v7949
    %vm7956 = vweird.f32 %v7950
    %vm7957 = vmor %vm7955, %vm7956
    %v7958 = vsel %vm7957, %v7950, %v7954
    %v7959 = vand.u32 2147483647, %v7949
    %vm7960 = vcmp.eq.f32.partialorder %v7959, 8.507059e+37
    %v7961 = vand.u32 %v7949, 2147483648
    %v7962 = vor.u32 1.1754944e-38, %v7961
    %v7963 = vsel %vm7960, %v7962, %v7958
    %v7964 = vmul.f32 1.0, %v7963
    %v7965 = vmul.f32 %v7964, %v7945
    %7966 = vst [vmem:[#allocation3 + $0x80] sm:$0xff] %v7965
    %v7967 = vld [vmem:[#allocation2 + $0x220] sm:$0xff]
    %v7968 = vld [vmem:[#allocation2 + $0x228] sm:$0xff]
    %v7969 = vld [vmem:[#allocation2 + $0x230] sm:$0xff]
    %v7970 = vld [vmem:[#allocation2 + $0x238] sm:$0xff]
    %v7971 = vpack.c.bf16 %v7965, %v7965
    %v7972 = vld [vmem:[#allocation7] sm:$0xff]
    %v7973 = vld [vmem:[#allocation7 + $0x8] sm:$0xff]
    %v7974 = vld [vmem:[#allocation7 + $0x10] sm:$0xff]
    %v7975 = vld [vmem:[#allocation7 + $0x18] sm:$0xff]
    %v7976 = vld [vmem:[#allocation7 + $0x20] sm:$0xff]
    %v7977 = vld [vmem:[#allocation7 + $0x28] sm:$0xff]
    %v7978 = vld [vmem:[#allocation7 + $0x30] sm:$0xff]
    %v7979 = vld [vmem:[#allocation7 + $0x38] sm:$0xff]
    %v7980 = vld [vmem:[#allocation7 + $0x40] sm:$0xff]
    %v7981 = vld [vmem:[#allocation7 + $0x48] sm:$0xff]
    %v7982 = vld [vmem:[#allocation7 + $0x50] sm:$0xff]
    %v7983 = vld [vmem:[#allocation7 + $0x58] sm:$0xff]
    %v7984 = vld [vmem:[#allocation7 + $0x60] sm:$0xff]
    %v7985 = vld [vmem:[#allocation7 + $0x68] sm:$0xff]
    %v7986 = vld [vmem:[#allocation7 + $0x70] sm:$0xff]
    %v7987 = vld [vmem:[#allocation7 + $0x78] sm:$0xff]
    %v7988 = vld [vmem:[#allocation7 + $0x80] sm:$0xff]
    %v7989 = vld [vmem:[#allocation7 + $0x88] sm:$0xff]
    %v7990 = vld [vmem:[#allocation7 + $0x90] sm:$0xff]
    %v7991 = vld [vmem:[#allocation7 + $0x98] sm:$0xff]
    %v7992 = vld [vmem:[#allocation7 + $0xa0] sm:$0xff]
    %v7993 = vld [vmem:[#allocation7 + $0xa8] sm:$0xff]
    %v7994 = vld [vmem:[#allocation7 + $0xb0] sm:$0xff]
    %v7995 = vld [vmem:[#allocation7 + $0xb8] sm:$0xff]
    %v7996 = vld [vmem:[#allocation7 + $0xc0] sm:$0xff]
    %v7997 = vld [vmem:[#allocation7 + $0xc8] sm:$0xff]
    %v7998 = vld [vmem:[#allocation7 + $0xd0] sm:$0xff]
    %v7999 = vld [vmem:[#allocation7 + $0xd8] sm:$0xff]
    %v8000 = vld [vmem:[#allocation7 + $0xe0] sm:$0xff]
    %v8001 = vld [vmem:[#allocation7 + $0xe8] sm:$0xff]
    %v8002 = vld [vmem:[#allocation7 + $0xf0] sm:$0xff]
    %v8003 = vld [vmem:[#allocation7 + $0xf8] sm:$0xff]
    %v8036 = vunpack.c.l.b16 %v7972
    %v8037 = vunpack.c.h.b16 %v7972
    %v8038 = vunpack.c.l.b16 %v7973
    %v8039 = vunpack.c.h.b16 %v7973
    %v8040 = vunpack.c.l.b16 %v7974
    %v8041 = vunpack.c.h.b16 %v7974
    %v8042 = vunpack.c.l.b16 %v7975
    %v8043 = vunpack.c.h.b16 %v7975
    %v8044 = vunpack.c.l.b16 %v7976
    %v8045 = vunpack.c.h.b16 %v7976
    %v8046 = vunpack.c.l.b16 %v7977
    %v8047 = vunpack.c.h.b16 %v7977
    %v8048 = vunpack.c.l.b16 %v7978
    %v8049 = vunpack.c.h.b16 %v7978
    %v8050 = vunpack.c.l.b16 %v7979
    %v8051 = vunpack.c.h.b16 %v7979
    %v8052 = vunpack.c.l.b16 %v7980
    %v8053 = vunpack.c.h.b16 %v7980
    %v8054 = vunpack.c.l.b16 %v7981
    %v8055 = vunpack.c.h.b16 %v7981
    %v8056 = vunpack.c.l.b16 %v7982
    %v8057 = vunpack.c.h.b16 %v7982
    %v8058 = vunpack.c.l.b16 %v7983
    %v8059 = vunpack.c.h.b16 %v7983
    %v8060 = vunpack.c.l.b16 %v7984
    %v8061 = vunpack.c.h.b16 %v7984
    %v8062 = vunpack.c.l.b16 %v7985
    %v8063 = vunpack.c.h.b16 %v7985
    %v8064 = vunpack.c.l.b16 %v7986
    %v8065 = vunpack.c.h.b16 %v7986
    %v8066 = vunpack.c.l.b16 %v7987
    %v8067 = vunpack.c.h.b16 %v7987
    %v8068 = vunpack.c.l.b16 %v7988
    %v8069 = vunpack.c.h.b16 %v7988
    %v8070 = vunpack.c.l.b16 %v7989
    %v8071 = vunpack.c.h.b16 %v7989
    %v8072 = vunpack.c.l.b16 %v7990
    %v8073 = vunpack.c.h.b16 %v7990
    %v8074 = vunpack.c.l.b16 %v7991
    %v8075 = vunpack.c.h.b16 %v7991
    %v8076 = vunpack.c.l.b16 %v7992
    %v8077 = vunpack.c.h.b16 %v7992
    %v8078 = vunpack.c.l.b16 %v7993
    %v8079 = vunpack.c.h.b16 %v7993
    %v8080 = vunpack.c.l.b16 %v7994
    %v8081 = vunpack.c.h.b16 %v7994
    %v8082 = vunpack.c.l.b16 %v7995
    %v8083 = vunpack.c.h.b16 %v7995
    %v8084 = vunpack.c.l.b16 %v7996
    %v8085 = vunpack.c.h.b16 %v7996
    %v8086 = vunpack.c.l.b16 %v7997
    %v8087 = vunpack.c.h.b16 %v7997
    %v8088 = vunpack.c.l.b16 %v7998
    %v8089 = vunpack.c.h.b16 %v7998
    %v8090 = vunpack.c.l.b16 %v7999
    %v8091 = vunpack.c.h.b16 %v7999
    %v8092 = vunpack.c.l.b16 %v8000
    %v8093 = vunpack.c.h.b16 %v8000
    %v8094 = vunpack.c.l.b16 %v8001
    %v8095 = vunpack.c.h.b16 %v8001
    %v8096 = vunpack.c.l.b16 %v8002
    %v8097 = vunpack.c.h.b16 %v8002
    %v8098 = vunpack.c.l.b16 %v8003
    %v8099 = vunpack.c.h.b16 %v8003
    %v8100 = vpack.c.b16 %v8040, %v8036
    %v8101 = vpack.c.b16 %v8041, %v8037
    %v8102 = vpack.c.b16 %v8042, %v8038
    %v8103 = vpack.c.b16 %v8043, %v8039
    %v8104 = vpack.c.b16 %v8048, %v8044
    %v8105 = vpack.c.b16 %v8049, %v8045
    %v8106 = vpack.c.b16 %v8050, %v8046
    %v8107 = vpack.c.b16 %v8051, %v8047
    %v8108 = vpack.c.b16 %v8056, %v8052
    %v8109 = vpack.c.b16 %v8057, %v8053
    %v8110 = vpack.c.b16 %v8058, %v8054
    %v8111 = vpack.c.b16 %v8059, %v8055
    %v8112 = vpack.c.b16 %v8064, %v8060
    %v8113 = vpack.c.b16 %v8065, %v8061
    %v8114 = vpack.c.b16 %v8066, %v8062
    %v8115 = vpack.c.b16 %v8067, %v8063
    %v8116 = vpack.c.b16 %v8072, %v8068
    %v8117 = vpack.c.b16 %v8073, %v8069
    %v8118 = vpack.c.b16 %v8074, %v8070
    %v8119 = vpack.c.b16 %v8075, %v8071
    %v8120 = vpack.c.b16 %v8080, %v8076
    %v8121 = vpack.c.b16 %v8081, %v8077
    %v8122 = vpack.c.b16 %v8082, %v8078
    %v8123 = vpack.c.b16 %v8083, %v8079
    %v8124 = vpack.c.b16 %v8088, %v8084
    %v8125 = vpack.c.b16 %v8089, %v8085
    %v8126 = vpack.c.b16 %v8090, %v8086
    %v8127 = vpack.c.b16 %v8091, %v8087
    %v8128 = vpack.c.b16 %v8096, %v8092
    %v8129 = vpack.c.b16 %v8097, %v8093
    %v8130 = vpack.c.b16 %v8098, %v8094
    %v8131 = vpack.c.b16 %v8099, %v8095
    %8164 = vmatpush.bf16.msra.mxu0 %v8128
    %8165 = vmatpush.bf16.msra.mxu0 %v8124
    %8166 = vmatpush.bf16.msra.mxu0 %v8120
    %8167 = vmatpush.bf16.msra.mxu0 %v8116
    %8168 = vmatpush.bf16.msra.mxu0 %v8112
    %8169 = vmatpush.bf16.msra.mxu0 %v8108
    %8170 = vmatpush.bf16.msra.mxu0 %v8104
    %8171 = vmatpush.bf16.msra.mxu0 %v8100
    %8172 = vmatmul.bf16.gmra.mxu0 %v7971
    %v8173 = vpop.f32.mrf.mxu0
    %v8174 = vadd.f32 0.0, %v8173
    %v8175 = vpop.f32.mrf.mxu0
    %8176 = vdwg.mxu0
    %8177 = vmatpush.bf16.msra.mxu0 %v8129
    %8178 = vmatpush.bf16.msra.mxu0 %v8125
    %8179 = vmatpush.bf16.msra.mxu0 %v8121
    %8180 = vmatpush.bf16.msra.mxu0 %v8117
    %8181 = vmatpush.bf16.msra.mxu0 %v8113
    %8182 = vmatpush.bf16.msra.mxu0 %v8109
    %8183 = vmatpush.bf16.msra.mxu0 %v8105
    %8184 = vmatpush.bf16.msra.mxu0 %v8101
    %8185 = vmatmul.bf16.gmra.mxu0 %v7971
    %v8186 = vpop.f32.mrf.mxu0
    %v8187 = vadd.f32 0.0, %v8186
    %v8188 = vpop.f32.mrf.mxu0
    %8189 = vdwg.mxu0
    %8190 = vmatpush.bf16.msra.mxu0 %v8130
    %8191 = vmatpush.bf16.msra.mxu0 %v8126
    %8192 = vmatpush.bf16.msra.mxu0 %v8122
    %8193 = vmatpush.bf16.msra.mxu0 %v8118
    %8194 = vmatpush.bf16.msra.mxu0 %v8114
    %8195 = vmatpush.bf16.msra.mxu0 %v8110
    %8196 = vmatpush.bf16.msra.mxu0 %v8106
    %8197 = vmatpush.bf16.msra.mxu0 %v8102
    %8198 = vmatmul.bf16.gmra.mxu0 %v7971
    %v8199 = vpop.f32.mrf.mxu0
    %v8200 = vadd.f32 0.0, %v8199
    %v8201 = vpop.f32.mrf.mxu0
    %8202 = vdwg.mxu0
    %8203 = vmatpush.bf16.msra.mxu0 %v8131
    %8204 = vmatpush.bf16.msra.mxu0 %v8127
    %8205 = vmatpush.bf16.msra.mxu0 %v8123
    %8206 = vmatpush.bf16.msra.mxu0 %v8119
    %8207 = vmatpush.bf16.msra.mxu0 %v8115
    %8208 = vmatpush.bf16.msra.mxu0 %v8111
    %8209 = vmatpush.bf16.msra.mxu0 %v8107
    %8210 = vmatpush.bf16.msra.mxu0 %v8103
    %8211 = vmatmul.bf16.gmra.mxu0 %v7971
    %v8212 = vpop.f32.mrf.mxu0
    %v8213 = vadd.f32 0.0, %v8212
    %v8214 = vpop.f32.mrf.mxu0
    %8215 = vdwg.mxu0
    %v8216 = vadd.f32 %v7967, %v8174
    %v8217 = vadd.f32 %v7968, %v8187
    %v8218 = vadd.f32 %v7969, %v8200
    %v8219 = vadd.f32 %v7970, %v8213
    %v8220 = vxor.u32 %v8216, 2147483648
    %v8221 = vxor.u32 %v8217, 2147483648
    %v8222 = vmul.f32 %v8220, 1.442695
    %v8223 = vpow.pop %v8222
    %v8224 = vmul.f32 %v8221, 1.442695
    %v8225 = vpow.pop %v8224
    %v8226 = vadd.f32 %v8223, 1.0
    %v8227 = vadd.f32 %v8225, 1.0
    %v8228 = vrcp.pop %v8226
    %v8229 = vmul.f32 %v8226, %v8228
    %v8230 = vsub.f32 1.0, %v8229
    %v8231 = vmul.f32 %v8228, %v8230
    %v8232 = vadd.f32 %v8228, %v8231
    %vm8233 = vweird.f32 %v8226
    %vm8234 = vweird.f32 %v8228
    %vm8235 = vmor %vm8233, %vm8234
    %v8236 = vsel %vm8235, %v8228, %v8232
    %v8237 = vand.u32 2147483647, %v8226
    %vm8238 = vcmp.eq.f32.partialorder %v8237, 8.507059e+37
    %v8239 = vand.u32 %v8226, 2147483648
    %v8240 = vor.u32 1.1754944e-38, %v8239
    %v8241 = vsel %vm8238, %v8240, %v8236
    %v8242 = vmul.f32 1.0, %v8241
    %v8243 = vrcp.pop %v8227
    %v8244 = vmul.f32 %v8227, %v8243
    %v8245 = vsub.f32 1.0, %v8244
    %v8246 = vmul.f32 %v8243, %v8245
    %v8247 = vadd.f32 %v8243, %v8246
    %vm8248 = vweird.f32 %v8227
    %vm8249 = vweird.f32 %v8243
    %vm8250 = vmor %vm8248, %vm8249
    %v8251 = vsel %vm8250, %v8243, %v8247
    %v8252 = vand.u32 2147483647, %v8227
    %vm8253 = vcmp.eq.f32.partialorder %v8252, 8.507059e+37
    %v8254 = vand.u32 %v8227, 2147483648
    %v8255 = vor.u32 1.1754944e-38, %v8254
    %v8256 = vsel %vm8253, %v8255, %v8251
    %v8257 = vmul.f32 1.0, %v8256
    %v8258 = vtanh.pop %v8218
    %v8259 = vmul.f32 %v8257, %v7944
    %v8260 = vmul.f32 %v8242, %v8258
    %v8261 = vadd.f32 %v8259, %v8260
    %v8262 = vtanh.pop %v8261
    %v8263 = vxor.u32 %v8219, 2147483648
    %v8264 = vmul.f32 %v8263, 1.442695
    %v8265 = vpow.pop %v8264
    %v8266 = vadd.f32 %v8265, 1.0
    %v8267 = vrcp.pop %v8266
    %v8268 = vmul.f32 %v8266, %v8267
    %v8269 = vsub.f32 1.0, %v8268
    %v8270 = vmul.f32 %v8267, %v8269
    %v8271 = vadd.f32 %v8267, %v8270
    %vm8272 = vweird.f32 %v8266
    %vm8273 = vweird.f32 %v8267
    %vm8274 = vmor %vm8272, %vm8273
    %v8275 = vsel %vm8274, %v8267, %v8271
    %v8276 = vand.u32 2147483647, %v8266
    %vm8277 = vcmp.eq.f32.partialorder %v8276, 8.507059e+37
    %v8278 = vand.u32 %v8266, 2147483648
    %v8279 = vor.u32 1.1754944e-38, %v8278
    %v8280 = vsel %vm8277, %v8279, %v8275
    %v8281 = vmul.f32 1.0, %v8280
    %v8282 = vmul.f32 %v8281, %v8262
    %8283 = vst [vmem:[#allocation3 + $0x88] sm:$0xff] %v8282
    %v8284 = vld [vmem:[#allocation2 + $0x240] sm:$0xff]
    %v8285 = vld [vmem:[#allocation2 + $0x248] sm:$0xff]
    %v8286 = vld [vmem:[#allocation2 + $0x250] sm:$0xff]
    %v8287 = vld [vmem:[#allocation2 + $0x258] sm:$0xff]
    %v8288 = vpack.c.bf16 %v8282, %v8282
    %v8289 = vld [vmem:[#allocation7] sm:$0xff]
    %v8290 = vld [vmem:[#allocation7 + $0x8] sm:$0xff]
    %v8291 = vld [vmem:[#allocation7 + $0x10] sm:$0xff]
    %v8292 = vld [vmem:[#allocation7 + $0x18] sm:$0xff]
    %v8293 = vld [vmem:[#allocation7 + $0x20] sm:$0xff]
    %v8294 = vld [vmem:[#allocation7 + $0x28] sm:$0xff]
    %v8295 = vld [vmem:[#allocation7 + $0x30] sm:$0xff]
    %v8296 = vld [vmem:[#allocation7 + $0x38] sm:$0xff]
    %v8297 = vld [vmem:[#allocation7 + $0x40] sm:$0xff]
    %v8298 = vld [vmem:[#allocation7 + $0x48] sm:$0xff]
    %v8299 = vld [vmem:[#allocation7 + $0x50] sm:$0xff]
    %v8300 = vld [vmem:[#allocation7 + $0x58] sm:$0xff]
    %v8301 = vld [vmem:[#allocation7 + $0x60] sm:$0xff]
    %v8302 = vld [vmem:[#allocation7 + $0x68] sm:$0xff]
    %v8303 = vld [vmem:[#allocation7 + $0x70] sm:$0xff]
    %v8304 = vld [vmem:[#allocation7 + $0x78] sm:$0xff]
    %v8305 = vld [vmem:[#allocation7 + $0x80] sm:$0xff]
    %v8306 = vld [vmem:[#allocation7 + $0x88] sm:$0xff]
    %v8307 = vld [vmem:[#allocation7 + $0x90] sm:$0xff]
    %v8308 = vld [vmem:[#allocation7 + $0x98] sm:$0xff]
    %v8309 = vld [vmem:[#allocation7 + $0xa0] sm:$0xff]
    %v8310 = vld [vmem:[#allocation7 + $0xa8] sm:$0xff]
    %v8311 = vld [vmem:[#allocation7 + $0xb0] sm:$0xff]
    %v8312 = vld [vmem:[#allocation7 + $0xb8] sm:$0xff]
    %v8313 = vld [vmem:[#allocation7 + $0xc0] sm:$0xff]
    %v8314 = vld [vmem:[#allocation7 + $0xc8] sm:$0xff]
    %v8315 = vld [vmem:[#allocation7 + $0xd0] sm:$0xff]
    %v8316 = vld [vmem:[#allocation7 + $0xd8] sm:$0xff]
    %v8317 = vld [vmem:[#allocation7 + $0xe0] sm:$0xff]
    %v8318 = vld [vmem:[#allocation7 + $0xe8] sm:$0xff]
    %v8319 = vld [vmem:[#allocation7 + $0xf0] sm:$0xff]
    %v8320 = vld [vmem:[#allocation7 + $0xf8] sm:$0xff]
    %v8353 = vunpack.c.l.b16 %v8289
    %v8354 = vunpack.c.h.b16 %v8289
    %v8355 = vunpack.c.l.b16 %v8290
    %v8356 = vunpack.c.h.b16 %v8290
    %v8357 = vunpack.c.l.b16 %v8291
    %v8358 = vunpack.c.h.b16 %v8291
    %v8359 = vunpack.c.l.b16 %v8292
    %v8360 = vunpack.c.h.b16 %v8292
    %v8361 = vunpack.c.l.b16 %v8293
    %v8362 = vunpack.c.h.b16 %v8293
    %v8363 = vunpack.c.l.b16 %v8294
    %v8364 = vunpack.c.h.b16 %v8294
    %v8365 = vunpack.c.l.b16 %v8295
    %v8366 = vunpack.c.h.b16 %v8295
    %v8367 = vunpack.c.l.b16 %v8296
    %v8368 = vunpack.c.h.b16 %v8296
    %v8369 = vunpack.c.l.b16 %v8297
    %v8370 = vunpack.c.h.b16 %v8297
    %v8371 = vunpack.c.l.b16 %v8298
    %v8372 = vunpack.c.h.b16 %v8298
    %v8373 = vunpack.c.l.b16 %v8299
    %v8374 = vunpack.c.h.b16 %v8299
    %v8375 = vunpack.c.l.b16 %v8300
    %v8376 = vunpack.c.h.b16 %v8300
    %v8377 = vunpack.c.l.b16 %v8301
    %v8378 = vunpack.c.h.b16 %v8301
    %v8379 = vunpack.c.l.b16 %v8302
    %v8380 = vunpack.c.h.b16 %v8302
    %v8381 = vunpack.c.l.b16 %v8303
    %v8382 = vunpack.c.h.b16 %v8303
    %v8383 = vunpack.c.l.b16 %v8304
    %v8384 = vunpack.c.h.b16 %v8304
    %v8385 = vunpack.c.l.b16 %v8305
    %v8386 = vunpack.c.h.b16 %v8305
    %v8387 = vunpack.c.l.b16 %v8306
    %v8388 = vunpack.c.h.b16 %v8306
    %v8389 = vunpack.c.l.b16 %v8307
    %v8390 = vunpack.c.h.b16 %v8307
    %v8391 = vunpack.c.l.b16 %v8308
    %v8392 = vunpack.c.h.b16 %v8308
    %v8393 = vunpack.c.l.b16 %v8309
    %v8394 = vunpack.c.h.b16 %v8309
    %v8395 = vunpack.c.l.b16 %v8310
    %v8396 = vunpack.c.h.b16 %v8310
    %v8397 = vunpack.c.l.b16 %v8311
    %v8398 = vunpack.c.h.b16 %v8311
    %v8399 = vunpack.c.l.b16 %v8312
    %v8400 = vunpack.c.h.b16 %v8312
    %v8401 = vunpack.c.l.b16 %v8313
    %v8402 = vunpack.c.h.b16 %v8313
    %v8403 = vunpack.c.l.b16 %v8314
    %v8404 = vunpack.c.h.b16 %v8314
    %v8405 = vunpack.c.l.b16 %v8315
    %v8406 = vunpack.c.h.b16 %v8315
    %v8407 = vunpack.c.l.b16 %v8316
    %v8408 = vunpack.c.h.b16 %v8316
    %v8409 = vunpack.c.l.b16 %v8317
    %v8410 = vunpack.c.h.b16 %v8317
    %v8411 = vunpack.c.l.b16 %v8318
    %v8412 = vunpack.c.h.b16 %v8318
    %v8413 = vunpack.c.l.b16 %v8319
    %v8414 = vunpack.c.h.b16 %v8319
    %v8415 = vunpack.c.l.b16 %v8320
    %v8416 = vunpack.c.h.b16 %v8320
    %v8417 = vpack.c.b16 %v8357, %v8353
    %v8418 = vpack.c.b16 %v8358, %v8354
    %v8419 = vpack.c.b16 %v8359, %v8355
    %v8420 = vpack.c.b16 %v8360, %v8356
    %v8421 = vpack.c.b16 %v8365, %v8361
    %v8422 = vpack.c.b16 %v8366, %v8362
    %v8423 = vpack.c.b16 %v8367, %v8363
    %v8424 = vpack.c.b16 %v8368, %v8364
    %v8425 = vpack.c.b16 %v8373, %v8369
    %v8426 = vpack.c.b16 %v8374, %v8370
    %v8427 = vpack.c.b16 %v8375, %v8371
    %v8428 = vpack.c.b16 %v8376, %v8372
    %v8429 = vpack.c.b16 %v8381, %v8377
    %v8430 = vpack.c.b16 %v8382, %v8378
    %v8431 = vpack.c.b16 %v8383, %v8379
    %v8432 = vpack.c.b16 %v8384, %v8380
    %v8433 = vpack.c.b16 %v8389, %v8385
    %v8434 = vpack.c.b16 %v8390, %v8386
    %v8435 = vpack.c.b16 %v8391, %v8387
    %v8436 = vpack.c.b16 %v8392, %v8388
    %v8437 = vpack.c.b16 %v8397, %v8393
    %v8438 = vpack.c.b16 %v8398, %v8394
    %v8439 = vpack.c.b16 %v8399, %v8395
    %v8440 = vpack.c.b16 %v8400, %v8396
    %v8441 = vpack.c.b16 %v8405, %v8401
    %v8442 = vpack.c.b16 %v8406, %v8402
    %v8443 = vpack.c.b16 %v8407, %v8403
    %v8444 = vpack.c.b16 %v8408, %v8404
    %v8445 = vpack.c.b16 %v8413, %v8409
    %v8446 = vpack.c.b16 %v8414, %v8410
    %v8447 = vpack.c.b16 %v8415, %v8411
    %v8448 = vpack.c.b16 %v8416, %v8412
    %8481 = vmatpush.bf16.msra.mxu0 %v8445
    %8482 = vmatpush.bf16.msra.mxu0 %v8441
    %8483 = vmatpush.bf16.msra.mxu0 %v8437
    %8484 = vmatpush.bf16.msra.mxu0 %v8433
    %8485 = vmatpush.bf16.msra.mxu0 %v8429
    %8486 = vmatpush.bf16.msra.mxu0 %v8425
    %8487 = vmatpush.bf16.msra.mxu0 %v8421
    %8488 = vmatpush.bf16.msra.mxu0 %v8417
    %8489 = vmatmul.bf16.gmra.mxu0 %v8288
    %v8490 = vpop.f32.mrf.mxu0
    %v8491 = vadd.f32 0.0, %v8490
    %v8492 = vpop.f32.mrf.mxu0
    %8493 = vdwg.mxu0
    %8494 = vmatpush.bf16.msra.mxu0 %v8446
    %8495 = vmatpush.bf16.msra.mxu0 %v8442
    %8496 = vmatpush.bf16.msra.mxu0 %v8438
    %8497 = vmatpush.bf16.msra.mxu0 %v8434
    %8498 = vmatpush.bf16.msra.mxu0 %v8430
    %8499 = vmatpush.bf16.msra.mxu0 %v8426
    %8500 = vmatpush.bf16.msra.mxu0 %v8422
    %8501 = vmatpush.bf16.msra.mxu0 %v8418
    %8502 = vmatmul.bf16.gmra.mxu0 %v8288
    %v8503 = vpop.f32.mrf.mxu0
    %v8504 = vadd.f32 0.0, %v8503
    %v8505 = vpop.f32.mrf.mxu0
    %8506 = vdwg.mxu0
    %8507 = vmatpush.bf16.msra.mxu0 %v8447
    %8508 = vmatpush.bf16.msra.mxu0 %v8443
    %8509 = vmatpush.bf16.msra.mxu0 %v8439
    %8510 = vmatpush.bf16.msra.mxu0 %v8435
    %8511 = vmatpush.bf16.msra.mxu0 %v8431
    %8512 = vmatpush.bf16.msra.mxu0 %v8427
    %8513 = vmatpush.bf16.msra.mxu0 %v8423
    %8514 = vmatpush.bf16.msra.mxu0 %v8419
    %8515 = vmatmul.bf16.gmra.mxu0 %v8288
    %v8516 = vpop.f32.mrf.mxu0
    %v8517 = vadd.f32 0.0, %v8516
    %v8518 = vpop.f32.mrf.mxu0
    %8519 = vdwg.mxu0
    %8520 = vmatpush.bf16.msra.mxu0 %v8448
    %8521 = vmatpush.bf16.msra.mxu0 %v8444
    %8522 = vmatpush.bf16.msra.mxu0 %v8440
    %8523 = vmatpush.bf16.msra.mxu0 %v8436
    %8524 = vmatpush.bf16.msra.mxu0 %v8432
    %8525 = vmatpush.bf16.msra.mxu0 %v8428
    %8526 = vmatpush.bf16.msra.mxu0 %v8424
    %8527 = vmatpush.bf16.msra.mxu0 %v8420
    %8528 = vmatmul.bf16.gmra.mxu0 %v8288
    %v8529 = vpop.f32.mrf.mxu0
    %v8530 = vadd.f32 0.0, %v8529
    %v8531 = vpop.f32.mrf.mxu0
    %8532 = vdwg.mxu0
    %v8533 = vadd.f32 %v8284, %v8491
    %v8534 = vadd.f32 %v8285, %v8504
    %v8535 = vadd.f32 %v8286, %v8517
    %v8536 = vadd.f32 %v8287, %v8530
    %v8537 = vxor.u32 %v8533, 2147483648
    %v8538 = vxor.u32 %v8534, 2147483648
    %v8539 = vmul.f32 %v8537, 1.442695
    %v8540 = vpow.pop %v8539
    %v8541 = vmul.f32 %v8538, 1.442695
    %v8542 = vpow.pop %v8541
    %v8543 = vadd.f32 %v8540, 1.0
    %v8544 = vadd.f32 %v8542, 1.0
    %v8545 = vrcp.pop %v8543
    %v8546 = vmul.f32 %v8543, %v8545
    %v8547 = vsub.f32 1.0, %v8546
    %v8548 = vmul.f32 %v8545, %v8547
    %v8549 = vadd.f32 %v8545, %v8548
    %vm8550 = vweird.f32 %v8543
    %vm8551 = vweird.f32 %v8545
    %vm8552 = vmor %vm8550, %vm8551
    %v8553 = vsel %vm8552, %v8545, %v8549
    %v8554 = vand.u32 2147483647, %v8543
    %vm8555 = vcmp.eq.f32.partialorder %v8554, 8.507059e+37
    %v8556 = vand.u32 %v8543, 2147483648
    %v8557 = vor.u32 1.1754944e-38, %v8556
    %v8558 = vsel %vm8555, %v8557, %v8553
    %v8559 = vmul.f32 1.0, %v8558
    %v8560 = vrcp.pop %v8544
    %v8561 = vmul.f32 %v8544, %v8560
    %v8562 = vsub.f32 1.0, %v8561
    %v8563 = vmul.f32 %v8560, %v8562
    %v8564 = vadd.f32 %v8560, %v8563
    %vm8565 = vweird.f32 %v8544
    %vm8566 = vweird.f32 %v8560
    %vm8567 = vmor %vm8565, %vm8566
    %v8568 = vsel %vm8567, %v8560, %v8564
    %v8569 = vand.u32 2147483647, %v8544
    %vm8570 = vcmp.eq.f32.partialorder %v8569, 8.507059e+37
    %v8571 = vand.u32 %v8544, 2147483648
    %v8572 = vor.u32 1.1754944e-38, %v8571
    %v8573 = vsel %vm8570, %v8572, %v8568
    %v8574 = vmul.f32 1.0, %v8573
    %v8575 = vtanh.pop %v8535
    %v8576 = vmul.f32 %v8574, %v8261
    %v8577 = vmul.f32 %v8559, %v8575
    %v8578 = vadd.f32 %v8576, %v8577
    %v8579 = vtanh.pop %v8578
    %v8580 = vxor.u32 %v8536, 2147483648
    %v8581 = vmul.f32 %v8580, 1.442695
    %v8582 = vpow.pop %v8581
    %v8583 = vadd.f32 %v8582, 1.0
    %v8584 = vrcp.pop %v8583
    %v8585 = vmul.f32 %v8583, %v8584
    %v8586 = vsub.f32 1.0, %v8585
    %v8587 = vmul.f32 %v8584, %v8586
    %v8588 = vadd.f32 %v8584, %v8587
    %vm8589 = vweird.f32 %v8583
    %vm8590 = vweird.f32 %v8584
    %vm8591 = vmor %vm8589, %vm8590
    %v8592 = vsel %vm8591, %v8584, %v8588
    %v8593 = vand.u32 2147483647, %v8583
    %vm8594 = vcmp.eq.f32.partialorder %v8593, 8.507059e+37
    %v8595 = vand.u32 %v8583, 2147483648
    %v8596 = vor.u32 1.1754944e-38, %v8595
    %v8597 = vsel %vm8594, %v8596, %v8592
    %v8598 = vmul.f32 1.0, %v8597
    %v8599 = vmul.f32 %v8598, %v8579
    %8600 = vst [vmem:[#allocation3 + $0x90] sm:$0xff] %v8599
    %v8601 = vld [vmem:[#allocation2 + $0x260] sm:$0xff]
    %v8602 = vld [vmem:[#allocation2 + $0x268] sm:$0xff]
    %v8603 = vld [vmem:[#allocation2 + $0x270] sm:$0xff]
    %v8604 = vld [vmem:[#allocation2 + $0x278] sm:$0xff]
    %v8605 = vpack.c.bf16 %v8599, %v8599
    %v8606 = vld [vmem:[#allocation7] sm:$0xff]
    %v8607 = vld [vmem:[#allocation7 + $0x8] sm:$0xff]
    %v8608 = vld [vmem:[#allocation7 + $0x10] sm:$0xff]
    %v8609 = vld [vmem:[#allocation7 + $0x18] sm:$0xff]
    %v8610 = vld [vmem:[#allocation7 + $0x20] sm:$0xff]
    %v8611 = vld [vmem:[#allocation7 + $0x28] sm:$0xff]
    %v8612 = vld [vmem:[#allocation7 + $0x30] sm:$0xff]
    %v8613 = vld [vmem:[#allocation7 + $0x38] sm:$0xff]
    %v8614 = vld [vmem:[#allocation7 + $0x40] sm:$0xff]
    %v8615 = vld [vmem:[#allocation7 + $0x48] sm:$0xff]
    %v8616 = vld [vmem:[#allocation7 + $0x50] sm:$0xff]
    %v8617 = vld [vmem:[#allocation7 + $0x58] sm:$0xff]
    %v8618 = vld [vmem:[#allocation7 + $0x60] sm:$0xff]
    %v8619 = vld [vmem:[#allocation7 + $0x68] sm:$0xff]
    %v8620 = vld [vmem:[#allocation7 + $0x70] sm:$0xff]
    %v8621 = vld [vmem:[#allocation7 + $0x78] sm:$0xff]
    %v8622 = vld [vmem:[#allocation7 + $0x80] sm:$0xff]
    %v8623 = vld [vmem:[#allocation7 + $0x88] sm:$0xff]
    %v8624 = vld [vmem:[#allocation7 + $0x90] sm:$0xff]
    %v8625 = vld [vmem:[#allocation7 + $0x98] sm:$0xff]
    %v8626 = vld [vmem:[#allocation7 + $0xa0] sm:$0xff]
    %v8627 = vld [vmem:[#allocation7 + $0xa8] sm:$0xff]
    %v8628 = vld [vmem:[#allocation7 + $0xb0] sm:$0xff]
    %v8629 = vld [vmem:[#allocation7 + $0xb8] sm:$0xff]
    %v8630 = vld [vmem:[#allocation7 + $0xc0] sm:$0xff]
    %v8631 = vld [vmem:[#allocation7 + $0xc8] sm:$0xff]
    %v8632 = vld [vmem:[#allocation7 + $0xd0] sm:$0xff]
    %v8633 = vld [vmem:[#allocation7 + $0xd8] sm:$0xff]
    %v8634 = vld [vmem:[#allocation7 + $0xe0] sm:$0xff]
    %v8635 = vld [vmem:[#allocation7 + $0xe8] sm:$0xff]
    %v8636 = vld [vmem:[#allocation7 + $0xf0] sm:$0xff]
    %v8637 = vld [vmem:[#allocation7 + $0xf8] sm:$0xff]
    %v8670 = vunpack.c.l.b16 %v8606
    %v8671 = vunpack.c.h.b16 %v8606
    %v8672 = vunpack.c.l.b16 %v8607
    %v8673 = vunpack.c.h.b16 %v8607
    %v8674 = vunpack.c.l.b16 %v8608
    %v8675 = vunpack.c.h.b16 %v8608
    %v8676 = vunpack.c.l.b16 %v8609
    %v8677 = vunpack.c.h.b16 %v8609
    %v8678 = vunpack.c.l.b16 %v8610
    %v8679 = vunpack.c.h.b16 %v8610
    %v8680 = vunpack.c.l.b16 %v8611
    %v8681 = vunpack.c.h.b16 %v8611
    %v8682 = vunpack.c.l.b16 %v8612
    %v8683 = vunpack.c.h.b16 %v8612
    %v8684 = vunpack.c.l.b16 %v8613
    %v8685 = vunpack.c.h.b16 %v8613
    %v8686 = vunpack.c.l.b16 %v8614
    %v8687 = vunpack.c.h.b16 %v8614
    %v8688 = vunpack.c.l.b16 %v8615
    %v8689 = vunpack.c.h.b16 %v8615
    %v8690 = vunpack.c.l.b16 %v8616
    %v8691 = vunpack.c.h.b16 %v8616
    %v8692 = vunpack.c.l.b16 %v8617
    %v8693 = vunpack.c.h.b16 %v8617
    %v8694 = vunpack.c.l.b16 %v8618
    %v8695 = vunpack.c.h.b16 %v8618
    %v8696 = vunpack.c.l.b16 %v8619
    %v8697 = vunpack.c.h.b16 %v8619
    %v8698 = vunpack.c.l.b16 %v8620
    %v8699 = vunpack.c.h.b16 %v8620
    %v8700 = vunpack.c.l.b16 %v8621
    %v8701 = vunpack.c.h.b16 %v8621
    %v8702 = vunpack.c.l.b16 %v8622
    %v8703 = vunpack.c.h.b16 %v8622
    %v8704 = vunpack.c.l.b16 %v8623
    %v8705 = vunpack.c.h.b16 %v8623
    %v8706 = vunpack.c.l.b16 %v8624
    %v8707 = vunpack.c.h.b16 %v8624
    %v8708 = vunpack.c.l.b16 %v8625
    %v8709 = vunpack.c.h.b16 %v8625
    %v8710 = vunpack.c.l.b16 %v8626
    %v8711 = vunpack.c.h.b16 %v8626
    %v8712 = vunpack.c.l.b16 %v8627
    %v8713 = vunpack.c.h.b16 %v8627
    %v8714 = vunpack.c.l.b16 %v8628
    %v8715 = vunpack.c.h.b16 %v8628
    %v8716 = vunpack.c.l.b16 %v8629
    %v8717 = vunpack.c.h.b16 %v8629
    %v8718 = vunpack.c.l.b16 %v8630
    %v8719 = vunpack.c.h.b16 %v8630
    %v8720 = vunpack.c.l.b16 %v8631
    %v8721 = vunpack.c.h.b16 %v8631
    %v8722 = vunpack.c.l.b16 %v8632
    %v8723 = vunpack.c.h.b16 %v8632
    %v8724 = vunpack.c.l.b16 %v8633
    %v8725 = vunpack.c.h.b16 %v8633
    %v8726 = vunpack.c.l.b16 %v8634
    %v8727 = vunpack.c.h.b16 %v8634
    %v8728 = vunpack.c.l.b16 %v8635
    %v8729 = vunpack.c.h.b16 %v8635
    %v8730 = vunpack.c.l.b16 %v8636
    %v8731 = vunpack.c.h.b16 %v8636
    %v8732 = vunpack.c.l.b16 %v8637
    %v8733 = vunpack.c.h.b16 %v8637
    %v8734 = vpack.c.b16 %v8674, %v8670
    %v8735 = vpack.c.b16 %v8675, %v8671
    %v8736 = vpack.c.b16 %v8676, %v8672
    %v8737 = vpack.c.b16 %v8677, %v8673
    %v8738 = vpack.c.b16 %v8682, %v8678
    %v8739 = vpack.c.b16 %v8683, %v8679
    %v8740 = vpack.c.b16 %v8684, %v8680
    %v8741 = vpack.c.b16 %v8685, %v8681
    %v8742 = vpack.c.b16 %v8690, %v8686
    %v8743 = vpack.c.b16 %v8691, %v8687
    %v8744 = vpack.c.b16 %v8692, %v8688
    %v8745 = vpack.c.b16 %v8693, %v8689
    %v8746 = vpack.c.b16 %v8698, %v8694
    %v8747 = vpack.c.b16 %v8699, %v8695
    %v8748 = vpack.c.b16 %v8700, %v8696
    %v8749 = vpack.c.b16 %v8701, %v8697
    %v8750 = vpack.c.b16 %v8706, %v8702
    %v8751 = vpack.c.b16 %v8707, %v8703
    %v8752 = vpack.c.b16 %v8708, %v8704
    %v8753 = vpack.c.b16 %v8709, %v8705
    %v8754 = vpack.c.b16 %v8714, %v8710
    %v8755 = vpack.c.b16 %v8715, %v8711
    %v8756 = vpack.c.b16 %v8716, %v8712
    %v8757 = vpack.c.b16 %v8717, %v8713
    %v8758 = vpack.c.b16 %v8722, %v8718
    %v8759 = vpack.c.b16 %v8723, %v8719
    %v8760 = vpack.c.b16 %v8724, %v8720
    %v8761 = vpack.c.b16 %v8725, %v8721
    %v8762 = vpack.c.b16 %v8730, %v8726
    %v8763 = vpack.c.b16 %v8731, %v8727
    %v8764 = vpack.c.b16 %v8732, %v8728
    %v8765 = vpack.c.b16 %v8733, %v8729
    %8798 = vmatpush.bf16.msra.mxu0 %v8762
    %8799 = vmatpush.bf16.msra.mxu0 %v8758
    %8800 = vmatpush.bf16.msra.mxu0 %v8754
    %8801 = vmatpush.bf16.msra.mxu0 %v8750
    %8802 = vmatpush.bf16.msra.mxu0 %v8746
    %8803 = vmatpush.bf16.msra.mxu0 %v8742
    %8804 = vmatpush.bf16.msra.mxu0 %v8738
    %8805 = vmatpush.bf16.msra.mxu0 %v8734
    %8806 = vmatmul.bf16.gmra.mxu0 %v8605
    %v8807 = vpop.f32.mrf.mxu0
    %v8808 = vadd.f32 0.0, %v8807
    %v8809 = vpop.f32.mrf.mxu0
    %8810 = vdwg.mxu0
    %8811 = vmatpush.bf16.msra.mxu0 %v8763
    %8812 = vmatpush.bf16.msra.mxu0 %v8759
    %8813 = vmatpush.bf16.msra.mxu0 %v8755
    %8814 = vmatpush.bf16.msra.mxu0 %v8751
    %8815 = vmatpush.bf16.msra.mxu0 %v8747
    %8816 = vmatpush.bf16.msra.mxu0 %v8743
    %8817 = vmatpush.bf16.msra.mxu0 %v8739
    %8818 = vmatpush.bf16.msra.mxu0 %v8735
    %8819 = vmatmul.bf16.gmra.mxu0 %v8605
    %v8820 = vpop.f32.mrf.mxu0
    %v8821 = vadd.f32 0.0, %v8820
    %v8822 = vpop.f32.mrf.mxu0
    %8823 = vdwg.mxu0
    %8824 = vmatpush.bf16.msra.mxu0 %v8764
    %8825 = vmatpush.bf16.msra.mxu0 %v8760
    %8826 = vmatpush.bf16.msra.mxu0 %v8756
    %8827 = vmatpush.bf16.msra.mxu0 %v8752
    %8828 = vmatpush.bf16.msra.mxu0 %v8748
    %8829 = vmatpush.bf16.msra.mxu0 %v8744
    %8830 = vmatpush.bf16.msra.mxu0 %v8740
    %8831 = vmatpush.bf16.msra.mxu0 %v8736
    %8832 = vmatmul.bf16.gmra.mxu0 %v8605
    %v8833 = vpop.f32.mrf.mxu0
    %v8834 = vadd.f32 0.0, %v8833
    %v8835 = vpop.f32.mrf.mxu0
    %8836 = vdwg.mxu0
    %8837 = vmatpush.bf16.msra.mxu0 %v8765
    %8838 = vmatpush.bf16.msra.mxu0 %v8761
    %8839 = vmatpush.bf16.msra.mxu0 %v8757
    %8840 = vmatpush.bf16.msra.mxu0 %v8753
    %8841 = vmatpush.bf16.msra.mxu0 %v8749
    %8842 = vmatpush.bf16.msra.mxu0 %v8745
    %8843 = vmatpush.bf16.msra.mxu0 %v8741
    %8844 = vmatpush.bf16.msra.mxu0 %v8737
    %8845 = vmatmul.bf16.gmra.mxu0 %v8605
    %v8846 = vpop.f32.mrf.mxu0
    %v8847 = vadd.f32 0.0, %v8846
    %v8848 = vpop.f32.mrf.mxu0
    %8849 = vdwg.mxu0
    %v8850 = vadd.f32 %v8601, %v8808
    %v8851 = vadd.f32 %v8602, %v8821
    %v8852 = vadd.f32 %v8603, %v8834
    %v8853 = vadd.f32 %v8604, %v8847
    %v8854 = vxor.u32 %v8850, 2147483648
    %v8855 = vxor.u32 %v8851, 2147483648
    %v8856 = vmul.f32 %v8854, 1.442695
    %v8857 = vpow.pop %v8856
    %v8858 = vmul.f32 %v8855, 1.442695
    %v8859 = vpow.pop %v8858
    %v8860 = vadd.f32 %v8857, 1.0
    %v8861 = vadd.f32 %v8859, 1.0
    %v8862 = vrcp.pop %v8860
    %v8863 = vmul.f32 %v8860, %v8862
    %v8864 = vsub.f32 1.0, %v8863
    %v8865 = vmul.f32 %v8862, %v8864
    %v8866 = vadd.f32 %v8862, %v8865
    %vm8867 = vweird.f32 %v8860
    %vm8868 = vweird.f32 %v8862
    %vm8869 = vmor %vm8867, %vm8868
    %v8870 = vsel %vm8869, %v8862, %v8866
    %v8871 = vand.u32 2147483647, %v8860
    %vm8872 = vcmp.eq.f32.partialorder %v8871, 8.507059e+37
    %v8873 = vand.u32 %v8860, 2147483648
    %v8874 = vor.u32 1.1754944e-38, %v8873
    %v8875 = vsel %vm8872, %v8874, %v8870
    %v8876 = vmul.f32 1.0, %v8875
    %v8877 = vrcp.pop %v8861
    %v8878 = vmul.f32 %v8861, %v8877
    %v8879 = vsub.f32 1.0, %v8878
    %v8880 = vmul.f32 %v8877, %v8879
    %v8881 = vadd.f32 %v8877, %v8880
    %vm8882 = vweird.f32 %v8861
    %vm8883 = vweird.f32 %v8877
    %vm8884 = vmor %vm8882, %vm8883
    %v8885 = vsel %vm8884, %v8877, %v8881
    %v8886 = vand.u32 2147483647, %v8861
    %vm8887 = vcmp.eq.f32.partialorder %v8886, 8.507059e+37
    %v8888 = vand.u32 %v8861, 2147483648
    %v8889 = vor.u32 1.1754944e-38, %v8888
    %v8890 = vsel %vm8887, %v8889, %v8885
    %v8891 = vmul.f32 1.0, %v8890
    %v8892 = vtanh.pop %v8852
    %v8893 = vmul.f32 %v8891, %v8578
    %v8894 = vmul.f32 %v8876, %v8892
    %v8895 = vadd.f32 %v8893, %v8894
    %v8896 = vtanh.pop %v8895
    %v8897 = vxor.u32 %v8853, 2147483648
    %v8898 = vmul.f32 %v8897, 1.442695
    %v8899 = vpow.pop %v8898
    %v8900 = vadd.f32 %v8899, 1.0
    %v8901 = vrcp.pop %v8900
    %v8902 = vmul.f32 %v8900, %v8901
    %v8903 = vsub.f32 1.0, %v8902
    %v8904 = vmul.f32 %v8901, %v8903
    %v8905 = vadd.f32 %v8901, %v8904
    %vm8906 = vweird.f32 %v8900
    %vm8907 = vweird.f32 %v8901
    %vm8908 = vmor %vm8906, %vm8907
    %v8909 = vsel %vm8908, %v8901, %v8905
    %v8910 = vand.u32 2147483647, %v8900
    %vm8911 = vcmp.eq.f32.partialorder %v8910, 8.507059e+37
    %v8912 = vand.u32 %v8900, 2147483648
    %v8913 = vor.u32 1.1754944e-38, %v8912
    %v8914 = vsel %vm8911, %v8913, %v8909
    %v8915 = vmul.f32 1.0, %v8914
    %v8916 = vmul.f32 %v8915, %v8896
    %8917 = vst [vmem:[#allocation3 + $0x98] sm:$0xff] %v8916
    %v8918 = vld [vmem:[#allocation3] sm:$0xff]
    %v8919 = vld [vmem:[#allocation3 + $0x8] sm:$0xff]
    %v8920 = vld [vmem:[#allocation3 + $0x10] sm:$0xff]
    %v8921 = vld [vmem:[#allocation3 + $0x18] sm:$0xff]
    %v8922 = vld [vmem:[#allocation3 + $0x20] sm:$0xff]
    %v8923 = vld [vmem:[#allocation3 + $0x28] sm:$0xff]
    %v8924 = vld [vmem:[#allocation3 + $0x30] sm:$0xff]
    %v8925 = vld [vmem:[#allocation3 + $0x38] sm:$0xff]
    %v8926 = vld [vmem:[#allocation3 + $0x40] sm:$0xff]
    %v8927 = vld [vmem:[#allocation3 + $0x48] sm:$0xff]
    %v8928 = vld [vmem:[#allocation3 + $0x50] sm:$0xff]
    %v8929 = vld [vmem:[#allocation3 + $0x58] sm:$0xff]
    %v8930 = vld [vmem:[#allocation3 + $0x60] sm:$0xff]
    %v8931 = vld [vmem:[#allocation3 + $0x68] sm:$0xff]
    %v8932 = vld [vmem:[#allocation3 + $0x70] sm:$0xff]
    %v8933 = vld [vmem:[#allocation3 + $0x78] sm:$0xff]
    %v8934 = vld [vmem:[#allocation3 + $0x80] sm:$0xff]
    %v8935 = vld [vmem:[#allocation3 + $0x88] sm:$0xff]
    %v8936 = vld [vmem:[#allocation3 + $0x90] sm:$0xff]
    %v8937 = vld [vmem:[#allocation3 + $0x98] sm:$0xff]
    %v8938 = vld [vmem:[%s4] sm:$0x1f]
    %v8939 = vld [vmem:[%s4 + $0x8] sm:$0x1f]
    %v8940 = vld [vmem:[%s4 + $0x10] sm:$0x1f]
    %v8941 = vld [vmem:[%s4 + $0x18] sm:$0x1f]
    %v8942 = vld [vmem:[%s4 + $0x20] sm:$0x1f]
    %v8943 = vld [vmem:[%s4 + $0x28] sm:$0x1f]
    %v8944 = vld [vmem:[%s4 + $0x30] sm:$0x1f]
    %v8945 = vld [vmem:[%s4 + $0x38] sm:$0x1f]
    %v8946 = vld [vmem:[%s4 + $0x40] sm:$0x1f]
    %v8947 = vld [vmem:[%s4 + $0x48] sm:$0x1f]
    %v8948 = vld [vmem:[%s4 + $0x50] sm:$0x1f]
    %v8949 = vld [vmem:[%s4 + $0x58] sm:$0x1f]
    %v8950 = vld [vmem:[%s4 + $0x60] sm:$0x1f]
    %v8951 = vld [vmem:[%s4 + $0x68] sm:$0x1f]
    %v8952 = vld [vmem:[%s4 + $0x70] sm:$0x1f]
    %v8953 = vld [vmem:[%s4 + $0x78] sm:$0x1f]
    %v8954 = vld [vmem:[%s4 + $0x80] sm:$0x1f]
    %v8955 = vld [vmem:[%s4 + $0x88] sm:$0x1f]
    %v8956 = vld [vmem:[%s4 + $0x90] sm:$0x1f]
    %v8957 = vld [vmem:[%s4 + $0x98] sm:$0x1f]
    %v8958 = vld [vmem:[%s5] sm:$0x1]
    %v8960 = vperm.slane %v8958, 0
    %8962 = vmatpush.xpose.msra.mxu0 0.0
    %8963 = vmatpush.xpose.msra.mxu0 0.0
    %8964 = vmatpush.xpose.msra.mxu0 0.0
    %8965 = vmatpush.xpose.msra.mxu0 0.0
    %8966 = vmatpush.xpose.msra.mxu0 0.0
    %8967 = vmatpush.xpose.msra.mxu0 0.0
    %8968 = vmatpush.xpose.msra.mxu0 0.0
    %8969 = vmatpush.xpose.msra.mxu0 0.0
    %8970 = vmatpush.xpose.msra.mxu0 0.0
    %8971 = vmatpush.xpose.msra.mxu0 0.0
    %8972 = vmatpush.xpose.msra.mxu0 0.0
    %8973 = vmatpush.xpose.msra.mxu0 0.0
    %8974 = vmatpush.xpose.msra.mxu0 0.0
    %8975 = vmatpush.xpose.msra.mxu0 0.0
    %8976 = vmatpush.xpose.msra.mxu0 0.0
    %8977 = vmatpush.xpose.msra.mxu0 %v8938
    %8978 = vmatmul.f32.gmra.mxu0 %v8918
    %v8979 = vpop.f32.mrf.mxu0
    %v8980 = vadd.f32 %v8960, %v8979
    %8981 = vdwg.mxu0
    %8982 = vmatpush.xpose.msra.mxu0 0.0
    %8983 = vmatpush.xpose.msra.mxu0 0.0
    %8984 = vmatpush.xpose.msra.mxu0 0.0
    %8985 = vmatpush.xpose.msra.mxu0 0.0
    %8986 = vmatpush.xpose.msra.mxu0 0.0
    %8987 = vmatpush.xpose.msra.mxu0 0.0
    %8988 = vmatpush.xpose.msra.mxu0 0.0
    %8989 = vmatpush.xpose.msra.mxu0 0.0
    %8990 = vmatpush.xpose.msra.mxu0 0.0
    %8991 = vmatpush.xpose.msra.mxu0 0.0
    %8992 = vmatpush.xpose.msra.mxu0 0.0
    %8993 = vmatpush.xpose.msra.mxu0 0.0
    %8994 = vmatpush.xpose.msra.mxu0 0.0
    %8995 = vmatpush.xpose.msra.mxu0 0.0
    %8996 = vmatpush.xpose.msra.mxu0 0.0
    %8997 = vmatpush.xpose.msra.mxu0 %v8939
    %8998 = vmatmul.f32.gmra.mxu0 %v8919
    %v8999 = vpop.f32.mrf.mxu0
    %v9000 = vadd.f32 %v8980, %v8999
    %9001 = vdwg.mxu0
    %9002 = vmatpush.xpose.msra.mxu0 0.0
    %9003 = vmatpush.xpose.msra.mxu0 0.0
    %9004 = vmatpush.xpose.msra.mxu0 0.0
    %9005 = vmatpush.xpose.msra.mxu0 0.0
    %9006 = vmatpush.xpose.msra.mxu0 0.0
    %9007 = vmatpush.xpose.msra.mxu0 0.0
    %9008 = vmatpush.xpose.msra.mxu0 0.0
    %9009 = vmatpush.xpose.msra.mxu0 0.0
    %9010 = vmatpush.xpose.msra.mxu0 0.0
    %9011 = vmatpush.xpose.msra.mxu0 0.0
    %9012 = vmatpush.xpose.msra.mxu0 0.0
    %9013 = vmatpush.xpose.msra.mxu0 0.0
    %9014 = vmatpush.xpose.msra.mxu0 0.0
    %9015 = vmatpush.xpose.msra.mxu0 0.0
    %9016 = vmatpush.xpose.msra.mxu0 0.0
    %9017 = vmatpush.xpose.msra.mxu0 %v8940
    %9018 = vmatmul.f32.gmra.mxu0 %v8920
    %v9019 = vpop.f32.mrf.mxu0
    %v9020 = vadd.f32 %v9000, %v9019
    %9021 = vdwg.mxu0
    %9022 = vmatpush.xpose.msra.mxu0 0.0
    %9023 = vmatpush.xpose.msra.mxu0 0.0
    %9024 = vmatpush.xpose.msra.mxu0 0.0
    %9025 = vmatpush.xpose.msra.mxu0 0.0
    %9026 = vmatpush.xpose.msra.mxu0 0.0
    %9027 = vmatpush.xpose.msra.mxu0 0.0
    %9028 = vmatpush.xpose.msra.mxu0 0.0
    %9029 = vmatpush.xpose.msra.mxu0 0.0
    %9030 = vmatpush.xpose.msra.mxu0 0.0
    %9031 = vmatpush.xpose.msra.mxu0 0.0
    %9032 = vmatpush.xpose.msra.mxu0 0.0
    %9033 = vmatpush.xpose.msra.mxu0 0.0
    %9034 = vmatpush.xpose.msra.mxu0 0.0
    %9035 = vmatpush.xpose.msra.mxu0 0.0
    %9036 = vmatpush.xpose.msra.mxu0 0.0
    %9037 = vmatpush.xpose.msra.mxu0 %v8941
    %9038 = vmatmul.f32.gmra.mxu0 %v8921
    %v9039 = vpop.f32.mrf.mxu0
    %v9040 = vadd.f32 %v9020, %v9039
    %9041 = vdwg.mxu0
    %9042 = vmatpush.xpose.msra.mxu0 0.0
    %9043 = vmatpush.xpose.msra.mxu0 0.0
    %9044 = vmatpush.xpose.msra.mxu0 0.0
    %9045 = vmatpush.xpose.msra.mxu0 0.0
    %9046 = vmatpush.xpose.msra.mxu0 0.0
    %9047 = vmatpush.xpose.msra.mxu0 0.0
    %9048 = vmatpush.xpose.msra.mxu0 0.0
    %9049 = vmatpush.xpose.msra.mxu0 0.0
    %9050 = vmatpush.xpose.msra.mxu0 0.0
    %9051 = vmatpush.xpose.msra.mxu0 0.0
    %9052 = vmatpush.xpose.msra.mxu0 0.0
    %9053 = vmatpush.xpose.msra.mxu0 0.0
    %9054 = vmatpush.xpose.msra.mxu0 0.0
    %9055 = vmatpush.xpose.msra.mxu0 0.0
    %9056 = vmatpush.xpose.msra.mxu0 0.0
    %9057 = vmatpush.xpose.msra.mxu0 %v8942
    %9058 = vmatmul.f32.gmra.mxu0 %v8922
    %v9059 = vpop.f32.mrf.mxu0
    %v9060 = vadd.f32 %v9040, %v9059
    %9061 = vdwg.mxu0
    %9062 = vmatpush.xpose.msra.mxu0 0.0
    %9063 = vmatpush.xpose.msra.mxu0 0.0
    %9064 = vmatpush.xpose.msra.mxu0 0.0
    %9065 = vmatpush.xpose.msra.mxu0 0.0
    %9066 = vmatpush.xpose.msra.mxu0 0.0
    %9067 = vmatpush.xpose.msra.mxu0 0.0
    %9068 = vmatpush.xpose.msra.mxu0 0.0
    %9069 = vmatpush.xpose.msra.mxu0 0.0
    %9070 = vmatpush.xpose.msra.mxu0 0.0
    %9071 = vmatpush.xpose.msra.mxu0 0.0
    %9072 = vmatpush.xpose.msra.mxu0 0.0
    %9073 = vmatpush.xpose.msra.mxu0 0.0
    %9074 = vmatpush.xpose.msra.mxu0 0.0
    %9075 = vmatpush.xpose.msra.mxu0 0.0
    %9076 = vmatpush.xpose.msra.mxu0 0.0
    %9077 = vmatpush.xpose.msra.mxu0 %v8943
    %9078 = vmatmul.f32.gmra.mxu0 %v8923
    %v9079 = vpop.f32.mrf.mxu0
    %v9080 = vadd.f32 %v9060, %v9079
    %9081 = vdwg.mxu0
    %9082 = vmatpush.xpose.msra.mxu0 0.0
    %9083 = vmatpush.xpose.msra.mxu0 0.0
    %9084 = vmatpush.xpose.msra.mxu0 0.0
    %9085 = vmatpush.xpose.msra.mxu0 0.0
    %9086 = vmatpush.xpose.msra.mxu0 0.0
    %9087 = vmatpush.xpose.msra.mxu0 0.0
    %9088 = vmatpush.xpose.msra.mxu0 0.0
    %9089 = vmatpush.xpose.msra.mxu0 0.0
    %9090 = vmatpush.xpose.msra.mxu0 0.0
    %9091 = vmatpush.xpose.msra.mxu0 0.0
    %9092 = vmatpush.xpose.msra.mxu0 0.0
    %9093 = vmatpush.xpose.msra.mxu0 0.0
    %9094 = vmatpush.xpose.msra.mxu0 0.0
    %9095 = vmatpush.xpose.msra.mxu0 0.0
    %9096 = vmatpush.xpose.msra.mxu0 0.0
    %9097 = vmatpush.xpose.msra.mxu0 %v8944
    %9098 = vmatmul.f32.gmra.mxu0 %v8924
    %v9099 = vpop.f32.mrf.mxu0
    %v9100 = vadd.f32 %v9080, %v9099
    %9101 = vdwg.mxu0
    %9102 = vmatpush.xpose.msra.mxu0 0.0
    %9103 = vmatpush.xpose.msra.mxu0 0.0
    %9104 = vmatpush.xpose.msra.mxu0 0.0
    %9105 = vmatpush.xpose.msra.mxu0 0.0
    %9106 = vmatpush.xpose.msra.mxu0 0.0
    %9107 = vmatpush.xpose.msra.mxu0 0.0
    %9108 = vmatpush.xpose.msra.mxu0 0.0
    %9109 = vmatpush.xpose.msra.mxu0 0.0
    %9110 = vmatpush.xpose.msra.mxu0 0.0
    %9111 = vmatpush.xpose.msra.mxu0 0.0
    %9112 = vmatpush.xpose.msra.mxu0 0.0
    %9113 = vmatpush.xpose.msra.mxu0 0.0
    %9114 = vmatpush.xpose.msra.mxu0 0.0
    %9115 = vmatpush.xpose.msra.mxu0 0.0
    %9116 = vmatpush.xpose.msra.mxu0 0.0
    %9117 = vmatpush.xpose.msra.mxu0 %v8945
    %9118 = vmatmul.f32.gmra.mxu0 %v8925
    %v9119 = vpop.f32.mrf.mxu0
    %v9120 = vadd.f32 %v9100, %v9119
    %9121 = vdwg.mxu0
    %9122 = vmatpush.xpose.msra.mxu0 0.0
    %9123 = vmatpush.xpose.msra.mxu0 0.0
    %9124 = vmatpush.xpose.msra.mxu0 0.0
    %9125 = vmatpush.xpose.msra.mxu0 0.0
    %9126 = vmatpush.xpose.msra.mxu0 0.0
    %9127 = vmatpush.xpose.msra.mxu0 0.0
    %9128 = vmatpush.xpose.msra.mxu0 0.0
    %9129 = vmatpush.xpose.msra.mxu0 0.0
    %9130 = vmatpush.xpose.msra.mxu0 0.0
    %9131 = vmatpush.xpose.msra.mxu0 0.0
    %9132 = vmatpush.xpose.msra.mxu0 0.0
    %9133 = vmatpush.xpose.msra.mxu0 0.0
    %9134 = vmatpush.xpose.msra.mxu0 0.0
    %9135 = vmatpush.xpose.msra.mxu0 0.0
    %9136 = vmatpush.xpose.msra.mxu0 0.0
    %9137 = vmatpush.xpose.msra.mxu0 %v8946
    %9138 = vmatmul.f32.gmra.mxu0 %v8926
    %v9139 = vpop.f32.mrf.mxu0
    %v9140 = vadd.f32 %v9120, %v9139
    %9141 = vdwg.mxu0
    %9142 = vmatpush.xpose.msra.mxu0 0.0
    %9143 = vmatpush.xpose.msra.mxu0 0.0
    %9144 = vmatpush.xpose.msra.mxu0 0.0
    %9145 = vmatpush.xpose.msra.mxu0 0.0
    %9146 = vmatpush.xpose.msra.mxu0 0.0
    %9147 = vmatpush.xpose.msra.mxu0 0.0
    %9148 = vmatpush.xpose.msra.mxu0 0.0
    %9149 = vmatpush.xpose.msra.mxu0 0.0
    %9150 = vmatpush.xpose.msra.mxu0 0.0
    %9151 = vmatpush.xpose.msra.mxu0 0.0
    %9152 = vmatpush.xpose.msra.mxu0 0.0
    %9153 = vmatpush.xpose.msra.mxu0 0.0
    %9154 = vmatpush.xpose.msra.mxu0 0.0
    %9155 = vmatpush.xpose.msra.mxu0 0.0
    %9156 = vmatpush.xpose.msra.mxu0 0.0
    %9157 = vmatpush.xpose.msra.mxu0 %v8947
    %9158 = vmatmul.f32.gmra.mxu0 %v8927
    %v9159 = vpop.f32.mrf.mxu0
    %v9160 = vadd.f32 %v9140, %v9159
    %9161 = vdwg.mxu0
    %9162 = vmatpush.xpose.msra.mxu0 0.0
    %9163 = vmatpush.xpose.msra.mxu0 0.0
    %9164 = vmatpush.xpose.msra.mxu0 0.0
    %9165 = vmatpush.xpose.msra.mxu0 0.0
    %9166 = vmatpush.xpose.msra.mxu0 0.0
    %9167 = vmatpush.xpose.msra.mxu0 0.0
    %9168 = vmatpush.xpose.msra.mxu0 0.0
    %9169 = vmatpush.xpose.msra.mxu0 0.0
    %9170 = vmatpush.xpose.msra.mxu0 0.0
    %9171 = vmatpush.xpose.msra.mxu0 0.0
    %9172 = vmatpush.xpose.msra.mxu0 0.0
    %9173 = vmatpush.xpose.msra.mxu0 0.0
    %9174 = vmatpush.xpose.msra.mxu0 0.0
    %9175 = vmatpush.xpose.msra.mxu0 0.0
    %9176 = vmatpush.xpose.msra.mxu0 0.0
    %9177 = vmatpush.xpose.msra.mxu0 %v8948
    %9178 = vmatmul.f32.gmra.mxu0 %v8928
    %v9179 = vpop.f32.mrf.mxu0
    %v9180 = vadd.f32 %v9160, %v9179
    %9181 = vdwg.mxu0
    %9182 = vmatpush.xpose.msra.mxu0 0.0
    %9183 = vmatpush.xpose.msra.mxu0 0.0
    %9184 = vmatpush.xpose.msra.mxu0 0.0
    %9185 = vmatpush.xpose.msra.mxu0 0.0
    %9186 = vmatpush.xpose.msra.mxu0 0.0
    %9187 = vmatpush.xpose.msra.mxu0 0.0
    %9188 = vmatpush.xpose.msra.mxu0 0.0
    %9189 = vmatpush.xpose.msra.mxu0 0.0
    %9190 = vmatpush.xpose.msra.mxu0 0.0
    %9191 = vmatpush.xpose.msra.mxu0 0.0
    %9192 = vmatpush.xpose.msra.mxu0 0.0
    %9193 = vmatpush.xpose.msra.mxu0 0.0
    %9194 = vmatpush.xpose.msra.mxu0 0.0
    %9195 = vmatpush.xpose.msra.mxu0 0.0
    %9196 = vmatpush.xpose.msra.mxu0 0.0
    %9197 = vmatpush.xpose.msra.mxu0 %v8949
    %9198 = vmatmul.f32.gmra.mxu0 %v8929
    %v9199 = vpop.f32.mrf.mxu0
    %v9200 = vadd.f32 %v9180, %v9199
    %9201 = vdwg.mxu0
    %9202 = vmatpush.xpose.msra.mxu0 0.0
    %9203 = vmatpush.xpose.msra.mxu0 0.0
    %9204 = vmatpush.xpose.msra.mxu0 0.0
    %9205 = vmatpush.xpose.msra.mxu0 0.0
    %9206 = vmatpush.xpose.msra.mxu0 0.0
    %9207 = vmatpush.xpose.msra.mxu0 0.0
    %9208 = vmatpush.xpose.msra.mxu0 0.0
    %9209 = vmatpush.xpose.msra.mxu0 0.0
    %9210 = vmatpush.xpose.msra.mxu0 0.0
    %9211 = vmatpush.xpose.msra.mxu0 0.0
    %9212 = vmatpush.xpose.msra.mxu0 0.0
    %9213 = vmatpush.xpose.msra.mxu0 0.0
    %9214 = vmatpush.xpose.msra.mxu0 0.0
    %9215 = vmatpush.xpose.msra.mxu0 0.0
    %9216 = vmatpush.xpose.msra.mxu0 0.0
    %9217 = vmatpush.xpose.msra.mxu0 %v8950
    %9218 = vmatmul.f32.gmra.mxu0 %v8930
    %v9219 = vpop.f32.mrf.mxu0
    %v9220 = vadd.f32 %v9200, %v9219
    %9221 = vdwg.mxu0
    %9222 = vmatpush.xpose.msra.mxu0 0.0
    %9223 = vmatpush.xpose.msra.mxu0 0.0
    %9224 = vmatpush.xpose.msra.mxu0 0.0
    %9225 = vmatpush.xpose.msra.mxu0 0.0
    %9226 = vmatpush.xpose.msra.mxu0 0.0
    %9227 = vmatpush.xpose.msra.mxu0 0.0
    %9228 = vmatpush.xpose.msra.mxu0 0.0
    %9229 = vmatpush.xpose.msra.mxu0 0.0
    %9230 = vmatpush.xpose.msra.mxu0 0.0
    %9231 = vmatpush.xpose.msra.mxu0 0.0
    %9232 = vmatpush.xpose.msra.mxu0 0.0
    %9233 = vmatpush.xpose.msra.mxu0 0.0
    %9234 = vmatpush.xpose.msra.mxu0 0.0
    %9235 = vmatpush.xpose.msra.mxu0 0.0
    %9236 = vmatpush.xpose.msra.mxu0 0.0
    %9237 = vmatpush.xpose.msra.mxu0 %v8951
    %9238 = vmatmul.f32.gmra.mxu0 %v8931
    %v9239 = vpop.f32.mrf.mxu0
    %v9240 = vadd.f32 %v9220, %v9239
    %9241 = vdwg.mxu0
    %9242 = vmatpush.xpose.msra.mxu0 0.0
    %9243 = vmatpush.xpose.msra.mxu0 0.0
    %9244 = vmatpush.xpose.msra.mxu0 0.0
    %9245 = vmatpush.xpose.msra.mxu0 0.0
    %9246 = vmatpush.xpose.msra.mxu0 0.0
    %9247 = vmatpush.xpose.msra.mxu0 0.0
    %9248 = vmatpush.xpose.msra.mxu0 0.0
    %9249 = vmatpush.xpose.msra.mxu0 0.0
    %9250 = vmatpush.xpose.msra.mxu0 0.0
    %9251 = vmatpush.xpose.msra.mxu0 0.0
    %9252 = vmatpush.xpose.msra.mxu0 0.0
    %9253 = vmatpush.xpose.msra.mxu0 0.0
    %9254 = vmatpush.xpose.msra.mxu0 0.0
    %9255 = vmatpush.xpose.msra.mxu0 0.0
    %9256 = vmatpush.xpose.msra.mxu0 0.0
    %9257 = vmatpush.xpose.msra.mxu0 %v8952
    %9258 = vmatmul.f32.gmra.mxu0 %v8932
    %v9259 = vpop.f32.mrf.mxu0
    %v9260 = vadd.f32 %v9240, %v9259
    %9261 = vdwg.mxu0
    %9262 = vmatpush.xpose.msra.mxu0 0.0
    %9263 = vmatpush.xpose.msra.mxu0 0.0
    %9264 = vmatpush.xpose.msra.mxu0 0.0
    %9265 = vmatpush.xpose.msra.mxu0 0.0
    %9266 = vmatpush.xpose.msra.mxu0 0.0
    %9267 = vmatpush.xpose.msra.mxu0 0.0
    %9268 = vmatpush.xpose.msra.mxu0 0.0
    %9269 = vmatpush.xpose.msra.mxu0 0.0
    %9270 = vmatpush.xpose.msra.mxu0 0.0
    %9271 = vmatpush.xpose.msra.mxu0 0.0
    %9272 = vmatpush.xpose.msra.mxu0 0.0
    %9273 = vmatpush.xpose.msra.mxu0 0.0
    %9274 = vmatpush.xpose.msra.mxu0 0.0
    %9275 = vmatpush.xpose.msra.mxu0 0.0
    %9276 = vmatpush.xpose.msra.mxu0 0.0
    %9277 = vmatpush.xpose.msra.mxu0 %v8953
    %9278 = vmatmul.f32.gmra.mxu0 %v8933
    %v9279 = vpop.f32.mrf.mxu0
    %v9280 = vadd.f32 %v9260, %v9279
    %9281 = vdwg.mxu0
    %9282 = vmatpush.xpose.msra.mxu0 0.0
    %9283 = vmatpush.xpose.msra.mxu0 0.0
    %9284 = vmatpush.xpose.msra.mxu0 0.0
    %9285 = vmatpush.xpose.msra.mxu0 0.0
    %9286 = vmatpush.xpose.msra.mxu0 0.0
    %9287 = vmatpush.xpose.msra.mxu0 0.0
    %9288 = vmatpush.xpose.msra.mxu0 0.0
    %9289 = vmatpush.xpose.msra.mxu0 0.0
    %9290 = vmatpush.xpose.msra.mxu0 0.0
    %9291 = vmatpush.xpose.msra.mxu0 0.0
    %9292 = vmatpush.xpose.msra.mxu0 0.0
    %9293 = vmatpush.xpose.msra.mxu0 0.0
    %9294 = vmatpush.xpose.msra.mxu0 0.0
    %9295 = vmatpush.xpose.msra.mxu0 0.0
    %9296 = vmatpush.xpose.msra.mxu0 0.0
    %9297 = vmatpush.xpose.msra.mxu0 %v8954
    %9298 = vmatmul.f32.gmra.mxu0 %v8934
    %v9299 = vpop.f32.mrf.mxu0
    %v9300 = vadd.f32 %v9280, %v9299
    %9301 = vdwg.mxu0
    %9302 = vmatpush.xpose.msra.mxu0 0.0
    %9303 = vmatpush.xpose.msra.mxu0 0.0
    %9304 = vmatpush.xpose.msra.mxu0 0.0
    %9305 = vmatpush.xpose.msra.mxu0 0.0
    %9306 = vmatpush.xpose.msra.mxu0 0.0
    %9307 = vmatpush.xpose.msra.mxu0 0.0
    %9308 = vmatpush.xpose.msra.mxu0 0.0
    %9309 = vmatpush.xpose.msra.mxu0 0.0
    %9310 = vmatpush.xpose.msra.mxu0 0.0
    %9311 = vmatpush.xpose.msra.mxu0 0.0
    %9312 = vmatpush.xpose.msra.mxu0 0.0
    %9313 = vmatpush.xpose.msra.mxu0 0.0
    %9314 = vmatpush.xpose.msra.mxu0 0.0
    %9315 = vmatpush.xpose.msra.mxu0 0.0
    %9316 = vmatpush.xpose.msra.mxu0 0.0
    %9317 = vmatpush.xpose.msra.mxu0 %v8955
    %9318 = vmatmul.f32.gmra.mxu0 %v8935
    %v9319 = vpop.f32.mrf.mxu0
    %v9320 = vadd.f32 %v9300, %v9319
    %9321 = vdwg.mxu0
    %9322 = vmatpush.xpose.msra.mxu0 0.0
    %9323 = vmatpush.xpose.msra.mxu0 0.0
    %9324 = vmatpush.xpose.msra.mxu0 0.0
    %9325 = vmatpush.xpose.msra.mxu0 0.0
    %9326 = vmatpush.xpose.msra.mxu0 0.0
    %9327 = vmatpush.xpose.msra.mxu0 0.0
    %9328 = vmatpush.xpose.msra.mxu0 0.0
    %9329 = vmatpush.xpose.msra.mxu0 0.0
    %9330 = vmatpush.xpose.msra.mxu0 0.0
    %9331 = vmatpush.xpose.msra.mxu0 0.0
    %9332 = vmatpush.xpose.msra.mxu0 0.0
    %9333 = vmatpush.xpose.msra.mxu0 0.0
    %9334 = vmatpush.xpose.msra.mxu0 0.0
    %9335 = vmatpush.xpose.msra.mxu0 0.0
    %9336 = vmatpush.xpose.msra.mxu0 0.0
    %9337 = vmatpush.xpose.msra.mxu0 %v8956
    %9338 = vmatmul.f32.gmra.mxu0 %v8936
    %v9339 = vpop.f32.mrf.mxu0
    %v9340 = vadd.f32 %v9320, %v9339
    %9341 = vdwg.mxu0
    %9342 = vmatpush.xpose.msra.mxu0 0.0
    %9343 = vmatpush.xpose.msra.mxu0 0.0
    %9344 = vmatpush.xpose.msra.mxu0 0.0
    %9345 = vmatpush.xpose.msra.mxu0 0.0
    %9346 = vmatpush.xpose.msra.mxu0 0.0
    %9347 = vmatpush.xpose.msra.mxu0 0.0
    %9348 = vmatpush.xpose.msra.mxu0 0.0
    %9349 = vmatpush.xpose.msra.mxu0 0.0
    %9350 = vmatpush.xpose.msra.mxu0 0.0
    %9351 = vmatpush.xpose.msra.mxu0 0.0
    %9352 = vmatpush.xpose.msra.mxu0 0.0
    %9353 = vmatpush.xpose.msra.mxu0 0.0
    %9354 = vmatpush.xpose.msra.mxu0 0.0
    %9355 = vmatpush.xpose.msra.mxu0 0.0
    %9356 = vmatpush.xpose.msra.mxu0 0.0
    %9357 = vmatpush.xpose.msra.mxu0 %v8957
    %9358 = vmatmul.f32.gmra.mxu0 %v8937
    %v9359 = vpop.f32.mrf.mxu0
    %v9360 = vadd.f32 %v9340, %v9359
    %9361 = vdwg.mxu0
    %vm9362 = vcmask 39936
    %9363 = vst.msk [vmem:[#allocation9] sm:$0xff] %vm9362, %v9360
    // Predicated region
    $region34: #{tpu_custom_call.1} parent=1 // pred_check
      _
    $region35: #{tpu_custom_call.1} parent=1 // pred_check_branch
      %9365 = sbr.rel (0) target = $region37
    $region36: #{tpu_custom_call.1} parent=1 // pred_region
      %9367 = vsyncadd [#allocation6], 0
      %s9369 = sshll.u32 [#allocation9], 4
      %s9370 = int_to_ptr.vmem [resolvable:$true] %s9369
      %s9371 = sshll.u32 %s6, 4
      %s9372 = int_to_ptr.hbm [resolvable:$true] %s9371
      %9374 = dma.vmem_to_hbm [thread:$0]  %s9370, 128, %s9372, [#allocation6]
    $region37: #{tpu_custom_call.1} parent=1 // pred_fallthru
      _
    // Predicated region
    $region38: #{tpu_custom_call.1} parent=1 // pred_check
      _
    $region39: #{tpu_custom_call.1} parent=1 // pred_check_branch
      %9376 = sbr.rel (0) target = $region41
    $region40: #{tpu_custom_call.1} parent=1 // pred_region
      %9378 = dma.done [#allocation6], 128
    $region41: #{tpu_custom_call.1} parent=1 // pred_fallthru
      _
    %9379 = vsyncpa [#allocation5], 1
    %9380 = vsyncpa [#allocation8], 1
    %9381 = vsyncpa [#allocation6], 1

</llo_original>
